<compile_context>
chip_gen: v6e
topology: v6e:2x2x1
jax: 0.10.0
libtpu: 0.0.40
codegen_flags: <defaults>
</compile_context>

<pallas_src>
import numpy as np
import jax
import jax.numpy as jnp
from jax import lax
from jax.experimental import pallas as pl
from jax.experimental.pallas import tpu as pltpu

INF = 1e5
# TODO(synk): diffab's custom LayerNorm epsilon is not visible here; using nn.LayerNorm default 1e-5.
LN_EPS = 1e-5
DIR_EPS = 1e-4   # normalize_vector eps used in _spatial_aggregation


def _layer_norm(v, g, b):
    mu = jnp.mean(v, axis=-1, keepdims=True)
    var = jnp.mean((v - mu) ** 2, axis=-1, keepdims=True)
    return (v - mu) * lax.rsqrt(var + LN_EPS) * g + b


def _make_ga_block_kernel(H, Dqk, Dv, P, Pv, F, C, L, compute_dtype):
    HD, HV = H * Dqk, H * Dv
    HP, HPv = H * P, H * Pv
    oq, ok, ov = 0, HD, 2 * HD
    oqp = ov + HV
    okp = oqp + 3 * HP
    ovp = okp + 3 * HP
    oend = ovp + 3 * HPv

    # group-major feature-slab column offsets (wo rows permuted to match)
    p2n_off = 0
    node_off = p2n_off + H * C
    fpx_off = node_off + HV
    fpy_off = fpx_off + HPv
    fpz_off = fpy_off + HPv
    dist_off = fpz_off + HPv
    dirx_off = dist_off + HPv
    diry_off = dirx_off + HPv
    dirz_off = diry_off + HPv
    in_feat = dirz_off + HPv

    cd = compute_dtype

    def _mm(a, b):                    # MXU matmul, operands in compute dtype, f32 acc
        return jnp.dot(a.astype(cd), b.astype(cd),
                       preferred_element_type=jnp.float32)

    def _dot_t(a, b):                 # a @ b.T (contract last dims), f32 acc
        return lax.dot_general(a.astype(cd), b.astype(cd),
                               (((1,), (1,)), ((), ())),
                               preferred_element_type=jnp.float32)

    def kernel(R_ref, t_ref, x_ref, z_ref, m_ref,
               wproj_ref, wpb_ref, ptscale_ref, wo_ref, small_ref, mlpw_ref,
               o_ref, feat_ref):
        # ---- parameters (small, loaded once per grid step) ----
        wproj = wproj_ref[...]
        wpb = wpb_ref[...]
        ptscale = ptscale_ref[...]                # (1, H*P + H)
        wo = wo_ref[...]
        small = small_ref[...]
        w1, w2, w3 = mlpw_ref[0], mlpw_ref[1], mlpw_ref[2]
        bo, g1, b1 = small[0:1], small[1:2], small[2:3]
        c1, c2, c3 = small[3:4], small[4:5], small[5:6]
        g2, b2 = small[6:7], small[7:8]

        qg_scale = ptscale[:, :HP]                # (1, H*P) = -2*scale_attn*gcoef_h
        qn_scale = ptscale[:, HP:HP + H]          # (1, H)   =    scale_attn*gcoef_h

        # ---- per-batch-element data ----
        R9 = R_ref[0]        # (L, 9), R[i, j] at column 3*i + j
        t = t_ref[0]         # (L, 3)
        x = x_ref[0]         # (L, F)
        z3 = z_ref[0]        # (L, L, C)
        m = m_ref[0]         # (L, 1) float {0,1}

        def rc(i, j):
            return R9[:, 3 * i + j:3 * i + j + 1]          # (L, 1)

        tx, ty, tz = t[:, 0:1], t[:, 1:2], t[:, 2:3]

        # ---- fused projections: one wide MXU matmul ----
        # (scale_node*scale_attn already folded into the wq columns)
        proj = _mm(x, wproj)                               # (L, oend) f32
        q_all = proj[:, oq:ok]
        k_all = proj[:, ok:ov]
        v_all = proj[:, ov:oqp]
        qp = proj[:, oqp:okp]          # component-planar: [x(H*P) | y | z]
        kp = proj[:, okp:ovp]
        vp = proj[:, ovp:oend]         # component-planar: [x(H*Pv) | y | z]

        def to_global(p, n):
            px, py, pz = p[:, :n], p[:, n:2 * n], p[:, 2 * n:3 * n]
            gx = rc(0, 0) * px + rc(0, 1) * py + rc(0, 2) * pz + tx
            gy = rc(1, 0) * px + rc(1, 1) * py + rc(1, 2) * pz + ty
            gz = rc(2, 0) * px + rc(2, 1) * py + rc(2, 2) * pz + tz
            return gx, gy, gz

        # loc2glob applied once, head-batched (L, H*P)/(L, H*Pv) planes.
        qgx, qgy, qgz = to_global(qp, HP)
        kgx, kgy, kgz = to_global(kp, HP)
        vgx, vgy, vgz = to_global(vp, HPv)
        q_sq = qgx * qgx + qgy * qgy + qgz * qgz           # (L, H*P)
        k_sq = kgx * kgx + kgy * kgy + kgz * kgz

        # spatial coefficient folded in as lane-dense plane multiplies (once).
        qgx_s = qgx * qg_scale
        qgy_s = qgy * qg_scale
        qgz_s = qgz * qg_scale

        # Pair bias for all heads: ONE MXU pass over z (scale_attn folded into wpb).
        # TODO(synk): head-major (H,L,L) layout would drop the per-head lane slice
        # below but requires a minor-dim-splitting reshape; kept the proven layout.
        z2 = z3.reshape(L * L, C)
        pb3 = _mm(z2, wpb).reshape(L, L, H)                # (L, L, H) f32

        mT = jnp.transpose(m)                              # (1, L)
        mask_pair = (m * mT) > 0.5                         # (L, L)
        mask_row = m > 0.5                                 # (L, 1)
        ones_col = jnp.ones((L, 1), jnp.float32)           # hoisted out of head loop

        for h in range(H):
            sd = slice(h * Dqk, (h + 1) * Dqk)
            sp = slice(h * P, (h + 1) * P)
            sv = slice(h * Pv, (h + 1) * Pv)

            # --- augmented-QK fusion: node + cross + qn/kn terms in ONE matmul ---
            qn = jnp.sum(q_sq[:, sp], axis=-1, keepdims=True) * qn_scale[:, h:h + 1]
            kn = jnp.sum(k_sq[:, sp], axis=-1, keepdims=True) * qn_scale[:, h:h + 1]
            q_aug = jnp.concatenate(
                [q_all[:, sd], qgx_s[:, sp], qgy_s[:, sp], qgz_s[:, sp],
                 qn, ones_col], axis=1)                    # (L, Dqk+3P+2)
            k_aug = jnp.concatenate(
                [k_all[:, sd], kgx[:, sp], kgy[:, sp], kgz[:, sp],
                 ones_col, kn], axis=1)
            logits = _dot_t(q_aug, k_aug) + jnp.sum(pb3[:, :, h:h + 1], axis=-1)

            # --- masked softmax over key axis (all scaling already folded in) ---
            logits = jnp.where(mask_pair, logits, logits - INF)
            lmax = jnp.max(logits, axis=-1, keepdims=True)
            e = jnp.exp(logits - lmax)
            alpha = e * pl.reciprocal(jnp.sum(e, axis=-1, keepdims=True),
                                      approx=True)
            alpha = jnp.where(mask_row, alpha, 0.0)        # (L, L)

            # --- pair -> node aggregation ---
            # TODO(synk): single-pass all-head version via einsum 'qhk,qkc->qhc'
            # (z read once) deferred; kept the lowering-proven per-head reduce.
            p2n = jnp.sum(alpha[:, :, None] * z3, axis=1)  # (L, C)
            feat_ref[:, p2n_off + h * C:p2n_off + (h + 1) * C] = p2n

            # --- node + all value points aggregated in ONE matmul ---
            vcat = jnp.concatenate(
                [v_all[:, h * Dv:(h + 1) * Dv],
                 vgx[:, sv], vgy[:, sv], vgz[:, sv]], axis=1)    # (L, Dv+3Pv)
            agg = _mm(alpha, vcat)                               # (L, Dv+3Pv)
            feat_ref[:, node_off + h * Dv:node_off + (h + 1) * Dv] = agg[:, :Dv]
            # stash raw aggregated global coords; rotated in one pass after the loop
            feat_ref[:, fpx_off + h * Pv:fpx_off + (h + 1) * Pv] = agg[:, Dv:Dv + Pv]
            feat_ref[:, fpy_off + h * Pv:fpy_off + (h + 1) * Pv] = agg[:, Dv + Pv:Dv + 2 * Pv]
            feat_ref[:, fpz_off + h * Pv:fpz_off + (h + 1) * Pv] = agg[:, Dv + 2 * Pv:Dv + 3 * Pv]

        # ---- head-batched post-processing, ONCE on (L, H*Pv) planes ----
        ax = feat_ref[:, fpx_off:fpx_off + HPv]
        ay = feat_ref[:, fpy_off:fpy_off + HPv]
        az = feat_ref[:, fpz_off:fpz_off + HPv]
        dx, dy, dz = ax - tx, ay - ty, az - tz
        # fp = R^T (aggr - t)
        fpx = rc(0, 0) * dx + rc(1, 0) * dy + rc(2, 0) * dz
        fpy = rc(0, 1) * dx + rc(1, 1) * dy + rc(2, 1) * dz
        fpz = rc(0, 2) * dx + rc(1, 2) * dy + rc(2, 2) * dz
        # TODO(synk): no eps inside the sqrt (matches reference forward); add one
        # before differentiating this kernel.
        dist = jnp.sqrt(fpx * fpx + fpy * fpy + fpz * fpz)       # (L, H*Pv)
        inv = pl.reciprocal(dist + DIR_EPS, approx=True)
        feat_ref[:, fpx_off:fpx_off + HPv] = fpx
        feat_ref[:, fpy_off:fpy_off + HPv] = fpy
        feat_ref[:, fpz_off:fpz_off + HPv] = fpz
        feat_ref[:, dist_off:dist_off + HPv] = dist
        feat_ref[:, dirx_off:dirx_off + HPv] = fpx * inv
        feat_ref[:, diry_off:diry_off + HPv] = fpy * inv
        feat_ref[:, dirz_off:dirz_off + HPv] = fpz * inv

        # ---- single wide out_transform matmul over the scratch feature slab ----
        out = _mm(feat_ref[...], wo) + bo
        out = jnp.where(mask_row, out, 0.0)

        x1 = _layer_norm(x + out, g1, b1)
        h1 = jnp.maximum(_mm(x1, w1) + c1, 0.0)
        h2 = jnp.maximum(_mm(h1, w2) + c2, 0.0)
        h3 = _mm(h2, w3) + c3
        x2 = _layer_norm(x1 + h3, g2, b2)

        o_ref[0] = x2.astype(o_ref.dtype)

    return kernel, in_feat


def _plane_perm(H, P):
    # new column (comp, h, p)  <-  original column (h*P + p)*3 + comp
    idx = [(h * P + p) * 3 + comp
           for comp in range(3) for h in range(H) for p in range(P)]
    return np.asarray(idx, dtype=np.int32)


def _wo_row_perm(H, C, Dv, Pv):
    # Maps the kernel's group-major feature-slab column order back to the
    # original torch.cat row order of wo, so feat_new @ wo[perm] == feat_orig @ wo.
    off_node = H * C
    off_fp = off_node + H * Dv
    off_dist = off_fp + H * Pv * 3
    off_dir = off_dist + H * Pv
    order = []
    order += [h * C + c for h in range(H) for c in range(C)]                    # p2n
    order += [off_node + h * Dv + d for h in range(H) for d in range(Dv)]       # node
    for comp in range(3):                                                       # fpx|fpy|fpz
        order += [off_fp + (h * Pv + p) * 3 + comp
                  for h in range(H) for p in range(Pv)]
    order += [off_dist + h * Pv + p for h in range(H) for p in range(Pv)]       # dist
    for comp in range(3):                                                       # dirx|diry|dirz
        order += [off_dir + (h * Pv + p) * 3 + comp
                  for h in range(H) for p in range(Pv)]
    return np.asarray(order, dtype=np.int32)


def _auto_vmem_limit(data_block_bytes, weight_bytes, scratch_bytes, interm_bytes):
    needed = (2 * data_block_bytes + 2 * weight_bytes + scratch_bytes
              + interm_bytes + (4 << 20))
    cap = 128 << 20
    try:
        cap = int(pltpu.get_tpu_info().vmem_capacity_bytes)
    except Exception:
        pass
    hi = max(32 << 20, (cap * 3) // 4)          # ~48 MiB on v7x, ~96 MiB on v5e/v6e
    return int(min(max(needed, 32 << 20), hi))


def ga_block_apply(R, t, x, z, mask, params, *, compute_dtype=jnp.float32):
    """One GABlock forward. compute_dtype=bf16 recommended on v6e/v7x; keep f32 on v5e."""
    N, L, F = x.shape
    C = z.shape[-1]
    H = params["wpb"].shape[1]
    Dqk = params["wq"].shape[1] // H
    Dv = params["wv"].shape[1] // H
    P = params["wqp"].shape[1] // (H * 3)
    Pv = params["wvp"].shape[1] // (H * 3)

    scale_attn = float(np.sqrt(1.0 / 3.0))
    scale_node = float(1.0 / np.sqrt(Dqk))

    # --- parameter packing / permutation / constant folding (zero-cost layout) ---
    perm_p = _plane_perm(H, P)
    perm_pv = _plane_perm(H, Pv)
    w_proj = jnp.concatenate(
        [params["wq"] * (scale_node * scale_attn),        # node scaling folded into wq
         params["wk"], params["wv"],
         params["wqp"][:, perm_p], params["wkp"][:, perm_p],
         params["wvp"][:, perm_pv]], axis=1)
    wpb = params["wpb"] * scale_attn                      # softmax scaling folded into wpb
    gcoef = params["gcoef"]                               # (1, H), softplus already applied
    # NOTE: if spatial_coef is trained, re-apply softplus here each forward.
    qg_scale = jnp.repeat(gcoef * (-2.0 * scale_attn), P, axis=1)     # (1, H*P)
    qn_scale = gcoef * scale_attn                                     # (1, H)
    ptscale = jnp.concatenate([qg_scale, qn_scale], axis=1).astype(jnp.float32)

    wo_p = params["wo"][_wo_row_perm(H, C, Dv, Pv), :]
    small = jnp.concatenate(
        [params["bo"], params["g1"], params["b1"], params["c1"],
         params["c2"], params["c3"], params["g2"], params["b2"]], axis=0)
    mlpw = jnp.stack([params["w1"], params["w2"], params["w3"]], axis=0)

    R9 = R.reshape(N, L, 9).astype(jnp.float32)
    xk, zk = x, z
    if compute_dtype != jnp.float32:
        # bf16 MXU operands + bf16 z/x for HBM/VMEM bandwidth (v6e/v7x);
        # softmax / LayerNorm / geometry stay in f32 inside the kernel.
        xk = x.astype(compute_dtype)
        zk = z.astype(compute_dtype)
        w_proj = w_proj.astype(compute_dtype)
        wo_p = wo_p.astype(compute_dtype)
        mlpw = mlpw.astype(compute_dtype)
        wpb = wpb.astype(compute_dtype)

    kernel, in_feat = _make_ga_block_kernel(H, Dqk, Dv, P, Pv, F, C, L,
                                            compute_dtype)

    data_specs = [
        pl.BlockSpec((1, L, 9), lambda n: (n, 0, 0)),        # R (flattened 3x3)
        pl.BlockSpec((1, L, 3), lambda n: (n, 0, 0)),        # t
        pl.BlockSpec((1, L, F), lambda n: (n, 0, 0)),        # x
        pl.BlockSpec((1, L, L, C), lambda n: (n, 0, 0, 0)),  # z
        pl.BlockSpec((1, L, 1), lambda n: (n, 0, 0)),        # mask
    ]
    wvals = [w_proj, wpb, ptscale, wo_p, small, mlpw]
    wspecs = [pl.BlockSpec(w.shape, lambda n, _nd=w.ndim: (0,) * _nd)
              for w in wvals]

    # --- VMEM budget from actual block / weight / scratch sizes ---
    data_blk = (4 * (L * 9 + L * 3 + L + L * F)           # R, t, mask, out (f32)
                + xk.dtype.itemsize * L * F
                + zk.dtype.itemsize * L * L * C)
    weight_bytes = sum(int(np.prod(w.shape)) * w.dtype.itemsize for w in wvals)
    scratch_bytes = 4 * L * in_feat
    interm_bytes = 4 * (L * L * (H + 4)
                        + L * (w_proj.shape[1] + 6 * H * P + 10 * H * Pv
                               + in_feat + 4 * F))
    vlim = _auto_vmem_limit(data_blk, weight_bytes, scratch_bytes, interm_bytes)

    return pl.pallas_call(
        kernel,
        out_shape=jax.ShapeDtypeStruct((N, L, F), jnp.float32),
        grid=(N,),
        in_specs=data_specs + wspecs,
        out_specs=pl.BlockSpec((1, L, F), lambda n: (n, 0, 0)),
        scratch_shapes=[pltpu.VMEM((L, in_feat), jnp.float32)],
        compiler_params=pltpu.CompilerParams(
            dimension_semantics=("parallel",),
            # TODO(synk): for L/C where the (L,L,C) z block no longer fits (v7x
            # 64 MiB VMEM), add a key-axis grid dimension with online softmax.
            vmem_limit_bytes=vlim),
    )(R9, t, xk, zk, mask, *wvals)


def ga_encoder_apply(R, t, x, z, mask, layer_params, **kw):
    for p in layer_params:
        x = ga_block_apply(R, t, x, z, mask, p, **kw)
    return x


def init_ga_block_params(key, F, C, H, Dqk, Dv, P, Pv):
    ks = iter(jax.random.split(key, 16))

    def lin_w(k, fin, fout):
        s = 1.0 / np.sqrt(fin)
        return jax.random.uniform(k, (fin, fout), jnp.float32, -s, s)

    def lin_b(k, fin, fout):
        s = 1.0 / np.sqrt(fin)
        return jax.random.uniform(k, (1, fout), jnp.float32, -s, s)

    in_feat = H * C + H * Dv + H * Pv * (3 + 3 + 1)
    # spatial_coef init = log(e - 1)  ->  softplus(coef) = 1; precompute the
    # scalar spatial coefficient (parameter-setup glue, no data dependence).
    coef = jnp.full((1, H), np.log(np.e - 1.0), jnp.float32)
    gamma = jnp.logaddexp(0.0, coef)
    gcoef = (-gamma * np.sqrt(2.0 / (9.0 * P)) / 2.0).astype(jnp.float32)

    return {
        "wq": lin_w(next(ks), F, H * Dqk),
        "wk": lin_w(next(ks), F, H * Dqk),
        "wv": lin_w(next(ks), F, H * Dv),
        "wpb": lin_w(next(ks), C, H),
        "gcoef": gcoef,
        "wqp": lin_w(next(ks), F, H * P * 3),
        "wkp": lin_w(next(ks), F, H * P * 3),
        "wvp": lin_w(next(ks), F, H * Pv * 3),
        "wo": lin_w(next(ks), in_feat, F),
        "bo": lin_b(next(ks), in_feat, F),
        "g1": jnp.ones((1, F), jnp.float32),
        "b1": jnp.zeros((1, F), jnp.float32),
        "w1": lin_w(next(ks), F, F),
        "c1": lin_b(next(ks), F, F),
        "w2": lin_w(next(ks), F, F),
        "c2": lin_b(next(ks), F, F),
        "w3": lin_w(next(ks), F, F),
        "c3": lin_b(next(ks), F, F),
        "g2": jnp.ones((1, F), jnp.float32),
        "b2": jnp.zeros((1, F), jnp.float32),
    }


if __name__ == "__main__":
    N, L = 2, 16
    F, C = 32, 8                           # node_feat_dim, pair_feat_dim
    H, Dqk, Dv, P, Pv = 4, 16, 16, 4, 4
    num_layers = 2

    root = jax.random.PRNGKey(0)
    kR, kt, kx, kz, km, kw = jax.random.split(root, 6)

    # Random orthonormal frames (keeps coordinate magnitudes sane).
    Rraw = jax.random.normal(kR, (N, L, 3, 3), jnp.float32)
    Rq, _ = jnp.linalg.qr(Rraw)
    R = Rq.astype(jnp.float32)
    t = jax.random.normal(kt, (N, L, 3), jnp.float32)
    x = jax.random.normal(kx, (N, L, F), jnp.float32)
    z = jax.random.normal(kz, (N, L, L, C), jnp.float32)
    mask = (jax.random.uniform(km, (N, L)) > 0.2).astype(jnp.float32)
    mask = mask.at[:, 0].set(1.0)          # at least one valid residue per batch
    mask3 = mask[:, :, None]               # (N, L, 1)

    layer_params = [init_ga_block_params(k, F, C, H, Dqk, Dv, P, Pv)
                    for k in jax.random.split(kw, num_layers)]

    out = ga_encoder_apply(R, t, x, z, mask3, layer_params)
    out = jax.block_until_ready(out)
    assert out.shape == (N, L, F)
    assert bool(jnp.all(jnp.isfinite(out)))
    print("KERNEL_OK")
</pallas_src>

<mosaic_0001>
module attributes {stable_mosaic.version = 11 : i64} {
  func.func @kernel(%arg0: i32, %arg1: memref<1x16x9xf32, #tpu.memory_space<vmem>>, %arg2: memref<1x16x3xf32, #tpu.memory_space<vmem>>, %arg3: memref<1x16x32xf32, #tpu.memory_space<vmem>>, %arg4: memref<1x16x16x8xf32, #tpu.memory_space<vmem>>, %arg5: memref<1x16x1xf32, #tpu.memory_space<vmem>>, %arg6: memref<32x336xf32, #tpu.memory_space<vmem>>, %arg7: memref<8x4xf32, #tpu.memory_space<vmem>>, %arg8: memref<1x20xf32, #tpu.memory_space<vmem>>, %arg9: memref<208x32xf32, #tpu.memory_space<vmem>>, %arg10: memref<8x32xf32, #tpu.memory_space<vmem>>, %arg11: memref<3x32x32xf32, #tpu.memory_space<vmem>>, %arg12: memref<1x16x32xf32, #tpu.memory_space<vmem>>, %arg13: memref<16x208xf32, #tpu.memory_space<vmem>>) attributes {dimension_semantics = [#tpu.dimension_semantics<parallel>], iteration_bounds = array<i64: 2>, scalar_prefetch = 0 : i64, scratch_operands = 1 : i64, tpu.core_type = #tpu.core_type<tc>, window_params = [{transform_indices = @transform_0, window_bounds = array<i64: 1, 16, 9>}, {transform_indices = @transform_1, window_bounds = array<i64: 1, 16, 3>}, {transform_indices = @transform_2, window_bounds = array<i64: 1, 16, 32>}, {transform_indices = @transform_3, window_bounds = array<i64: 1, 16, 16, 8>}, {transform_indices = @transform_4, window_bounds = array<i64: 1, 16, 1>}, {pipeline_mode = #tpu.pipeline_mode<synchronous>, transform_indices = @transform_5, window_bounds = array<i64: 32, 336>}, {pipeline_mode = #tpu.pipeline_mode<synchronous>, transform_indices = @transform_6, window_bounds = array<i64: 8, 4>}, {pipeline_mode = #tpu.pipeline_mode<synchronous>, transform_indices = @transform_7, window_bounds = array<i64: 1, 20>}, {pipeline_mode = #tpu.pipeline_mode<synchronous>, transform_indices = @transform_8, window_bounds = array<i64: 208, 32>}, {pipeline_mode = #tpu.pipeline_mode<synchronous>, transform_indices = @transform_9, window_bounds = array<i64: 8, 32>}, {pipeline_mode = #tpu.pipeline_mode<synchronous>, transform_indices = @transform_10, window_bounds = array<i64: 3, 32, 32>}, {transform_indices = @transform_11, window_bounds = array<i64: 1, 16, 32>}]} {
    %c0 = arith.constant 0 : index
    %c0_0 = arith.constant 0 : index
    %0 = vector.load %arg6[%c0, %c0_0] : memref<32x336xf32, #tpu.memory_space<vmem>>, vector<32x336xf32>
    %c0_1 = arith.constant 0 : index
    %c0_2 = arith.constant 0 : index
    %1 = vector.load %arg7[%c0_1, %c0_2] : memref<8x4xf32, #tpu.memory_space<vmem>>, vector<8x4xf32>
    %c0_3 = arith.constant 0 : index
    %c0_4 = arith.constant 0 : index
    %2 = vector.load %arg8[%c0_3, %c0_4] : memref<1x20xf32, #tpu.memory_space<vmem>>, vector<1x20xf32>
    %c0_5 = arith.constant 0 : index
    %c0_6 = arith.constant 0 : index
    %3 = vector.load %arg9[%c0_5, %c0_6] : memref<208x32xf32, #tpu.memory_space<vmem>>, vector<208x32xf32>
    %c0_7 = arith.constant 0 : index
    %c0_8 = arith.constant 0 : index
    %4 = vector.load %arg10[%c0_7, %c0_8] : memref<8x32xf32, #tpu.memory_space<vmem>>, vector<8x32xf32>
    %c0_9 = arith.constant 0 : index
    %c0_10 = arith.constant 0 : index
    %c0_11 = arith.constant 0 : index
    %5 = vector.load %arg11[%c0_9, %c0_10, %c0_11] : memref<3x32x32xf32, #tpu.memory_space<vmem>>, vector<1x32x32xf32>
    %6 = vector.shape_cast %5 : vector<1x32x32xf32> to vector<32x32xf32>
    %c1 = arith.constant 1 : index
    %c0_12 = arith.constant 0 : index
    %c0_13 = arith.constant 0 : index
    %7 = vector.load %arg11[%c1, %c0_12, %c0_13] : memref<3x32x32xf32, #tpu.memory_space<vmem>>, vector<1x32x32xf32>
    %8 = vector.shape_cast %7 : vector<1x32x32xf32> to vector<32x32xf32>
    %c2 = arith.constant 2 : index
    %c0_14 = arith.constant 0 : index
    %c0_15 = arith.constant 0 : index
    %9 = vector.load %arg11[%c2, %c0_14, %c0_15] : memref<3x32x32xf32, #tpu.memory_space<vmem>>, vector<1x32x32xf32>
    %10 = vector.shape_cast %9 : vector<1x32x32xf32> to vector<32x32xf32>
    %11 = vector.extract_strided_slice %4 {offsets = [0, 0], sizes = [1, 32], strides = [1, 1]} : vector<8x32xf32> to vector<1x32xf32>
    %12 = vector.extract_strided_slice %4 {offsets = [1, 0], sizes = [1, 32], strides = [1, 1]} : vector<8x32xf32> to vector<1x32xf32>
    %13 = vector.extract_strided_slice %4 {offsets = [2, 0], sizes = [1, 32], strides = [1, 1]} : vector<8x32xf32> to vector<1x32xf32>
    %14 = vector.extract_strided_slice %4 {offsets = [3, 0], sizes = [1, 32], strides = [1, 1]} : vector<8x32xf32> to vector<1x32xf32>
    %15 = vector.extract_strided_slice %4 {offsets = [4, 0], sizes = [1, 32], strides = [1, 1]} : vector<8x32xf32> to vector<1x32xf32>
    %16 = vector.extract_strided_slice %4 {offsets = [5, 0], sizes = [1, 32], strides = [1, 1]} : vector<8x32xf32> to vector<1x32xf32>
    %17 = vector.extract_strided_slice %4 {offsets = [6, 0], sizes = [1, 32], strides = [1, 1]} : vector<8x32xf32> to vector<1x32xf32>
    %18 = vector.extract_strided_slice %4 {offsets = [7, 0], sizes = [1, 32], strides = [1, 1]} : vector<8x32xf32> to vector<1x32xf32>
    %19 = vector.extract_strided_slice %2 {offsets = [0, 0], sizes = [1, 16], strides = [1, 1]} : vector<1x20xf32> to vector<1x16xf32>
    %20 = vector.extract_strided_slice %2 {offsets = [0, 16], sizes = [1, 4], strides = [1, 1]} : vector<1x20xf32> to vector<1x4xf32>
    %c0_16 = arith.constant 0 : index
    %c0_17 = arith.constant 0 : index
    %c0_18 = arith.constant 0 : index
    %21 = vector.load %arg1[%c0_16, %c0_17, %c0_18] : memref<1x16x9xf32, #tpu.memory_space<vmem>>, vector<1x16x9xf32>
    %22 = vector.shape_cast %21 : vector<1x16x9xf32> to vector<16x9xf32>
    %c0_19 = arith.constant 0 : index
    %c0_20 = arith.constant 0 : index
    %c0_21 = arith.constant 0 : index
    %23 = vector.load %arg2[%c0_19, %c0_20, %c0_21] : memref<1x16x3xf32, #tpu.memory_space<vmem>>, vector<1x16x3xf32>
    %24 = vector.shape_cast %23 : vector<1x16x3xf32> to vector<16x3xf32>
    %c0_22 = arith.constant 0 : index
    %c0_23 = arith.constant 0 : index
    %c0_24 = arith.constant 0 : index
    %25 = vector.load %arg3[%c0_22, %c0_23, %c0_24] : memref<1x16x32xf32, #tpu.memory_space<vmem>>, vector<1x16x32xf32>
    %26 = vector.shape_cast %25 : vector<1x16x32xf32> to vector<16x32xf32>
    %c0_25 = arith.constant 0 : index
    %c0_26 = arith.constant 0 : index
    %c0_27 = arith.constant 0 : index
    %c0_28 = arith.constant 0 : index
    %27 = vector.load %arg4[%c0_25, %c0_26, %c0_27, %c0_28] : memref<1x16x16x8xf32, #tpu.memory_space<vmem>>, vector<1x16x16x8xf32>
    %28 = vector.shape_cast %27 : vector<1x16x16x8xf32> to vector<16x16x8xf32>
    %c0_29 = arith.constant 0 : index
    %c0_30 = arith.constant 0 : index
    %c0_31 = arith.constant 0 : index
    %29 = vector.load %arg5[%c0_29, %c0_30, %c0_31] : memref<1x16x1xf32, #tpu.memory_space<vmem>>, vector<1x16x1xf32>
    %30 = vector.shape_cast %29 : vector<1x16x1xf32> to vector<16x1xf32>
    %31 = vector.extract_strided_slice %24 {offsets = [0, 0], sizes = [16, 1], strides = [1, 1]} : vector<16x3xf32> to vector<16x1xf32>
    %32 = vector.extract_strided_slice %24 {offsets = [0, 1], sizes = [16, 1], strides = [1, 1]} : vector<16x3xf32> to vector<16x1xf32>
    %33 = vector.extract_strided_slice %24 {offsets = [0, 2], sizes = [16, 1], strides = [1, 1]} : vector<16x3xf32> to vector<16x1xf32>
    %cst = arith.constant dense<0.000000e+00> : vector<16x336xf32>
    %34 = tpu.matmul %26, %0, %cst {dimension_numbers = #tpu.dot_dimension_numbers<[1], [0], [0], [1], [0, 0, 1, 1], [], []>} : vector<16x32xf32>, vector<32x336xf32>, vector<16x336xf32> -> vector<16x336xf32>
    %35 = vector.extract_strided_slice %34 {offsets = [0, 0], sizes = [16, 64], strides = [1, 1]} : vector<16x336xf32> to vector<16x64xf32>
    %36 = vector.extract_strided_slice %34 {offsets = [0, 64], sizes = [16, 64], strides = [1, 1]} : vector<16x336xf32> to vector<16x64xf32>
    %37 = vector.extract_strided_slice %34 {offsets = [0, 128], sizes = [16, 64], strides = [1, 1]} : vector<16x336xf32> to vector<16x64xf32>
    %38 = vector.extract_strided_slice %34 {offsets = [0, 192], sizes = [16, 48], strides = [1, 1]} : vector<16x336xf32> to vector<16x48xf32>
    %39 = vector.extract_strided_slice %34 {offsets = [0, 240], sizes = [16, 48], strides = [1, 1]} : vector<16x336xf32> to vector<16x48xf32>
    %40 = vector.extract_strided_slice %34 {offsets = [0, 288], sizes = [16, 48], strides = [1, 1]} : vector<16x336xf32> to vector<16x48xf32>
    %41 = vector.extract_strided_slice %38 {offsets = [0, 0], sizes = [16, 16], strides = [1, 1]} : vector<16x48xf32> to vector<16x16xf32>
    %42 = vector.extract_strided_slice %38 {offsets = [0, 16], sizes = [16, 16], strides = [1, 1]} : vector<16x48xf32> to vector<16x16xf32>
    %43 = vector.extract_strided_slice %38 {offsets = [0, 32], sizes = [16, 16], strides = [1, 1]} : vector<16x48xf32> to vector<16x16xf32>
    %44 = vector.extract_strided_slice %22 {offsets = [0, 0], sizes = [16, 1], strides = [1, 1]} : vector<16x9xf32> to vector<16x1xf32>
    %45 = vector.broadcast %44 : vector<16x1xf32> to vector<16x16xf32>
    %46 = arith.mulf %45, %41 : vector<16x16xf32>
    %47 = vector.extract_strided_slice %22 {offsets = [0, 1], sizes = [16, 1], strides = [1, 1]} : vector<16x9xf32> to vector<16x1xf32>
    %48 = vector.broadcast %47 : vector<16x1xf32> to vector<16x16xf32>
    %49 = arith.mulf %48, %42 : vector<16x16xf32>
    %50 = arith.addf %46, %49 : vector<16x16xf32>
    %51 = vector.extract_strided_slice %22 {offsets = [0, 2], sizes = [16, 1], strides = [1, 1]} : vector<16x9xf32> to vector<16x1xf32>
    %52 = vector.broadcast %51 : vector<16x1xf32> to vector<16x16xf32>
    %53 = arith.mulf %52, %43 : vector<16x16xf32>
    %54 = arith.addf %50, %53 : vector<16x16xf32>
    %55 = vector.broadcast %31 : vector<16x1xf32> to vector<16x16xf32>
    %56 = arith.addf %54, %55 : vector<16x16xf32>
    %57 = vector.extract_strided_slice %22 {offsets = [0, 3], sizes = [16, 1], strides = [1, 1]} : vector<16x9xf32> to vector<16x1xf32>
    %58 = vector.broadcast %57 : vector<16x1xf32> to vector<16x16xf32>
    %59 = arith.mulf %58, %41 : vector<16x16xf32>
    %60 = vector.extract_strided_slice %22 {offsets = [0, 4], sizes = [16, 1], strides = [1, 1]} : vector<16x9xf32> to vector<16x1xf32>
    %61 = vector.broadcast %60 : vector<16x1xf32> to vector<16x16xf32>
    %62 = arith.mulf %61, %42 : vector<16x16xf32>
    %63 = arith.addf %59, %62 : vector<16x16xf32>
    %64 = vector.extract_strided_slice %22 {offsets = [0, 5], sizes = [16, 1], strides = [1, 1]} : vector<16x9xf32> to vector<16x1xf32>
    %65 = vector.broadcast %64 : vector<16x1xf32> to vector<16x16xf32>
    %66 = arith.mulf %65, %43 : vector<16x16xf32>
    %67 = arith.addf %63, %66 : vector<16x16xf32>
    %68 = vector.broadcast %32 : vector<16x1xf32> to vector<16x16xf32>
    %69 = arith.addf %67, %68 : vector<16x16xf32>
    %70 = vector.extract_strided_slice %22 {offsets = [0, 6], sizes = [16, 1], strides = [1, 1]} : vector<16x9xf32> to vector<16x1xf32>
    %71 = vector.broadcast %70 : vector<16x1xf32> to vector<16x16xf32>
    %72 = arith.mulf %71, %41 : vector<16x16xf32>
    %73 = vector.extract_strided_slice %22 {offsets = [0, 7], sizes = [16, 1], strides = [1, 1]} : vector<16x9xf32> to vector<16x1xf32>
    %74 = vector.broadcast %73 : vector<16x1xf32> to vector<16x16xf32>
    %75 = arith.mulf %74, %42 : vector<16x16xf32>
    %76 = arith.addf %72, %75 : vector<16x16xf32>
    %77 = vector.extract_strided_slice %22 {offsets = [0, 8], sizes = [16, 1], strides = [1, 1]} : vector<16x9xf32> to vector<16x1xf32>
    %78 = vector.broadcast %77 : vector<16x1xf32> to vector<16x16xf32>
    %79 = arith.mulf %78, %43 : vector<16x16xf32>
    %80 = arith.addf %76, %79 : vector<16x16xf32>
    %81 = vector.broadcast %33 : vector<16x1xf32> to vector<16x16xf32>
    %82 = arith.addf %80, %81 : vector<16x16xf32>
    %83 = vector.extract_strided_slice %39 {offsets = [0, 0], sizes = [16, 16], strides = [1, 1]} : vector<16x48xf32> to vector<16x16xf32>
    %84 = vector.extract_strided_slice %39 {offsets = [0, 16], sizes = [16, 16], strides = [1, 1]} : vector<16x48xf32> to vector<16x16xf32>
    %85 = vector.extract_strided_slice %39 {offsets = [0, 32], sizes = [16, 16], strides = [1, 1]} : vector<16x48xf32> to vector<16x16xf32>
    %86 = vector.extract_strided_slice %22 {offsets = [0, 0], sizes = [16, 1], strides = [1, 1]} : vector<16x9xf32> to vector<16x1xf32>
    %87 = vector.broadcast %86 : vector<16x1xf32> to vector<16x16xf32>
    %88 = arith.mulf %87, %83 : vector<16x16xf32>
    %89 = vector.extract_strided_slice %22 {offsets = [0, 1], sizes = [16, 1], strides = [1, 1]} : vector<16x9xf32> to vector<16x1xf32>
    %90 = vector.broadcast %89 : vector<16x1xf32> to vector<16x16xf32>
    %91 = arith.mulf %90, %84 : vector<16x16xf32>
    %92 = arith.addf %88, %91 : vector<16x16xf32>
    %93 = vector.extract_strided_slice %22 {offsets = [0, 2], sizes = [16, 1], strides = [1, 1]} : vector<16x9xf32> to vector<16x1xf32>
    %94 = vector.broadcast %93 : vector<16x1xf32> to vector<16x16xf32>
    %95 = arith.mulf %94, %85 : vector<16x16xf32>
    %96 = arith.addf %92, %95 : vector<16x16xf32>
    %97 = vector.broadcast %31 : vector<16x1xf32> to vector<16x16xf32>
    %98 = arith.addf %96, %97 : vector<16x16xf32>
    %99 = vector.extract_strided_slice %22 {offsets = [0, 3], sizes = [16, 1], strides = [1, 1]} : vector<16x9xf32> to vector<16x1xf32>
    %100 = vector.broadcast %99 : vector<16x1xf32> to vector<16x16xf32>
    %101 = arith.mulf %100, %83 : vector<16x16xf32>
    %102 = vector.extract_strided_slice %22 {offsets = [0, 4], sizes = [16, 1], strides = [1, 1]} : vector<16x9xf32> to vector<16x1xf32>
    %103 = vector.broadcast %102 : vector<16x1xf32> to vector<16x16xf32>
    %104 = arith.mulf %103, %84 : vector<16x16xf32>
    %105 = arith.addf %101, %104 : vector<16x16xf32>
    %106 = vector.extract_strided_slice %22 {offsets = [0, 5], sizes = [16, 1], strides = [1, 1]} : vector<16x9xf32> to vector<16x1xf32>
    %107 = vector.broadcast %106 : vector<16x1xf32> to vector<16x16xf32>
    %108 = arith.mulf %107, %85 : vector<16x16xf32>
    %109 = arith.addf %105, %108 : vector<16x16xf32>
    %110 = vector.broadcast %32 : vector<16x1xf32> to vector<16x16xf32>
    %111 = arith.addf %109, %110 : vector<16x16xf32>
    %112 = vector.extract_strided_slice %22 {offsets = [0, 6], sizes = [16, 1], strides = [1, 1]} : vector<16x9xf32> to vector<16x1xf32>
    %113 = vector.broadcast %112 : vector<16x1xf32> to vector<16x16xf32>
    %114 = arith.mulf %113, %83 : vector<16x16xf32>
    %115 = vector.extract_strided_slice %22 {offsets = [0, 7], sizes = [16, 1], strides = [1, 1]} : vector<16x9xf32> to vector<16x1xf32>
    %116 = vector.broadcast %115 : vector<16x1xf32> to vector<16x16xf32>
    %117 = arith.mulf %116, %84 : vector<16x16xf32>
    %118 = arith.addf %114, %117 : vector<16x16xf32>
    %119 = vector.extract_strided_slice %22 {offsets = [0, 8], sizes = [16, 1], strides = [1, 1]} : vector<16x9xf32> to vector<16x1xf32>
    %120 = vector.broadcast %119 : vector<16x1xf32> to vector<16x16xf32>
    %121 = arith.mulf %120, %85 : vector<16x16xf32>
    %122 = arith.addf %118, %121 : vector<16x16xf32>
    %123 = vector.broadcast %33 : vector<16x1xf32> to vector<16x16xf32>
    %124 = arith.addf %122, %123 : vector<16x16xf32>
    %125 = vector.extract_strided_slice %40 {offsets = [0, 0], sizes = [16, 16], strides = [1, 1]} : vector<16x48xf32> to vector<16x16xf32>
    %126 = vector.extract_strided_slice %40 {offsets = [0, 16], sizes = [16, 16], strides = [1, 1]} : vector<16x48xf32> to vector<16x16xf32>
    %127 = vector.extract_strided_slice %40 {offsets = [0, 32], sizes = [16, 16], strides = [1, 1]} : vector<16x48xf32> to vector<16x16xf32>
    %128 = vector.extract_strided_slice %22 {offsets = [0, 0], sizes = [16, 1], strides = [1, 1]} : vector<16x9xf32> to vector<16x1xf32>
    %129 = vector.broadcast %128 : vector<16x1xf32> to vector<16x16xf32>
    %130 = arith.mulf %129, %125 : vector<16x16xf32>
    %131 = vector.extract_strided_slice %22 {offsets = [0, 1], sizes = [16, 1], strides = [1, 1]} : vector<16x9xf32> to vector<16x1xf32>
    %132 = vector.broadcast %131 : vector<16x1xf32> to vector<16x16xf32>
    %133 = arith.mulf %132, %126 : vector<16x16xf32>
    %134 = arith.addf %130, %133 : vector<16x16xf32>
    %135 = vector.extract_strided_slice %22 {offsets = [0, 2], sizes = [16, 1], strides = [1, 1]} : vector<16x9xf32> to vector<16x1xf32>
    %136 = vector.broadcast %135 : vector<16x1xf32> to vector<16x16xf32>
    %137 = arith.mulf %136, %127 : vector<16x16xf32>
    %138 = arith.addf %134, %137 : vector<16x16xf32>
    %139 = vector.broadcast %31 : vector<16x1xf32> to vector<16x16xf32>
    %140 = arith.addf %138, %139 : vector<16x16xf32>
    %141 = vector.extract_strided_slice %22 {offsets = [0, 3], sizes = [16, 1], strides = [1, 1]} : vector<16x9xf32> to vector<16x1xf32>
    %142 = vector.broadcast %141 : vector<16x1xf32> to vector<16x16xf32>
    %143 = arith.mulf %142, %125 : vector<16x16xf32>
    %144 = vector.extract_strided_slice %22 {offsets = [0, 4], sizes = [16, 1], strides = [1, 1]} : vector<16x9xf32> to vector<16x1xf32>
    %145 = vector.broadcast %144 : vector<16x1xf32> to vector<16x16xf32>
    %146 = arith.mulf %145, %126 : vector<16x16xf32>
    %147 = arith.addf %143, %146 : vector<16x16xf32>
    %148 = vector.extract_strided_slice %22 {offsets = [0, 5], sizes = [16, 1], strides = [1, 1]} : vector<16x9xf32> to vector<16x1xf32>
    %149 = vector.broadcast %148 : vector<16x1xf32> to vector<16x16xf32>
    %150 = arith.mulf %149, %127 : vector<16x16xf32>
    %151 = arith.addf %147, %150 : vector<16x16xf32>
    %152 = vector.broadcast %32 : vector<16x1xf32> to vector<16x16xf32>
    %153 = arith.addf %151, %152 : vector<16x16xf32>
    %154 = vector.extract_strided_slice %22 {offsets = [0, 6], sizes = [16, 1], strides = [1, 1]} : vector<16x9xf32> to vector<16x1xf32>
    %155 = vector.broadcast %154 : vector<16x1xf32> to vector<16x16xf32>
    %156 = arith.mulf %155, %125 : vector<16x16xf32>
    %157 = vector.extract_strided_slice %22 {offsets = [0, 7], sizes = [16, 1], strides = [1, 1]} : vector<16x9xf32> to vector<16x1xf32>
    %158 = vector.broadcast %157 : vector<16x1xf32> to vector<16x16xf32>
    %159 = arith.mulf %158, %126 : vector<16x16xf32>
    %160 = arith.addf %156, %159 : vector<16x16xf32>
    %161 = vector.extract_strided_slice %22 {offsets = [0, 8], sizes = [16, 1], strides = [1, 1]} : vector<16x9xf32> to vector<16x1xf32>
    %162 = vector.broadcast %161 : vector<16x1xf32> to vector<16x16xf32>
    %163 = arith.mulf %162, %127 : vector<16x16xf32>
    %164 = arith.addf %160, %163 : vector<16x16xf32>
    %165 = vector.broadcast %33 : vector<16x1xf32> to vector<16x16xf32>
    %166 = arith.addf %164, %165 : vector<16x16xf32>
    %167 = arith.mulf %56, %56 : vector<16x16xf32>
    %168 = arith.mulf %69, %69 : vector<16x16xf32>
    %169 = arith.addf %167, %168 : vector<16x16xf32>
    %170 = arith.mulf %82, %82 : vector<16x16xf32>
    %171 = arith.addf %169, %170 : vector<16x16xf32>
    %172 = arith.mulf %98, %98 : vector<16x16xf32>
    %173 = arith.mulf %111, %111 : vector<16x16xf32>
    %174 = arith.addf %172, %173 : vector<16x16xf32>
    %175 = arith.mulf %124, %124 : vector<16x16xf32>
    %176 = arith.addf %174, %175 : vector<16x16xf32>
    %177 = vector.broadcast %19 : vector<1x16xf32> to vector<16x16xf32>
    %178 = arith.mulf %56, %177 : vector<16x16xf32>
    %179 = vector.broadcast %19 : vector<1x16xf32> to vector<16x16xf32>
    %180 = arith.mulf %69, %179 : vector<16x16xf32>
    %181 = vector.broadcast %19 : vector<1x16xf32> to vector<16x16xf32>
    %182 = arith.mulf %82, %181 : vector<16x16xf32>
    %183 = vector.shape_cast %28 : vector<16x16x8xf32> to vector<256x8xf32>
    %cst_32 = arith.constant dense<0.000000e+00> : vector<256x4xf32>
    %184 = tpu.matmul %183, %1, %cst_32 {dimension_numbers = #tpu.dot_dimension_numbers<[1], [0], [0], [1], [0, 0, 1, 1], [], []>} : vector<256x8xf32>, vector<8x4xf32>, vector<256x4xf32> -> vector<256x4xf32>
    %185 = vector.shape_cast %184 : vector<256x4xf32> to vector<16x16x4xf32>
    %186 = tpu.transpose %30, [1, 0] : vector<16x1xf32> -> vector<1x16xf32>
    %187 = vector.broadcast %30 : vector<16x1xf32> to vector<16x16xf32>
    %188 = vector.broadcast %186 : vector<1x16xf32> to vector<16x16xf32>
    %189 = arith.mulf %187, %188 : vector<16x16xf32>
    %cst_33 = arith.constant 5.000000e-01 : f32
    %190 = vector.broadcast %cst_33 : f32 to vector<16x16xf32>
    %191 = arith.cmpf ogt, %189, %190 : vector<16x16xf32>
    %cst_34 = arith.constant 5.000000e-01 : f32
    %192 = vector.broadcast %cst_34 : f32 to vector<16x1xf32>
    %193 = arith.cmpf ogt, %30, %192 : vector<16x1xf32>
    %cst_35 = arith.constant 1.000000e+00 : f32
    %194 = vector.broadcast %cst_35 : f32 to vector<16x1xf32>
    %195 = vector.extract_strided_slice %171 {offsets = [0, 0], sizes = [16, 4], strides = [1, 1]} : vector<16x16xf32> to vector<16x4xf32>
    %cst_36 = arith.constant dense<0.000000e+00> : vector<16xf32>
    %196 = vector.multi_reduction <add>, %195, %cst_36 [1] : vector<16x4xf32> to vector<16xf32>
    %197 = vector.shape_cast %196 : vector<16xf32> to vector<16x1xf32>
    %198 = vector.extract_strided_slice %20 {offsets = [0, 0], sizes = [1, 1], strides = [1, 1]} : vector<1x4xf32> to vector<1x1xf32>
    %199 = vector.broadcast %198 : vector<1x1xf32> to vector<16x1xf32>
    %200 = arith.mulf %197, %199 : vector<16x1xf32>
    %201 = vector.extract_strided_slice %176 {offsets = [0, 0], sizes = [16, 4], strides = [1, 1]} : vector<16x16xf32> to vector<16x4xf32>
    %cst_37 = arith.constant dense<0.000000e+00> : vector<16xf32>
    %202 = vector.multi_reduction <add>, %201, %cst_37 [1] : vector<16x4xf32> to vector<16xf32>
    %203 = vector.shape_cast %202 : vector<16xf32> to vector<16x1xf32>
    %204 = vector.extract_strided_slice %20 {offsets = [0, 0], sizes = [1, 1], strides = [1, 1]} : vector<1x4xf32> to vector<1x1xf32>
    %205 = vector.broadcast %204 : vector<1x1xf32> to vector<16x1xf32>
    %206 = arith.mulf %203, %205 : vector<16x1xf32>
    %207 = vector.extract_strided_slice %35 {offsets = [0, 0], sizes = [16, 16], strides = [1, 1]} : vector<16x64xf32> to vector<16x16xf32>
    %208 = vector.extract_strided_slice %178 {offsets = [0, 0], sizes = [16, 4], strides = [1, 1]} : vector<16x16xf32> to vector<16x4xf32>
    %209 = vector.extract_strided_slice %180 {offsets = [0, 0], sizes = [16, 4], strides = [1, 1]} : vector<16x16xf32> to vector<16x4xf32>
    %210 = vector.extract_strided_slice %182 {offsets = [0, 0], sizes = [16, 4], strides = [1, 1]} : vector<16x16xf32> to vector<16x4xf32>
    %211 = tpu.concatenate %207, %208, %209, %210, %200, %194 in 1 : vector<16x16xf32>, vector<16x4xf32>, vector<16x4xf32>, vector<16x4xf32>, vector<16x1xf32>, vector<16x1xf32> -> vector<16x30xf32>
    %212 = vector.extract_strided_slice %36 {offsets = [0, 0], sizes = [16, 16], strides = [1, 1]} : vector<16x64xf32> to vector<16x16xf32>
    %213 = vector.extract_strided_slice %98 {offsets = [0, 0], sizes = [16, 4], strides = [1, 1]} : vector<16x16xf32> to vector<16x4xf32>
    %214 = vector.extract_strided_slice %111 {offsets = [0, 0], sizes = [16, 4], strides = [1, 1]} : vector<16x16xf32> to vector<16x4xf32>
    %215 = vector.extract_strided_slice %124 {offsets = [0, 0], sizes = [16, 4], strides = [1, 1]} : vector<16x16xf32> to vector<16x4xf32>
    %216 = tpu.concatenate %212, %213, %214, %215, %194, %206 in 1 : vector<16x16xf32>, vector<16x4xf32>, vector<16x4xf32>, vector<16x4xf32>, vector<16x1xf32>, vector<16x1xf32> -> vector<16x30xf32>
    %cst_38 = arith.constant dense<0.000000e+00> : vector<16x16xf32>
    %217 = tpu.matmul %211, %216, %cst_38 {dimension_numbers = #tpu.dot_dimension_numbers<[1], [1], [0], [0], [0, 0, 1, 0], [], []>} : vector<16x30xf32>, vector<16x30xf32>, vector<16x16xf32> -> vector<16x16xf32>
    %218 = vector.extract_strided_slice %185 {offsets = [0, 0, 0], sizes = [16, 16, 1], strides = [1, 1, 1]} : vector<16x16x4xf32> to vector<16x16x1xf32>
    %cst_39 = arith.constant dense<0.000000e+00> : vector<16x16xf32>
    %219 = vector.multi_reduction <add>, %218, %cst_39 [2] : vector<16x16x1xf32> to vector<16x16xf32>
    %220 = arith.addf %217, %219 : vector<16x16xf32>
    %cst_40 = arith.constant 1.000000e+05 : f32
    %221 = vector.broadcast %cst_40 : f32 to vector<16x16xf32>
    %222 = arith.subf %220, %221 : vector<16x16xf32>
    %223 = arith.select %191, %220, %222 : vector<16x16xi1>, vector<16x16xf32>
    %cst_41 = arith.constant dense<0xFF800000> : vector<16xf32>
    %224 = vector.multi_reduction <maximumf>, %223, %cst_41 [1] : vector<16x16xf32> to vector<16xf32>
    %225 = vector.shape_cast %224 : vector<16xf32> to vector<16x1xf32>
    %226 = vector.broadcast %225 : vector<16x1xf32> to vector<16x16xf32>
    %227 = arith.subf %223, %226 : vector<16x16xf32>
    %228 = math.exp %227 : vector<16x16xf32>
    %cst_42 = arith.constant dense<0.000000e+00> : vector<16xf32>
    %229 = vector.multi_reduction <add>, %228, %cst_42 [1] : vector<16x16xf32> to vector<16xf32>
    %230 = vector.shape_cast %229 : vector<16xf32> to vector<16x1xf32>
    %231 = tpu.reciprocal %230 {approx = true} : vector<16x1xf32> -> vector<16x1xf32>
    %232 = vector.broadcast %231 : vector<16x1xf32> to vector<16x16xf32>
    %233 = arith.mulf %228, %232 : vector<16x16xf32>
    %cst_43 = arith.constant 0.000000e+00 : f32
    %234 = vector.shape_cast %193 : vector<16x1xi1> to vector<16x1xi1>
    %235 = vector.broadcast %234 : vector<16x1xi1> to vector<16x16xi1>
    %236 = vector.broadcast %cst_43 : f32 to vector<16x16xf32>
    %237 = arith.select %235, %233, %236 : vector<16x16xi1>, vector<16x16xf32>
    %238 = vector.shape_cast %237 : vector<16x16xf32> to vector<16x16x1xf32>
    %239 = vector.broadcast %238 : vector<16x16x1xf32> to vector<16x16x8xf32>
    %240 = arith.mulf %239, %28 : vector<16x16x8xf32>
    %cst_44 = arith.constant dense<0.000000e+00> : vector<16x8xf32>
    %241 = vector.multi_reduction <add>, %240, %cst_44 [1] : vector<16x16x8xf32> to vector<16x8xf32>
    %c0_45 = arith.constant 0 : index
    %c0_46 = arith.constant 0 : index
    %242 = vector.load %arg13[%c0_45, %c0_46] : memref<16x208xf32, #tpu.memory_space<vmem>>, vector<16x8xf32>
    tpu.vector_store %arg13[%c0_45, %c0_46], %241 {strides = array<i32>} : memref<16x208xf32, #tpu.memory_space<vmem>>, vector<16x8xf32>,
    %243 = vector.extract_strided_slice %37 {offsets = [0, 0], sizes = [16, 16], strides = [1, 1]} : vector<16x64xf32> to vector<16x16xf32>
    %244 = vector.extract_strided_slice %140 {offsets = [0, 0], sizes = [16, 4], strides = [1, 1]} : vector<16x16xf32> to vector<16x4xf32>
    %245 = vector.extract_strided_slice %153 {offsets = [0, 0], sizes = [16, 4], strides = [1, 1]} : vector<16x16xf32> to vector<16x4xf32>
    %246 = vector.extract_strided_slice %166 {offsets = [0, 0], sizes = [16, 4], strides = [1, 1]} : vector<16x16xf32> to vector<16x4xf32>
    %247 = tpu.concatenate %243, %244, %245, %246 in 1 : vector<16x16xf32>, vector<16x4xf32>, vector<16x4xf32>, vector<16x4xf32> -> vector<16x28xf32>
    %cst_47 = arith.constant dense<0.000000e+00> : vector<16x28xf32>
    %248 = tpu.matmul %237, %247, %cst_47 {dimension_numbers = #tpu.dot_dimension_numbers<[1], [0], [0], [1], [0, 0, 1, 1], [], []>} : vector<16x16xf32>, vector<16x28xf32>, vector<16x28xf32> -> vector<16x28xf32>
    %249 = vector.extract_strided_slice %248 {offsets = [0, 0], sizes = [16, 16], strides = [1, 1]} : vector<16x28xf32> to vector<16x16xf32>
    %c0_48 = arith.constant 0 : index
    %c32 = arith.constant 32 : index
    %250 = vector.load %arg13[%c0_48, %c32] : memref<16x208xf32, #tpu.memory_space<vmem>>, vector<16x16xf32>
    tpu.vector_store %arg13[%c0_48, %c32], %249 {strides = array<i32>} : memref<16x208xf32, #tpu.memory_space<vmem>>, vector<16x16xf32>,
    %251 = vector.extract_strided_slice %248 {offsets = [0, 16], sizes = [16, 4], strides = [1, 1]} : vector<16x28xf32> to vector<16x4xf32>
    %c0_49 = arith.constant 0 : index
    %c96 = arith.constant 96 : index
    %252 = vector.load %arg13[%c0_49, %c96] : memref<16x208xf32, #tpu.memory_space<vmem>>, vector<16x4xf32>
    tpu.vector_store %arg13[%c0_49, %c96], %251 {strides = array<i32>} : memref<16x208xf32, #tpu.memory_space<vmem>>, vector<16x4xf32>,
    %253 = vector.extract_strided_slice %248 {offsets = [0, 20], sizes = [16, 4], strides = [1, 1]} : vector<16x28xf32> to vector<16x4xf32>
    %c0_50 = arith.constant 0 : index
    %c112 = arith.constant 112 : index
    %254 = vector.load %arg13[%c0_50, %c112] : memref<16x208xf32, #tpu.memory_space<vmem>>, vector<16x4xf32>
    tpu.vector_store %arg13[%c0_50, %c112], %253 {strides = array<i32>} : memref<16x208xf32, #tpu.memory_space<vmem>>, vector<16x4xf32>,
    %255 = vector.extract_strided_slice %248 {offsets = [0, 24], sizes = [16, 4], strides = [1, 1]} : vector<16x28xf32> to vector<16x4xf32>
    %c0_51 = arith.constant 0 : index
    %c128 = arith.constant 128 : index
    %256 = vector.load %arg13[%c0_51, %c128] : memref<16x208xf32, #tpu.memory_space<vmem>>, vector<16x4xf32>
    tpu.vector_store %arg13[%c0_51, %c128], %255 {strides = array<i32>} : memref<16x208xf32, #tpu.memory_space<vmem>>, vector<16x4xf32>,
    %257 = vector.extract_strided_slice %171 {offsets = [0, 4], sizes = [16, 4], strides = [1, 1]} : vector<16x16xf32> to vector<16x4xf32>
    %cst_52 = arith.constant dense<0.000000e+00> : vector<16xf32>
    %258 = vector.multi_reduction <add>, %257, %cst_52 [1] : vector<16x4xf32> to vector<16xf32>
    %259 = vector.shape_cast %258 : vector<16xf32> to vector<16x1xf32>
    %260 = vector.extract_strided_slice %20 {offsets = [0, 1], sizes = [1, 1], strides = [1, 1]} : vector<1x4xf32> to vector<1x1xf32>
    %261 = vector.broadcast %260 : vector<1x1xf32> to vector<16x1xf32>
    %262 = arith.mulf %259, %261 : vector<16x1xf32>
    %263 = vector.extract_strided_slice %176 {offsets = [0, 4], sizes = [16, 4], strides = [1, 1]} : vector<16x16xf32> to vector<16x4xf32>
    %cst_53 = arith.constant dense<0.000000e+00> : vector<16xf32>
    %264 = vector.multi_reduction <add>, %263, %cst_53 [1] : vector<16x4xf32> to vector<16xf32>
    %265 = vector.shape_cast %264 : vector<16xf32> to vector<16x1xf32>
    %266 = vector.extract_strided_slice %20 {offsets = [0, 1], sizes = [1, 1], strides = [1, 1]} : vector<1x4xf32> to vector<1x1xf32>
    %267 = vector.broadcast %266 : vector<1x1xf32> to vector<16x1xf32>
    %268 = arith.mulf %265, %267 : vector<16x1xf32>
    %269 = vector.extract_strided_slice %35 {offsets = [0, 16], sizes = [16, 16], strides = [1, 1]} : vector<16x64xf32> to vector<16x16xf32>
    %270 = vector.extract_strided_slice %178 {offsets = [0, 4], sizes = [16, 4], strides = [1, 1]} : vector<16x16xf32> to vector<16x4xf32>
    %271 = vector.extract_strided_slice %180 {offsets = [0, 4], sizes = [16, 4], strides = [1, 1]} : vector<16x16xf32> to vector<16x4xf32>
    %272 = vector.extract_strided_slice %182 {offsets = [0, 4], sizes = [16, 4], strides = [1, 1]} : vector<16x16xf32> to vector<16x4xf32>
    %273 = tpu.concatenate %269, %270, %271, %272, %262, %194 in 1 : vector<16x16xf32>, vector<16x4xf32>, vector<16x4xf32>, vector<16x4xf32>, vector<16x1xf32>, vector<16x1xf32> -> vector<16x30xf32>
    %274 = vector.extract_strided_slice %36 {offsets = [0, 16], sizes = [16, 16], strides = [1, 1]} : vector<16x64xf32> to vector<16x16xf32>
    %275 = vector.extract_strided_slice %98 {offsets = [0, 4], sizes = [16, 4], strides = [1, 1]} : vector<16x16xf32> to vector<16x4xf32>
    %276 = vector.extract_strided_slice %111 {offsets = [0, 4], sizes = [16, 4], strides = [1, 1]} : vector<16x16xf32> to vector<16x4xf32>
    %277 = vector.extract_strided_slice %124 {offsets = [0, 4], sizes = [16, 4], strides = [1, 1]} : vector<16x16xf32> to vector<16x4xf32>
    %278 = tpu.concatenate %274, %275, %276, %277, %194, %268 in 1 : vector<16x16xf32>, vector<16x4xf32>, vector<16x4xf32>, vector<16x4xf32>, vector<16x1xf32>, vector<16x1xf32> -> vector<16x30xf32>
    %cst_54 = arith.constant dense<0.000000e+00> : vector<16x16xf32>
    %279 = tpu.matmul %273, %278, %cst_54 {dimension_numbers = #tpu.dot_dimension_numbers<[1], [1], [0], [0], [0, 0, 1, 0], [], []>} : vector<16x30xf32>, vector<16x30xf32>, vector<16x16xf32> -> vector<16x16xf32>
    %280 = vector.extract_strided_slice %185 {offsets = [0, 0, 1], sizes = [16, 16, 1], strides = [1, 1, 1]} : vector<16x16x4xf32> to vector<16x16x1xf32>
    %cst_55 = arith.constant dense<0.000000e+00> : vector<16x16xf32>
    %281 = vector.multi_reduction <add>, %280, %cst_55 [2] : vector<16x16x1xf32> to vector<16x16xf32>
    %282 = arith.addf %279, %281 : vector<16x16xf32>
    %cst_56 = arith.constant 1.000000e+05 : f32
    %283 = vector.broadcast %cst_56 : f32 to vector<16x16xf32>
    %284 = arith.subf %282, %283 : vector<16x16xf32>
    %285 = arith.select %191, %282, %284 : vector<16x16xi1>, vector<16x16xf32>
    %cst_57 = arith.constant dense<0xFF800000> : vector<16xf32>
    %286 = vector.multi_reduction <maximumf>, %285, %cst_57 [1] : vector<16x16xf32> to vector<16xf32>
    %287 = vector.shape_cast %286 : vector<16xf32> to vector<16x1xf32>
    %288 = vector.broadcast %287 : vector<16x1xf32> to vector<16x16xf32>
    %289 = arith.subf %285, %288 : vector<16x16xf32>
    %290 = math.exp %289 : vector<16x16xf32>
    %cst_58 = arith.constant dense<0.000000e+00> : vector<16xf32>
    %291 = vector.multi_reduction <add>, %290, %cst_58 [1] : vector<16x16xf32> to vector<16xf32>
    %292 = vector.shape_cast %291 : vector<16xf32> to vector<16x1xf32>
    %293 = tpu.reciprocal %292 {approx = true} : vector<16x1xf32> -> vector<16x1xf32>
    %294 = vector.broadcast %293 : vector<16x1xf32> to vector<16x16xf32>
    %295 = arith.mulf %290, %294 : vector<16x16xf32>
    %cst_59 = arith.constant 0.000000e+00 : f32
    %296 = vector.shape_cast %193 : vector<16x1xi1> to vector<16x1xi1>
    %297 = vector.broadcast %296 : vector<16x1xi1> to vector<16x16xi1>
    %298 = vector.broadcast %cst_59 : f32 to vector<16x16xf32>
    %299 = arith.select %297, %295, %298 : vector<16x16xi1>, vector<16x16xf32>
    %300 = vector.shape_cast %299 : vector<16x16xf32> to vector<16x16x1xf32>
    %301 = vector.broadcast %300 : vector<16x16x1xf32> to vector<16x16x8xf32>
    %302 = arith.mulf %301, %28 : vector<16x16x8xf32>
    %cst_60 = arith.constant dense<0.000000e+00> : vector<16x8xf32>
    %303 = vector.multi_reduction <add>, %302, %cst_60 [1] : vector<16x16x8xf32> to vector<16x8xf32>
    %c0_61 = arith.constant 0 : index
    %c8 = arith.constant 8 : index
    %304 = vector.load %arg13[%c0_61, %c8] : memref<16x208xf32, #tpu.memory_space<vmem>>, vector<16x8xf32>
    tpu.vector_store %arg13[%c0_61, %c8], %303 {strides = array<i32>} : memref<16x208xf32, #tpu.memory_space<vmem>>, vector<16x8xf32>,
    %305 = vector.extract_strided_slice %37 {offsets = [0, 16], sizes = [16, 16], strides = [1, 1]} : vector<16x64xf32> to vector<16x16xf32>
    %306 = vector.extract_strided_slice %140 {offsets = [0, 4], sizes = [16, 4], strides = [1, 1]} : vector<16x16xf32> to vector<16x4xf32>
    %307 = vector.extract_strided_slice %153 {offsets = [0, 4], sizes = [16, 4], strides = [1, 1]} : vector<16x16xf32> to vector<16x4xf32>
    %308 = vector.extract_strided_slice %166 {offsets = [0, 4], sizes = [16, 4], strides = [1, 1]} : vector<16x16xf32> to vector<16x4xf32>
    %309 = tpu.concatenate %305, %306, %307, %308 in 1 : vector<16x16xf32>, vector<16x4xf32>, vector<16x4xf32>, vector<16x4xf32> -> vector<16x28xf32>
    %cst_62 = arith.constant dense<0.000000e+00> : vector<16x28xf32>
    %310 = tpu.matmul %299, %309, %cst_62 {dimension_numbers = #tpu.dot_dimension_numbers<[1], [0], [0], [1], [0, 0, 1, 1], [], []>} : vector<16x16xf32>, vector<16x28xf32>, vector<16x28xf32> -> vector<16x28xf32>
    %311 = vector.extract_strided_slice %310 {offsets = [0, 0], sizes = [16, 16], strides = [1, 1]} : vector<16x28xf32> to vector<16x16xf32>
    %c0_63 = arith.constant 0 : index
    %c48 = arith.constant 48 : index
    %312 = vector.load %arg13[%c0_63, %c48] : memref<16x208xf32, #tpu.memory_space<vmem>>, vector<16x16xf32>
    tpu.vector_store %arg13[%c0_63, %c48], %311 {strides = array<i32>} : memref<16x208xf32, #tpu.memory_space<vmem>>, vector<16x16xf32>,
    %313 = vector.extract_strided_slice %310 {offsets = [0, 16], sizes = [16, 4], strides = [1, 1]} : vector<16x28xf32> to vector<16x4xf32>
    %c0_64 = arith.constant 0 : index
    %c100 = arith.constant 100 : index
    %314 = vector.load %arg13[%c0_64, %c100] : memref<16x208xf32, #tpu.memory_space<vmem>>, vector<16x4xf32>
    tpu.vector_store %arg13[%c0_64, %c100], %313 {strides = array<i32>} : memref<16x208xf32, #tpu.memory_space<vmem>>, vector<16x4xf32>,
    %315 = vector.extract_strided_slice %310 {offsets = [0, 20], sizes = [16, 4], strides = [1, 1]} : vector<16x28xf32> to vector<16x4xf32>
    %c0_65 = arith.constant 0 : index
    %c116 = arith.constant 116 : index
    %316 = vector.load %arg13[%c0_65, %c116] : memref<16x208xf32, #tpu.memory_space<vmem>>, vector<16x4xf32>
    tpu.vector_store %arg13[%c0_65, %c116], %315 {strides = array<i32>} : memref<16x208xf32, #tpu.memory_space<vmem>>, vector<16x4xf32>,
    %317 = vector.extract_strided_slice %310 {offsets = [0, 24], sizes = [16, 4], strides = [1, 1]} : vector<16x28xf32> to vector<16x4xf32>
    %c0_66 = arith.constant 0 : index
    %c132 = arith.constant 132 : index
    %318 = vector.load %arg13[%c0_66, %c132] : memref<16x208xf32, #tpu.memory_space<vmem>>, vector<16x4xf32>
    tpu.vector_store %arg13[%c0_66, %c132], %317 {strides = array<i32>} : memref<16x208xf32, #tpu.memory_space<vmem>>, vector<16x4xf32>,
    %319 = vector.extract_strided_slice %171 {offsets = [0, 8], sizes = [16, 4], strides = [1, 1]} : vector<16x16xf32> to vector<16x4xf32>
    %cst_67 = arith.constant dense<0.000000e+00> : vector<16xf32>
    %320 = vector.multi_reduction <add>, %319, %cst_67 [1] : vector<16x4xf32> to vector<16xf32>
    %321 = vector.shape_cast %320 : vector<16xf32> to vector<16x1xf32>
    %322 = vector.extract_strided_slice %20 {offsets = [0, 2], sizes = [1, 1], strides = [1, 1]} : vector<1x4xf32> to vector<1x1xf32>
    %323 = vector.broadcast %322 : vector<1x1xf32> to vector<16x1xf32>
    %324 = arith.mulf %321, %323 : vector<16x1xf32>
    %325 = vector.extract_strided_slice %176 {offsets = [0, 8], sizes = [16, 4], strides = [1, 1]} : vector<16x16xf32> to vector<16x4xf32>
    %cst_68 = arith.constant dense<0.000000e+00> : vector<16xf32>
    %326 = vector.multi_reduction <add>, %325, %cst_68 [1] : vector<16x4xf32> to vector<16xf32>
    %327 = vector.shape_cast %326 : vector<16xf32> to vector<16x1xf32>
    %328 = vector.extract_strided_slice %20 {offsets = [0, 2], sizes = [1, 1], strides = [1, 1]} : vector<1x4xf32> to vector<1x1xf32>
    %329 = vector.broadcast %328 : vector<1x1xf32> to vector<16x1xf32>
    %330 = arith.mulf %327, %329 : vector<16x1xf32>
    %331 = vector.extract_strided_slice %35 {offsets = [0, 32], sizes = [16, 16], strides = [1, 1]} : vector<16x64xf32> to vector<16x16xf32>
    %332 = vector.extract_strided_slice %178 {offsets = [0, 8], sizes = [16, 4], strides = [1, 1]} : vector<16x16xf32> to vector<16x4xf32>
    %333 = vector.extract_strided_slice %180 {offsets = [0, 8], sizes = [16, 4], strides = [1, 1]} : vector<16x16xf32> to vector<16x4xf32>
    %334 = vector.extract_strided_slice %182 {offsets = [0, 8], sizes = [16, 4], strides = [1, 1]} : vector<16x16xf32> to vector<16x4xf32>
    %335 = tpu.concatenate %331, %332, %333, %334, %324, %194 in 1 : vector<16x16xf32>, vector<16x4xf32>, vector<16x4xf32>, vector<16x4xf32>, vector<16x1xf32>, vector<16x1xf32> -> vector<16x30xf32>
    %336 = vector.extract_strided_slice %36 {offsets = [0, 32], sizes = [16, 16], strides = [1, 1]} : vector<16x64xf32> to vector<16x16xf32>
    %337 = vector.extract_strided_slice %98 {offsets = [0, 8], sizes = [16, 4], strides = [1, 1]} : vector<16x16xf32> to vector<16x4xf32>
    %338 = vector.extract_strided_slice %111 {offsets = [0, 8], sizes = [16, 4], strides = [1, 1]} : vector<16x16xf32> to vector<16x4xf32>
    %339 = vector.extract_strided_slice %124 {offsets = [0, 8], sizes = [16, 4], strides = [1, 1]} : vector<16x16xf32> to vector<16x4xf32>
    %340 = tpu.concatenate %336, %337, %338, %339, %194, %330 in 1 : vector<16x16xf32>, vector<16x4xf32>, vector<16x4xf32>, vector<16x4xf32>, vector<16x1xf32>, vector<16x1xf32> -> vector<16x30xf32>
    %cst_69 = arith.constant dense<0.000000e+00> : vector<16x16xf32>
    %341 = tpu.matmul %335, %340, %cst_69 {dimension_numbers = #tpu.dot_dimension_numbers<[1], [1], [0], [0], [0, 0, 1, 0], [], []>} : vector<16x30xf32>, vector<16x30xf32>, vector<16x16xf32> -> vector<16x16xf32>
    %342 = vector.extract_strided_slice %185 {offsets = [0, 0, 2], sizes = [16, 16, 1], strides = [1, 1, 1]} : vector<16x16x4xf32> to vector<16x16x1xf32>
    %cst_70 = arith.constant dense<0.000000e+00> : vector<16x16xf32>
    %343 = vector.multi_reduction <add>, %342, %cst_70 [2] : vector<16x16x1xf32> to vector<16x16xf32>
    %344 = arith.addf %341, %343 : vector<16x16xf32>
    %cst_71 = arith.constant 1.000000e+05 : f32
    %345 = vector.broadcast %cst_71 : f32 to vector<16x16xf32>
    %346 = arith.subf %344, %345 : vector<16x16xf32>
    %347 = arith.select %191, %344, %346 : vector<16x16xi1>, vector<16x16xf32>
    %cst_72 = arith.constant dense<0xFF800000> : vector<16xf32>
    %348 = vector.multi_reduction <maximumf>, %347, %cst_72 [1] : vector<16x16xf32> to vector<16xf32>
    %349 = vector.shape_cast %348 : vector<16xf32> to vector<16x1xf32>
    %350 = vector.broadcast %349 : vector<16x1xf32> to vector<16x16xf32>
    %351 = arith.subf %347, %350 : vector<16x16xf32>
    %352 = math.exp %351 : vector<16x16xf32>
    %cst_73 = arith.constant dense<0.000000e+00> : vector<16xf32>
    %353 = vector.multi_reduction <add>, %352, %cst_73 [1] : vector<16x16xf32> to vector<16xf32>
    %354 = vector.shape_cast %353 : vector<16xf32> to vector<16x1xf32>
    %355 = tpu.reciprocal %354 {approx = true} : vector<16x1xf32> -> vector<16x1xf32>
    %356 = vector.broadcast %355 : vector<16x1xf32> to vector<16x16xf32>
    %357 = arith.mulf %352, %356 : vector<16x16xf32>
    %cst_74 = arith.constant 0.000000e+00 : f32
    %358 = vector.shape_cast %193 : vector<16x1xi1> to vector<16x1xi1>
    %359 = vector.broadcast %358 : vector<16x1xi1> to vector<16x16xi1>
    %360 = vector.broadcast %cst_74 : f32 to vector<16x16xf32>
    %361 = arith.select %359, %357, %360 : vector<16x16xi1>, vector<16x16xf32>
    %362 = vector.shape_cast %361 : vector<16x16xf32> to vector<16x16x1xf32>
    %363 = vector.broadcast %362 : vector<16x16x1xf32> to vector<16x16x8xf32>
    %364 = arith.mulf %363, %28 : vector<16x16x8xf32>
    %cst_75 = arith.constant dense<0.000000e+00> : vector<16x8xf32>
    %365 = vector.multi_reduction <add>, %364, %cst_75 [1] : vector<16x16x8xf32> to vector<16x8xf32>
    %c0_76 = arith.constant 0 : index
    %c16 = arith.constant 16 : index
    %366 = vector.load %arg13[%c0_76, %c16] : memref<16x208xf32, #tpu.memory_space<vmem>>, vector<16x8xf32>
    tpu.vector_store %arg13[%c0_76, %c16], %365 {strides = array<i32>} : memref<16x208xf32, #tpu.memory_space<vmem>>, vector<16x8xf32>,
    %367 = vector.extract_strided_slice %37 {offsets = [0, 32], sizes = [16, 16], strides = [1, 1]} : vector<16x64xf32> to vector<16x16xf32>
    %368 = vector.extract_strided_slice %140 {offsets = [0, 8], sizes = [16, 4], strides = [1, 1]} : vector<16x16xf32> to vector<16x4xf32>
    %369 = vector.extract_strided_slice %153 {offsets = [0, 8], sizes = [16, 4], strides = [1, 1]} : vector<16x16xf32> to vector<16x4xf32>
    %370 = vector.extract_strided_slice %166 {offsets = [0, 8], sizes = [16, 4], strides = [1, 1]} : vector<16x16xf32> to vector<16x4xf32>
    %371 = tpu.concatenate %367, %368, %369, %370 in 1 : vector<16x16xf32>, vector<16x4xf32>, vector<16x4xf32>, vector<16x4xf32> -> vector<16x28xf32>
    %cst_77 = arith.constant dense<0.000000e+00> : vector<16x28xf32>
    %372 = tpu.matmul %361, %371, %cst_77 {dimension_numbers = #tpu.dot_dimension_numbers<[1], [0], [0], [1], [0, 0, 1, 1], [], []>} : vector<16x16xf32>, vector<16x28xf32>, vector<16x28xf32> -> vector<16x28xf32>
    %373 = vector.extract_strided_slice %372 {offsets = [0, 0], sizes = [16, 16], strides = [1, 1]} : vector<16x28xf32> to vector<16x16xf32>
    %c0_78 = arith.constant 0 : index
    %c64 = arith.constant 64 : index
    %374 = vector.load %arg13[%c0_78, %c64] : memref<16x208xf32, #tpu.memory_space<vmem>>, vector<16x16xf32>
    tpu.vector_store %arg13[%c0_78, %c64], %373 {strides = array<i32>} : memref<16x208xf32, #tpu.memory_space<vmem>>, vector<16x16xf32>,
    %375 = vector.extract_strided_slice %372 {offsets = [0, 16], sizes = [16, 4], strides = [1, 1]} : vector<16x28xf32> to vector<16x4xf32>
    %c0_79 = arith.constant 0 : index
    %c104 = arith.constant 104 : index
    %376 = vector.load %arg13[%c0_79, %c104] : memref<16x208xf32, #tpu.memory_space<vmem>>, vector<16x4xf32>
    tpu.vector_store %arg13[%c0_79, %c104], %375 {strides = array<i32>} : memref<16x208xf32, #tpu.memory_space<vmem>>, vector<16x4xf32>,
    %377 = vector.extract_strided_slice %372 {offsets = [0, 20], sizes = [16, 4], strides = [1, 1]} : vector<16x28xf32> to vector<16x4xf32>
    %c0_80 = arith.constant 0 : index
    %c120 = arith.constant 120 : index
    %378 = vector.load %arg13[%c0_80, %c120] : memref<16x208xf32, #tpu.memory_space<vmem>>, vector<16x4xf32>
    tpu.vector_store %arg13[%c0_80, %c120], %377 {strides = array<i32>} : memref<16x208xf32, #tpu.memory_space<vmem>>, vector<16x4xf32>,
    %379 = vector.extract_strided_slice %372 {offsets = [0, 24], sizes = [16, 4], strides = [1, 1]} : vector<16x28xf32> to vector<16x4xf32>
    %c0_81 = arith.constant 0 : index
    %c136 = arith.constant 136 : index
    %380 = vector.load %arg13[%c0_81, %c136] : memref<16x208xf32, #tpu.memory_space<vmem>>, vector<16x4xf32>
    tpu.vector_store %arg13[%c0_81, %c136], %379 {strides = array<i32>} : memref<16x208xf32, #tpu.memory_space<vmem>>, vector<16x4xf32>,
    %381 = vector.extract_strided_slice %171 {offsets = [0, 12], sizes = [16, 4], strides = [1, 1]} : vector<16x16xf32> to vector<16x4xf32>
    %cst_82 = arith.constant dense<0.000000e+00> : vector<16xf32>
    %382 = vector.multi_reduction <add>, %381, %cst_82 [1] : vector<16x4xf32> to vector<16xf32>
    %383 = vector.shape_cast %382 : vector<16xf32> to vector<16x1xf32>
    %384 = vector.extract_strided_slice %20 {offsets = [0, 3], sizes = [1, 1], strides = [1, 1]} : vector<1x4xf32> to vector<1x1xf32>
    %385 = vector.broadcast %384 : vector<1x1xf32> to vector<16x1xf32>
    %386 = arith.mulf %383, %385 : vector<16x1xf32>
    %387 = vector.extract_strided_slice %176 {offsets = [0, 12], sizes = [16, 4], strides = [1, 1]} : vector<16x16xf32> to vector<16x4xf32>
    %cst_83 = arith.constant dense<0.000000e+00> : vector<16xf32>
    %388 = vector.multi_reduction <add>, %387, %cst_83 [1] : vector<16x4xf32> to vector<16xf32>
    %389 = vector.shape_cast %388 : vector<16xf32> to vector<16x1xf32>
    %390 = vector.extract_strided_slice %20 {offsets = [0, 3], sizes = [1, 1], strides = [1, 1]} : vector<1x4xf32> to vector<1x1xf32>
    %391 = vector.broadcast %390 : vector<1x1xf32> to vector<16x1xf32>
    %392 = arith.mulf %389, %391 : vector<16x1xf32>
    %393 = vector.extract_strided_slice %35 {offsets = [0, 48], sizes = [16, 16], strides = [1, 1]} : vector<16x64xf32> to vector<16x16xf32>
    %394 = vector.extract_strided_slice %178 {offsets = [0, 12], sizes = [16, 4], strides = [1, 1]} : vector<16x16xf32> to vector<16x4xf32>
    %395 = vector.extract_strided_slice %180 {offsets = [0, 12], sizes = [16, 4], strides = [1, 1]} : vector<16x16xf32> to vector<16x4xf32>
    %396 = vector.extract_strided_slice %182 {offsets = [0, 12], sizes = [16, 4], strides = [1, 1]} : vector<16x16xf32> to vector<16x4xf32>
    %397 = tpu.concatenate %393, %394, %395, %396, %386, %194 in 1 : vector<16x16xf32>, vector<16x4xf32>, vector<16x4xf32>, vector<16x4xf32>, vector<16x1xf32>, vector<16x1xf32> -> vector<16x30xf32>
    %398 = vector.extract_strided_slice %36 {offsets = [0, 48], sizes = [16, 16], strides = [1, 1]} : vector<16x64xf32> to vector<16x16xf32>
    %399 = vector.extract_strided_slice %98 {offsets = [0, 12], sizes = [16, 4], strides = [1, 1]} : vector<16x16xf32> to vector<16x4xf32>
    %400 = vector.extract_strided_slice %111 {offsets = [0, 12], sizes = [16, 4], strides = [1, 1]} : vector<16x16xf32> to vector<16x4xf32>
    %401 = vector.extract_strided_slice %124 {offsets = [0, 12], sizes = [16, 4], strides = [1, 1]} : vector<16x16xf32> to vector<16x4xf32>
    %402 = tpu.concatenate %398, %399, %400, %401, %194, %392 in 1 : vector<16x16xf32>, vector<16x4xf32>, vector<16x4xf32>, vector<16x4xf32>, vector<16x1xf32>, vector<16x1xf32> -> vector<16x30xf32>
    %cst_84 = arith.constant dense<0.000000e+00> : vector<16x16xf32>
    %403 = tpu.matmul %397, %402, %cst_84 {dimension_numbers = #tpu.dot_dimension_numbers<[1], [1], [0], [0], [0, 0, 1, 0], [], []>} : vector<16x30xf32>, vector<16x30xf32>, vector<16x16xf32> -> vector<16x16xf32>
    %404 = vector.extract_strided_slice %185 {offsets = [0, 0, 3], sizes = [16, 16, 1], strides = [1, 1, 1]} : vector<16x16x4xf32> to vector<16x16x1xf32>
    %cst_85 = arith.constant dense<0.000000e+00> : vector<16x16xf32>
    %405 = vector.multi_reduction <add>, %404, %cst_85 [2] : vector<16x16x1xf32> to vector<16x16xf32>
    %406 = arith.addf %403, %405 : vector<16x16xf32>
    %cst_86 = arith.constant 1.000000e+05 : f32
    %407 = vector.broadcast %cst_86 : f32 to vector<16x16xf32>
    %408 = arith.subf %406, %407 : vector<16x16xf32>
    %409 = arith.select %191, %406, %408 : vector<16x16xi1>, vector<16x16xf32>
    %cst_87 = arith.constant dense<0xFF800000> : vector<16xf32>
    %410 = vector.multi_reduction <maximumf>, %409, %cst_87 [1] : vector<16x16xf32> to vector<16xf32>
    %411 = vector.shape_cast %410 : vector<16xf32> to vector<16x1xf32>
    %412 = vector.broadcast %411 : vector<16x1xf32> to vector<16x16xf32>
    %413 = arith.subf %409, %412 : vector<16x16xf32>
    %414 = math.exp %413 : vector<16x16xf32>
    %cst_88 = arith.constant dense<0.000000e+00> : vector<16xf32>
    %415 = vector.multi_reduction <add>, %414, %cst_88 [1] : vector<16x16xf32> to vector<16xf32>
    %416 = vector.shape_cast %415 : vector<16xf32> to vector<16x1xf32>
    %417 = tpu.reciprocal %416 {approx = true} : vector<16x1xf32> -> vector<16x1xf32>
    %418 = vector.broadcast %417 : vector<16x1xf32> to vector<16x16xf32>
    %419 = arith.mulf %414, %418 : vector<16x16xf32>
    %cst_89 = arith.constant 0.000000e+00 : f32
    %420 = vector.shape_cast %193 : vector<16x1xi1> to vector<16x1xi1>
    %421 = vector.broadcast %420 : vector<16x1xi1> to vector<16x16xi1>
    %422 = vector.broadcast %cst_89 : f32 to vector<16x16xf32>
    %423 = arith.select %421, %419, %422 : vector<16x16xi1>, vector<16x16xf32>
    %424 = vector.shape_cast %423 : vector<16x16xf32> to vector<16x16x1xf32>
    %425 = vector.broadcast %424 : vector<16x16x1xf32> to vector<16x16x8xf32>
    %426 = arith.mulf %425, %28 : vector<16x16x8xf32>
    %cst_90 = arith.constant dense<0.000000e+00> : vector<16x8xf32>
    %427 = vector.multi_reduction <add>, %426, %cst_90 [1] : vector<16x16x8xf32> to vector<16x8xf32>
    %c0_91 = arith.constant 0 : index
    %c24 = arith.constant 24 : index
    %428 = vector.load %arg13[%c0_91, %c24] : memref<16x208xf32, #tpu.memory_space<vmem>>, vector<16x8xf32>
    tpu.vector_store %arg13[%c0_91, %c24], %427 {strides = array<i32>} : memref<16x208xf32, #tpu.memory_space<vmem>>, vector<16x8xf32>,
    %429 = vector.extract_strided_slice %37 {offsets = [0, 48], sizes = [16, 16], strides = [1, 1]} : vector<16x64xf32> to vector<16x16xf32>
    %430 = vector.extract_strided_slice %140 {offsets = [0, 12], sizes = [16, 4], strides = [1, 1]} : vector<16x16xf32> to vector<16x4xf32>
    %431 = vector.extract_strided_slice %153 {offsets = [0, 12], sizes = [16, 4], strides = [1, 1]} : vector<16x16xf32> to vector<16x4xf32>
    %432 = vector.extract_strided_slice %166 {offsets = [0, 12], sizes = [16, 4], strides = [1, 1]} : vector<16x16xf32> to vector<16x4xf32>
    %433 = tpu.concatenate %429, %430, %431, %432 in 1 : vector<16x16xf32>, vector<16x4xf32>, vector<16x4xf32>, vector<16x4xf32> -> vector<16x28xf32>
    %cst_92 = arith.constant dense<0.000000e+00> : vector<16x28xf32>
    %434 = tpu.matmul %423, %433, %cst_92 {dimension_numbers = #tpu.dot_dimension_numbers<[1], [0], [0], [1], [0, 0, 1, 1], [], []>} : vector<16x16xf32>, vector<16x28xf32>, vector<16x28xf32> -> vector<16x28xf32>
    %435 = vector.extract_strided_slice %434 {offsets = [0, 0], sizes = [16, 16], strides = [1, 1]} : vector<16x28xf32> to vector<16x16xf32>
    %c0_93 = arith.constant 0 : index
    %c80 = arith.constant 80 : index
    %436 = vector.load %arg13[%c0_93, %c80] : memref<16x208xf32, #tpu.memory_space<vmem>>, vector<16x16xf32>
    tpu.vector_store %arg13[%c0_93, %c80], %435 {strides = array<i32>} : memref<16x208xf32, #tpu.memory_space<vmem>>, vector<16x16xf32>,
    %437 = vector.extract_strided_slice %434 {offsets = [0, 16], sizes = [16, 4], strides = [1, 1]} : vector<16x28xf32> to vector<16x4xf32>
    %c0_94 = arith.constant 0 : index
    %c108 = arith.constant 108 : index
    %438 = vector.load %arg13[%c0_94, %c108] : memref<16x208xf32, #tpu.memory_space<vmem>>, vector<16x4xf32>
    tpu.vector_store %arg13[%c0_94, %c108], %437 {strides = array<i32>} : memref<16x208xf32, #tpu.memory_space<vmem>>, vector<16x4xf32>,
    %439 = vector.extract_strided_slice %434 {offsets = [0, 20], sizes = [16, 4], strides = [1, 1]} : vector<16x28xf32> to vector<16x4xf32>
    %c0_95 = arith.constant 0 : index
    %c124 = arith.constant 124 : index
    %440 = vector.load %arg13[%c0_95, %c124] : memref<16x208xf32, #tpu.memory_space<vmem>>, vector<16x4xf32>
    tpu.vector_store %arg13[%c0_95, %c124], %439 {strides = array<i32>} : memref<16x208xf32, #tpu.memory_space<vmem>>, vector<16x4xf32>,
    %441 = vector.extract_strided_slice %434 {offsets = [0, 24], sizes = [16, 4], strides = [1, 1]} : vector<16x28xf32> to vector<16x4xf32>
    %c0_96 = arith.constant 0 : index
    %c140 = arith.constant 140 : index
    %442 = vector.load %arg13[%c0_96, %c140] : memref<16x208xf32, #tpu.memory_space<vmem>>, vector<16x4xf32>
    tpu.vector_store %arg13[%c0_96, %c140], %441 {strides = array<i32>} : memref<16x208xf32, #tpu.memory_space<vmem>>, vector<16x4xf32>,
    %c0_97 = arith.constant 0 : index
    %c96_98 = arith.constant 96 : index
    %443 = vector.load %arg13[%c0_97, %c96_98] : memref<16x208xf32, #tpu.memory_space<vmem>>, vector<16x16xf32>
    %c0_99 = arith.constant 0 : index
    %c112_100 = arith.constant 112 : index
    %444 = vector.load %arg13[%c0_99, %c112_100] : memref<16x208xf32, #tpu.memory_space<vmem>>, vector<16x16xf32>
    %c0_101 = arith.constant 0 : index
    %c128_102 = arith.constant 128 : index
    %445 = vector.load %arg13[%c0_101, %c128_102] : memref<16x208xf32, #tpu.memory_space<vmem>>, vector<16x16xf32>
    %446 = vector.broadcast %31 : vector<16x1xf32> to vector<16x16xf32>
    %447 = arith.subf %443, %446 : vector<16x16xf32>
    %448 = vector.broadcast %32 : vector<16x1xf32> to vector<16x16xf32>
    %449 = arith.subf %444, %448 : vector<16x16xf32>
    %450 = vector.broadcast %33 : vector<16x1xf32> to vector<16x16xf32>
    %451 = arith.subf %445, %450 : vector<16x16xf32>
    %452 = vector.extract_strided_slice %22 {offsets = [0, 0], sizes = [16, 1], strides = [1, 1]} : vector<16x9xf32> to vector<16x1xf32>
    %453 = vector.broadcast %452 : vector<16x1xf32> to vector<16x16xf32>
    %454 = arith.mulf %453, %447 : vector<16x16xf32>
    %455 = vector.extract_strided_slice %22 {offsets = [0, 3], sizes = [16, 1], strides = [1, 1]} : vector<16x9xf32> to vector<16x1xf32>
    %456 = vector.broadcast %455 : vector<16x1xf32> to vector<16x16xf32>
    %457 = arith.mulf %456, %449 : vector<16x16xf32>
    %458 = arith.addf %454, %457 : vector<16x16xf32>
    %459 = vector.extract_strided_slice %22 {offsets = [0, 6], sizes = [16, 1], strides = [1, 1]} : vector<16x9xf32> to vector<16x1xf32>
    %460 = vector.broadcast %459 : vector<16x1xf32> to vector<16x16xf32>
    %461 = arith.mulf %460, %451 : vector<16x16xf32>
    %462 = arith.addf %458, %461 : vector<16x16xf32>
    %463 = vector.extract_strided_slice %22 {offsets = [0, 1], sizes = [16, 1], strides = [1, 1]} : vector<16x9xf32> to vector<16x1xf32>
    %464 = vector.broadcast %463 : vector<16x1xf32> to vector<16x16xf32>
    %465 = arith.mulf %464, %447 : vector<16x16xf32>
    %466 = vector.extract_strided_slice %22 {offsets = [0, 4], sizes = [16, 1], strides = [1, 1]} : vector<16x9xf32> to vector<16x1xf32>
    %467 = vector.broadcast %466 : vector<16x1xf32> to vector<16x16xf32>
    %468 = arith.mulf %467, %449 : vector<16x16xf32>
    %469 = arith.addf %465, %468 : vector<16x16xf32>
    %470 = vector.extract_strided_slice %22 {offsets = [0, 7], sizes = [16, 1], strides = [1, 1]} : vector<16x9xf32> to vector<16x1xf32>
    %471 = vector.broadcast %470 : vector<16x1xf32> to vector<16x16xf32>
    %472 = arith.mulf %471, %451 : vector<16x16xf32>
    %473 = arith.addf %469, %472 : vector<16x16xf32>
    %474 = vector.extract_strided_slice %22 {offsets = [0, 2], sizes = [16, 1], strides = [1, 1]} : vector<16x9xf32> to vector<16x1xf32>
    %475 = vector.broadcast %474 : vector<16x1xf32> to vector<16x16xf32>
    %476 = arith.mulf %475, %447 : vector<16x16xf32>
    %477 = vector.extract_strided_slice %22 {offsets = [0, 5], sizes = [16, 1], strides = [1, 1]} : vector<16x9xf32> to vector<16x1xf32>
    %478 = vector.broadcast %477 : vector<16x1xf32> to vector<16x16xf32>
    %479 = arith.mulf %478, %449 : vector<16x16xf32>
    %480 = arith.addf %476, %479 : vector<16x16xf32>
    %481 = vector.extract_strided_slice %22 {offsets = [0, 8], sizes = [16, 1], strides = [1, 1]} : vector<16x9xf32> to vector<16x1xf32>
    %482 = vector.broadcast %481 : vector<16x1xf32> to vector<16x16xf32>
    %483 = arith.mulf %482, %451 : vector<16x16xf32>
    %484 = arith.addf %480, %483 : vector<16x16xf32>
    %485 = arith.mulf %462, %462 : vector<16x16xf32>
    %486 = arith.mulf %473, %473 : vector<16x16xf32>
    %487 = arith.addf %485, %486 : vector<16x16xf32>
    %488 = arith.mulf %484, %484 : vector<16x16xf32>
    %489 = arith.addf %487, %488 : vector<16x16xf32>
    %490 = math.sqrt %489 : vector<16x16xf32>
    %cst_103 = arith.constant 9.99999974E-5 : f32
    %491 = vector.broadcast %cst_103 : f32 to vector<16x16xf32>
    %492 = arith.addf %490, %491 : vector<16x16xf32>
    %493 = tpu.reciprocal %492 {approx = true} : vector<16x16xf32> -> vector<16x16xf32>
    %c0_104 = arith.constant 0 : index
    %c96_105 = arith.constant 96 : index
    %494 = vector.load %arg13[%c0_104, %c96_105] : memref<16x208xf32, #tpu.memory_space<vmem>>, vector<16x16xf32>
    tpu.vector_store %arg13[%c0_104, %c96_105], %462 {strides = array<i32>} : memref<16x208xf32, #tpu.memory_space<vmem>>, vector<16x16xf32>,
    %c0_106 = arith.constant 0 : index
    %c112_107 = arith.constant 112 : index
    %495 = vector.load %arg13[%c0_106, %c112_107] : memref<16x208xf32, #tpu.memory_space<vmem>>, vector<16x16xf32>
    tpu.vector_store %arg13[%c0_106, %c112_107], %473 {strides = array<i32>} : memref<16x208xf32, #tpu.memory_space<vmem>>, vector<16x16xf32>,
    %c0_108 = arith.constant 0 : index
    %c128_109 = arith.constant 128 : index
    %496 = vector.load %arg13[%c0_108, %c128_109] : memref<16x208xf32, #tpu.memory_space<vmem>>, vector<16x16xf32>
    tpu.vector_store %arg13[%c0_108, %c128_109], %484 {strides = array<i32>} : memref<16x208xf32, #tpu.memory_space<vmem>>, vector<16x16xf32>,
    %c0_110 = arith.constant 0 : index
    %c144 = arith.constant 144 : index
    %497 = vector.load %arg13[%c0_110, %c144] : memref<16x208xf32, #tpu.memory_space<vmem>>, vector<16x16xf32>
    tpu.vector_store %arg13[%c0_110, %c144], %490 {strides = array<i32>} : memref<16x208xf32, #tpu.memory_space<vmem>>, vector<16x16xf32>,
    %498 = arith.mulf %462, %493 : vector<16x16xf32>
    %c0_111 = arith.constant 0 : index
    %c160 = arith.constant 160 : index
    %499 = vector.load %arg13[%c0_111, %c160] : memref<16x208xf32, #tpu.memory_space<vmem>>, vector<16x16xf32>
    tpu.vector_store %arg13[%c0_111, %c160], %498 {strides = array<i32>} : memref<16x208xf32, #tpu.memory_space<vmem>>, vector<16x16xf32>,
    %500 = arith.mulf %473, %493 : vector<16x16xf32>
    %c0_112 = arith.constant 0 : index
    %c176 = arith.constant 176 : index
    %501 = vector.load %arg13[%c0_112, %c176] : memref<16x208xf32, #tpu.memory_space<vmem>>, vector<16x16xf32>
    tpu.vector_store %arg13[%c0_112, %c176], %500 {strides = array<i32>} : memref<16x208xf32, #tpu.memory_space<vmem>>, vector<16x16xf32>,
    %502 = arith.mulf %484, %493 : vector<16x16xf32>
    %c0_113 = arith.constant 0 : index
    %c192 = arith.constant 192 : index
    %503 = vector.load %arg13[%c0_113, %c192] : memref<16x208xf32, #tpu.memory_space<vmem>>, vector<16x16xf32>
    tpu.vector_store %arg13[%c0_113, %c192], %502 {strides = array<i32>} : memref<16x208xf32, #tpu.memory_space<vmem>>, vector<16x16xf32>,
    %c0_114 = arith.constant 0 : index
    %c0_115 = arith.constant 0 : index
    %504 = vector.load %arg13[%c0_114, %c0_115] : memref<16x208xf32, #tpu.memory_space<vmem>>, vector<16x208xf32>
    %cst_116 = arith.constant dense<0.000000e+00> : vector<16x32xf32>
    %505 = tpu.matmul %504, %3, %cst_116 {dimension_numbers = #tpu.dot_dimension_numbers<[1], [0], [0], [1], [0, 0, 1, 1], [], []>} : vector<16x208xf32>, vector<208x32xf32>, vector<16x32xf32> -> vector<16x32xf32>
    %506 = vector.broadcast %11 : vector<1x32xf32> to vector<16x32xf32>
    %507 = arith.addf %505, %506 : vector<16x32xf32>
    %cst_117 = arith.constant 0.000000e+00 : f32
    %508 = vector.shape_cast %193 : vector<16x1xi1> to vector<16x1xi1>
    %509 = vector.broadcast %508 : vector<16x1xi1> to vector<16x32xi1>
    %510 = vector.broadcast %cst_117 : f32 to vector<16x32xf32>
    %511 = arith.select %509, %507, %510 : vector<16x32xi1>, vector<16x32xf32>
    %512 = arith.addf %26, %511 : vector<16x32xf32>
    %cst_118 = arith.constant dense<0.000000e+00> : vector<16xf32>
    %513 = vector.multi_reduction <add>, %512, %cst_118 [1] : vector<16x32xf32> to vector<16xf32>
    %514 = vector.shape_cast %513 : vector<16xf32> to vector<16x1xf32>
    %cst_119 = arith.constant 3.200000e+01 : f32
    %515 = vector.broadcast %cst_119 : f32 to vector<16x1xf32>
    %516 = arith.divf %514, %515 : vector<16x1xf32>
    %517 = vector.broadcast %516 : vector<16x1xf32> to vector<16x32xf32>
    %518 = arith.subf %512, %517 : vector<16x32xf32>
    %519 = arith.mulf %518, %518 : vector<16x32xf32>
    %cst_120 = arith.constant dense<0.000000e+00> : vector<16xf32>
    %520 = vector.multi_reduction <add>, %519, %cst_120 [1] : vector<16x32xf32> to vector<16xf32>
    %521 = vector.shape_cast %520 : vector<16xf32> to vector<16x1xf32>
    %cst_121 = arith.constant 3.200000e+01 : f32
    %522 = vector.broadcast %cst_121 : f32 to vector<16x1xf32>
    %523 = arith.divf %521, %522 : vector<16x1xf32>
    %524 = vector.broadcast %516 : vector<16x1xf32> to vector<16x32xf32>
    %525 = arith.subf %512, %524 : vector<16x32xf32>
    %cst_122 = arith.constant 9.99999974E-6 : f32
    %526 = vector.broadcast %cst_122 : f32 to vector<16x1xf32>
    %527 = arith.addf %523, %526 : vector<16x1xf32>
    %528 = math.rsqrt %527 : vector<16x1xf32>
    %529 = vector.broadcast %528 : vector<16x1xf32> to vector<16x32xf32>
    %530 = arith.mulf %525, %529 : vector<16x32xf32>
    %531 = vector.broadcast %12 : vector<1x32xf32> to vector<16x32xf32>
    %532 = arith.mulf %530, %531 : vector<16x32xf32>
    %533 = vector.broadcast %13 : vector<1x32xf32> to vector<16x32xf32>
    %534 = arith.addf %532, %533 : vector<16x32xf32>
    %cst_123 = arith.constant dense<0.000000e+00> : vector<16x32xf32>
    %535 = tpu.matmul %534, %6, %cst_123 {dimension_numbers = #tpu.dot_dimension_numbers<[1], [0], [0], [1], [0, 0, 1, 1], [], []>} : vector<16x32xf32>, vector<32x32xf32>, vector<16x32xf32> -> vector<16x32xf32>
    %536 = vector.broadcast %14 : vector<1x32xf32> to vector<16x32xf32>
    %537 = arith.addf %535, %536 : vector<16x32xf32>
    %cst_124 = arith.constant 0.000000e+00 : f32
    %538 = vector.broadcast %cst_124 : f32 to vector<16x32xf32>
    %539 = arith.maximumf %537, %538 : vector<16x32xf32>
    %cst_125 = arith.constant dense<0.000000e+00> : vector<16x32xf32>
    %540 = tpu.matmul %539, %8, %cst_125 {dimension_numbers = #tpu.dot_dimension_numbers<[1], [0], [0], [1], [0, 0, 1, 1], [], []>} : vector<16x32xf32>, vector<32x32xf32>, vector<16x32xf32> -> vector<16x32xf32>
    %541 = vector.broadcast %15 : vector<1x32xf32> to vector<16x32xf32>
    %542 = arith.addf %540, %541 : vector<16x32xf32>
    %cst_126 = arith.constant 0.000000e+00 : f32
    %543 = vector.broadcast %cst_126 : f32 to vector<16x32xf32>
    %544 = arith.maximumf %542, %543 : vector<16x32xf32>
    %cst_127 = arith.constant dense<0.000000e+00> : vector<16x32xf32>
    %545 = tpu.matmul %544, %10, %cst_127 {dimension_numbers = #tpu.dot_dimension_numbers<[1], [0], [0], [1], [0, 0, 1, 1], [], []>} : vector<16x32xf32>, vector<32x32xf32>, vector<16x32xf32> -> vector<16x32xf32>
    %546 = vector.broadcast %16 : vector<1x32xf32> to vector<16x32xf32>
    %547 = arith.addf %545, %546 : vector<16x32xf32>
    %548 = arith.addf %534, %547 : vector<16x32xf32>
    %cst_128 = arith.constant dense<0.000000e+00> : vector<16xf32>
    %549 = vector.multi_reduction <add>, %548, %cst_128 [1] : vector<16x32xf32> to vector<16xf32>
    %550 = vector.shape_cast %549 : vector<16xf32> to vector<16x1xf32>
    %cst_129 = arith.constant 3.200000e+01 : f32
    %551 = vector.broadcast %cst_129 : f32 to vector<16x1xf32>
    %552 = arith.divf %550, %551 : vector<16x1xf32>
    %553 = vector.broadcast %552 : vector<16x1xf32> to vector<16x32xf32>
    %554 = arith.subf %548, %553 : vector<16x32xf32>
    %555 = arith.mulf %554, %554 : vector<16x32xf32>
    %cst_130 = arith.constant dense<0.000000e+00> : vector<16xf32>
    %556 = vector.multi_reduction <add>, %555, %cst_130 [1] : vector<16x32xf32> to vector<16xf32>
    %557 = vector.shape_cast %556 : vector<16xf32> to vector<16x1xf32>
    %cst_131 = arith.constant 3.200000e+01 : f32
    %558 = vector.broadcast %cst_131 : f32 to vector<16x1xf32>
    %559 = arith.divf %557, %558 : vector<16x1xf32>
    %560 = vector.broadcast %552 : vector<16x1xf32> to vector<16x32xf32>
    %561 = arith.subf %548, %560 : vector<16x32xf32>
    %cst_132 = arith.constant 9.99999974E-6 : f32
    %562 = vector.broadcast %cst_132 : f32 to vector<16x1xf32>
    %563 = arith.addf %559, %562 : vector<16x1xf32>
    %564 = math.rsqrt %563 : vector<16x1xf32>
    %565 = vector.broadcast %564 : vector<16x1xf32> to vector<16x32xf32>
    %566 = arith.mulf %561, %565 : vector<16x32xf32>
    %567 = vector.broadcast %17 : vector<1x32xf32> to vector<16x32xf32>
    %568 = arith.mulf %566, %567 : vector<16x32xf32>
    %569 = vector.broadcast %18 : vector<1x32xf32> to vector<16x32xf32>
    %570 = arith.addf %568, %569 : vector<16x32xf32>
    %c0_133 = arith.constant 0 : index
    %c0_134 = arith.constant 0 : index
    %c0_135 = arith.constant 0 : index
    %571 = vector.load %arg12[%c0_133, %c0_134, %c0_135] : memref<1x16x32xf32, #tpu.memory_space<vmem>>, vector<1x16x32xf32>
    %572 = vector.shape_cast %571 : vector<1x16x32xf32> to vector<16x32xf32>
    %573 = vector.shape_cast %570 : vector<16x32xf32> to vector<1x16x32xf32>
    tpu.vector_store %arg12[%c0_133, %c0_134, %c0_135], %573 {strides = array<i32>} : memref<1x16x32xf32, #tpu.memory_space<vmem>>, vector<1x16x32xf32>,
    return
  }
  func.func @transform_0(%arg0: i32) -> (i32, i32, i32) {
    %c0_i32 = arith.constant 0 : i32
    %c0_i32_0 = arith.constant 0 : i32
    %c0_i32_1 = arith.constant 0 : i32
    return %arg0, %c0_i32, %c0_i32_0 : i32, i32, i32
  }
  func.func @transform_1(%arg0: i32) -> (i32, i32, i32) {
    %c0_i32 = arith.constant 0 : i32
    %c0_i32_0 = arith.constant 0 : i32
    %c0_i32_1 = arith.constant 0 : i32
    return %arg0, %c0_i32, %c0_i32_0 : i32, i32, i32
  }
  func.func @transform_2(%arg0: i32) -> (i32, i32, i32) {
    %c0_i32 = arith.constant 0 : i32
    %c0_i32_0 = arith.constant 0 : i32
    %c0_i32_1 = arith.constant 0 : i32
    return %arg0, %c0_i32, %c0_i32_0 : i32, i32, i32
  }
  func.func @transform_3(%arg0: i32) -> (i32, i32, i32, i32) {
    %c0_i32 = arith.constant 0 : i32
    %c0_i32_0 = arith.constant 0 : i32
    %c0_i32_1 = arith.constant 0 : i32
    %c0_i32_2 = arith.constant 0 : i32
    return %arg0, %c0_i32, %c0_i32_0, %c0_i32_1 : i32, i32, i32, i32
  }
  func.func @transform_4(%arg0: i32) -> (i32, i32, i32) {
    %c0_i32 = arith.constant 0 : i32
    %c0_i32_0 = arith.constant 0 : i32
    %c0_i32_1 = arith.constant 0 : i32
    return %arg0, %c0_i32, %c0_i32_0 : i32, i32, i32
  }
  func.func @transform_5(%arg0: i32) -> (i32, i32) {
    %c0_i32 = arith.constant 0 : i32
    %c0_i32_0 = arith.constant 0 : i32
    %c0_i32_1 = arith.constant 0 : i32
    return %c0_i32, %c0_i32_0 : i32, i32
  }
  func.func @transform_6(%arg0: i32) -> (i32, i32) {
    %c0_i32 = arith.constant 0 : i32
    %c0_i32_0 = arith.constant 0 : i32
    %c0_i32_1 = arith.constant 0 : i32
    return %c0_i32, %c0_i32_0 : i32, i32
  }
  func.func @transform_7(%arg0: i32) -> (i32, i32) {
    %c0_i32 = arith.constant 0 : i32
    %c0_i32_0 = arith.constant 0 : i32
    %c0_i32_1 = arith.constant 0 : i32
    return %c0_i32, %c0_i32_0 : i32, i32
  }
  func.func @transform_8(%arg0: i32) -> (i32, i32) {
    %c0_i32 = arith.constant 0 : i32
    %c0_i32_0 = arith.constant 0 : i32
    %c0_i32_1 = arith.constant 0 : i32
    return %c0_i32, %c0_i32_0 : i32, i32
  }
  func.func @transform_9(%arg0: i32) -> (i32, i32) {
    %c0_i32 = arith.constant 0 : i32
    %c0_i32_0 = arith.constant 0 : i32
    %c0_i32_1 = arith.constant 0 : i32
    return %c0_i32, %c0_i32_0 : i32, i32
  }
  func.func @transform_10(%arg0: i32) -> (i32, i32, i32) {
    %c0_i32 = arith.constant 0 : i32
    %c0_i32_0 = arith.constant 0 : i32
    %c0_i32_1 = arith.constant 0 : i32
    %c0_i32_2 = arith.constant 0 : i32
    return %c0_i32, %c0_i32_0, %c0_i32_1 : i32, i32, i32
  }
  func.func @transform_11(%arg0: i32) -> (i32, i32, i32) {
    %c0_i32 = arith.constant 0 : i32
    %c0_i32_0 = arith.constant 0 : i32
    %c0_i32_1 = arith.constant 0 : i32
    return %arg0, %c0_i32, %c0_i32_0 : i32, i32, i32
  }
}

</mosaic_0001>

<llo_original>
// kernel: tpu_custom_call.1
$region0: #{tpu_custom_call.1}
  #allocation0 [shape = 'u32[]', space=smem, size = 0x4, offset = 0x4, fixed_abs, tag = 'smem constant byte address 0x4 - core index']
  #allocation1 [shape = 'u32[144,128]{1,0:T(1,128)}', space=vmem, size = 0x12000, scoped, tag = 'internal scratch']
  #allocation2 [shape = 'f32[16,208]{1,0:T(8,128)}', space=vmem, size = 0x4000, scoped, tag = 'scratch operand']
  %s0 = inlined_call_operand.vmem [shape: f32[2,16,9], index: 0, kind: input, shape index: {}]
  %s1 = inlined_call_operand.vmem [shape: f32[2,16,3], index: 1, kind: input, shape index: {}]
  %s2 = inlined_call_operand.vmem [shape: f32[2,16,32], index: 2, kind: input, shape index: {}]
  %s3 = inlined_call_operand.vmem [shape: f32[2,16,16,8], index: 3, kind: input, shape index: {}]
  %s4 = inlined_call_operand.vmem [shape: f32[2,16,1], index: 4, kind: input, shape index: {}]
  %s5 = inlined_call_operand.vmem [shape: f32[32,336], index: 5, kind: input, shape index: {}]
  %s6 = inlined_call_operand.vmem [shape: f32[8,4], index: 6, kind: input, shape index: {}]
  %s7 = inlined_call_operand.vmem [shape: f32[1,20], index: 7, kind: input, shape index: {}]
  %s8 = inlined_call_operand.vmem [shape: f32[208,32], index: 8, kind: input, shape index: {}]
  %s9 = inlined_call_operand.vmem [shape: f32[8,32], index: 9, kind: input, shape index: {}]
  %s10 = inlined_call_operand.vmem [shape: f32[3,32,32], index: 10, kind: input, shape index: {}]
  %s11 = inlined_call_operand.hbm [shape: f32[2,16,32], index: 11, kind: output, shape index: {}]
  %s12 = sld [smem:[#allocation0]]
  $region77: #{tpu_custom_call.1} parent=0
    _
  %s14 = ssub.s32 1, %s12
  %s15 = scalar_select 0, %s14, %s12
  $region1: #{tpu_custom_call.1} parent=0
    #allocation3 [shape = 'u8[16384]{0}', space=vmem, size = 0x4000, scoped, tag = 'output window, operand 0']
    #allocation4 [shape = 's32[2]{0}', space=sflag, size = 0x8, scoped, tag = 'scoped memory for tpu_custom_call.1']
    %16 = vsyncpa [#allocation4], 0
    %s17 = scalar_lea.sflag [#allocation4], 1
    %18 = vsyncpa %s17, 0
    loop: start=0, step=1, limit=4
    $region2: #{tpu_custom_call.1} parent=1 // loop_pre_header
      _
    $region3: #{tpu_custom_call.1} parent=1 // loop_header
      %s20 = sphi 0, %s24
      %p21 = scmp.ge.s32.totalorder %s20, 4
      %s30 = sphi 0, %s32
      %s33 = sphi 0, %s30
      %s34 = sphi 0, %s33
      %s50 = sphi 0, %s34
      %s56 = sphi 0, %s58
      %s59 = sphi 0, %s56
      %s60 = sphi 0, %s59
      %s76 = sphi 0, %s60
      %s82 = sphi 0, %s84
      %s85 = sphi 0, %s82
      %s86 = sphi 0, %s85
      %s102 = sphi 0, %s86
      %s108 = sphi 0, %s110
      %s111 = sphi 0, %s108
      %s112 = sphi 0, %s111
      %s128 = sphi 0, %s112
      %s134 = sphi 0, %s136
      %s137 = sphi 0, %s134
      %s138 = sphi 0, %s137
      %s154 = sphi 0, %s138
      %s158 = sphi 0, %s158
      %s160 = sphi 0, %s158
      %s161 = sphi 0, %s160
      %s175 = sphi 0, %s161
      %s179 = sphi 0, %s179
      %s181 = sphi 0, %s179
      %s182 = sphi 0, %s181
      %s196 = sphi 0, %s182
      %s200 = sphi 0, %s200
      %s202 = sphi 0, %s200
      %s203 = sphi 0, %s202
      %s217 = sphi 0, %s203
      %s221 = sphi 0, %s221
      %s223 = sphi 0, %s221
      %s224 = sphi 0, %s223
      %s238 = sphi 0, %s224
      %s242 = sphi 0, %s242
      %s244 = sphi 0, %s242
      %s245 = sphi 0, %s244
      %s259 = sphi 0, %s245
      %s263 = sphi 0, %s263
      %s265 = sphi 0, %s263
      %s266 = sphi 0, %s265
      %s280 = sphi 0, %s266
      %s286 = sphi 0, %s288
      %s289 = sphi 0, %s286
      %s290 = sphi 0, %s289
      %s306 = sphi 0, %s290
    $region4: #{tpu_custom_call.1} parent=1 // loop_header_branch
      %23 = sbr.rel (%p21) target = $region8
    $region5: #{tpu_custom_call.1} parent=1 // loop_body
      %s25 = ssub.s32 %s20, 1
      %s26 = ssub.s32 %s20, 2
      %s27 = sadd.s32 %s20, 1
      %s28 = ssub.s32 %s20, %s27
      %p29 = scmp.eq.s32.totalorder %s28, 0
      %s31 = sadd.s32 %s30, 1
      %s32 = scalar_select %p29, %s30, %s31
      %p35 = pneg %p29
      %p36 = scmp.eq.s32.totalorder %s20, 1
      %p37 = por %p35, %p36
      %p38 = scmp.ne.s32.totalorder %s30, %s33
      %p39 = scmp.eq.s32.totalorder %s20, 0
      %p40 = por %p38, %p39
      %p41 = scmp.ne.s32.totalorder %s30, %s33
      %p42 = scmp.eq.s32.totalorder %s25, 1
      %p43 = por %p41, %p42
      %p44 = scmp.ne.s32.totalorder %s33, %s34
      %p45 = scmp.eq.s32.totalorder %s25, 0
      %p46 = por %p44, %p45
      %p47 = scmp.ne.s32.totalorder %s33, %s34
      %p48 = scmp.eq.s32.totalorder %s26, 1
      %p49 = por %p47, %p48
      %p51 = scmp.ne.s32.totalorder %s34, %s50
      %p52 = scmp.eq.s32.totalorder %s26, 0
      %p53 = por %p51, %p52
      %s54 = ssub.s32 %s20, %s27
      %p55 = scmp.eq.s32.totalorder %s54, 0
      %s57 = sadd.s32 %s56, 1
      %s58 = scalar_select %p55, %s56, %s57
      %p61 = pneg %p55
      %p62 = scmp.eq.s32.totalorder %s20, 1
      %p63 = por %p61, %p62
      %p64 = scmp.ne.s32.totalorder %s56, %s59
      %p65 = scmp.eq.s32.totalorder %s20, 0
      %p66 = por %p64, %p65
      %p67 = scmp.ne.s32.totalorder %s56, %s59
      %p68 = scmp.eq.s32.totalorder %s25, 1
      %p69 = por %p67, %p68
      %p70 = scmp.ne.s32.totalorder %s59, %s60
      %p71 = scmp.eq.s32.totalorder %s25, 0
      %p72 = por %p70, %p71
      %p73 = scmp.ne.s32.totalorder %s59, %s60
      %p74 = scmp.eq.s32.totalorder %s26, 1
      %p75 = por %p73, %p74
      %p77 = scmp.ne.s32.totalorder %s60, %s76
      %p78 = scmp.eq.s32.totalorder %s26, 0
      %p79 = por %p77, %p78
      %s80 = ssub.s32 %s20, %s27
      %p81 = scmp.eq.s32.totalorder %s80, 0
      %s83 = sadd.s32 %s82, 1
      %s84 = scalar_select %p81, %s82, %s83
      %p87 = pneg %p81
      %p88 = scmp.eq.s32.totalorder %s20, 1
      %p89 = por %p87, %p88
      %p90 = scmp.ne.s32.totalorder %s82, %s85
      %p91 = scmp.eq.s32.totalorder %s20, 0
      %p92 = por %p90, %p91
      %p93 = scmp.ne.s32.totalorder %s82, %s85
      %p94 = scmp.eq.s32.totalorder %s25, 1
      %p95 = por %p93, %p94
      %p96 = scmp.ne.s32.totalorder %s85, %s86
      %p97 = scmp.eq.s32.totalorder %s25, 0
      %p98 = por %p96, %p97
      %p99 = scmp.ne.s32.totalorder %s85, %s86
      %p100 = scmp.eq.s32.totalorder %s26, 1
      %p101 = por %p99, %p100
      %p103 = scmp.ne.s32.totalorder %s86, %s102
      %p104 = scmp.eq.s32.totalorder %s26, 0
      %p105 = por %p103, %p104
      %s106 = ssub.s32 %s20, %s27
      %p107 = scmp.eq.s32.totalorder %s106, 0
      %s109 = sadd.s32 %s108, 1
      %s110 = scalar_select %p107, %s108, %s109
      %p113 = pneg %p107
      %p114 = scmp.eq.s32.totalorder %s20, 1
      %p115 = por %p113, %p114
      %p116 = scmp.ne.s32.totalorder %s108, %s111
      %p117 = scmp.eq.s32.totalorder %s20, 0
      %p118 = por %p116, %p117
      %p119 = scmp.ne.s32.totalorder %s108, %s111
      %p120 = scmp.eq.s32.totalorder %s25, 1
      %p121 = por %p119, %p120
      %p122 = scmp.ne.s32.totalorder %s111, %s112
      %p123 = scmp.eq.s32.totalorder %s25, 0
      %p124 = por %p122, %p123
      %p125 = scmp.ne.s32.totalorder %s111, %s112
      %p126 = scmp.eq.s32.totalorder %s26, 1
      %p127 = por %p125, %p126
      %p129 = scmp.ne.s32.totalorder %s112, %s128
      %p130 = scmp.eq.s32.totalorder %s26, 0
      %p131 = por %p129, %p130
      %s132 = ssub.s32 %s20, %s27
      %p133 = scmp.eq.s32.totalorder %s132, 0
      %s135 = sadd.s32 %s134, 1
      %s136 = scalar_select %p133, %s134, %s135
      %p139 = pneg %p133
      %p140 = scmp.eq.s32.totalorder %s20, 1
      %p141 = por %p139, %p140
      %p142 = scmp.ne.s32.totalorder %s134, %s137
      %p143 = scmp.eq.s32.totalorder %s20, 0
      %p144 = por %p142, %p143
      %p145 = scmp.ne.s32.totalorder %s134, %s137
      %p146 = scmp.eq.s32.totalorder %s25, 1
      %p147 = por %p145, %p146
      %p148 = scmp.ne.s32.totalorder %s137, %s138
      %p149 = scmp.eq.s32.totalorder %s25, 0
      %p150 = por %p148, %p149
      %p151 = scmp.ne.s32.totalorder %s137, %s138
      %p152 = scmp.eq.s32.totalorder %s26, 1
      %p153 = por %p151, %p152
      %p155 = scmp.ne.s32.totalorder %s138, %s154
      %p156 = scmp.eq.s32.totalorder %s26, 0
      %p157 = por %p155, %p156
      %s159 = sadd.s32 %s158, 1
      %p162 = scmp.eq.s32.totalorder %s20, 1
      %p163 = scmp.ne.s32.totalorder %s158, %s160
      %p164 = scmp.eq.s32.totalorder %s20, 0
      %p165 = por %p163, %p164
      %p166 = scmp.ne.s32.totalorder %s158, %s160
      %p167 = scmp.eq.s32.totalorder %s25, 1
      %p168 = por %p166, %p167
      %p169 = scmp.ne.s32.totalorder %s160, %s161
      %p170 = scmp.eq.s32.totalorder %s25, 0
      %p171 = por %p169, %p170
      %p172 = scmp.ne.s32.totalorder %s160, %s161
      %p173 = scmp.eq.s32.totalorder %s26, 1
      %p174 = por %p172, %p173
      %p176 = scmp.ne.s32.totalorder %s161, %s175
      %p177 = scmp.eq.s32.totalorder %s26, 0
      %p178 = por %p176, %p177
      %s180 = sadd.s32 %s179, 1
      %p183 = scmp.eq.s32.totalorder %s20, 1
      %p184 = scmp.ne.s32.totalorder %s179, %s181
      %p185 = scmp.eq.s32.totalorder %s20, 0
      %p186 = por %p184, %p185
      %p187 = scmp.ne.s32.totalorder %s179, %s181
      %p188 = scmp.eq.s32.totalorder %s25, 1
      %p189 = por %p187, %p188
      %p190 = scmp.ne.s32.totalorder %s181, %s182
      %p191 = scmp.eq.s32.totalorder %s25, 0
      %p192 = por %p190, %p191
      %p193 = scmp.ne.s32.totalorder %s181, %s182
      %p194 = scmp.eq.s32.totalorder %s26, 1
      %p195 = por %p193, %p194
      %p197 = scmp.ne.s32.totalorder %s182, %s196
      %p198 = scmp.eq.s32.totalorder %s26, 0
      %p199 = por %p197, %p198
      %s201 = sadd.s32 %s200, 1
      %p204 = scmp.eq.s32.totalorder %s20, 1
      %p205 = scmp.ne.s32.totalorder %s200, %s202
      %p206 = scmp.eq.s32.totalorder %s20, 0
      %p207 = por %p205, %p206
      %p208 = scmp.ne.s32.totalorder %s200, %s202
      %p209 = scmp.eq.s32.totalorder %s25, 1
      %p210 = por %p208, %p209
      %p211 = scmp.ne.s32.totalorder %s202, %s203
      %p212 = scmp.eq.s32.totalorder %s25, 0
      %p213 = por %p211, %p212
      %p214 = scmp.ne.s32.totalorder %s202, %s203
      %p215 = scmp.eq.s32.totalorder %s26, 1
      %p216 = por %p214, %p215
      %p218 = scmp.ne.s32.totalorder %s203, %s217
      %p219 = scmp.eq.s32.totalorder %s26, 0
      %p220 = por %p218, %p219
      %s222 = sadd.s32 %s221, 1
      %p225 = scmp.eq.s32.totalorder %s20, 1
      %p226 = scmp.ne.s32.totalorder %s221, %s223
      %p227 = scmp.eq.s32.totalorder %s20, 0
      %p228 = por %p226, %p227
      %p229 = scmp.ne.s32.totalorder %s221, %s223
      %p230 = scmp.eq.s32.totalorder %s25, 1
      %p231 = por %p229, %p230
      %p232 = scmp.ne.s32.totalorder %s223, %s224
      %p233 = scmp.eq.s32.totalorder %s25, 0
      %p234 = por %p232, %p233
      %p235 = scmp.ne.s32.totalorder %s223, %s224
      %p236 = scmp.eq.s32.totalorder %s26, 1
      %p237 = por %p235, %p236
      %p239 = scmp.ne.s32.totalorder %s224, %s238
      %p240 = scmp.eq.s32.totalorder %s26, 0
      %p241 = por %p239, %p240
      %s243 = sadd.s32 %s242, 1
      %p246 = scmp.eq.s32.totalorder %s20, 1
      %p247 = scmp.ne.s32.totalorder %s242, %s244
      %p248 = scmp.eq.s32.totalorder %s20, 0
      %p249 = por %p247, %p248
      %p250 = scmp.ne.s32.totalorder %s242, %s244
      %p251 = scmp.eq.s32.totalorder %s25, 1
      %p252 = por %p250, %p251
      %p253 = scmp.ne.s32.totalorder %s244, %s245
      %p254 = scmp.eq.s32.totalorder %s25, 0
      %p255 = por %p253, %p254
      %p256 = scmp.ne.s32.totalorder %s244, %s245
      %p257 = scmp.eq.s32.totalorder %s26, 1
      %p258 = por %p256, %p257
      %p260 = scmp.ne.s32.totalorder %s245, %s259
      %p261 = scmp.eq.s32.totalorder %s26, 0
      %p262 = por %p260, %p261
      %s264 = sadd.s32 %s263, 1
      %p267 = scmp.eq.s32.totalorder %s20, 1
      %p268 = scmp.ne.s32.totalorder %s263, %s265
      %p269 = scmp.eq.s32.totalorder %s20, 0
      %p270 = por %p268, %p269
      %p271 = scmp.ne.s32.totalorder %s263, %s265
      %p272 = scmp.eq.s32.totalorder %s25, 1
      %p273 = por %p271, %p272
      %p274 = scmp.ne.s32.totalorder %s265, %s266
      %p275 = scmp.eq.s32.totalorder %s25, 0
      %p276 = por %p274, %p275
      %p277 = scmp.ne.s32.totalorder %s265, %s266
      %p278 = scmp.eq.s32.totalorder %s26, 1
      %p279 = por %p277, %p278
      %p281 = scmp.ne.s32.totalorder %s266, %s280
      %p282 = scmp.eq.s32.totalorder %s26, 0
      %p283 = por %p281, %p282
      %s284 = ssub.s32 %s20, %s27
      %p285 = scmp.eq.s32.totalorder %s284, 0
      %s287 = sadd.s32 %s286, 1
      %s288 = scalar_select %p285, %s286, %s287
      %p291 = pneg %p285
      %p292 = scmp.eq.s32.totalorder %s20, 1
      %p293 = por %p291, %p292
      %p294 = scmp.ne.s32.totalorder %s286, %s289
      %p295 = scmp.eq.s32.totalorder %s20, 0
      %p296 = por %p294, %p295
      %p297 = scmp.ne.s32.totalorder %s286, %s289
      %p298 = scmp.eq.s32.totalorder %s25, 1
      %p299 = por %p297, %p298
      %p300 = scmp.ne.s32.totalorder %s289, %s290
      %p301 = scmp.eq.s32.totalorder %s25, 0
      %p302 = por %p300, %p301
      %p303 = scmp.ne.s32.totalorder %s289, %s290
      %p304 = scmp.eq.s32.totalorder %s26, 1
      %p305 = por %p303, %p304
      %p307 = scmp.ne.s32.totalorder %s290, %s306
      %p308 = scmp.eq.s32.totalorder %s26, 0
      %p309 = por %p307, %p308
      %p310 = scmp.le.s32.totalorder 1, %s20
      %p311 = scmp.lt.s32.totalorder %s20, 3
      %p312 = pnand %p310, %p311
      %p313 = pneg %p312
      // Predicated region
      $region9: #{tpu_custom_call.1} parent=5 // pred_check
        _
      $region10: #{tpu_custom_call.1} parent=5 // pred_check_branch
        %315 = sbr.rel (%p312) target = $region12
      $region11: #{tpu_custom_call.1} parent=5 // pred_region
        %s316 = ssub.s32 %s20, 1
        // Predicated region
        $region13: #{tpu_custom_call.1} parent=11 // pred_check
          %p317 = pneg %p171
        $region14: #{tpu_custom_call.1} parent=11 // pred_check_branch
          %319 = sbr.rel (%p317) target = $region16
        $region15: #{tpu_custom_call.1} parent=11 // pred_region
          _
        $region16: #{tpu_custom_call.1} parent=11 // pred_fallthru
          _
        // Predicated region
        $region17: #{tpu_custom_call.1} parent=11 // pred_check
          %p320 = pneg %p192
        $region18: #{tpu_custom_call.1} parent=11 // pred_check_branch
          %322 = sbr.rel (%p320) target = $region20
        $region19: #{tpu_custom_call.1} parent=11 // pred_region
          _
        $region20: #{tpu_custom_call.1} parent=11 // pred_fallthru
          _
        // Predicated region
        $region21: #{tpu_custom_call.1} parent=11 // pred_check
          %p323 = pneg %p213
        $region22: #{tpu_custom_call.1} parent=11 // pred_check_branch
          %325 = sbr.rel (%p323) target = $region24
        $region23: #{tpu_custom_call.1} parent=11 // pred_region
          _
        $region24: #{tpu_custom_call.1} parent=11 // pred_fallthru
          _
        // Predicated region
        $region25: #{tpu_custom_call.1} parent=11 // pred_check
          %p326 = pneg %p234
        $region26: #{tpu_custom_call.1} parent=11 // pred_check_branch
          %328 = sbr.rel (%p326) target = $region28
        $region27: #{tpu_custom_call.1} parent=11 // pred_region
          _
        $region28: #{tpu_custom_call.1} parent=11 // pred_fallthru
          _
        // Predicated region
        $region29: #{tpu_custom_call.1} parent=11 // pred_check
          %p329 = pneg %p255
        $region30: #{tpu_custom_call.1} parent=11 // pred_check_branch
          %331 = sbr.rel (%p329) target = $region32
        $region31: #{tpu_custom_call.1} parent=11 // pred_region
          _
        $region32: #{tpu_custom_call.1} parent=11 // pred_fallthru
          _
        // Predicated region
        $region33: #{tpu_custom_call.1} parent=11 // pred_check
          %p332 = pneg %p276
        $region34: #{tpu_custom_call.1} parent=11 // pred_check_branch
          %334 = sbr.rel (%p332) target = $region36
        $region35: #{tpu_custom_call.1} parent=11 // pred_region
          _
        $region36: #{tpu_custom_call.1} parent=11 // pred_fallthru
          _
      $region12: #{tpu_custom_call.1} parent=5 // pred_fallthru
        _
      %p335 = scmp.lt.s32.totalorder %s20, 2
      // Predicated region
      $region37: #{tpu_custom_call.1} parent=5 // pred_check
        %p336 = pneg %p335
      $region38: #{tpu_custom_call.1} parent=5 // pred_check_branch
        %338 = sbr.rel (%p336) target = $region40
      $region39: #{tpu_custom_call.1} parent=5 // pred_region
        // Predicated region
        $region41: #{tpu_custom_call.1} parent=39 // pred_check
          %p339 = pneg %p40
        $region42: #{tpu_custom_call.1} parent=39 // pred_check_branch
          %341 = sbr.rel (%p339) target = $region44
        $region43: #{tpu_custom_call.1} parent=39 // pred_region
          %p342 = scmp.lt.s32.totalorder %s20, 1
          %s343 = scalar_select %p342, %s20, 1
          %s344 = smul.addr %s343, 2
          %s345 = smul.addr %s344, 8
          %s346 = scalar_lea.vmem %s0, %s345
        $region44: #{tpu_custom_call.1} parent=39 // pred_fallthru
          _
        // Predicated region
        $region45: #{tpu_custom_call.1} parent=39 // pred_check
          %p347 = pneg %p66
        $region46: #{tpu_custom_call.1} parent=39 // pred_check_branch
          %349 = sbr.rel (%p347) target = $region48
        $region47: #{tpu_custom_call.1} parent=39 // pred_region
          %p350 = scmp.lt.s32.totalorder %s20, 1
          %s351 = scalar_select %p350, %s20, 1
          %s352 = smul.addr %s351, 2
          %s353 = smul.addr %s352, 8
          %s354 = scalar_lea.vmem %s1, %s353
        $region48: #{tpu_custom_call.1} parent=39 // pred_fallthru
          _
        // Predicated region
        $region49: #{tpu_custom_call.1} parent=39 // pred_check
          %p355 = pneg %p92
        $region50: #{tpu_custom_call.1} parent=39 // pred_check_branch
          %357 = sbr.rel (%p355) target = $region52
        $region51: #{tpu_custom_call.1} parent=39 // pred_region
          %p358 = scmp.lt.s32.totalorder %s20, 1
          %s359 = scalar_select %p358, %s20, 1
          %s360 = smul.addr %s359, 2
          %s361 = smul.addr %s360, 8
          %s362 = scalar_lea.vmem %s2, %s361
        $region52: #{tpu_custom_call.1} parent=39 // pred_fallthru
          _
        // Predicated region
        $region53: #{tpu_custom_call.1} parent=39 // pred_check
          %p363 = pneg %p118
        $region54: #{tpu_custom_call.1} parent=39 // pred_check_branch
          %365 = sbr.rel (%p363) target = $region56
        $region55: #{tpu_custom_call.1} parent=39 // pred_region
          %p366 = scmp.lt.s32.totalorder %s20, 1
          %s367 = scalar_select %p366, %s20, 1
          %s368 = smul.addr %s367, 32
          %s369 = smul.addr %s368, 8
          %s370 = scalar_lea.vmem %s3, %s369
        $region56: #{tpu_custom_call.1} parent=39 // pred_fallthru
          _
        // Predicated region
        $region57: #{tpu_custom_call.1} parent=39 // pred_check
          %p371 = pneg %p144
        $region58: #{tpu_custom_call.1} parent=39 // pred_check_branch
          %373 = sbr.rel (%p371) target = $region60
        $region59: #{tpu_custom_call.1} parent=39 // pred_region
          %p374 = scmp.lt.s32.totalorder %s20, 1
          %s375 = scalar_select %p374, %s20, 1
          %s376 = smul.addr %s375, 2
          %s377 = smul.addr %s376, 8
          %s378 = scalar_lea.vmem %s4, %s377
        $region60: #{tpu_custom_call.1} parent=39 // pred_fallthru
          _
      $region40: #{tpu_custom_call.1} parent=5 // pred_fallthru
        _
      %p379 = scmp.le.s32.totalorder 1, %s20
      %p380 = scmp.lt.s32.totalorder %s20, 3
      %p381 = pnand %p379, %p380
      %p382 = pneg %p381
      // Predicated region
      $region61: #{tpu_custom_call.1} parent=5 // pred_check
        _
      $region62: #{tpu_custom_call.1} parent=5 // pred_check_branch
        %384 = sbr.rel (%p381) target = $region64
      $region63: #{tpu_custom_call.1} parent=5 // pred_region
        %s385 = ssub.s32 %s20, 1
        %p386 = scmp.lt.s32.totalorder %s25, 1
        %s387 = scalar_select %p386, %s25, 1
        %s388 = smul.addr %s387, 2
        %s389 = smul.addr %s388, 8
        %s390 = scalar_lea.vmem %s0, %s389
        %p391 = pneg %p46
        %p392 = pneg %p43
        %p393 = scmp.lt.s32.totalorder %s25, 1
        %s394 = scalar_select %p393, %s25, 1
        %s395 = smul.addr %s394, 2
        %s396 = smul.addr %s395, 8
        %s397 = scalar_lea.vmem %s1, %s396
        %p398 = pneg %p72
        %p399 = pneg %p69
        %p400 = scmp.lt.s32.totalorder %s25, 1
        %s401 = scalar_select %p400, %s25, 1
        %s402 = smul.addr %s401, 2
        %s403 = smul.addr %s402, 8
        %s404 = scalar_lea.vmem %s2, %s403
        %p405 = pneg %p98
        %p406 = pneg %p95
        %p407 = scmp.lt.s32.totalorder %s25, 1
        %s408 = scalar_select %p407, %s25, 1
        %s409 = smul.addr %s408, 32
        %s410 = smul.addr %s409, 8
        %s411 = scalar_lea.vmem %s3, %s410
        %p412 = pneg %p124
        %p413 = pneg %p121
        %p414 = scmp.lt.s32.totalorder %s25, 1
        %s415 = scalar_select %p414, %s25, 1
        %s416 = smul.addr %s415, 2
        %s417 = smul.addr %s416, 8
        %s418 = scalar_lea.vmem %s4, %s417
        %p419 = pneg %p150
        %p420 = pneg %p147
        %p421 = pneg %p171
        %p422 = pneg %p168
        %p423 = pneg %p192
        %p424 = pneg %p189
        %p425 = pneg %p213
        %p426 = pneg %p210
        %p427 = pneg %p234
        %p428 = pneg %p231
        %p429 = pneg %p255
        %p430 = pneg %p252
        %p431 = pneg %p276
        %p432 = pneg %p273
        %p433 = pneg %p302
        %p434 = pneg %p299
        %s435 = sand.u32 %s289, 1
        %s436 = scalar_lea.sflag [#allocation4], %s435
        %s437 = sand.u32 %s289, 1
        %s438 = smul.addr %s437, 16
        %s439 = scalar_lea.vmem [#allocation3], %s438
        %p440 = scmp.lt.s32.totalorder %s25, 1
        %s441 = scalar_select %p440, %s25, 1
        %s442 = smul.addr %s441, 2
        %s443 = smul.addr %s442, 8
        %s444 = scalar_lea.vmem %s0, %s443
        %p445 = scmp.lt.s32.totalorder %s25, 1
        %s446 = scalar_select %p445, %s25, 1
        %s447 = smul.addr %s446, 2
        %s448 = smul.addr %s447, 8
        %s449 = scalar_lea.vmem %s1, %s448
        %p450 = scmp.lt.s32.totalorder %s25, 1
        %s451 = scalar_select %p450, %s25, 1
        %s452 = smul.addr %s451, 2
        %s453 = smul.addr %s452, 8
        %s454 = scalar_lea.vmem %s2, %s453
        %p455 = scmp.lt.s32.totalorder %s25, 1
        %s456 = scalar_select %p455, %s25, 1
        %s457 = smul.addr %s456, 32
        %s458 = smul.addr %s457, 8
        %s459 = scalar_lea.vmem %s3, %s458
        %p460 = scmp.lt.s32.totalorder %s25, 1
        %s461 = scalar_select %p460, %s25, 1
        %s462 = smul.addr %s461, 2
        %s463 = smul.addr %s462, 8
        %s464 = scalar_lea.vmem %s4, %s463
        %v465 = vld [vmem:[%s5] sm:$0xff]
        %v466 = vld [vmem:[%s5 + $0x8] sm:$0xff]
        %v467 = vld [vmem:[%s5 + $0x10] sm:$0xff]
        %v468 = vld [vmem:[%s5 + $0x18] sm:$0xff]
        %v469 = vld [vmem:[%s5 + $0x20] sm:$0xff]
        %v470 = vld [vmem:[%s5 + $0x28] sm:$0xff]
        %v471 = vld [vmem:[%s5 + $0x30] sm:$0xff]
        %v472 = vld [vmem:[%s5 + $0x38] sm:$0xff]
        %v473 = vld [vmem:[%s5 + $0x40] sm:$0xff]
        %v474 = vld [vmem:[%s5 + $0x48] sm:$0xff]
        %v475 = vld [vmem:[%s5 + $0x50] sm:$0xff]
        %v476 = vld [vmem:[%s5 + $0x58] sm:$0xff]
        %v477 = vld [vmem:[%s6] sm:$0xff]
        %v478 = vld [vmem:[%s7] sm:$0x1]
        %v479 = vld [vmem:[%s8] sm:$0xff]
        %v480 = vld [vmem:[%s8 + $0x8] sm:$0xff]
        %v481 = vld [vmem:[%s8 + $0x10] sm:$0xff]
        %v482 = vld [vmem:[%s8 + $0x18] sm:$0xff]
        %v483 = vld [vmem:[%s8 + $0x20] sm:$0xff]
        %v484 = vld [vmem:[%s8 + $0x28] sm:$0xff]
        %v485 = vld [vmem:[%s8 + $0x30] sm:$0xff]
        %v486 = vld [vmem:[%s8 + $0x38] sm:$0xff]
        %v487 = vld [vmem:[%s8 + $0x40] sm:$0xff]
        %v488 = vld [vmem:[%s8 + $0x48] sm:$0xff]
        %v489 = vld [vmem:[%s8 + $0x50] sm:$0xff]
        %v490 = vld [vmem:[%s8 + $0x58] sm:$0xff]
        %v491 = vld [vmem:[%s8 + $0x60] sm:$0xff]
        %v492 = vld [vmem:[%s8 + $0x68] sm:$0xff]
        %v493 = vld [vmem:[%s8 + $0x70] sm:$0xff]
        %v494 = vld [vmem:[%s8 + $0x78] sm:$0xff]
        %v495 = vld [vmem:[%s8 + $0x80] sm:$0xff]
        %v496 = vld [vmem:[%s8 + $0x88] sm:$0xff]
        %v497 = vld [vmem:[%s8 + $0x90] sm:$0xff]
        %v498 = vld [vmem:[%s8 + $0x98] sm:$0xff]
        %v499 = vld [vmem:[%s8 + $0xa0] sm:$0xff]
        %v500 = vld [vmem:[%s8 + $0xa8] sm:$0xff]
        %v501 = vld [vmem:[%s8 + $0xb0] sm:$0xff]
        %v502 = vld [vmem:[%s8 + $0xb8] sm:$0xff]
        %v503 = vld [vmem:[%s8 + $0xc0] sm:$0xff]
        %v504 = vld [vmem:[%s8 + $0xc8] sm:$0xff]
        %v505 = vld [vmem:[%s9] sm:$0xff]
        %v506 = vld [vmem:[%s10] sm:$0xff]
        %v507 = vld [vmem:[%s10 + $0x8] sm:$0xff]
        %v508 = vld [vmem:[%s10 + $0x10] sm:$0xff]
        %v509 = vld [vmem:[%s10 + $0x18] sm:$0xff]
        %s510 = scalar_lea.vmem %s10, 32
        %v511 = vld [vmem:[%s510] sm:$0xff]
        %v512 = vld [vmem:[%s510 + $0x8] sm:$0xff]
        %v513 = vld [vmem:[%s510 + $0x10] sm:$0xff]
        %v514 = vld [vmem:[%s510 + $0x18] sm:$0xff]
        %s515 = scalar_lea.vmem %s10, 64
        %v516 = vld [vmem:[%s515] sm:$0xff]
        %v517 = vld [vmem:[%s515 + $0x8] sm:$0xff]
        %v518 = vld [vmem:[%s515 + $0x10] sm:$0xff]
        %v519 = vld [vmem:[%s515 + $0x18] sm:$0xff]
        %v520 = vld [vmem:[%s444] sm:$0xff]
        %v521 = vld [vmem:[%s444 + $0x8] sm:$0xff]
        %v522 = vld [vmem:[%s449] sm:$0xff]
        %v523 = vld [vmem:[%s449 + $0x8] sm:$0xff]
        %v524 = vld [vmem:[%s454] sm:$0xff]
        %v525 = vld [vmem:[%s454 + $0x8] sm:$0xff]
        %v526 = vld [vmem:[%s459] sm:$0xff]
        %v527 = vld [vmem:[%s459 + $0x8] sm:$0xff]
        %v528 = vld [vmem:[%s459 + $0x10] sm:$0xff]
        %v529 = vld [vmem:[%s459 + $0x18] sm:$0xff]
        %v530 = vld [vmem:[%s459 + $0x20] sm:$0xff]
        %v531 = vld [vmem:[%s459 + $0x28] sm:$0xff]
        %v532 = vld [vmem:[%s459 + $0x30] sm:$0xff]
        %v533 = vld [vmem:[%s459 + $0x38] sm:$0xff]
        %v534 = vld [vmem:[%s459 + $0x40] sm:$0xff]
        %v535 = vld [vmem:[%s459 + $0x48] sm:$0xff]
        %v536 = vld [vmem:[%s459 + $0x50] sm:$0xff]
        %v537 = vld [vmem:[%s459 + $0x58] sm:$0xff]
        %v538 = vld [vmem:[%s459 + $0x60] sm:$0xff]
        %v539 = vld [vmem:[%s459 + $0x68] sm:$0xff]
        %v540 = vld [vmem:[%s459 + $0x70] sm:$0xff]
        %v541 = vld [vmem:[%s459 + $0x78] sm:$0xff]
        %v542 = vld [vmem:[%s459 + $0x80] sm:$0xff]
        %v543 = vld [vmem:[%s459 + $0x88] sm:$0xff]
        %v544 = vld [vmem:[%s459 + $0x90] sm:$0xff]
        %v545 = vld [vmem:[%s459 + $0x98] sm:$0xff]
        %v546 = vld [vmem:[%s459 + $0xa0] sm:$0xff]
        %v547 = vld [vmem:[%s459 + $0xa8] sm:$0xff]
        %v548 = vld [vmem:[%s459 + $0xb0] sm:$0xff]
        %v549 = vld [vmem:[%s459 + $0xb8] sm:$0xff]
        %v550 = vld [vmem:[%s459 + $0xc0] sm:$0xff]
        %v551 = vld [vmem:[%s459 + $0xc8] sm:$0xff]
        %v552 = vld [vmem:[%s459 + $0xd0] sm:$0xff]
        %v553 = vld [vmem:[%s459 + $0xd8] sm:$0xff]
        %v554 = vld [vmem:[%s459 + $0xe0] sm:$0xff]
        %v555 = vld [vmem:[%s459 + $0xe8] sm:$0xff]
        %v556 = vld [vmem:[%s459 + $0xf0] sm:$0xff]
        %v557 = vld [vmem:[%s459 + $0xf8] sm:$0xff]
        %v558 = vld [vmem:[%s464] sm:$0xff]
        %v559 = vld [vmem:[%s464 + $0x8] sm:$0xff]
        %vm560 = vcmask 261120
        %v562 = vsel %vm560, %v524, 0
        %v565 = vsel %vm560, %v525, 0
        %567 = vmatprep.subr.mxu0 0.0
        %568 = vmatpush1.msra.mxu0 0.0
        %569 = vmatprep.subr.mxu0 0.0
        %570 = vmatpush1.msra.mxu0 0.0
        %571 = vmatprep.subr.mxu0 0.0
        %572 = vmatpush1.msra.mxu0 0.0
        %573 = vmatprep.subr.mxu0 0.0
        %574 = vmatpush1.msra.mxu0 0.0
        %575 = vmatprep.subr.mxu0 0.0
        %576 = vmatpush1.msra.mxu0 0.0
        %577 = vmatprep.subr.mxu0 0.0
        %578 = vmatpush1.msra.mxu0 0.0
        %579 = vmatprep.subr.mxu0 0.0
        %580 = vmatpush1.msra.mxu0 0.0
        %581 = vmatprep.subr.mxu0 0.0
        %582 = vmatpush1.msra.mxu0 0.0
        %583 = vmatprep.subr.mxu0 0.0
        %584 = vmatpush1.msra.mxu0 0.0
        %585 = vmatprep.subr.mxu0 0.0
        %586 = vmatpush1.msra.mxu0 0.0
        %587 = vmatprep.subr.mxu0 0.0
        %588 = vmatpush1.msra.mxu0 0.0
        %589 = vmatprep.subr.mxu0 0.0
        %590 = vmatpush1.msra.mxu0 0.0
        %591 = vmatprep.subr.mxu0 %v475
        %592 = vmatpush1.msra.mxu0 %v474
        %593 = vmatprep.subr.mxu0 %v472
        %594 = vmatpush1.msra.mxu0 %v471
        %595 = vmatprep.subr.mxu0 %v469
        %596 = vmatpush1.msra.mxu0 %v468
        %597 = vmatprep.subr.mxu0 %v466
        %598 = vmatpush1.msra.mxu0 %v465
        %599 = vmatprep.subr.mxu0 0.0
        %600 = vmatpush2.msra.mxu0 0.0
        %601 = vmatprep.subr.mxu0 0.0
        %602 = vmatpush2.msra.mxu0 0.0
        %603 = vmatprep.subr.mxu0 0.0
        %604 = vmatpush2.msra.mxu0 0.0
        %605 = vmatprep.subr.mxu0 0.0
        %606 = vmatpush2.msra.mxu0 0.0
        %607 = vmatprep.subr.mxu0 0.0
        %608 = vmatpush2.msra.mxu0 0.0
        %609 = vmatprep.subr.mxu0 0.0
        %610 = vmatpush2.msra.mxu0 0.0
        %611 = vmatprep.subr.mxu0 0.0
        %612 = vmatpush2.msra.mxu0 0.0
        %613 = vmatprep.subr.mxu0 0.0
        %614 = vmatpush2.msra.mxu0 0.0
        %615 = vmatprep.subr.mxu0 0.0
        %616 = vmatpush2.msra.mxu0 0.0
        %617 = vmatprep.subr.mxu0 0.0
        %618 = vmatpush2.msra.mxu0 0.0
        %619 = vmatprep.subr.mxu0 0.0
        %620 = vmatpush2.msra.mxu0 0.0
        %621 = vmatprep.subr.mxu0 0.0
        %622 = vmatpush2.msra.mxu0 0.0
        %623 = vmatprep.subr.mxu0 0.0
        %624 = vmatpush2.msra.mxu0 0.0
        %625 = vmatprep.subr.mxu0 0.0
        %626 = vmatpush2.msra.mxu0 0.0
        %627 = vmatprep.subr.mxu0 0.0
        %628 = vmatpush2.msra.mxu0 0.0
        %629 = vmatprep.subr.mxu0 0.0
        %630 = vmatpush2.msra.mxu0 0.0
        %631 = vmatprep.mubr.f32.mxu0 0.0
        %632 = vmatmul.mubr.f32.gmra.mxu0 %v562
        %v633 = vpop.f32.mrf.mxu0
        %v634 = vadd.f32 0.0, %v633
        %v635 = vpop.f32.mrf.mxu0
        %v636 = vadd.f32 0.0, %v635
        %637 = vmatprep.mubr.f32.mxu0 0.0
        %638 = vmatmul.mubr.f32.gmra.mxu0 %v565
        %v639 = vpop.f32.mrf.mxu0
        %v640 = vadd.f32 0.0, %v639
        %v641 = vpop.f32.mrf.mxu0
        %v642 = vadd.f32 0.0, %v641
        %643 = vdwg.mxu0
        %644 = vmatprep.subr.mxu0 0.0
        %645 = vmatpush1.msra.mxu0 0.0
        %646 = vmatprep.subr.mxu0 0.0
        %647 = vmatpush1.msra.mxu0 0.0
        %648 = vmatprep.subr.mxu0 0.0
        %649 = vmatpush1.msra.mxu0 0.0
        %650 = vmatprep.subr.mxu0 0.0
        %651 = vmatpush1.msra.mxu0 0.0
        %652 = vmatprep.subr.mxu0 0.0
        %653 = vmatpush1.msra.mxu0 0.0
        %654 = vmatprep.subr.mxu0 0.0
        %655 = vmatpush1.msra.mxu0 0.0
        %656 = vmatprep.subr.mxu0 0.0
        %657 = vmatpush1.msra.mxu0 0.0
        %658 = vmatprep.subr.mxu0 0.0
        %659 = vmatpush1.msra.mxu0 0.0
        %660 = vmatprep.subr.mxu0 0.0
        %661 = vmatpush1.msra.mxu0 0.0
        %662 = vmatprep.subr.mxu0 0.0
        %663 = vmatpush1.msra.mxu0 0.0
        %664 = vmatprep.subr.mxu0 0.0
        %665 = vmatpush1.msra.mxu0 0.0
        %666 = vmatprep.subr.mxu0 0.0
        %667 = vmatpush1.msra.mxu0 0.0
        %668 = vmatprep.subr.mxu0 0.0
        %669 = vmatpush1.msra.mxu0 %v476
        %670 = vmatprep.subr.mxu0 0.0
        %671 = vmatpush1.msra.mxu0 %v473
        %672 = vmatprep.subr.mxu0 0.0
        %673 = vmatpush1.msra.mxu0 %v470
        %674 = vmatprep.subr.mxu0 0.0
        %675 = vmatpush1.msra.mxu0 %v467
        %676 = vmatprep.subr.mxu0 0.0
        %677 = vmatpush2.msra.mxu0 0.0
        %678 = vmatprep.subr.mxu0 0.0
        %679 = vmatpush2.msra.mxu0 0.0
        %680 = vmatprep.subr.mxu0 0.0
        %681 = vmatpush2.msra.mxu0 0.0
        %682 = vmatprep.subr.mxu0 0.0
        %683 = vmatpush2.msra.mxu0 0.0
        %684 = vmatprep.subr.mxu0 0.0
        %685 = vmatpush2.msra.mxu0 0.0
        %686 = vmatprep.subr.mxu0 0.0
        %687 = vmatpush2.msra.mxu0 0.0
        %688 = vmatprep.subr.mxu0 0.0
        %689 = vmatpush2.msra.mxu0 0.0
        %690 = vmatprep.subr.mxu0 0.0
        %691 = vmatpush2.msra.mxu0 0.0
        %692 = vmatprep.subr.mxu0 0.0
        %693 = vmatpush2.msra.mxu0 0.0
        %694 = vmatprep.subr.mxu0 0.0
        %695 = vmatpush2.msra.mxu0 0.0
        %696 = vmatprep.subr.mxu0 0.0
        %697 = vmatpush2.msra.mxu0 0.0
        %698 = vmatprep.subr.mxu0 0.0
        %699 = vmatpush2.msra.mxu0 0.0
        %700 = vmatprep.subr.mxu0 0.0
        %701 = vmatpush2.msra.mxu0 0.0
        %702 = vmatprep.subr.mxu0 0.0
        %703 = vmatpush2.msra.mxu0 0.0
        %704 = vmatprep.subr.mxu0 0.0
        %705 = vmatpush2.msra.mxu0 0.0
        %706 = vmatprep.subr.mxu0 0.0
        %707 = vmatpush2.msra.mxu0 0.0
        %708 = vmatprep.mubr.f32.mxu0 0.0
        %709 = vmatmul.mubr.f32.gmra.mxu0 %v562
        %v710 = vpop.f32.mrf.mxu0
        %v711 = vadd.f32 0.0, %v710
        %v712 = vpop.f32.mrf.mxu0
        %713 = vmatprep.mubr.f32.mxu0 0.0
        %714 = vmatmul.mubr.f32.gmra.mxu0 %v565
        %v715 = vpop.f32.mrf.mxu0
        %v716 = vadd.f32 0.0, %v715
        %v717 = vpop.f32.mrf.mxu0
        %718 = vdwg.mxu0
        %720 = vset.pattern.permute.xlu0 0
        %721 = vperm.xlu0 %720, %v520
        %v722 = vpop.permute.xlu0 %721
        %725 = vset.pattern.permute.xlu0 0
        %726 = vperm.xlu0 %725, %v521
        %v727 = vpop.permute.xlu0 %726
        %v729 = vmul.f32 %v722, %v636
        %v730 = vmul.f32 %v727, %v642
        %731 = vset.pattern.permute.xlu0 1
        %732 = vperm.xlu0 %731, %v520
        %v733 = vpop.permute.xlu0 %732
        %735 = vset.pattern.permute.xlu0 1
        %736 = vperm.xlu0 %735, %v521
        %v737 = vpop.permute.xlu0 %736
        %v739 = vmul.f32 %v733, %v636
        %v740 = vmul.f32 %v737, %v642
        %743 = vrot.lane.b32.xlu0 %v739, 112
        %v744 = vpop.permute.xlu0 %743
        %745 = vrot.lane.b32.xlu0 %v740, 112
        %v746 = vpop.permute.xlu0 %745
        %v749 = vadd.f32 %v729, %v744
        %v750 = vadd.f32 %v730, %v746
        %751 = vset.pattern.permute.xlu0 2
        %752 = vperm.xlu0 %751, %v520
        %v753 = vpop.permute.xlu0 %752
        %755 = vset.pattern.permute.xlu0 2
        %756 = vperm.xlu0 %755, %v521
        %v757 = vpop.permute.xlu0 %756
        %v759 = vmul.f32 %v753, %v636
        %v760 = vmul.f32 %v757, %v642
        %763 = vrot.lane.b32.xlu0 %v759, 96
        %v764 = vpop.permute.xlu0 %763
        %765 = vrot.lane.b32.xlu0 %v760, 96
        %v766 = vpop.permute.xlu0 %765
        %v769 = vadd.f32 %v749, %v764
        %v770 = vadd.f32 %v750, %v766
        %772 = vset.pattern.permute.xlu0 0
        %773 = vperm.xlu0 %772, %v522
        %v774 = vpop.permute.xlu0 %773
        %777 = vset.pattern.permute.xlu0 0
        %778 = vperm.xlu0 %777, %v523
        %v779 = vpop.permute.xlu0 %778
        %v781 = vadd.f32 %v769, %v774
        %v782 = vadd.f32 %v770, %v779
        %783 = vset.pattern.permute.xlu0 3
        %784 = vperm.xlu0 %783, %v520
        %v785 = vpop.permute.xlu0 %784
        %787 = vset.pattern.permute.xlu0 3
        %788 = vperm.xlu0 %787, %v521
        %v789 = vpop.permute.xlu0 %788
        %v791 = vmul.f32 %v785, %v636
        %v792 = vmul.f32 %v789, %v642
        %793 = vset.pattern.permute.xlu0 4
        %794 = vperm.xlu0 %793, %v520
        %v795 = vpop.permute.xlu0 %794
        %797 = vset.pattern.permute.xlu0 4
        %798 = vperm.xlu0 %797, %v521
        %v799 = vpop.permute.xlu0 %798
        %v801 = vmul.f32 %v795, %v636
        %v802 = vmul.f32 %v799, %v642
        %805 = vrot.lane.b32.xlu0 %v801, 112
        %v806 = vpop.permute.xlu0 %805
        %807 = vrot.lane.b32.xlu0 %v802, 112
        %v808 = vpop.permute.xlu0 %807
        %v811 = vadd.f32 %v791, %v806
        %v812 = vadd.f32 %v792, %v808
        %813 = vset.pattern.permute.xlu0 5
        %814 = vperm.xlu0 %813, %v520
        %v815 = vpop.permute.xlu0 %814
        %817 = vset.pattern.permute.xlu0 5
        %818 = vperm.xlu0 %817, %v521
        %v819 = vpop.permute.xlu0 %818
        %v821 = vmul.f32 %v815, %v636
        %v822 = vmul.f32 %v819, %v642
        %825 = vrot.lane.b32.xlu0 %v821, 96
        %v826 = vpop.permute.xlu0 %825
        %827 = vrot.lane.b32.xlu0 %v822, 96
        %v828 = vpop.permute.xlu0 %827
        %v831 = vadd.f32 %v811, %v826
        %v832 = vadd.f32 %v812, %v828
        %833 = vset.pattern.permute.xlu0 1
        %834 = vperm.xlu0 %833, %v522
        %v835 = vpop.permute.xlu0 %834
        %837 = vset.pattern.permute.xlu0 1
        %838 = vperm.xlu0 %837, %v523
        %v839 = vpop.permute.xlu0 %838
        %v841 = vadd.f32 %v831, %v835
        %v842 = vadd.f32 %v832, %v839
        %843 = vset.pattern.permute.xlu0 6
        %844 = vperm.xlu0 %843, %v520
        %v845 = vpop.permute.xlu0 %844
        %847 = vset.pattern.permute.xlu0 6
        %848 = vperm.xlu0 %847, %v521
        %v849 = vpop.permute.xlu0 %848
        %v851 = vmul.f32 %v845, %v636
        %v852 = vmul.f32 %v849, %v642
        %853 = vset.pattern.permute.xlu0 7
        %854 = vperm.xlu0 %853, %v520
        %v855 = vpop.permute.xlu0 %854
        %857 = vset.pattern.permute.xlu0 7
        %858 = vperm.xlu0 %857, %v521
        %v859 = vpop.permute.xlu0 %858
        %v861 = vmul.f32 %v855, %v636
        %v862 = vmul.f32 %v859, %v642
        %865 = vrot.lane.b32.xlu0 %v861, 112
        %v866 = vpop.permute.xlu0 %865
        %867 = vrot.lane.b32.xlu0 %v862, 112
        %v868 = vpop.permute.xlu0 %867
        %v871 = vadd.f32 %v851, %v866
        %v872 = vadd.f32 %v852, %v868
        %873 = vset.pattern.permute.xlu0 8
        %874 = vperm.xlu0 %873, %v520
        %v875 = vpop.permute.xlu0 %874
        %877 = vset.pattern.permute.xlu0 8
        %878 = vperm.xlu0 %877, %v521
        %v879 = vpop.permute.xlu0 %878
        %v881 = vmul.f32 %v875, %v636
        %v882 = vmul.f32 %v879, %v642
        %885 = vrot.lane.b32.xlu0 %v881, 96
        %v886 = vpop.permute.xlu0 %885
        %887 = vrot.lane.b32.xlu0 %v882, 96
        %v888 = vpop.permute.xlu0 %887
        %v891 = vadd.f32 %v871, %v886
        %v892 = vadd.f32 %v872, %v888
        %893 = vset.pattern.permute.xlu0 2
        %894 = vperm.xlu0 %893, %v522
        %v895 = vpop.permute.xlu0 %894
        %897 = vset.pattern.permute.xlu0 2
        %898 = vperm.xlu0 %897, %v523
        %v899 = vpop.permute.xlu0 %898
        %v901 = vadd.f32 %v891, %v895
        %v902 = vadd.f32 %v892, %v899
        %v903 = vmul.f32 %v733, %v711
        %v904 = vmul.f32 %v737, %v716
        %907 = vrot.lane.b32.xlu0 %v903, 112
        %v908 = vpop.permute.xlu0 %907
        %909 = vrot.lane.b32.xlu0 %v904, 112
        %v910 = vpop.permute.xlu0 %909
        %v913 = vadd.f32 %v729, %v908
        %v914 = vadd.f32 %v730, %v910
        %v915 = vmul.f32 %v753, %v711
        %v916 = vmul.f32 %v757, %v716
        %919 = vrot.lane.b32.xlu0 %v915, 96
        %v920 = vpop.permute.xlu0 %919
        %921 = vrot.lane.b32.xlu0 %v916, 96
        %v922 = vpop.permute.xlu0 %921
        %v925 = vadd.f32 %v913, %v920
        %v926 = vadd.f32 %v914, %v922
        %v927 = vadd.f32 %v925, %v774
        %v928 = vadd.f32 %v926, %v779
        %v929 = vmul.f32 %v795, %v711
        %v930 = vmul.f32 %v799, %v716
        %933 = vrot.lane.b32.xlu0 %v929, 112
        %v934 = vpop.permute.xlu0 %933
        %935 = vrot.lane.b32.xlu0 %v930, 112
        %v936 = vpop.permute.xlu0 %935
        %v939 = vadd.f32 %v791, %v934
        %v940 = vadd.f32 %v792, %v936
        %v941 = vmul.f32 %v815, %v711
        %v942 = vmul.f32 %v819, %v716
        %945 = vrot.lane.b32.xlu0 %v941, 96
        %v946 = vpop.permute.xlu0 %945
        %947 = vrot.lane.b32.xlu0 %v942, 96
        %v948 = vpop.permute.xlu0 %947
        %v951 = vadd.f32 %v939, %v946
        %v952 = vadd.f32 %v940, %v948
        %v953 = vadd.f32 %v951, %v835
        %v954 = vadd.f32 %v952, %v839
        %v955 = vmul.f32 %v855, %v711
        %v956 = vmul.f32 %v859, %v716
        %959 = vrot.lane.b32.xlu0 %v955, 112
        %v960 = vpop.permute.xlu0 %959
        %961 = vrot.lane.b32.xlu0 %v956, 112
        %v962 = vpop.permute.xlu0 %961
        %v965 = vadd.f32 %v851, %v960
        %v966 = vadd.f32 %v852, %v962
        %v967 = vmul.f32 %v875, %v711
        %v968 = vmul.f32 %v879, %v716
        %971 = vrot.lane.b32.xlu0 %v967, 96
        %v972 = vpop.permute.xlu0 %971
        %973 = vrot.lane.b32.xlu0 %v968, 96
        %v974 = vpop.permute.xlu0 %973
        %v977 = vadd.f32 %v965, %v972
        %v978 = vadd.f32 %v966, %v974
        %v979 = vadd.f32 %v977, %v895
        %v980 = vadd.f32 %v978, %v899
        %v981 = vmul.f32 %v722, %v711
        %v982 = vmul.f32 %v727, %v716
        %v983 = vadd.f32 %v981, %v908
        %v984 = vadd.f32 %v982, %v910
        %v985 = vadd.f32 %v983, %v920
        %v986 = vadd.f32 %v984, %v922
        %v987 = vadd.f32 %v985, %v774
        %v988 = vadd.f32 %v986, %v779
        %v989 = vmul.f32 %v785, %v711
        %v990 = vmul.f32 %v789, %v716
        %v991 = vadd.f32 %v989, %v934
        %v992 = vadd.f32 %v990, %v936
        %v993 = vadd.f32 %v991, %v946
        %v994 = vadd.f32 %v992, %v948
        %v995 = vadd.f32 %v993, %v835
        %v996 = vadd.f32 %v994, %v839
        %v997 = vmul.f32 %v845, %v711
        %v998 = vmul.f32 %v849, %v716
        %v999 = vadd.f32 %v997, %v960
        %v1000 = vadd.f32 %v998, %v962
        %v1001 = vadd.f32 %v999, %v972
        %v1002 = vadd.f32 %v1000, %v974
        %v1003 = vadd.f32 %v1001, %v895
        %v1004 = vadd.f32 %v1002, %v899
        %v1005 = vmul.f32 %v781, %v781
        %v1006 = vmul.f32 %v782, %v782
        %v1007 = vmul.f32 %v841, %v841
        %v1008 = vmul.f32 %v842, %v842
        %v1009 = vadd.f32 %v1005, %v1007
        %v1010 = vadd.f32 %v1006, %v1008
        %v1011 = vmul.f32 %v901, %v901
        %v1012 = vmul.f32 %v902, %v902
        %v1013 = vadd.f32 %v1009, %v1011
        %v1014 = vadd.f32 %v1010, %v1012
        %v1015 = vmul.f32 %v927, %v927
        %v1016 = vmul.f32 %v928, %v928
        %v1017 = vmul.f32 %v953, %v953
        %v1018 = vmul.f32 %v954, %v954
        %v1019 = vadd.f32 %v1015, %v1017
        %v1020 = vadd.f32 %v1016, %v1018
        %v1021 = vmul.f32 %v979, %v979
        %v1022 = vmul.f32 %v980, %v980
        %v1023 = vadd.f32 %v1019, %v1021
        %v1024 = vadd.f32 %v1020, %v1022
        %v1026 = vlaneseq
        %v1027 = vshrl.u32 %v1026, 7
        %v1028 = vsub.s32 0, %v1027
        %v1029 = vrot.slane %v478, %v1028
        %1030 = vrot.lane.b32.xlu0 %v1029, 64
        %v1031 = vpop.permute.xlu0 %1030
        %v1033 = vmul.f32 %v781, %v1031
        %v1034 = vmul.f32 %v782, %v1031
        %v1035 = vmul.f32 %v841, %v1031
        %v1036 = vmul.f32 %v842, %v1031
        %v1037 = vmul.f32 %v901, %v1031
        %v1038 = vmul.f32 %v902, %v1031
        %vm1039 = vcmask 64512
        %v1041 = vsel %vm1039, %v526, 0
        %v1044 = vsel %vm1039, %v527, 0
        %v1047 = vsel %vm1039, %v528, 0
        %v1050 = vsel %vm1039, %v529, 0
        %v1053 = vsel %vm1039, %v530, 0
        %v1056 = vsel %vm1039, %v531, 0
        %v1059 = vsel %vm1039, %v532, 0
        %v1062 = vsel %vm1039, %v533, 0
        %v1065 = vsel %vm1039, %v534, 0
        %v1068 = vsel %vm1039, %v535, 0
        %v1071 = vsel %vm1039, %v536, 0
        %v1074 = vsel %vm1039, %v537, 0
        %v1077 = vsel %vm1039, %v538, 0
        %v1080 = vsel %vm1039, %v539, 0
        %v1083 = vsel %vm1039, %v540, 0
        %v1086 = vsel %vm1039, %v541, 0
        %v1089 = vsel %vm1039, %v542, 0
        %v1092 = vsel %vm1039, %v543, 0
        %v1095 = vsel %vm1039, %v544, 0
        %v1098 = vsel %vm1039, %v545, 0
        %v1101 = vsel %vm1039, %v546, 0
        %v1104 = vsel %vm1039, %v547, 0
        %v1107 = vsel %vm1039, %v548, 0
        %v1110 = vsel %vm1039, %v549, 0
        %v1113 = vsel %vm1039, %v550, 0
        %v1116 = vsel %vm1039, %v551, 0
        %v1119 = vsel %vm1039, %v552, 0
        %v1122 = vsel %vm1039, %v553, 0
        %v1125 = vsel %vm1039, %v554, 0
        %v1128 = vsel %vm1039, %v555, 0
        %v1131 = vsel %vm1039, %v556, 0
        %v1134 = vsel %vm1039, %v557, 0
        %1136 = vmatprep.subr.mxu0 0.0
        %1137 = vmatpush1.msra.mxu0 0.0
        %1138 = vmatprep.subr.mxu0 0.0
        %1139 = vmatpush1.msra.mxu0 0.0
        %1140 = vmatprep.subr.mxu0 0.0
        %1141 = vmatpush1.msra.mxu0 0.0
        %1142 = vmatprep.subr.mxu0 0.0
        %1143 = vmatpush1.msra.mxu0 0.0
        %1144 = vmatprep.subr.mxu0 0.0
        %1145 = vmatpush1.msra.mxu0 0.0
        %1146 = vmatprep.subr.mxu0 0.0
        %1147 = vmatpush1.msra.mxu0 0.0
        %1148 = vmatprep.subr.mxu0 0.0
        %1149 = vmatpush1.msra.mxu0 0.0
        %1150 = vmatprep.subr.mxu0 0.0
        %1151 = vmatpush1.msra.mxu0 0.0
        %1152 = vmatprep.subr.mxu0 0.0
        %1153 = vmatpush1.msra.mxu0 0.0
        %1154 = vmatprep.subr.mxu0 0.0
        %1155 = vmatpush1.msra.mxu0 0.0
        %1156 = vmatprep.subr.mxu0 0.0
        %1157 = vmatpush1.msra.mxu0 0.0
        %1158 = vmatprep.subr.mxu0 0.0
        %1159 = vmatpush1.msra.mxu0 0.0
        %1160 = vmatprep.subr.mxu0 0.0
        %1161 = vmatpush1.msra.mxu0 0.0
        %1162 = vmatprep.subr.mxu0 0.0
        %1163 = vmatpush1.msra.mxu0 0.0
        %1164 = vmatprep.subr.mxu0 0.0
        %1165 = vmatpush1.msra.mxu0 0.0
        %1166 = vmatprep.subr.mxu0 0.0
        %1167 = vmatpush1.msra.mxu0 %v477
        %1168 = vmatprep.subr.mxu0 0.0
        %1169 = vmatpush2.msra.mxu0 0.0
        %1170 = vmatprep.subr.mxu0 0.0
        %1171 = vmatpush2.msra.mxu0 0.0
        %1172 = vmatprep.subr.mxu0 0.0
        %1173 = vmatpush2.msra.mxu0 0.0
        %1174 = vmatprep.subr.mxu0 0.0
        %1175 = vmatpush2.msra.mxu0 0.0
        %1176 = vmatprep.subr.mxu0 0.0
        %1177 = vmatpush2.msra.mxu0 0.0
        %1178 = vmatprep.subr.mxu0 0.0
        %1179 = vmatpush2.msra.mxu0 0.0
        %1180 = vmatprep.subr.mxu0 0.0
        %1181 = vmatpush2.msra.mxu0 0.0
        %1182 = vmatprep.subr.mxu0 0.0
        %1183 = vmatpush2.msra.mxu0 0.0
        %1184 = vmatprep.subr.mxu0 0.0
        %1185 = vmatpush2.msra.mxu0 0.0
        %1186 = vmatprep.subr.mxu0 0.0
        %1187 = vmatpush2.msra.mxu0 0.0
        %1188 = vmatprep.subr.mxu0 0.0
        %1189 = vmatpush2.msra.mxu0 0.0
        %1190 = vmatprep.subr.mxu0 0.0
        %1191 = vmatpush2.msra.mxu0 0.0
        %1192 = vmatprep.subr.mxu0 0.0
        %1193 = vmatpush2.msra.mxu0 0.0
        %1194 = vmatprep.subr.mxu0 0.0
        %1195 = vmatpush2.msra.mxu0 0.0
        %1196 = vmatprep.subr.mxu0 0.0
        %1197 = vmatpush2.msra.mxu0 0.0
        %1198 = vmatprep.subr.mxu0 0.0
        %1199 = vmatpush2.msra.mxu0 0.0
        %1200 = vmatprep.mubr.f32.mxu0 0.0
        %1201 = vmatmul.mubr.f32.gmra.mxu0 %v1041
        %v1202 = vpop.f32.mrf.mxu0
        %v1203 = vadd.f32 0.0, %v1202
        %v1204 = vpop.f32.mrf.mxu0
        %1205 = vmatprep.mubr.f32.mxu0 0.0
        %1206 = vmatmul.mubr.f32.gmra.mxu0 %v1044
        %v1207 = vpop.f32.mrf.mxu0
        %v1208 = vadd.f32 0.0, %v1207
        %v1209 = vpop.f32.mrf.mxu0
        %1210 = vmatprep.mubr.f32.mxu0 0.0
        %1211 = vmatmul.mubr.f32.gmra.mxu0 %v1047
        %v1212 = vpop.f32.mrf.mxu0
        %v1213 = vadd.f32 0.0, %v1212
        %v1214 = vpop.f32.mrf.mxu0
        %1215 = vmatprep.mubr.f32.mxu0 0.0
        %1216 = vmatmul.mubr.f32.gmra.mxu0 %v1050
        %v1217 = vpop.f32.mrf.mxu0
        %v1218 = vadd.f32 0.0, %v1217
        %v1219 = vpop.f32.mrf.mxu0
        %1220 = vmatprep.mubr.f32.mxu0 0.0
        %1221 = vmatmul.mubr.f32.gmra.mxu0 %v1053
        %v1222 = vpop.f32.mrf.mxu0
        %v1223 = vadd.f32 0.0, %v1222
        %v1224 = vpop.f32.mrf.mxu0
        %1225 = vmatprep.mubr.f32.mxu0 0.0
        %1226 = vmatmul.mubr.f32.gmra.mxu0 %v1056
        %v1227 = vpop.f32.mrf.mxu0
        %v1228 = vadd.f32 0.0, %v1227
        %v1229 = vpop.f32.mrf.mxu0
        %1230 = vmatprep.mubr.f32.mxu0 0.0
        %1231 = vmatmul.mubr.f32.gmra.mxu0 %v1059
        %v1232 = vpop.f32.mrf.mxu0
        %v1233 = vadd.f32 0.0, %v1232
        %v1234 = vpop.f32.mrf.mxu0
        %1235 = vmatprep.mubr.f32.mxu0 0.0
        %1236 = vmatmul.mubr.f32.gmra.mxu0 %v1062
        %v1237 = vpop.f32.mrf.mxu0
        %v1238 = vadd.f32 0.0, %v1237
        %v1239 = vpop.f32.mrf.mxu0
        %1240 = vmatprep.mubr.f32.mxu0 0.0
        %1241 = vmatmul.mubr.f32.gmra.mxu0 %v1065
        %v1242 = vpop.f32.mrf.mxu0
        %v1243 = vadd.f32 0.0, %v1242
        %v1244 = vpop.f32.mrf.mxu0
        %1245 = vmatprep.mubr.f32.mxu0 0.0
        %1246 = vmatmul.mubr.f32.gmra.mxu0 %v1068
        %v1247 = vpop.f32.mrf.mxu0
        %v1248 = vadd.f32 0.0, %v1247
        %v1249 = vpop.f32.mrf.mxu0
        %1250 = vmatprep.mubr.f32.mxu0 0.0
        %1251 = vmatmul.mubr.f32.gmra.mxu0 %v1071
        %v1252 = vpop.f32.mrf.mxu0
        %v1253 = vadd.f32 0.0, %v1252
        %v1254 = vpop.f32.mrf.mxu0
        %1255 = vmatprep.mubr.f32.mxu0 0.0
        %1256 = vmatmul.mubr.f32.gmra.mxu0 %v1074
        %v1257 = vpop.f32.mrf.mxu0
        %v1258 = vadd.f32 0.0, %v1257
        %v1259 = vpop.f32.mrf.mxu0
        %1260 = vmatprep.mubr.f32.mxu0 0.0
        %1261 = vmatmul.mubr.f32.gmra.mxu0 %v1077
        %v1262 = vpop.f32.mrf.mxu0
        %v1263 = vadd.f32 0.0, %v1262
        %v1264 = vpop.f32.mrf.mxu0
        %1265 = vmatprep.mubr.f32.mxu0 0.0
        %1266 = vmatmul.mubr.f32.gmra.mxu0 %v1080
        %v1267 = vpop.f32.mrf.mxu0
        %v1268 = vadd.f32 0.0, %v1267
        %v1269 = vpop.f32.mrf.mxu0
        %1270 = vmatprep.mubr.f32.mxu0 0.0
        %1271 = vmatmul.mubr.f32.gmra.mxu0 %v1083
        %v1272 = vpop.f32.mrf.mxu0
        %v1273 = vadd.f32 0.0, %v1272
        %v1274 = vpop.f32.mrf.mxu0
        %1275 = vmatprep.mubr.f32.mxu0 0.0
        %1276 = vmatmul.mubr.f32.gmra.mxu0 %v1086
        %v1277 = vpop.f32.mrf.mxu0
        %v1278 = vadd.f32 0.0, %v1277
        %v1279 = vpop.f32.mrf.mxu0
        %1280 = vmatprep.mubr.f32.mxu0 0.0
        %1281 = vmatmul.mubr.f32.gmra.mxu0 %v1089
        %v1282 = vpop.f32.mrf.mxu0
        %v1283 = vadd.f32 0.0, %v1282
        %v1284 = vpop.f32.mrf.mxu0
        %1285 = vmatprep.mubr.f32.mxu0 0.0
        %1286 = vmatmul.mubr.f32.gmra.mxu0 %v1092
        %v1287 = vpop.f32.mrf.mxu0
        %v1288 = vadd.f32 0.0, %v1287
        %v1289 = vpop.f32.mrf.mxu0
        %1290 = vmatprep.mubr.f32.mxu0 0.0
        %1291 = vmatmul.mubr.f32.gmra.mxu0 %v1095
        %v1292 = vpop.f32.mrf.mxu0
        %v1293 = vadd.f32 0.0, %v1292
        %v1294 = vpop.f32.mrf.mxu0
        %1295 = vmatprep.mubr.f32.mxu0 0.0
        %1296 = vmatmul.mubr.f32.gmra.mxu0 %v1098
        %v1297 = vpop.f32.mrf.mxu0
        %v1298 = vadd.f32 0.0, %v1297
        %v1299 = vpop.f32.mrf.mxu0
        %1300 = vmatprep.mubr.f32.mxu0 0.0
        %1301 = vmatmul.mubr.f32.gmra.mxu0 %v1101
        %v1302 = vpop.f32.mrf.mxu0
        %v1303 = vadd.f32 0.0, %v1302
        %v1304 = vpop.f32.mrf.mxu0
        %1305 = vmatprep.mubr.f32.mxu0 0.0
        %1306 = vmatmul.mubr.f32.gmra.mxu0 %v1104
        %v1307 = vpop.f32.mrf.mxu0
        %v1308 = vadd.f32 0.0, %v1307
        %v1309 = vpop.f32.mrf.mxu0
        %1310 = vmatprep.mubr.f32.mxu0 0.0
        %1311 = vmatmul.mubr.f32.gmra.mxu0 %v1107
        %v1312 = vpop.f32.mrf.mxu0
        %v1313 = vadd.f32 0.0, %v1312
        %v1314 = vpop.f32.mrf.mxu0
        %1315 = vmatprep.mubr.f32.mxu0 0.0
        %1316 = vmatmul.mubr.f32.gmra.mxu0 %v1110
        %v1317 = vpop.f32.mrf.mxu0
        %v1318 = vadd.f32 0.0, %v1317
        %v1319 = vpop.f32.mrf.mxu0
        %1320 = vmatprep.mubr.f32.mxu0 0.0
        %1321 = vmatmul.mubr.f32.gmra.mxu0 %v1113
        %v1322 = vpop.f32.mrf.mxu0
        %v1323 = vadd.f32 0.0, %v1322
        %v1324 = vpop.f32.mrf.mxu0
        %1325 = vmatprep.mubr.f32.mxu0 0.0
        %1326 = vmatmul.mubr.f32.gmra.mxu0 %v1116
        %v1327 = vpop.f32.mrf.mxu0
        %v1328 = vadd.f32 0.0, %v1327
        %v1329 = vpop.f32.mrf.mxu0
        %1330 = vmatprep.mubr.f32.mxu0 0.0
        %1331 = vmatmul.mubr.f32.gmra.mxu0 %v1119
        %v1332 = vpop.f32.mrf.mxu0
        %v1333 = vadd.f32 0.0, %v1332
        %v1334 = vpop.f32.mrf.mxu0
        %1335 = vmatprep.mubr.f32.mxu0 0.0
        %1336 = vmatmul.mubr.f32.gmra.mxu0 %v1122
        %v1337 = vpop.f32.mrf.mxu0
        %v1338 = vadd.f32 0.0, %v1337
        %v1339 = vpop.f32.mrf.mxu0
        %1340 = vmatprep.mubr.f32.mxu0 0.0
        %1341 = vmatmul.mubr.f32.gmra.mxu0 %v1125
        %v1342 = vpop.f32.mrf.mxu0
        %v1343 = vadd.f32 0.0, %v1342
        %v1344 = vpop.f32.mrf.mxu0
        %1345 = vmatprep.mubr.f32.mxu0 0.0
        %1346 = vmatmul.mubr.f32.gmra.mxu0 %v1128
        %v1347 = vpop.f32.mrf.mxu0
        %v1348 = vadd.f32 0.0, %v1347
        %v1349 = vpop.f32.mrf.mxu0
        %1350 = vmatprep.mubr.f32.mxu0 0.0
        %1351 = vmatmul.mubr.f32.gmra.mxu0 %v1131
        %v1352 = vpop.f32.mrf.mxu0
        %v1353 = vadd.f32 0.0, %v1352
        %v1354 = vpop.f32.mrf.mxu0
        %1355 = vmatprep.mubr.f32.mxu0 0.0
        %1356 = vmatmul.mubr.f32.gmra.mxu0 %v1134
        %v1357 = vpop.f32.mrf.mxu0
        %v1358 = vadd.f32 0.0, %v1357
        %v1359 = vpop.f32.mrf.mxu0
        %1360 = vdwg.mxu0
        %1361 = vxpose.xlu0.b32.start [1/16] %v558, 128
        %1362 = vxpose.xlu0.b32.cont [2/16] %v559, 128
        %1363 = vxpose.xlu0.b32.cont [3/16] 0.0, 128
        %1364 = vxpose.xlu0.b32.cont [4/16] 0.0, 128
        %1365 = vxpose.xlu0.b32.cont [5/16] 0.0, 128
        %1366 = vxpose.xlu0.b32.cont [6/16] 0.0, 128
        %1367 = vxpose.xlu0.b32.cont [7/16] 0.0, 128
        %1368 = vxpose.xlu0.b32.cont [8/16] 0.0, 128
        %1369 = vxpose.xlu0.b32.cont [9/16] 0.0, 128
        %1370 = vxpose.xlu0.b32.cont [10/16] 0.0, 128
        %1371 = vxpose.xlu0.b32.cont [11/16] 0.0, 128
        %1372 = vxpose.xlu0.b32.cont [12/16] 0.0, 128
        %1373 = vxpose.xlu0.b32.cont [13/16] 0.0, 128
        %1374 = vxpose.xlu0.b32.cont [14/16] 0.0, 128
        %1375 = vxpose.xlu0.b32.cont [15/16] 0.0, 128
        %1376 = vxpose.xlu0.b32.end [16/16] 0.0, 128
        %v1377 = vpop.trf.xlu0
        %v1378 = vpop.trf.xlu0
        %v1379 = vpop.trf.xlu0
        %v1380 = vpop.trf.xlu0
        %v1381 = vpop.trf.xlu0
        %v1382 = vpop.trf.xlu0
        %v1383 = vpop.trf.xlu0
        %v1384 = vpop.trf.xlu0
        %v1385 = vpop.trf.xlu0
        %v1386 = vpop.trf.xlu0
        %v1387 = vpop.trf.xlu0
        %v1388 = vpop.trf.xlu0
        %v1389 = vpop.trf.xlu0
        %v1390 = vpop.trf.xlu0
        %v1391 = vpop.trf.xlu0
        %v1392 = vpop.trf.xlu0
        %1394 = vset.pattern.permute.xlu0 0
        %1395 = vperm.xlu0 %1394, %v558
        %v1396 = vpop.permute.xlu0 %1395
        %1399 = vset.pattern.permute.xlu0 0
        %1400 = vperm.xlu0 %1399, %v559
        %v1401 = vpop.permute.xlu0 %1400
        %v1403 = vlaneseq
        %v1404 = vshrl.u32 %v1403, 7
        %v1405 = vsub.s32 0, %v1404
        %v1406 = vrot.slane %v1377, %v1405
        %v1407 = vmul.f32 %v1396, %v1406
        %v1408 = vmul.f32 %v1401, %v1406
        %vm1409 = vcmp.gt.f32.partialorder %v1407, 0.5
        %vm1410 = vcmp.gt.f32.partialorder %v1408, 0.5
        %vm1411 = vcmp.gt.f32.partialorder %v558, 0.5
        %vm1412 = vcmp.gt.f32.partialorder %v559, 0.5
        %1415 = vrot.lane.b32.xlu0 %v1013, 64
        %v1416 = vpop.permute.xlu0 %1415
        %1417 = vrot.lane.b32.xlu0 %v1014, 64
        %v1418 = vpop.permute.xlu0 %1417
        %vm1421 = vcmask 31744
        %v1422 = vsel %vm1421, %v1416, 0.0
        %1423 = vadd.xlane.f32.xlu0 %v1422
        %v1424 = vpop.xlane.xlu0 %1423
        %v1425 = vsel %vm1421, %v1418, 0.0
        %1426 = vadd.xlane.f32.xlu0 %v1425
        %v1427 = vpop.xlane.xlu0 %1426
        %v1429 = vmul.f32 %v1424, %v1029
        %v1430 = vmul.f32 %v1427, %v1029
        %1433 = vrot.lane.b32.xlu0 %v1023, 16
        %v1434 = vpop.permute.xlu0 %1433
        %1435 = vrot.lane.b32.xlu0 %v1024, 16
        %v1436 = vpop.permute.xlu0 %1435
        %v1439 = vsel %vm1421, %v1434, 0.0
        %1440 = vadd.xlane.f32.xlu0 %v1439
        %v1441 = vpop.xlane.xlu0 %1440
        %v1442 = vsel %vm1421, %v1436, 0.0
        %1443 = vadd.xlane.f32.xlu0 %v1442
        %v1444 = vpop.xlane.xlu0 %1443
        %v1445 = vmul.f32 %v1441, %v1029
        %v1446 = vmul.f32 %v1444, %v1029
        %1449 = vrot.lane.b32.xlu0 %v1033, 80
        %v1450 = vpop.permute.xlu0 %1449
        %1451 = vrot.lane.b32.xlu0 %v1034, 80
        %v1452 = vpop.permute.xlu0 %1451
        %1457 = vrot.lane.b32.xlu0 %v1035, 84
        %v1458 = vpop.permute.xlu0 %1457
        %1459 = vrot.lane.b32.xlu0 %v1036, 84
        %v1460 = vpop.permute.xlu0 %1459
        %1465 = vrot.lane.b32.xlu0 %v1037, 88
        %v1466 = vpop.permute.xlu0 %1465
        %1467 = vrot.lane.b32.xlu0 %v1038, 88
        %v1468 = vpop.permute.xlu0 %1467
        %1473 = vrot.lane.b32.xlu0 %v1429, 12
        %v1474 = vpop.permute.xlu0 %1473
        %1475 = vrot.lane.b32.xlu0 %v1430, 12
        %v1476 = vpop.permute.xlu0 %1475
        %vm1479 = vcmask 130048
        %v1480 = vsel %vm1479, %v634, %v1450
        %v1481 = vsel %vm1479, %v640, %v1452
        %vm1482 = vcmask 162816
        %v1483 = vsel %vm1482, %v1480, %v1458
        %v1484 = vsel %vm1482, %v1481, %v1460
        %vm1485 = vcmask 195584
        %v1486 = vsel %vm1485, %v1483, %v1466
        %v1487 = vsel %vm1485, %v1484, %v1468
        %vm1488 = vcmask 228352
        %v1489 = vsel %vm1488, %v1486, %v1474
        %v1490 = vsel %vm1488, %v1487, %v1476
        %vm1491 = vcmask 236544
        %v1492 = vsel %vm1491, %v1489, 1.0
        %v1493 = vsel %vm1491, %v1490, 1.0
        %1496 = vrot.lane.b32.xlu0 %v634, 64
        %v1497 = vpop.permute.xlu0 %1496
        %1498 = vrot.lane.b32.xlu0 %v640, 64
        %v1499 = vpop.permute.xlu0 %1498
        %1504 = vrot.lane.b32.xlu0 %v927, 32
        %v1505 = vpop.permute.xlu0 %1504
        %1506 = vrot.lane.b32.xlu0 %v928, 32
        %v1507 = vpop.permute.xlu0 %1506
        %1512 = vrot.lane.b32.xlu0 %v953, 36
        %v1513 = vpop.permute.xlu0 %1512
        %1514 = vrot.lane.b32.xlu0 %v954, 36
        %v1515 = vpop.permute.xlu0 %1514
        %1520 = vrot.lane.b32.xlu0 %v979, 40
        %v1521 = vpop.permute.xlu0 %1520
        %1522 = vrot.lane.b32.xlu0 %v980, 40
        %v1523 = vpop.permute.xlu0 %1522
        %1528 = vrot.lane.b32.xlu0 %v1445, 13
        %v1529 = vpop.permute.xlu0 %1528
        %1530 = vrot.lane.b32.xlu0 %v1446, 13
        %v1531 = vpop.permute.xlu0 %1530
        %v1534 = vsel %vm1479, %v1497, %v1505
        %v1535 = vsel %vm1479, %v1499, %v1507
        %v1536 = vsel %vm1482, %v1534, %v1513
        %v1537 = vsel %vm1482, %v1535, %v1515
        %v1538 = vsel %vm1485, %v1536, %v1521
        %v1539 = vsel %vm1485, %v1537, %v1523
        %v1540 = vsel %vm1488, %v1538, 1.0
        %v1541 = vsel %vm1488, %v1539, 1.0
        %v1542 = vsel %vm1491, %v1540, %v1529
        %v1543 = vsel %vm1491, %v1541, %v1531
        %v1544 = vadd.f32 %v1203, 0.0
        %v1545 = vadd.f32 %v1208, 0.0
        %v1546 = vadd.f32 %v1213, 0.0
        %v1547 = vadd.f32 %v1218, 0.0
        %v1548 = vadd.f32 %v1223, 0.0
        %v1549 = vadd.f32 %v1228, 0.0
        %v1550 = vadd.f32 %v1233, 0.0
        %v1551 = vadd.f32 %v1238, 0.0
        %v1552 = vadd.f32 %v1243, 0.0
        %v1553 = vadd.f32 %v1248, 0.0
        %v1554 = vadd.f32 %v1253, 0.0
        %v1555 = vadd.f32 %v1258, 0.0
        %v1556 = vadd.f32 %v1263, 0.0
        %v1557 = vadd.f32 %v1268, 0.0
        %v1558 = vadd.f32 %v1273, 0.0
        %v1559 = vadd.f32 %v1278, 0.0
        %v1560 = vadd.f32 %v1283, 0.0
        %v1561 = vadd.f32 %v1288, 0.0
        %v1562 = vadd.f32 %v1293, 0.0
        %v1563 = vadd.f32 %v1298, 0.0
        %v1564 = vadd.f32 %v1303, 0.0
        %v1565 = vadd.f32 %v1308, 0.0
        %v1566 = vadd.f32 %v1313, 0.0
        %v1567 = vadd.f32 %v1318, 0.0
        %v1568 = vadd.f32 %v1323, 0.0
        %v1569 = vadd.f32 %v1328, 0.0
        %v1570 = vadd.f32 %v1333, 0.0
        %v1571 = vadd.f32 %v1338, 0.0
        %v1572 = vadd.f32 %v1343, 0.0
        %v1573 = vadd.f32 %v1348, 0.0
        %v1574 = vadd.f32 %v1353, 0.0
        %v1575 = vadd.f32 %v1358, 0.0
        %1608 = vset.pattern.permute.xlu0 0
        %1609 = vperm.xlu0 %1608, %v1544
        %v1610 = vpop.permute.xlu0 %1609
        %1611 = vset.pattern.permute.xlu0 0
        %1612 = vperm.xlu0 %1611, %v1545
        %v1613 = vpop.permute.xlu0 %1612
        %1614 = vset.pattern.permute.xlu0 0
        %1615 = vperm.xlu0 %1614, %v1546
        %v1616 = vpop.permute.xlu0 %1615
        %1617 = vset.pattern.permute.xlu0 0
        %1618 = vperm.xlu0 %1617, %v1547
        %v1619 = vpop.permute.xlu0 %1618
        %1620 = vset.pattern.permute.xlu0 0
        %1621 = vperm.xlu0 %1620, %v1548
        %v1622 = vpop.permute.xlu0 %1621
        %1623 = vset.pattern.permute.xlu0 0
        %1624 = vperm.xlu0 %1623, %v1549
        %v1625 = vpop.permute.xlu0 %1624
        %1626 = vset.pattern.permute.xlu0 0
        %1627 = vperm.xlu0 %1626, %v1550
        %v1628 = vpop.permute.xlu0 %1627
        %1629 = vset.pattern.permute.xlu0 0
        %1630 = vperm.xlu0 %1629, %v1551
        %v1631 = vpop.permute.xlu0 %1630
        %1632 = vset.pattern.permute.xlu0 0
        %1633 = vperm.xlu0 %1632, %v1552
        %v1634 = vpop.permute.xlu0 %1633
        %1635 = vset.pattern.permute.xlu0 0
        %1636 = vperm.xlu0 %1635, %v1553
        %v1637 = vpop.permute.xlu0 %1636
        %1638 = vset.pattern.permute.xlu0 0
        %1639 = vperm.xlu0 %1638, %v1554
        %v1640 = vpop.permute.xlu0 %1639
        %1641 = vset.pattern.permute.xlu0 0
        %1642 = vperm.xlu0 %1641, %v1555
        %v1643 = vpop.permute.xlu0 %1642
        %1644 = vset.pattern.permute.xlu0 0
        %1645 = vperm.xlu0 %1644, %v1556
        %v1646 = vpop.permute.xlu0 %1645
        %1647 = vset.pattern.permute.xlu0 0
        %1648 = vperm.xlu0 %1647, %v1557
        %v1649 = vpop.permute.xlu0 %1648
        %1650 = vset.pattern.permute.xlu0 0
        %1651 = vperm.xlu0 %1650, %v1558
        %v1652 = vpop.permute.xlu0 %1651
        %1653 = vset.pattern.permute.xlu0 0
        %1654 = vperm.xlu0 %1653, %v1559
        %v1655 = vpop.permute.xlu0 %1654
        %1656 = vset.pattern.permute.xlu0 0
        %1657 = vperm.xlu0 %1656, %v1560
        %v1658 = vpop.permute.xlu0 %1657
        %1659 = vset.pattern.permute.xlu0 0
        %1660 = vperm.xlu0 %1659, %v1561
        %v1661 = vpop.permute.xlu0 %1660
        %1662 = vset.pattern.permute.xlu0 0
        %1663 = vperm.xlu0 %1662, %v1562
        %v1664 = vpop.permute.xlu0 %1663
        %1665 = vset.pattern.permute.xlu0 0
        %1666 = vperm.xlu0 %1665, %v1563
        %v1667 = vpop.permute.xlu0 %1666
        %1668 = vset.pattern.permute.xlu0 0
        %1669 = vperm.xlu0 %1668, %v1564
        %v1670 = vpop.permute.xlu0 %1669
        %1671 = vset.pattern.permute.xlu0 0
        %1672 = vperm.xlu0 %1671, %v1565
        %v1673 = vpop.permute.xlu0 %1672
        %1674 = vset.pattern.permute.xlu0 0
        %1675 = vperm.xlu0 %1674, %v1566
        %v1676 = vpop.permute.xlu0 %1675
        %1677 = vset.pattern.permute.xlu0 0
        %1678 = vperm.xlu0 %1677, %v1567
        %v1679 = vpop.permute.xlu0 %1678
        %1680 = vset.pattern.permute.xlu0 0
        %1681 = vperm.xlu0 %1680, %v1568
        %v1682 = vpop.permute.xlu0 %1681
        %1683 = vset.pattern.permute.xlu0 0
        %1684 = vperm.xlu0 %1683, %v1569
        %v1685 = vpop.permute.xlu0 %1684
        %1686 = vset.pattern.permute.xlu0 0
        %1687 = vperm.xlu0 %1686, %v1570
        %v1688 = vpop.permute.xlu0 %1687
        %1689 = vset.pattern.permute.xlu0 0
        %1690 = vperm.xlu0 %1689, %v1571
        %v1691 = vpop.permute.xlu0 %1690
        %1692 = vset.pattern.permute.xlu0 0
        %1693 = vperm.xlu0 %1692, %v1572
        %v1694 = vpop.permute.xlu0 %1693
        %1695 = vset.pattern.permute.xlu0 0
        %1696 = vperm.xlu0 %1695, %v1573
        %v1697 = vpop.permute.xlu0 %1696
        %1698 = vset.pattern.permute.xlu0 0
        %1699 = vperm.xlu0 %1698, %v1574
        %v1700 = vpop.permute.xlu0 %1699
        %1701 = vset.pattern.permute.xlu0 0
        %1702 = vperm.xlu0 %1701, %v1575
        %v1703 = vpop.permute.xlu0 %1702
        %v1704 = vlaneseq
        %v1705 = vand.u32 %v1704, 127
        %v1706 = vlaneseq
        %v1707 = vshrl.u32 %v1706, 7
        %v1708 = vsub.s32 %v1705, %v1707
        %v1709 = vrot.slane %v1610, %v1708
        %v1710 = vadd.s32 %v1705, 4294967288
        %v1711 = vlaneseq
        %v1712 = vshrl.u32 %v1711, 7
        %v1713 = vsub.s32 %v1710, %v1712
        %v1714 = vrot.slane %v1613, %v1713
        %vm1715 = vcmask 130112
        %v1716 = vsel %vm1715, %v1714, %v1709
        %v1717 = vlaneseq
        %v1718 = vshrl.u32 %v1717, 7
        %v1719 = vsub.s32 %v1705, %v1718
        %v1720 = vrot.slane %v1616, %v1719
        %v1721 = vlaneseq
        %v1722 = vshrl.u32 %v1721, 7
        %v1723 = vsub.s32 %v1710, %v1722
        %v1724 = vrot.slane %v1619, %v1723
        %v1725 = vsel %vm1715, %v1724, %v1720
        %v1726 = vlaneseq
        %v1727 = vshrl.u32 %v1726, 7
        %v1728 = vsub.s32 %v1705, %v1727
        %v1729 = vrot.slane %v1622, %v1728
        %v1730 = vlaneseq
        %v1731 = vshrl.u32 %v1730, 7
        %v1732 = vsub.s32 %v1710, %v1731
        %v1733 = vrot.slane %v1625, %v1732
        %v1734 = vsel %vm1715, %v1733, %v1729
        %v1735 = vlaneseq
        %v1736 = vshrl.u32 %v1735, 7
        %v1737 = vsub.s32 %v1705, %v1736
        %v1738 = vrot.slane %v1628, %v1737
        %v1739 = vlaneseq
        %v1740 = vshrl.u32 %v1739, 7
        %v1741 = vsub.s32 %v1710, %v1740
        %v1742 = vrot.slane %v1631, %v1741
        %v1743 = vsel %vm1715, %v1742, %v1738
        %v1744 = vlaneseq
        %v1745 = vshrl.u32 %v1744, 7
        %v1746 = vsub.s32 %v1705, %v1745
        %v1747 = vrot.slane %v1634, %v1746
        %v1748 = vlaneseq
        %v1749 = vshrl.u32 %v1748, 7
        %v1750 = vsub.s32 %v1710, %v1749
        %v1751 = vrot.slane %v1637, %v1750
        %v1752 = vsel %vm1715, %v1751, %v1747
        %v1753 = vlaneseq
        %v1754 = vshrl.u32 %v1753, 7
        %v1755 = vsub.s32 %v1705, %v1754
        %v1756 = vrot.slane %v1640, %v1755
        %v1757 = vlaneseq
        %v1758 = vshrl.u32 %v1757, 7
        %v1759 = vsub.s32 %v1710, %v1758
        %v1760 = vrot.slane %v1643, %v1759
        %v1761 = vsel %vm1715, %v1760, %v1756
        %v1762 = vlaneseq
        %v1763 = vshrl.u32 %v1762, 7
        %v1764 = vsub.s32 %v1705, %v1763
        %v1765 = vrot.slane %v1646, %v1764
        %v1766 = vlaneseq
        %v1767 = vshrl.u32 %v1766, 7
        %v1768 = vsub.s32 %v1710, %v1767
        %v1769 = vrot.slane %v1649, %v1768
        %v1770 = vsel %vm1715, %v1769, %v1765
        %v1771 = vlaneseq
        %v1772 = vshrl.u32 %v1771, 7
        %v1773 = vsub.s32 %v1705, %v1772
        %v1774 = vrot.slane %v1652, %v1773
        %v1775 = vlaneseq
        %v1776 = vshrl.u32 %v1775, 7
        %v1777 = vsub.s32 %v1710, %v1776
        %v1778 = vrot.slane %v1655, %v1777
        %v1779 = vsel %vm1715, %v1778, %v1774
        %v1780 = vlaneseq
        %v1781 = vshrl.u32 %v1780, 7
        %v1782 = vsub.s32 %v1705, %v1781
        %v1783 = vrot.slane %v1658, %v1782
        %v1784 = vlaneseq
        %v1785 = vshrl.u32 %v1784, 7
        %v1786 = vsub.s32 %v1710, %v1785
        %v1787 = vrot.slane %v1661, %v1786
        %v1788 = vsel %vm1715, %v1787, %v1783
        %v1789 = vlaneseq
        %v1790 = vshrl.u32 %v1789, 7
        %v1791 = vsub.s32 %v1705, %v1790
        %v1792 = vrot.slane %v1664, %v1791
        %v1793 = vlaneseq
        %v1794 = vshrl.u32 %v1793, 7
        %v1795 = vsub.s32 %v1710, %v1794
        %v1796 = vrot.slane %v1667, %v1795
        %v1797 = vsel %vm1715, %v1796, %v1792
        %v1798 = vlaneseq
        %v1799 = vshrl.u32 %v1798, 7
        %v1800 = vsub.s32 %v1705, %v1799
        %v1801 = vrot.slane %v1670, %v1800
        %v1802 = vlaneseq
        %v1803 = vshrl.u32 %v1802, 7
        %v1804 = vsub.s32 %v1710, %v1803
        %v1805 = vrot.slane %v1673, %v1804
        %v1806 = vsel %vm1715, %v1805, %v1801
        %v1807 = vlaneseq
        %v1808 = vshrl.u32 %v1807, 7
        %v1809 = vsub.s32 %v1705, %v1808
        %v1810 = vrot.slane %v1676, %v1809
        %v1811 = vlaneseq
        %v1812 = vshrl.u32 %v1811, 7
        %v1813 = vsub.s32 %v1710, %v1812
        %v1814 = vrot.slane %v1679, %v1813
        %v1815 = vsel %vm1715, %v1814, %v1810
        %v1816 = vlaneseq
        %v1817 = vshrl.u32 %v1816, 7
        %v1818 = vsub.s32 %v1705, %v1817
        %v1819 = vrot.slane %v1682, %v1818
        %v1820 = vlaneseq
        %v1821 = vshrl.u32 %v1820, 7
        %v1822 = vsub.s32 %v1710, %v1821
        %v1823 = vrot.slane %v1685, %v1822
        %v1824 = vsel %vm1715, %v1823, %v1819
        %v1825 = vlaneseq
        %v1826 = vshrl.u32 %v1825, 7
        %v1827 = vsub.s32 %v1705, %v1826
        %v1828 = vrot.slane %v1688, %v1827
        %v1829 = vlaneseq
        %v1830 = vshrl.u32 %v1829, 7
        %v1831 = vsub.s32 %v1710, %v1830
        %v1832 = vrot.slane %v1691, %v1831
        %v1833 = vsel %vm1715, %v1832, %v1828
        %v1834 = vlaneseq
        %v1835 = vshrl.u32 %v1834, 7
        %v1836 = vsub.s32 %v1705, %v1835
        %v1837 = vrot.slane %v1694, %v1836
        %v1838 = vlaneseq
        %v1839 = vshrl.u32 %v1838, 7
        %v1840 = vsub.s32 %v1710, %v1839
        %v1841 = vrot.slane %v1697, %v1840
        %v1842 = vsel %vm1715, %v1841, %v1837
        %v1843 = vlaneseq
        %v1844 = vshrl.u32 %v1843, 7
        %v1845 = vsub.s32 %v1705, %v1844
        %v1846 = vrot.slane %v1700, %v1845
        %v1847 = vlaneseq
        %v1848 = vshrl.u32 %v1847, 7
        %v1849 = vsub.s32 %v1710, %v1848
        %v1850 = vrot.slane %v1703, %v1849
        %v1851 = vsel %vm1715, %v1850, %v1846
        %vm1852 = vcmask 1041409
        %v1853 = vsel %vm1852, %v1725, %v1716
        %vm1854 = vcmask 1042434
        %v1855 = vsel %vm1854, %v1734, %v1853
        %vm1856 = vcmask 1043459
        %v1857 = vsel %vm1856, %v1743, %v1855
        %vm1858 = vcmask 1044484
        %v1859 = vsel %vm1858, %v1752, %v1857
        %vm1860 = vcmask 1045509
        %v1861 = vsel %vm1860, %v1761, %v1859
        %vm1862 = vcmask 1046534
        %v1863 = vsel %vm1862, %v1770, %v1861
        %vm1864 = vcmask 1047559
        %v1865 = vsel %vm1864, %v1779, %v1863
        %v1866 = vsel %vm1852, %v1797, %v1788
        %v1867 = vsel %vm1854, %v1806, %v1866
        %v1868 = vsel %vm1856, %v1815, %v1867
        %v1869 = vsel %vm1858, %v1824, %v1868
        %v1870 = vsel %vm1860, %v1833, %v1869
        %v1871 = vsel %vm1862, %v1842, %v1870
        %v1872 = vsel %vm1864, %v1851, %v1871
        %vm1875 = vcmask 244736
        %v1877 = vsel %vm1875, %v1492, 0
        %v1880 = vsel %vm1875, %v1493, 0
        %v1883 = vsel %vm1875, %v1542, 0
        %v1886 = vsel %vm1875, %v1543, 0
        %1888 = vmatprep.subr.mxu0 0.0
        %1889 = vmatpush1.xpose.msra.mxu0 0.0
        %1890 = vmatprep.subr.mxu0 0.0
        %1891 = vmatpush1.xpose.msra.mxu0 0.0
        %1892 = vmatprep.subr.mxu0 0.0
        %1893 = vmatpush1.xpose.msra.mxu0 0.0
        %1894 = vmatprep.subr.mxu0 0.0
        %1895 = vmatpush1.xpose.msra.mxu0 0.0
        %1896 = vmatprep.subr.mxu0 0.0
        %1897 = vmatpush1.xpose.msra.mxu0 0.0
        %1898 = vmatprep.subr.mxu0 0.0
        %1899 = vmatpush1.xpose.msra.mxu0 0.0
        %1900 = vmatprep.subr.mxu0 0.0
        %1901 = vmatpush1.xpose.msra.mxu0 0.0
        %1902 = vmatprep.subr.mxu0 0.0
        %1903 = vmatpush1.xpose.msra.mxu0 0.0
        %1904 = vmatprep.subr.mxu0 0.0
        %1905 = vmatpush1.xpose.msra.mxu0 0.0
        %1906 = vmatprep.subr.mxu0 0.0
        %1907 = vmatpush1.xpose.msra.mxu0 0.0
        %1908 = vmatprep.subr.mxu0 0.0
        %1909 = vmatpush1.xpose.msra.mxu0 0.0
        %1910 = vmatprep.subr.mxu0 0.0
        %1911 = vmatpush1.xpose.msra.mxu0 0.0
        %1912 = vmatprep.subr.mxu0 0.0
        %1913 = vmatpush1.xpose.msra.mxu0 0.0
        %1914 = vmatprep.subr.mxu0 0.0
        %1915 = vmatpush1.xpose.msra.mxu0 0.0
        %1916 = vmatprep.subr.mxu0 0.0
        %1917 = vmatpush1.xpose.msra.mxu0 %v1886
        %1918 = vmatprep.subr.mxu0 0.0
        %1919 = vmatpush1.xpose.msra.mxu0 %v1883
        %1920 = vmatprep.subr.mxu0 0.0
        %1921 = vmatpush2.xpose.msra.mxu0 0.0
        %1922 = vmatprep.subr.mxu0 0.0
        %1923 = vmatpush2.xpose.msra.mxu0 0.0
        %1924 = vmatprep.subr.mxu0 0.0
        %1925 = vmatpush2.xpose.msra.mxu0 0.0
        %1926 = vmatprep.subr.mxu0 0.0
        %1927 = vmatpush2.xpose.msra.mxu0 0.0
        %1928 = vmatprep.subr.mxu0 0.0
        %1929 = vmatpush2.xpose.msra.mxu0 0.0
        %1930 = vmatprep.subr.mxu0 0.0
        %1931 = vmatpush2.xpose.msra.mxu0 0.0
        %1932 = vmatprep.subr.mxu0 0.0
        %1933 = vmatpush2.xpose.msra.mxu0 0.0
        %1934 = vmatprep.subr.mxu0 0.0
        %1935 = vmatpush2.xpose.msra.mxu0 0.0
        %1936 = vmatprep.subr.mxu0 0.0
        %1937 = vmatpush2.xpose.msra.mxu0 0.0
        %1938 = vmatprep.subr.mxu0 0.0
        %1939 = vmatpush2.xpose.msra.mxu0 0.0
        %1940 = vmatprep.subr.mxu0 0.0
        %1941 = vmatpush2.xpose.msra.mxu0 0.0
        %1942 = vmatprep.subr.mxu0 0.0
        %1943 = vmatpush2.xpose.msra.mxu0 0.0
        %1944 = vmatprep.subr.mxu0 0.0
        %1945 = vmatpush2.xpose.msra.mxu0 0.0
        %1946 = vmatprep.subr.mxu0 0.0
        %1947 = vmatpush2.xpose.msra.mxu0 0.0
        %1948 = vmatprep.subr.mxu0 0.0
        %1949 = vmatpush2.xpose.msra.mxu0 0.0
        %1950 = vmatprep.subr.mxu0 0.0
        %1951 = vmatpush2.xpose.msra.mxu0 0.0
        %1952 = vmatprep.mubr.f32.mxu0 0.0
        %1953 = vmatmul.mubr.f32.gmra.mxu0 %v1877
        %v1954 = vpop.f32.mrf.mxu0
        %v1955 = vadd.f32 %v1865, %v1954
        %v1956 = vpop.f32.mrf.mxu0
        %1957 = vmatprep.mubr.f32.mxu0 0.0
        %1958 = vmatmul.mubr.f32.gmra.mxu0 %v1880
        %v1959 = vpop.f32.mrf.mxu0
        %v1960 = vadd.f32 %v1872, %v1959
        %v1961 = vpop.f32.mrf.mxu0
        %1962 = vdwg.mxu0
        %v1963 = vsub.f32 %v1955, 100000.0
        %v1964 = vsub.f32 %v1960, 100000.0
        %v1965 = vsel %vm1409, %v1955, %v1963
        %v1966 = vsel %vm1410, %v1960, %v1964
        %v1967 = vsel %vm1479, %v1965, -inf
        %1968 = vmax.xlane.f32.xlu0 %v1967
        %v1969 = vpop.xlane.xlu0 %1968
        %v1970 = vsel %vm1479, %v1966, -inf
        %1971 = vmax.xlane.f32.xlu0 %v1970
        %v1972 = vpop.xlane.xlu0 %1971
        %v1973 = vsub.f32 %v1965, %v1969
        %v1974 = vsub.f32 %v1966, %v1972
        %v1975 = vmul.f32 %v1973, 1.442695
        %v1976 = vpow.pop %v1975
        %v1977 = vmul.f32 %v1974, 1.442695
        %v1978 = vpow.pop %v1977
        %v1979 = vsel %vm1479, %v1976, 0.0
        %1980 = vadd.xlane.f32.xlu0 %v1979
        %v1981 = vpop.xlane.xlu0 %1980
        %v1982 = vsel %vm1479, %v1978, 0.0
        %1983 = vadd.xlane.f32.xlu0 %v1982
        %v1984 = vpop.xlane.xlu0 %1983
        %v1985 = vrcp.pop %v1981
        %v1986 = vrcp.pop %v1984
        %v1987 = vmul.f32 %v1976, %v1985
        %v1988 = vmul.f32 %v1978, %v1986
        %v1989 = vsel %vm1411, 1, 0
        %v1990 = vsel %vm1412, 1, 0
        %1991 = vset.pattern.permute.xlu0 0
        %1992 = vperm.xlu0 %1991, %v1989
        %v1993 = vpop.permute.xlu0 %1992
        %1994 = vset.pattern.permute.xlu0 0
        %1995 = vperm.xlu0 %1994, %v1990
        %v1996 = vpop.permute.xlu0 %1995
        %vm1997 = vcmp.eq.s32.totalorder %v1993, 1
        %vm1998 = vcmp.eq.s32.totalorder %v1996, 1
        %v1999 = vsel %vm1997, %v1987, 0.0
        %v2000 = vsel %vm1998, %v1988, 0.0
        %v2001 = vlaneseq
        %v2002 = vshrl.u32 %v2001, 7
        %v2003 = vsub.s32 0, %v2002
        %v2004 = vrot.slane %v1999, %v2003
        %2006 = vbcast.lane.b32.xlu0 %v2004, 256
        %v2007 = vpop.permute.xlu0 %2006
        %s2009 = sor.u32 256, 8
        %2010 = vbcast.lane.b32.xlu0 %v2004, %s2009
        %v2011 = vpop.permute.xlu0 %2010
        %v2012 = vlaneseq
        %v2013 = vshrl.u32 %v2012, 7
        %v2014 = vsub.s32 1, %v2013
        %v2015 = vrot.slane %v1999, %v2014
        %2017 = vbcast.lane.b32.xlu0 %v2015, 256
        %v2018 = vpop.permute.xlu0 %2017
        %s2020 = sor.u32 256, 8
        %2021 = vbcast.lane.b32.xlu0 %v2015, %s2020
        %v2022 = vpop.permute.xlu0 %2021
        %v2023 = vlaneseq
        %v2024 = vshrl.u32 %v2023, 7
        %v2025 = vsub.s32 2, %v2024
        %v2026 = vrot.slane %v1999, %v2025
        %2028 = vbcast.lane.b32.xlu0 %v2026, 256
        %v2029 = vpop.permute.xlu0 %2028
        %s2031 = sor.u32 256, 8
        %2032 = vbcast.lane.b32.xlu0 %v2026, %s2031
        %v2033 = vpop.permute.xlu0 %2032
        %v2034 = vlaneseq
        %v2035 = vshrl.u32 %v2034, 7
        %v2036 = vsub.s32 3, %v2035
        %v2037 = vrot.slane %v1999, %v2036
        %2039 = vbcast.lane.b32.xlu0 %v2037, 256
        %v2040 = vpop.permute.xlu0 %2039
        %s2042 = sor.u32 256, 8
        %2043 = vbcast.lane.b32.xlu0 %v2037, %s2042
        %v2044 = vpop.permute.xlu0 %2043
        %v2045 = vlaneseq
        %v2046 = vshrl.u32 %v2045, 7
        %v2047 = vsub.s32 4, %v2046
        %v2048 = vrot.slane %v1999, %v2047
        %2050 = vbcast.lane.b32.xlu0 %v2048, 256
        %v2051 = vpop.permute.xlu0 %2050
        %s2053 = sor.u32 256, 8
        %2054 = vbcast.lane.b32.xlu0 %v2048, %s2053
        %v2055 = vpop.permute.xlu0 %2054
        %v2056 = vlaneseq
        %v2057 = vshrl.u32 %v2056, 7
        %v2058 = vsub.s32 5, %v2057
        %v2059 = vrot.slane %v1999, %v2058
        %2061 = vbcast.lane.b32.xlu0 %v2059, 256
        %v2062 = vpop.permute.xlu0 %2061
        %s2064 = sor.u32 256, 8
        %2065 = vbcast.lane.b32.xlu0 %v2059, %s2064
        %v2066 = vpop.permute.xlu0 %2065
        %v2067 = vlaneseq
        %v2068 = vshrl.u32 %v2067, 7
        %v2069 = vsub.s32 6, %v2068
        %v2070 = vrot.slane %v1999, %v2069
        %2072 = vbcast.lane.b32.xlu0 %v2070, 256
        %v2073 = vpop.permute.xlu0 %2072
        %s2075 = sor.u32 256, 8
        %2076 = vbcast.lane.b32.xlu0 %v2070, %s2075
        %v2077 = vpop.permute.xlu0 %2076
        %v2078 = vlaneseq
        %v2079 = vshrl.u32 %v2078, 7
        %v2080 = vsub.s32 7, %v2079
        %v2081 = vrot.slane %v1999, %v2080
        %2083 = vbcast.lane.b32.xlu0 %v2081, 256
        %v2084 = vpop.permute.xlu0 %2083
        %s2086 = sor.u32 256, 8
        %2087 = vbcast.lane.b32.xlu0 %v2081, %s2086
        %v2088 = vpop.permute.xlu0 %2087
        %v2089 = vlaneseq
        %v2090 = vshrl.u32 %v2089, 7
        %v2091 = vsub.s32 0, %v2090
        %v2092 = vrot.slane %v2000, %v2091
        %2094 = vbcast.lane.b32.xlu0 %v2092, 256
        %v2095 = vpop.permute.xlu0 %2094
        %s2097 = sor.u32 256, 8
        %2098 = vbcast.lane.b32.xlu0 %v2092, %s2097
        %v2099 = vpop.permute.xlu0 %2098
        %v2100 = vlaneseq
        %v2101 = vshrl.u32 %v2100, 7
        %v2102 = vsub.s32 1, %v2101
        %v2103 = vrot.slane %v2000, %v2102
        %2105 = vbcast.lane.b32.xlu0 %v2103, 256
        %v2106 = vpop.permute.xlu0 %2105
        %s2108 = sor.u32 256, 8
        %2109 = vbcast.lane.b32.xlu0 %v2103, %s2108
        %v2110 = vpop.permute.xlu0 %2109
        %v2111 = vlaneseq
        %v2112 = vshrl.u32 %v2111, 7
        %v2113 = vsub.s32 2, %v2112
        %v2114 = vrot.slane %v2000, %v2113
        %2116 = vbcast.lane.b32.xlu0 %v2114, 256
        %v2117 = vpop.permute.xlu0 %2116
        %s2119 = sor.u32 256, 8
        %2120 = vbcast.lane.b32.xlu0 %v2114, %s2119
        %v2121 = vpop.permute.xlu0 %2120
        %v2122 = vlaneseq
        %v2123 = vshrl.u32 %v2122, 7
        %v2124 = vsub.s32 3, %v2123
        %v2125 = vrot.slane %v2000, %v2124
        %2127 = vbcast.lane.b32.xlu0 %v2125, 256
        %v2128 = vpop.permute.xlu0 %2127
        %s2130 = sor.u32 256, 8
        %2131 = vbcast.lane.b32.xlu0 %v2125, %s2130
        %v2132 = vpop.permute.xlu0 %2131
        %v2133 = vlaneseq
        %v2134 = vshrl.u32 %v2133, 7
        %v2135 = vsub.s32 4, %v2134
        %v2136 = vrot.slane %v2000, %v2135
        %2138 = vbcast.lane.b32.xlu0 %v2136, 256
        %v2139 = vpop.permute.xlu0 %2138
        %s2141 = sor.u32 256, 8
        %2142 = vbcast.lane.b32.xlu0 %v2136, %s2141
        %v2143 = vpop.permute.xlu0 %2142
        %v2144 = vlaneseq
        %v2145 = vshrl.u32 %v2144, 7
        %v2146 = vsub.s32 5, %v2145
        %v2147 = vrot.slane %v2000, %v2146
        %2149 = vbcast.lane.b32.xlu0 %v2147, 256
        %v2150 = vpop.permute.xlu0 %2149
        %s2152 = sor.u32 256, 8
        %2153 = vbcast.lane.b32.xlu0 %v2147, %s2152
        %v2154 = vpop.permute.xlu0 %2153
        %v2155 = vlaneseq
        %v2156 = vshrl.u32 %v2155, 7
        %v2157 = vsub.s32 6, %v2156
        %v2158 = vrot.slane %v2000, %v2157
        %2160 = vbcast.lane.b32.xlu0 %v2158, 256
        %v2161 = vpop.permute.xlu0 %2160
        %s2163 = sor.u32 256, 8
        %2164 = vbcast.lane.b32.xlu0 %v2158, %s2163
        %v2165 = vpop.permute.xlu0 %2164
        %v2166 = vlaneseq
        %v2167 = vshrl.u32 %v2166, 7
        %v2168 = vsub.s32 7, %v2167
        %v2169 = vrot.slane %v2000, %v2168
        %2171 = vbcast.lane.b32.xlu0 %v2169, 256
        %v2172 = vpop.permute.xlu0 %2171
        %s2174 = sor.u32 256, 8
        %2175 = vbcast.lane.b32.xlu0 %v2169, %s2174
        %v2176 = vpop.permute.xlu0 %2175
        %v2177 = vmul.f32 %v2007, %v526
        %v2178 = vmul.f32 %v2011, %v527
        %v2179 = vmul.f32 %v2018, %v528
        %v2180 = vmul.f32 %v2022, %v529
        %v2181 = vmul.f32 %v2029, %v530
        %v2182 = vmul.f32 %v2033, %v531
        %v2183 = vmul.f32 %v2040, %v532
        %v2184 = vmul.f32 %v2044, %v533
        %v2185 = vmul.f32 %v2051, %v534
        %v2186 = vmul.f32 %v2055, %v535
        %v2187 = vmul.f32 %v2062, %v536
        %v2188 = vmul.f32 %v2066, %v537
        %v2189 = vmul.f32 %v2073, %v538
        %v2190 = vmul.f32 %v2077, %v539
        %v2191 = vmul.f32 %v2084, %v540
        %v2192 = vmul.f32 %v2088, %v541
        %v2193 = vmul.f32 %v2095, %v542
        %v2194 = vmul.f32 %v2099, %v543
        %v2195 = vmul.f32 %v2106, %v544
        %v2196 = vmul.f32 %v2110, %v545
        %v2197 = vmul.f32 %v2117, %v546
        %v2198 = vmul.f32 %v2121, %v547
        %v2199 = vmul.f32 %v2128, %v548
        %v2200 = vmul.f32 %v2132, %v549
        %v2201 = vmul.f32 %v2139, %v550
        %v2202 = vmul.f32 %v2143, %v551
        %v2203 = vmul.f32 %v2150, %v552
        %v2204 = vmul.f32 %v2154, %v553
        %v2205 = vmul.f32 %v2161, %v554
        %v2206 = vmul.f32 %v2165, %v555
        %v2207 = vmul.f32 %v2172, %v556
        %v2208 = vmul.f32 %v2176, %v557
        %v2209 = vsel %vm1039, %v2177, 0.0
        %v2210 = vsel %vm1039, %v2178, 0.0
        %v2211 = vadd.f32 %v2209, %v2210
        %v2212 = vrot.slane %v2211, 4
        %v2213 = vadd.f32 %v2211, %v2212
        %v2214 = vrot.slane %v2213, 2
        %v2215 = vadd.f32 %v2213, %v2214
        %v2216 = vrot.slane %v2215, 1
        %v2217 = vadd.f32 %v2215, %v2216
        %v2218 = vsel %vm1039, %v2179, 0.0
        %v2219 = vsel %vm1039, %v2180, 0.0
        %v2220 = vadd.f32 %v2218, %v2219
        %v2221 = vrot.slane %v2220, 4
        %v2222 = vadd.f32 %v2220, %v2221
        %v2223 = vrot.slane %v2222, 2
        %v2224 = vadd.f32 %v2222, %v2223
        %v2225 = vrot.slane %v2224, 1
        %v2226 = vadd.f32 %v2224, %v2225
        %v2227 = vsel %vm1039, %v2181, 0.0
        %v2228 = vsel %vm1039, %v2182, 0.0
        %v2229 = vadd.f32 %v2227, %v2228
        %v2230 = vrot.slane %v2229, 4
        %v2231 = vadd.f32 %v2229, %v2230
        %v2232 = vrot.slane %v2231, 2
        %v2233 = vadd.f32 %v2231, %v2232
        %v2234 = vrot.slane %v2233, 1
        %v2235 = vadd.f32 %v2233, %v2234
        %v2236 = vsel %vm1039, %v2183, 0.0
        %v2237 = vsel %vm1039, %v2184, 0.0
        %v2238 = vadd.f32 %v2236, %v2237
        %v2239 = vrot.slane %v2238, 4
        %v2240 = vadd.f32 %v2238, %v2239
        %v2241 = vrot.slane %v2240, 2
        %v2242 = vadd.f32 %v2240, %v2241
        %v2243 = vrot.slane %v2242, 1
        %v2244 = vadd.f32 %v2242, %v2243
        %v2245 = vsel %vm1039, %v2185, 0.0
        %v2246 = vsel %vm1039, %v2186, 0.0
        %v2247 = vadd.f32 %v2245, %v2246
        %v2248 = vrot.slane %v2247, 4
        %v2249 = vadd.f32 %v2247, %v2248
        %v2250 = vrot.slane %v2249, 2
        %v2251 = vadd.f32 %v2249, %v2250
        %v2252 = vrot.slane %v2251, 1
        %v2253 = vadd.f32 %v2251, %v2252
        %v2254 = vsel %vm1039, %v2187, 0.0
        %v2255 = vsel %vm1039, %v2188, 0.0
        %v2256 = vadd.f32 %v2254, %v2255
        %v2257 = vrot.slane %v2256, 4
        %v2258 = vadd.f32 %v2256, %v2257
        %v2259 = vrot.slane %v2258, 2
        %v2260 = vadd.f32 %v2258, %v2259
        %v2261 = vrot.slane %v2260, 1
        %v2262 = vadd.f32 %v2260, %v2261
        %v2263 = vsel %vm1039, %v2189, 0.0
        %v2264 = vsel %vm1039, %v2190, 0.0
        %v2265 = vadd.f32 %v2263, %v2264
        %v2266 = vrot.slane %v2265, 4
        %v2267 = vadd.f32 %v2265, %v2266
        %v2268 = vrot.slane %v2267, 2
        %v2269 = vadd.f32 %v2267, %v2268
        %v2270 = vrot.slane %v2269, 1
        %v2271 = vadd.f32 %v2269, %v2270
        %v2272 = vsel %vm1039, %v2191, 0.0
        %v2273 = vsel %vm1039, %v2192, 0.0
        %v2274 = vadd.f32 %v2272, %v2273
        %v2275 = vrot.slane %v2274, 4
        %v2276 = vadd.f32 %v2274, %v2275
        %v2277 = vrot.slane %v2276, 2
        %v2278 = vadd.f32 %v2276, %v2277
        %v2279 = vrot.slane %v2278, 1
        %v2280 = vadd.f32 %v2278, %v2279
        %v2281 = vsel %vm1039, %v2193, 0.0
        %v2282 = vsel %vm1039, %v2194, 0.0
        %v2283 = vadd.f32 %v2281, %v2282
        %v2284 = vrot.slane %v2283, 4
        %v2285 = vadd.f32 %v2283, %v2284
        %v2286 = vrot.slane %v2285, 2
        %v2287 = vadd.f32 %v2285, %v2286
        %v2288 = vrot.slane %v2287, 1
        %v2289 = vadd.f32 %v2287, %v2288
        %v2290 = vsel %vm1039, %v2195, 0.0
        %v2291 = vsel %vm1039, %v2196, 0.0
        %v2292 = vadd.f32 %v2290, %v2291
        %v2293 = vrot.slane %v2292, 4
        %v2294 = vadd.f32 %v2292, %v2293
        %v2295 = vrot.slane %v2294, 2
        %v2296 = vadd.f32 %v2294, %v2295
        %v2297 = vrot.slane %v2296, 1
        %v2298 = vadd.f32 %v2296, %v2297
        %v2299 = vsel %vm1039, %v2197, 0.0
        %v2300 = vsel %vm1039, %v2198, 0.0
        %v2301 = vadd.f32 %v2299, %v2300
        %v2302 = vrot.slane %v2301, 4
        %v2303 = vadd.f32 %v2301, %v2302
        %v2304 = vrot.slane %v2303, 2
        %v2305 = vadd.f32 %v2303, %v2304
        %v2306 = vrot.slane %v2305, 1
        %v2307 = vadd.f32 %v2305, %v2306
        %v2308 = vsel %vm1039, %v2199, 0.0
        %v2309 = vsel %vm1039, %v2200, 0.0
        %v2310 = vadd.f32 %v2308, %v2309
        %v2311 = vrot.slane %v2310, 4
        %v2312 = vadd.f32 %v2310, %v2311
        %v2313 = vrot.slane %v2312, 2
        %v2314 = vadd.f32 %v2312, %v2313
        %v2315 = vrot.slane %v2314, 1
        %v2316 = vadd.f32 %v2314, %v2315
        %v2317 = vsel %vm1039, %v2201, 0.0
        %v2318 = vsel %vm1039, %v2202, 0.0
        %v2319 = vadd.f32 %v2317, %v2318
        %v2320 = vrot.slane %v2319, 4
        %v2321 = vadd.f32 %v2319, %v2320
        %v2322 = vrot.slane %v2321, 2
        %v2323 = vadd.f32 %v2321, %v2322
        %v2324 = vrot.slane %v2323, 1
        %v2325 = vadd.f32 %v2323, %v2324
        %v2326 = vsel %vm1039, %v2203, 0.0
        %v2327 = vsel %vm1039, %v2204, 0.0
        %v2328 = vadd.f32 %v2326, %v2327
        %v2329 = vrot.slane %v2328, 4
        %v2330 = vadd.f32 %v2328, %v2329
        %v2331 = vrot.slane %v2330, 2
        %v2332 = vadd.f32 %v2330, %v2331
        %v2333 = vrot.slane %v2332, 1
        %v2334 = vadd.f32 %v2332, %v2333
        %v2335 = vsel %vm1039, %v2205, 0.0
        %v2336 = vsel %vm1039, %v2206, 0.0
        %v2337 = vadd.f32 %v2335, %v2336
        %v2338 = vrot.slane %v2337, 4
        %v2339 = vadd.f32 %v2337, %v2338
        %v2340 = vrot.slane %v2339, 2
        %v2341 = vadd.f32 %v2339, %v2340
        %v2342 = vrot.slane %v2341, 1
        %v2343 = vadd.f32 %v2341, %v2342
        %v2344 = vsel %vm1039, %v2207, 0.0
        %v2345 = vsel %vm1039, %v2208, 0.0
        %v2346 = vadd.f32 %v2344, %v2345
        %v2347 = vrot.slane %v2346, 4
        %v2348 = vadd.f32 %v2346, %v2347
        %v2349 = vrot.slane %v2348, 2
        %v2350 = vadd.f32 %v2348, %v2349
        %v2351 = vrot.slane %v2350, 1
        %v2352 = vadd.f32 %v2350, %v2351
        %v2369 = vsel %vm1852, %v2226, %v2217
        %v2370 = vsel %vm1854, %v2235, %v2369
        %v2371 = vsel %vm1856, %v2244, %v2370
        %v2372 = vsel %vm1858, %v2253, %v2371
        %v2373 = vsel %vm1860, %v2262, %v2372
        %v2374 = vsel %vm1862, %v2271, %v2373
        %v2375 = vsel %vm1864, %v2280, %v2374
        %v2376 = vsel %vm1852, %v2298, %v2289
        %v2377 = vsel %vm1854, %v2307, %v2376
        %v2378 = vsel %vm1856, %v2316, %v2377
        %v2379 = vsel %vm1858, %v2325, %v2378
        %v2380 = vsel %vm1860, %v2334, %v2379
        %v2381 = vsel %vm1862, %v2343, %v2380
        %v2382 = vsel %vm1864, %v2352, %v2381
        %2385 = vst.msk [vmem:[#allocation2] sm:$0xff] %vm1039, %v2375
        %2386 = vst.msk [vmem:[#allocation2 + $0x10] sm:$0xff] %vm1039, %v2382
        %2389 = vrot.lane.b32.xlu0 %v987, 112
        %v2390 = vpop.permute.xlu0 %2389
        %2391 = vrot.lane.b32.xlu0 %v988, 112
        %v2392 = vpop.permute.xlu0 %2391
        %2397 = vrot.lane.b32.xlu0 %v995, 116
        %v2398 = vpop.permute.xlu0 %2397
        %2399 = vrot.lane.b32.xlu0 %v996, 116
        %v2400 = vpop.permute.xlu0 %2399
        %2405 = vrot.lane.b32.xlu0 %v1003, 120
        %v2406 = vpop.permute.xlu0 %2405
        %2407 = vrot.lane.b32.xlu0 %v1004, 120
        %v2408 = vpop.permute.xlu0 %2407
        %v2411 = vsel %vm1479, %v636, %v2390
        %v2412 = vsel %vm1479, %v642, %v2392
        %v2413 = vsel %vm1482, %v2411, %v2398
        %v2414 = vsel %vm1482, %v2412, %v2400
        %v2415 = vsel %vm1485, %v2413, %v2406
        %v2416 = vsel %vm1485, %v2414, %v2408
        %v2418 = vsel %vm1479, %v1999, 0
        %v2421 = vsel %vm1479, %v2000, 0
        %2423 = vmatprep.subr.mxu0 0.0
        %2424 = vmatpush1.msra.mxu0 0.0
        %2425 = vmatprep.subr.mxu0 0.0
        %2426 = vmatpush1.msra.mxu0 0.0
        %2427 = vmatprep.subr.mxu0 0.0
        %2428 = vmatpush1.msra.mxu0 0.0
        %2429 = vmatprep.subr.mxu0 0.0
        %2430 = vmatpush1.msra.mxu0 0.0
        %2431 = vmatprep.subr.mxu0 0.0
        %2432 = vmatpush1.msra.mxu0 0.0
        %2433 = vmatprep.subr.mxu0 0.0
        %2434 = vmatpush1.msra.mxu0 0.0
        %2435 = vmatprep.subr.mxu0 0.0
        %2436 = vmatpush1.msra.mxu0 0.0
        %2437 = vmatprep.subr.mxu0 0.0
        %2438 = vmatpush1.msra.mxu0 0.0
        %2439 = vmatprep.subr.mxu0 0.0
        %2440 = vmatpush1.msra.mxu0 0.0
        %2441 = vmatprep.subr.mxu0 0.0
        %2442 = vmatpush1.msra.mxu0 0.0
        %2443 = vmatprep.subr.mxu0 0.0
        %2444 = vmatpush1.msra.mxu0 0.0
        %2445 = vmatprep.subr.mxu0 0.0
        %2446 = vmatpush1.msra.mxu0 0.0
        %2447 = vmatprep.subr.mxu0 0.0
        %2448 = vmatpush1.msra.mxu0 0.0
        %2449 = vmatprep.subr.mxu0 0.0
        %2450 = vmatpush1.msra.mxu0 0.0
        %2451 = vmatprep.subr.mxu0 0.0
        %2452 = vmatpush1.msra.mxu0 %v2416
        %2453 = vmatprep.subr.mxu0 0.0
        %2454 = vmatpush1.msra.mxu0 %v2415
        %2455 = vmatprep.subr.mxu0 0.0
        %2456 = vmatpush2.msra.mxu0 0.0
        %2457 = vmatprep.subr.mxu0 0.0
        %2458 = vmatpush2.msra.mxu0 0.0
        %2459 = vmatprep.subr.mxu0 0.0
        %2460 = vmatpush2.msra.mxu0 0.0
        %2461 = vmatprep.subr.mxu0 0.0
        %2462 = vmatpush2.msra.mxu0 0.0
        %2463 = vmatprep.subr.mxu0 0.0
        %2464 = vmatpush2.msra.mxu0 0.0
        %2465 = vmatprep.subr.mxu0 0.0
        %2466 = vmatpush2.msra.mxu0 0.0
        %2467 = vmatprep.subr.mxu0 0.0
        %2468 = vmatpush2.msra.mxu0 0.0
        %2469 = vmatprep.subr.mxu0 0.0
        %2470 = vmatpush2.msra.mxu0 0.0
        %2471 = vmatprep.subr.mxu0 0.0
        %2472 = vmatpush2.msra.mxu0 0.0
        %2473 = vmatprep.subr.mxu0 0.0
        %2474 = vmatpush2.msra.mxu0 0.0
        %2475 = vmatprep.subr.mxu0 0.0
        %2476 = vmatpush2.msra.mxu0 0.0
        %2477 = vmatprep.subr.mxu0 0.0
        %2478 = vmatpush2.msra.mxu0 0.0
        %2479 = vmatprep.subr.mxu0 0.0
        %2480 = vmatpush2.msra.mxu0 0.0
        %2481 = vmatprep.subr.mxu0 0.0
        %2482 = vmatpush2.msra.mxu0 0.0
        %2483 = vmatprep.subr.mxu0 0.0
        %2484 = vmatpush2.msra.mxu0 0.0
        %2485 = vmatprep.subr.mxu0 0.0
        %2486 = vmatpush2.msra.mxu0 0.0
        %2487 = vmatprep.mubr.f32.mxu0 0.0
        %2488 = vmatmul.mubr.f32.gmra.mxu0 %v2418
        %v2489 = vpop.f32.mrf.mxu0
        %v2490 = vadd.f32 0.0, %v2489
        %v2491 = vpop.f32.mrf.mxu0
        %2492 = vmatprep.mubr.f32.mxu0 0.0
        %2493 = vmatmul.mubr.f32.gmra.mxu0 %v2421
        %v2494 = vpop.f32.mrf.mxu0
        %v2495 = vadd.f32 0.0, %v2494
        %v2496 = vpop.f32.mrf.mxu0
        %2497 = vdwg.mxu0
        %2500 = vrot.lane.b32.xlu0 %v2490, 32
        %v2501 = vpop.permute.xlu0 %2500
        %2502 = vrot.lane.b32.xlu0 %v2495, 32
        %v2503 = vpop.permute.xlu0 %2502
        %vm2506 = vcmask 392448
        %2507 = vst.msk [vmem:[#allocation2] sm:$0xff] %vm2506, %v2501
        %2508 = vst.msk [vmem:[#allocation2 + $0x10] sm:$0xff] %vm2506, %v2503
        %2509 = vrot.lane.b32.xlu0 %v2490, 80
        %v2510 = vpop.permute.xlu0 %2509
        %2511 = vrot.lane.b32.xlu0 %v2495, 80
        %v2512 = vpop.permute.xlu0 %2511
        %vm2515 = vcmask 818944
        %2516 = vst.msk [vmem:[#allocation2] sm:$0xff] %vm2515, %v2510
        %2517 = vst.msk [vmem:[#allocation2 + $0x10] sm:$0xff] %vm2515, %v2512
        %2518 = vrot.lane.b32.xlu0 %v2490, 92
        %v2519 = vpop.permute.xlu0 %2518
        %2520 = vrot.lane.b32.xlu0 %v2495, 92
        %v2521 = vpop.permute.xlu0 %2520
        %vm2524 = vcmask 950144
        %2525 = vst.msk [vmem:[#allocation2] sm:$0xff] %vm2524, %v2519
        %2526 = vst.msk [vmem:[#allocation2 + $0x10] sm:$0xff] %vm2524, %v2521
        %2527 = vrot.lane.b32.xlu0 %v2490, 104
        %v2528 = vpop.permute.xlu0 %2527
        %2529 = vrot.lane.b32.xlu0 %v2495, 104
        %v2530 = vpop.permute.xlu0 %2529
        %2533 = vst.msk [vmem:[#allocation2 + $0x8] sm:$0xff] %vm1421, %v2528
        %2534 = vst.msk [vmem:[#allocation2 + $0x18] sm:$0xff] %vm1421, %v2530
        %2535 = vrot.lane.b32.xlu0 %v1013, 60
        %v2536 = vpop.permute.xlu0 %2535
        %2537 = vrot.lane.b32.xlu0 %v1014, 60
        %v2538 = vpop.permute.xlu0 %2537
        %v2541 = vsel %vm1421, %v2536, 0.0
        %2542 = vadd.xlane.f32.xlu0 %v2541
        %v2543 = vpop.xlane.xlu0 %2542
        %v2544 = vsel %vm1421, %v2538, 0.0
        %2545 = vadd.xlane.f32.xlu0 %v2544
        %v2546 = vpop.xlane.xlu0 %2545
        %v2547 = vmul.f32 %v2543, %v1029
        %v2548 = vmul.f32 %v2546, %v1029
        %2549 = vrot.lane.b32.xlu0 %v1023, 12
        %v2550 = vpop.permute.xlu0 %2549
        %2551 = vrot.lane.b32.xlu0 %v1024, 12
        %v2552 = vpop.permute.xlu0 %2551
        %v2555 = vsel %vm1421, %v2550, 0.0
        %2556 = vadd.xlane.f32.xlu0 %v2555
        %v2557 = vpop.xlane.xlu0 %2556
        %v2558 = vsel %vm1421, %v2552, 0.0
        %2559 = vadd.xlane.f32.xlu0 %v2558
        %v2560 = vpop.xlane.xlu0 %2559
        %v2561 = vmul.f32 %v2557, %v1029
        %v2562 = vmul.f32 %v2560, %v1029
        %2563 = vrot.lane.b32.xlu0 %v634, 112
        %v2564 = vpop.permute.xlu0 %2563
        %2565 = vrot.lane.b32.xlu0 %v640, 112
        %v2566 = vpop.permute.xlu0 %2565
        %2569 = vrot.lane.b32.xlu0 %v1033, 76
        %v2570 = vpop.permute.xlu0 %2569
        %2571 = vrot.lane.b32.xlu0 %v1034, 76
        %v2572 = vpop.permute.xlu0 %2571
        %2575 = vrot.lane.b32.xlu0 %v1035, 80
        %v2576 = vpop.permute.xlu0 %2575
        %2577 = vrot.lane.b32.xlu0 %v1036, 80
        %v2578 = vpop.permute.xlu0 %2577
        %2581 = vrot.lane.b32.xlu0 %v1037, 84
        %v2582 = vpop.permute.xlu0 %2581
        %2583 = vrot.lane.b32.xlu0 %v1038, 84
        %v2584 = vpop.permute.xlu0 %2583
        %2589 = vrot.lane.b32.xlu0 %v2547, 11
        %v2590 = vpop.permute.xlu0 %2589
        %2591 = vrot.lane.b32.xlu0 %v2548, 11
        %v2592 = vpop.permute.xlu0 %2591
        %v2595 = vsel %vm1479, %v2564, %v2570
        %v2596 = vsel %vm1479, %v2566, %v2572
        %v2597 = vsel %vm1482, %v2595, %v2576
        %v2598 = vsel %vm1482, %v2596, %v2578
        %v2599 = vsel %vm1485, %v2597, %v2582
        %v2600 = vsel %vm1485, %v2598, %v2584
        %v2601 = vsel %vm1488, %v2599, %v2590
        %v2602 = vsel %vm1488, %v2600, %v2592
        %v2603 = vsel %vm1491, %v2601, 1.0
        %v2604 = vsel %vm1491, %v2602, 1.0
        %2605 = vrot.lane.b32.xlu0 %v634, 48
        %v2606 = vpop.permute.xlu0 %2605
        %2607 = vrot.lane.b32.xlu0 %v640, 48
        %v2608 = vpop.permute.xlu0 %2607
        %2611 = vrot.lane.b32.xlu0 %v927, 28
        %v2612 = vpop.permute.xlu0 %2611
        %2613 = vrot.lane.b32.xlu0 %v928, 28
        %v2614 = vpop.permute.xlu0 %2613
        %2617 = vrot.lane.b32.xlu0 %v953, 32
        %v2618 = vpop.permute.xlu0 %2617
        %2619 = vrot.lane.b32.xlu0 %v954, 32
        %v2620 = vpop.permute.xlu0 %2619
        %2623 = vrot.lane.b32.xlu0 %v979, 36
        %v2624 = vpop.permute.xlu0 %2623
        %2625 = vrot.lane.b32.xlu0 %v980, 36
        %v2626 = vpop.permute.xlu0 %2625
        %2631 = vrot.lane.b32.xlu0 %v2561, 12
        %v2632 = vpop.permute.xlu0 %2631
        %2633 = vrot.lane.b32.xlu0 %v2562, 12
        %v2634 = vpop.permute.xlu0 %2633
        %v2637 = vsel %vm1479, %v2606, %v2612
        %v2638 = vsel %vm1479, %v2608, %v2614
        %v2639 = vsel %vm1482, %v2637, %v2618
        %v2640 = vsel %vm1482, %v2638, %v2620
        %v2641 = vsel %vm1485, %v2639, %v2624
        %v2642 = vsel %vm1485, %v2640, %v2626
        %v2643 = vsel %vm1488, %v2641, 1.0
        %v2644 = vsel %vm1488, %v2642, 1.0
        %v2645 = vsel %vm1491, %v2643, %v2632
        %v2646 = vsel %vm1491, %v2644, %v2634
        %2647 = vset.pattern.permute.xlu0 1
        %2648 = vperm.xlu0 %2647, %v1544
        %v2649 = vpop.permute.xlu0 %2648
        %2650 = vset.pattern.permute.xlu0 1
        %2651 = vperm.xlu0 %2650, %v1545
        %v2652 = vpop.permute.xlu0 %2651
        %2653 = vset.pattern.permute.xlu0 1
        %2654 = vperm.xlu0 %2653, %v1546
        %v2655 = vpop.permute.xlu0 %2654
        %2656 = vset.pattern.permute.xlu0 1
        %2657 = vperm.xlu0 %2656, %v1547
        %v2658 = vpop.permute.xlu0 %2657
        %2659 = vset.pattern.permute.xlu0 1
        %2660 = vperm.xlu0 %2659, %v1548
        %v2661 = vpop.permute.xlu0 %2660
        %2662 = vset.pattern.permute.xlu0 1
        %2663 = vperm.xlu0 %2662, %v1549
        %v2664 = vpop.permute.xlu0 %2663
        %2665 = vset.pattern.permute.xlu0 1
        %2666 = vperm.xlu0 %2665, %v1550
        %v2667 = vpop.permute.xlu0 %2666
        %2668 = vset.pattern.permute.xlu0 1
        %2669 = vperm.xlu0 %2668, %v1551
        %v2670 = vpop.permute.xlu0 %2669
        %2671 = vset.pattern.permute.xlu0 1
        %2672 = vperm.xlu0 %2671, %v1552
        %v2673 = vpop.permute.xlu0 %2672
        %2674 = vset.pattern.permute.xlu0 1
        %2675 = vperm.xlu0 %2674, %v1553
        %v2676 = vpop.permute.xlu0 %2675
        %2677 = vset.pattern.permute.xlu0 1
        %2678 = vperm.xlu0 %2677, %v1554
        %v2679 = vpop.permute.xlu0 %2678
        %2680 = vset.pattern.permute.xlu0 1
        %2681 = vperm.xlu0 %2680, %v1555
        %v2682 = vpop.permute.xlu0 %2681
        %2683 = vset.pattern.permute.xlu0 1
        %2684 = vperm.xlu0 %2683, %v1556
        %v2685 = vpop.permute.xlu0 %2684
        %2686 = vset.pattern.permute.xlu0 1
        %2687 = vperm.xlu0 %2686, %v1557
        %v2688 = vpop.permute.xlu0 %2687
        %2689 = vset.pattern.permute.xlu0 1
        %2690 = vperm.xlu0 %2689, %v1558
        %v2691 = vpop.permute.xlu0 %2690
        %2692 = vset.pattern.permute.xlu0 1
        %2693 = vperm.xlu0 %2692, %v1559
        %v2694 = vpop.permute.xlu0 %2693
        %2695 = vset.pattern.permute.xlu0 1
        %2696 = vperm.xlu0 %2695, %v1560
        %v2697 = vpop.permute.xlu0 %2696
        %2698 = vset.pattern.permute.xlu0 1
        %2699 = vperm.xlu0 %2698, %v1561
        %v2700 = vpop.permute.xlu0 %2699
        %2701 = vset.pattern.permute.xlu0 1
        %2702 = vperm.xlu0 %2701, %v1562
        %v2703 = vpop.permute.xlu0 %2702
        %2704 = vset.pattern.permute.xlu0 1
        %2705 = vperm.xlu0 %2704, %v1563
        %v2706 = vpop.permute.xlu0 %2705
        %2707 = vset.pattern.permute.xlu0 1
        %2708 = vperm.xlu0 %2707, %v1564
        %v2709 = vpop.permute.xlu0 %2708
        %2710 = vset.pattern.permute.xlu0 1
        %2711 = vperm.xlu0 %2710, %v1565
        %v2712 = vpop.permute.xlu0 %2711
        %2713 = vset.pattern.permute.xlu0 1
        %2714 = vperm.xlu0 %2713, %v1566
        %v2715 = vpop.permute.xlu0 %2714
        %2716 = vset.pattern.permute.xlu0 1
        %2717 = vperm.xlu0 %2716, %v1567
        %v2718 = vpop.permute.xlu0 %2717
        %2719 = vset.pattern.permute.xlu0 1
        %2720 = vperm.xlu0 %2719, %v1568
        %v2721 = vpop.permute.xlu0 %2720
        %2722 = vset.pattern.permute.xlu0 1
        %2723 = vperm.xlu0 %2722, %v1569
        %v2724 = vpop.permute.xlu0 %2723
        %2725 = vset.pattern.permute.xlu0 1
        %2726 = vperm.xlu0 %2725, %v1570
        %v2727 = vpop.permute.xlu0 %2726
        %2728 = vset.pattern.permute.xlu0 1
        %2729 = vperm.xlu0 %2728, %v1571
        %v2730 = vpop.permute.xlu0 %2729
        %2731 = vset.pattern.permute.xlu0 1
        %2732 = vperm.xlu0 %2731, %v1572
        %v2733 = vpop.permute.xlu0 %2732
        %2734 = vset.pattern.permute.xlu0 1
        %2735 = vperm.xlu0 %2734, %v1573
        %v2736 = vpop.permute.xlu0 %2735
        %2737 = vset.pattern.permute.xlu0 1
        %2738 = vperm.xlu0 %2737, %v1574
        %v2739 = vpop.permute.xlu0 %2738
        %2740 = vset.pattern.permute.xlu0 1
        %2741 = vperm.xlu0 %2740, %v1575
        %v2742 = vpop.permute.xlu0 %2741
        %v2743 = vlaneseq
        %v2744 = vshrl.u32 %v2743, 7
        %v2745 = vsub.s32 %v1705, %v2744
        %v2746 = vrot.slane %v2649, %v2745
        %v2747 = vlaneseq
        %v2748 = vshrl.u32 %v2747, 7
        %v2749 = vsub.s32 %v1710, %v2748
        %v2750 = vrot.slane %v2652, %v2749
        %v2751 = vsel %vm1715, %v2750, %v2746
        %v2752 = vlaneseq
        %v2753 = vshrl.u32 %v2752, 7
        %v2754 = vsub.s32 %v1705, %v2753
        %v2755 = vrot.slane %v2655, %v2754
        %v2756 = vlaneseq
        %v2757 = vshrl.u32 %v2756, 7
        %v2758 = vsub.s32 %v1710, %v2757
        %v2759 = vrot.slane %v2658, %v2758
        %v2760 = vsel %vm1715, %v2759, %v2755
        %v2761 = vlaneseq
        %v2762 = vshrl.u32 %v2761, 7
        %v2763 = vsub.s32 %v1705, %v2762
        %v2764 = vrot.slane %v2661, %v2763
        %v2765 = vlaneseq
        %v2766 = vshrl.u32 %v2765, 7
        %v2767 = vsub.s32 %v1710, %v2766
        %v2768 = vrot.slane %v2664, %v2767
        %v2769 = vsel %vm1715, %v2768, %v2764
        %v2770 = vlaneseq
        %v2771 = vshrl.u32 %v2770, 7
        %v2772 = vsub.s32 %v1705, %v2771
        %v2773 = vrot.slane %v2667, %v2772
        %v2774 = vlaneseq
        %v2775 = vshrl.u32 %v2774, 7
        %v2776 = vsub.s32 %v1710, %v2775
        %v2777 = vrot.slane %v2670, %v2776
        %v2778 = vsel %vm1715, %v2777, %v2773
        %v2779 = vlaneseq
        %v2780 = vshrl.u32 %v2779, 7
        %v2781 = vsub.s32 %v1705, %v2780
        %v2782 = vrot.slane %v2673, %v2781
        %v2783 = vlaneseq
        %v2784 = vshrl.u32 %v2783, 7
        %v2785 = vsub.s32 %v1710, %v2784
        %v2786 = vrot.slane %v2676, %v2785
        %v2787 = vsel %vm1715, %v2786, %v2782
        %v2788 = vlaneseq
        %v2789 = vshrl.u32 %v2788, 7
        %v2790 = vsub.s32 %v1705, %v2789
        %v2791 = vrot.slane %v2679, %v2790
        %v2792 = vlaneseq
        %v2793 = vshrl.u32 %v2792, 7
        %v2794 = vsub.s32 %v1710, %v2793
        %v2795 = vrot.slane %v2682, %v2794
        %v2796 = vsel %vm1715, %v2795, %v2791
        %v2797 = vlaneseq
        %v2798 = vshrl.u32 %v2797, 7
        %v2799 = vsub.s32 %v1705, %v2798
        %v2800 = vrot.slane %v2685, %v2799
        %v2801 = vlaneseq
        %v2802 = vshrl.u32 %v2801, 7
        %v2803 = vsub.s32 %v1710, %v2802
        %v2804 = vrot.slane %v2688, %v2803
        %v2805 = vsel %vm1715, %v2804, %v2800
        %v2806 = vlaneseq
        %v2807 = vshrl.u32 %v2806, 7
        %v2808 = vsub.s32 %v1705, %v2807
        %v2809 = vrot.slane %v2691, %v2808
        %v2810 = vlaneseq
        %v2811 = vshrl.u32 %v2810, 7
        %v2812 = vsub.s32 %v1710, %v2811
        %v2813 = vrot.slane %v2694, %v2812
        %v2814 = vsel %vm1715, %v2813, %v2809
        %v2815 = vlaneseq
        %v2816 = vshrl.u32 %v2815, 7
        %v2817 = vsub.s32 %v1705, %v2816
        %v2818 = vrot.slane %v2697, %v2817
        %v2819 = vlaneseq
        %v2820 = vshrl.u32 %v2819, 7
        %v2821 = vsub.s32 %v1710, %v2820
        %v2822 = vrot.slane %v2700, %v2821
        %v2823 = vsel %vm1715, %v2822, %v2818
        %v2824 = vlaneseq
        %v2825 = vshrl.u32 %v2824, 7
        %v2826 = vsub.s32 %v1705, %v2825
        %v2827 = vrot.slane %v2703, %v2826
        %v2828 = vlaneseq
        %v2829 = vshrl.u32 %v2828, 7
        %v2830 = vsub.s32 %v1710, %v2829
        %v2831 = vrot.slane %v2706, %v2830
        %v2832 = vsel %vm1715, %v2831, %v2827
        %v2833 = vlaneseq
        %v2834 = vshrl.u32 %v2833, 7
        %v2835 = vsub.s32 %v1705, %v2834
        %v2836 = vrot.slane %v2709, %v2835
        %v2837 = vlaneseq
        %v2838 = vshrl.u32 %v2837, 7
        %v2839 = vsub.s32 %v1710, %v2838
        %v2840 = vrot.slane %v2712, %v2839
        %v2841 = vsel %vm1715, %v2840, %v2836
        %v2842 = vlaneseq
        %v2843 = vshrl.u32 %v2842, 7
        %v2844 = vsub.s32 %v1705, %v2843
        %v2845 = vrot.slane %v2715, %v2844
        %v2846 = vlaneseq
        %v2847 = vshrl.u32 %v2846, 7
        %v2848 = vsub.s32 %v1710, %v2847
        %v2849 = vrot.slane %v2718, %v2848
        %v2850 = vsel %vm1715, %v2849, %v2845
        %v2851 = vlaneseq
        %v2852 = vshrl.u32 %v2851, 7
        %v2853 = vsub.s32 %v1705, %v2852
        %v2854 = vrot.slane %v2721, %v2853
        %v2855 = vlaneseq
        %v2856 = vshrl.u32 %v2855, 7
        %v2857 = vsub.s32 %v1710, %v2856
        %v2858 = vrot.slane %v2724, %v2857
        %v2859 = vsel %vm1715, %v2858, %v2854
        %v2860 = vlaneseq
        %v2861 = vshrl.u32 %v2860, 7
        %v2862 = vsub.s32 %v1705, %v2861
        %v2863 = vrot.slane %v2727, %v2862
        %v2864 = vlaneseq
        %v2865 = vshrl.u32 %v2864, 7
        %v2866 = vsub.s32 %v1710, %v2865
        %v2867 = vrot.slane %v2730, %v2866
        %v2868 = vsel %vm1715, %v2867, %v2863
        %v2869 = vlaneseq
        %v2870 = vshrl.u32 %v2869, 7
        %v2871 = vsub.s32 %v1705, %v2870
        %v2872 = vrot.slane %v2733, %v2871
        %v2873 = vlaneseq
        %v2874 = vshrl.u32 %v2873, 7
        %v2875 = vsub.s32 %v1710, %v2874
        %v2876 = vrot.slane %v2736, %v2875
        %v2877 = vsel %vm1715, %v2876, %v2872
        %v2878 = vlaneseq
        %v2879 = vshrl.u32 %v2878, 7
        %v2880 = vsub.s32 %v1705, %v2879
        %v2881 = vrot.slane %v2739, %v2880
        %v2882 = vlaneseq
        %v2883 = vshrl.u32 %v2882, 7
        %v2884 = vsub.s32 %v1710, %v2883
        %v2885 = vrot.slane %v2742, %v2884
        %v2886 = vsel %vm1715, %v2885, %v2881
        %v2887 = vsel %vm1852, %v2760, %v2751
        %v2888 = vsel %vm1854, %v2769, %v2887
        %v2889 = vsel %vm1856, %v2778, %v2888
        %v2890 = vsel %vm1858, %v2787, %v2889
        %v2891 = vsel %vm1860, %v2796, %v2890
        %v2892 = vsel %vm1862, %v2805, %v2891
        %v2893 = vsel %vm1864, %v2814, %v2892
        %v2894 = vsel %vm1852, %v2832, %v2823
        %v2895 = vsel %vm1854, %v2841, %v2894
        %v2896 = vsel %vm1856, %v2850, %v2895
        %v2897 = vsel %vm1858, %v2859, %v2896
        %v2898 = vsel %vm1860, %v2868, %v2897
        %v2899 = vsel %vm1862, %v2877, %v2898
        %v2900 = vsel %vm1864, %v2886, %v2899
        %v2904 = vsel %vm1875, %v2603, 0
        %v2907 = vsel %vm1875, %v2604, 0
        %v2910 = vsel %vm1875, %v2645, 0
        %v2913 = vsel %vm1875, %v2646, 0
        %2915 = vmatprep.subr.mxu0 0.0
        %2916 = vmatpush1.xpose.msra.mxu0 0.0
        %2917 = vmatprep.subr.mxu0 0.0
        %2918 = vmatpush1.xpose.msra.mxu0 0.0
        %2919 = vmatprep.subr.mxu0 0.0
        %2920 = vmatpush1.xpose.msra.mxu0 0.0
        %2921 = vmatprep.subr.mxu0 0.0
        %2922 = vmatpush1.xpose.msra.mxu0 0.0
        %2923 = vmatprep.subr.mxu0 0.0
        %2924 = vmatpush1.xpose.msra.mxu0 0.0
        %2925 = vmatprep.subr.mxu0 0.0
        %2926 = vmatpush1.xpose.msra.mxu0 0.0
        %2927 = vmatprep.subr.mxu0 0.0
        %2928 = vmatpush1.xpose.msra.mxu0 0.0
        %2929 = vmatprep.subr.mxu0 0.0
        %2930 = vmatpush1.xpose.msra.mxu0 0.0
        %2931 = vmatprep.subr.mxu0 0.0
        %2932 = vmatpush1.xpose.msra.mxu0 0.0
        %2933 = vmatprep.subr.mxu0 0.0
        %2934 = vmatpush1.xpose.msra.mxu0 0.0
        %2935 = vmatprep.subr.mxu0 0.0
        %2936 = vmatpush1.xpose.msra.mxu0 0.0
        %2937 = vmatprep.subr.mxu0 0.0
        %2938 = vmatpush1.xpose.msra.mxu0 0.0
        %2939 = vmatprep.subr.mxu0 0.0
        %2940 = vmatpush1.xpose.msra.mxu0 0.0
        %2941 = vmatprep.subr.mxu0 0.0
        %2942 = vmatpush1.xpose.msra.mxu0 0.0
        %2943 = vmatprep.subr.mxu0 0.0
        %2944 = vmatpush1.xpose.msra.mxu0 %v2913
        %2945 = vmatprep.subr.mxu0 0.0
        %2946 = vmatpush1.xpose.msra.mxu0 %v2910
        %2947 = vmatprep.subr.mxu0 0.0
        %2948 = vmatpush2.xpose.msra.mxu0 0.0
        %2949 = vmatprep.subr.mxu0 0.0
        %2950 = vmatpush2.xpose.msra.mxu0 0.0
        %2951 = vmatprep.subr.mxu0 0.0
        %2952 = vmatpush2.xpose.msra.mxu0 0.0
        %2953 = vmatprep.subr.mxu0 0.0
        %2954 = vmatpush2.xpose.msra.mxu0 0.0
        %2955 = vmatprep.subr.mxu0 0.0
        %2956 = vmatpush2.xpose.msra.mxu0 0.0
        %2957 = vmatprep.subr.mxu0 0.0
        %2958 = vmatpush2.xpose.msra.mxu0 0.0
        %2959 = vmatprep.subr.mxu0 0.0
        %2960 = vmatpush2.xpose.msra.mxu0 0.0
        %2961 = vmatprep.subr.mxu0 0.0
        %2962 = vmatpush2.xpose.msra.mxu0 0.0
        %2963 = vmatprep.subr.mxu0 0.0
        %2964 = vmatpush2.xpose.msra.mxu0 0.0
        %2965 = vmatprep.subr.mxu0 0.0
        %2966 = vmatpush2.xpose.msra.mxu0 0.0
        %2967 = vmatprep.subr.mxu0 0.0
        %2968 = vmatpush2.xpose.msra.mxu0 0.0
        %2969 = vmatprep.subr.mxu0 0.0
        %2970 = vmatpush2.xpose.msra.mxu0 0.0
        %2971 = vmatprep.subr.mxu0 0.0
        %2972 = vmatpush2.xpose.msra.mxu0 0.0
        %2973 = vmatprep.subr.mxu0 0.0
        %2974 = vmatpush2.xpose.msra.mxu0 0.0
        %2975 = vmatprep.subr.mxu0 0.0
        %2976 = vmatpush2.xpose.msra.mxu0 0.0
        %2977 = vmatprep.subr.mxu0 0.0
        %2978 = vmatpush2.xpose.msra.mxu0 0.0
        %2979 = vmatprep.mubr.f32.mxu0 0.0
        %2980 = vmatmul.mubr.f32.gmra.mxu0 %v2904
        %v2981 = vpop.f32.mrf.mxu0
        %v2982 = vadd.f32 %v2893, %v2981
        %v2983 = vpop.f32.mrf.mxu0
        %2984 = vmatprep.mubr.f32.mxu0 0.0
        %2985 = vmatmul.mubr.f32.gmra.mxu0 %v2907
        %v2986 = vpop.f32.mrf.mxu0
        %v2987 = vadd.f32 %v2900, %v2986
        %v2988 = vpop.f32.mrf.mxu0
        %2989 = vdwg.mxu0
        %v2990 = vsub.f32 %v2982, 100000.0
        %v2991 = vsub.f32 %v2987, 100000.0
        %v2992 = vsel %vm1409, %v2982, %v2990
        %v2993 = vsel %vm1410, %v2987, %v2991
        %v2994 = vsel %vm1479, %v2992, -inf
        %2995 = vmax.xlane.f32.xlu0 %v2994
        %v2996 = vpop.xlane.xlu0 %2995
        %v2997 = vsel %vm1479, %v2993, -inf
        %2998 = vmax.xlane.f32.xlu0 %v2997
        %v2999 = vpop.xlane.xlu0 %2998
        %v3000 = vsub.f32 %v2992, %v2996
        %v3001 = vsub.f32 %v2993, %v2999
        %v3002 = vmul.f32 %v3000, 1.442695
        %v3003 = vpow.pop %v3002
        %v3004 = vmul.f32 %v3001, 1.442695
        %v3005 = vpow.pop %v3004
        %v3006 = vsel %vm1479, %v3003, 0.0
        %3007 = vadd.xlane.f32.xlu0 %v3006
        %v3008 = vpop.xlane.xlu0 %3007
        %v3009 = vsel %vm1479, %v3005, 0.0
        %3010 = vadd.xlane.f32.xlu0 %v3009
        %v3011 = vpop.xlane.xlu0 %3010
        %v3012 = vrcp.pop %v3008
        %v3013 = vrcp.pop %v3011
        %v3014 = vmul.f32 %v3003, %v3012
        %v3015 = vmul.f32 %v3005, %v3013
        %v3016 = vsel %vm1997, %v3014, 0.0
        %v3017 = vsel %vm1998, %v3015, 0.0
        %v3018 = vlaneseq
        %v3019 = vshrl.u32 %v3018, 7
        %v3020 = vsub.s32 0, %v3019
        %v3021 = vrot.slane %v3016, %v3020
        %3023 = vbcast.lane.b32.xlu0 %v3021, 256
        %v3024 = vpop.permute.xlu0 %3023
        %s3026 = sor.u32 256, 8
        %3027 = vbcast.lane.b32.xlu0 %v3021, %s3026
        %v3028 = vpop.permute.xlu0 %3027
        %v3029 = vlaneseq
        %v3030 = vshrl.u32 %v3029, 7
        %v3031 = vsub.s32 1, %v3030
        %v3032 = vrot.slane %v3016, %v3031
        %3034 = vbcast.lane.b32.xlu0 %v3032, 256
        %v3035 = vpop.permute.xlu0 %3034
        %s3037 = sor.u32 256, 8
        %3038 = vbcast.lane.b32.xlu0 %v3032, %s3037
        %v3039 = vpop.permute.xlu0 %3038
        %v3040 = vlaneseq
        %v3041 = vshrl.u32 %v3040, 7
        %v3042 = vsub.s32 2, %v3041
        %v3043 = vrot.slane %v3016, %v3042
        %3045 = vbcast.lane.b32.xlu0 %v3043, 256
        %v3046 = vpop.permute.xlu0 %3045
        %s3048 = sor.u32 256, 8
        %3049 = vbcast.lane.b32.xlu0 %v3043, %s3048
        %v3050 = vpop.permute.xlu0 %3049
        %v3051 = vlaneseq
        %v3052 = vshrl.u32 %v3051, 7
        %v3053 = vsub.s32 3, %v3052
        %v3054 = vrot.slane %v3016, %v3053
        %3056 = vbcast.lane.b32.xlu0 %v3054, 256
        %v3057 = vpop.permute.xlu0 %3056
        %s3059 = sor.u32 256, 8
        %3060 = vbcast.lane.b32.xlu0 %v3054, %s3059
        %v3061 = vpop.permute.xlu0 %3060
        %v3062 = vlaneseq
        %v3063 = vshrl.u32 %v3062, 7
        %v3064 = vsub.s32 4, %v3063
        %v3065 = vrot.slane %v3016, %v3064
        %3067 = vbcast.lane.b32.xlu0 %v3065, 256
        %v3068 = vpop.permute.xlu0 %3067
        %s3070 = sor.u32 256, 8
        %3071 = vbcast.lane.b32.xlu0 %v3065, %s3070
        %v3072 = vpop.permute.xlu0 %3071
        %v3073 = vlaneseq
        %v3074 = vshrl.u32 %v3073, 7
        %v3075 = vsub.s32 5, %v3074
        %v3076 = vrot.slane %v3016, %v3075
        %3078 = vbcast.lane.b32.xlu0 %v3076, 256
        %v3079 = vpop.permute.xlu0 %3078
        %s3081 = sor.u32 256, 8
        %3082 = vbcast.lane.b32.xlu0 %v3076, %s3081
        %v3083 = vpop.permute.xlu0 %3082
        %v3084 = vlaneseq
        %v3085 = vshrl.u32 %v3084, 7
        %v3086 = vsub.s32 6, %v3085
        %v3087 = vrot.slane %v3016, %v3086
        %3089 = vbcast.lane.b32.xlu0 %v3087, 256
        %v3090 = vpop.permute.xlu0 %3089
        %s3092 = sor.u32 256, 8
        %3093 = vbcast.lane.b32.xlu0 %v3087, %s3092
        %v3094 = vpop.permute.xlu0 %3093
        %v3095 = vlaneseq
        %v3096 = vshrl.u32 %v3095, 7
        %v3097 = vsub.s32 7, %v3096
        %v3098 = vrot.slane %v3016, %v3097
        %3100 = vbcast.lane.b32.xlu0 %v3098, 256
        %v3101 = vpop.permute.xlu0 %3100
        %s3103 = sor.u32 256, 8
        %3104 = vbcast.lane.b32.xlu0 %v3098, %s3103
        %v3105 = vpop.permute.xlu0 %3104
        %v3106 = vlaneseq
        %v3107 = vshrl.u32 %v3106, 7
        %v3108 = vsub.s32 0, %v3107
        %v3109 = vrot.slane %v3017, %v3108
        %3111 = vbcast.lane.b32.xlu0 %v3109, 256
        %v3112 = vpop.permute.xlu0 %3111
        %s3114 = sor.u32 256, 8
        %3115 = vbcast.lane.b32.xlu0 %v3109, %s3114
        %v3116 = vpop.permute.xlu0 %3115
        %v3117 = vlaneseq
        %v3118 = vshrl.u32 %v3117, 7
        %v3119 = vsub.s32 1, %v3118
        %v3120 = vrot.slane %v3017, %v3119
        %3122 = vbcast.lane.b32.xlu0 %v3120, 256
        %v3123 = vpop.permute.xlu0 %3122
        %s3125 = sor.u32 256, 8
        %3126 = vbcast.lane.b32.xlu0 %v3120, %s3125
        %v3127 = vpop.permute.xlu0 %3126
        %v3128 = vlaneseq
        %v3129 = vshrl.u32 %v3128, 7
        %v3130 = vsub.s32 2, %v3129
        %v3131 = vrot.slane %v3017, %v3130
        %3133 = vbcast.lane.b32.xlu0 %v3131, 256
        %v3134 = vpop.permute.xlu0 %3133
        %s3136 = sor.u32 256, 8
        %3137 = vbcast.lane.b32.xlu0 %v3131, %s3136
        %v3138 = vpop.permute.xlu0 %3137
        %v3139 = vlaneseq
        %v3140 = vshrl.u32 %v3139, 7
        %v3141 = vsub.s32 3, %v3140
        %v3142 = vrot.slane %v3017, %v3141
        %3144 = vbcast.lane.b32.xlu0 %v3142, 256
        %v3145 = vpop.permute.xlu0 %3144
        %s3147 = sor.u32 256, 8
        %3148 = vbcast.lane.b32.xlu0 %v3142, %s3147
        %v3149 = vpop.permute.xlu0 %3148
        %v3150 = vlaneseq
        %v3151 = vshrl.u32 %v3150, 7
        %v3152 = vsub.s32 4, %v3151
        %v3153 = vrot.slane %v3017, %v3152
        %3155 = vbcast.lane.b32.xlu0 %v3153, 256
        %v3156 = vpop.permute.xlu0 %3155
        %s3158 = sor.u32 256, 8
        %3159 = vbcast.lane.b32.xlu0 %v3153, %s3158
        %v3160 = vpop.permute.xlu0 %3159
        %v3161 = vlaneseq
        %v3162 = vshrl.u32 %v3161, 7
        %v3163 = vsub.s32 5, %v3162
        %v3164 = vrot.slane %v3017, %v3163
        %3166 = vbcast.lane.b32.xlu0 %v3164, 256
        %v3167 = vpop.permute.xlu0 %3166
        %s3169 = sor.u32 256, 8
        %3170 = vbcast.lane.b32.xlu0 %v3164, %s3169
        %v3171 = vpop.permute.xlu0 %3170
        %v3172 = vlaneseq
        %v3173 = vshrl.u32 %v3172, 7
        %v3174 = vsub.s32 6, %v3173
        %v3175 = vrot.slane %v3017, %v3174
        %3177 = vbcast.lane.b32.xlu0 %v3175, 256
        %v3178 = vpop.permute.xlu0 %3177
        %s3180 = sor.u32 256, 8
        %3181 = vbcast.lane.b32.xlu0 %v3175, %s3180
        %v3182 = vpop.permute.xlu0 %3181
        %v3183 = vlaneseq
        %v3184 = vshrl.u32 %v3183, 7
        %v3185 = vsub.s32 7, %v3184
        %v3186 = vrot.slane %v3017, %v3185
        %3188 = vbcast.lane.b32.xlu0 %v3186, 256
        %v3189 = vpop.permute.xlu0 %3188
        %s3191 = sor.u32 256, 8
        %3192 = vbcast.lane.b32.xlu0 %v3186, %s3191
        %v3193 = vpop.permute.xlu0 %3192
        %v3194 = vmul.f32 %v3024, %v526
        %v3195 = vmul.f32 %v3028, %v527
        %v3196 = vmul.f32 %v3035, %v528
        %v3197 = vmul.f32 %v3039, %v529
        %v3198 = vmul.f32 %v3046, %v530
        %v3199 = vmul.f32 %v3050, %v531
        %v3200 = vmul.f32 %v3057, %v532
        %v3201 = vmul.f32 %v3061, %v533
        %v3202 = vmul.f32 %v3068, %v534
        %v3203 = vmul.f32 %v3072, %v535
        %v3204 = vmul.f32 %v3079, %v536
        %v3205 = vmul.f32 %v3083, %v537
        %v3206 = vmul.f32 %v3090, %v538
        %v3207 = vmul.f32 %v3094, %v539
        %v3208 = vmul.f32 %v3101, %v540
        %v3209 = vmul.f32 %v3105, %v541
        %v3210 = vmul.f32 %v3112, %v542
        %v3211 = vmul.f32 %v3116, %v543
        %v3212 = vmul.f32 %v3123, %v544
        %v3213 = vmul.f32 %v3127, %v545
        %v3214 = vmul.f32 %v3134, %v546
        %v3215 = vmul.f32 %v3138, %v547
        %v3216 = vmul.f32 %v3145, %v548
        %v3217 = vmul.f32 %v3149, %v549
        %v3218 = vmul.f32 %v3156, %v550
        %v3219 = vmul.f32 %v3160, %v551
        %v3220 = vmul.f32 %v3167, %v552
        %v3221 = vmul.f32 %v3171, %v553
        %v3222 = vmul.f32 %v3178, %v554
        %v3223 = vmul.f32 %v3182, %v555
        %v3224 = vmul.f32 %v3189, %v556
        %v3225 = vmul.f32 %v3193, %v557
        %v3226 = vsel %vm1039, %v3194, 0.0
        %v3227 = vsel %vm1039, %v3195, 0.0
        %v3228 = vadd.f32 %v3226, %v3227
        %v3229 = vrot.slane %v3228, 4
        %v3230 = vadd.f32 %v3228, %v3229
        %v3231 = vrot.slane %v3230, 2
        %v3232 = vadd.f32 %v3230, %v3231
        %v3233 = vrot.slane %v3232, 1
        %v3234 = vadd.f32 %v3232, %v3233
        %v3235 = vsel %vm1039, %v3196, 0.0
        %v3236 = vsel %vm1039, %v3197, 0.0
        %v3237 = vadd.f32 %v3235, %v3236
        %v3238 = vrot.slane %v3237, 4
        %v3239 = vadd.f32 %v3237, %v3238
        %v3240 = vrot.slane %v3239, 2
        %v3241 = vadd.f32 %v3239, %v3240
        %v3242 = vrot.slane %v3241, 1
        %v3243 = vadd.f32 %v3241, %v3242
        %v3244 = vsel %vm1039, %v3198, 0.0
        %v3245 = vsel %vm1039, %v3199, 0.0
        %v3246 = vadd.f32 %v3244, %v3245
        %v3247 = vrot.slane %v3246, 4
        %v3248 = vadd.f32 %v3246, %v3247
        %v3249 = vrot.slane %v3248, 2
        %v3250 = vadd.f32 %v3248, %v3249
        %v3251 = vrot.slane %v3250, 1
        %v3252 = vadd.f32 %v3250, %v3251
        %v3253 = vsel %vm1039, %v3200, 0.0
        %v3254 = vsel %vm1039, %v3201, 0.0
        %v3255 = vadd.f32 %v3253, %v3254
        %v3256 = vrot.slane %v3255, 4
        %v3257 = vadd.f32 %v3255, %v3256
        %v3258 = vrot.slane %v3257, 2
        %v3259 = vadd.f32 %v3257, %v3258
        %v3260 = vrot.slane %v3259, 1
        %v3261 = vadd.f32 %v3259, %v3260
        %v3262 = vsel %vm1039, %v3202, 0.0
        %v3263 = vsel %vm1039, %v3203, 0.0
        %v3264 = vadd.f32 %v3262, %v3263
        %v3265 = vrot.slane %v3264, 4
        %v3266 = vadd.f32 %v3264, %v3265
        %v3267 = vrot.slane %v3266, 2
        %v3268 = vadd.f32 %v3266, %v3267
        %v3269 = vrot.slane %v3268, 1
        %v3270 = vadd.f32 %v3268, %v3269
        %v3271 = vsel %vm1039, %v3204, 0.0
        %v3272 = vsel %vm1039, %v3205, 0.0
        %v3273 = vadd.f32 %v3271, %v3272
        %v3274 = vrot.slane %v3273, 4
        %v3275 = vadd.f32 %v3273, %v3274
        %v3276 = vrot.slane %v3275, 2
        %v3277 = vadd.f32 %v3275, %v3276
        %v3278 = vrot.slane %v3277, 1
        %v3279 = vadd.f32 %v3277, %v3278
        %v3280 = vsel %vm1039, %v3206, 0.0
        %v3281 = vsel %vm1039, %v3207, 0.0
        %v3282 = vadd.f32 %v3280, %v3281
        %v3283 = vrot.slane %v3282, 4
        %v3284 = vadd.f32 %v3282, %v3283
        %v3285 = vrot.slane %v3284, 2
        %v3286 = vadd.f32 %v3284, %v3285
        %v3287 = vrot.slane %v3286, 1
        %v3288 = vadd.f32 %v3286, %v3287
        %v3289 = vsel %vm1039, %v3208, 0.0
        %v3290 = vsel %vm1039, %v3209, 0.0
        %v3291 = vadd.f32 %v3289, %v3290
        %v3292 = vrot.slane %v3291, 4
        %v3293 = vadd.f32 %v3291, %v3292
        %v3294 = vrot.slane %v3293, 2
        %v3295 = vadd.f32 %v3293, %v3294
        %v3296 = vrot.slane %v3295, 1
        %v3297 = vadd.f32 %v3295, %v3296
        %v3298 = vsel %vm1039, %v3210, 0.0
        %v3299 = vsel %vm1039, %v3211, 0.0
        %v3300 = vadd.f32 %v3298, %v3299
        %v3301 = vrot.slane %v3300, 4
        %v3302 = vadd.f32 %v3300, %v3301
        %v3303 = vrot.slane %v3302, 2
        %v3304 = vadd.f32 %v3302, %v3303
        %v3305 = vrot.slane %v3304, 1
        %v3306 = vadd.f32 %v3304, %v3305
        %v3307 = vsel %vm1039, %v3212, 0.0
        %v3308 = vsel %vm1039, %v3213, 0.0
        %v3309 = vadd.f32 %v3307, %v3308
        %v3310 = vrot.slane %v3309, 4
        %v3311 = vadd.f32 %v3309, %v3310
        %v3312 = vrot.slane %v3311, 2
        %v3313 = vadd.f32 %v3311, %v3312
        %v3314 = vrot.slane %v3313, 1
        %v3315 = vadd.f32 %v3313, %v3314
        %v3316 = vsel %vm1039, %v3214, 0.0
        %v3317 = vsel %vm1039, %v3215, 0.0
        %v3318 = vadd.f32 %v3316, %v3317
        %v3319 = vrot.slane %v3318, 4
        %v3320 = vadd.f32 %v3318, %v3319
        %v3321 = vrot.slane %v3320, 2
        %v3322 = vadd.f32 %v3320, %v3321
        %v3323 = vrot.slane %v3322, 1
        %v3324 = vadd.f32 %v3322, %v3323
        %v3325 = vsel %vm1039, %v3216, 0.0
        %v3326 = vsel %vm1039, %v3217, 0.0
        %v3327 = vadd.f32 %v3325, %v3326
        %v3328 = vrot.slane %v3327, 4
        %v3329 = vadd.f32 %v3327, %v3328
        %v3330 = vrot.slane %v3329, 2
        %v3331 = vadd.f32 %v3329, %v3330
        %v3332 = vrot.slane %v3331, 1
        %v3333 = vadd.f32 %v3331, %v3332
        %v3334 = vsel %vm1039, %v3218, 0.0
        %v3335 = vsel %vm1039, %v3219, 0.0
        %v3336 = vadd.f32 %v3334, %v3335
        %v3337 = vrot.slane %v3336, 4
        %v3338 = vadd.f32 %v3336, %v3337
        %v3339 = vrot.slane %v3338, 2
        %v3340 = vadd.f32 %v3338, %v3339
        %v3341 = vrot.slane %v3340, 1
        %v3342 = vadd.f32 %v3340, %v3341
        %v3343 = vsel %vm1039, %v3220, 0.0
        %v3344 = vsel %vm1039, %v3221, 0.0
        %v3345 = vadd.f32 %v3343, %v3344
        %v3346 = vrot.slane %v3345, 4
        %v3347 = vadd.f32 %v3345, %v3346
        %v3348 = vrot.slane %v3347, 2
        %v3349 = vadd.f32 %v3347, %v3348
        %v3350 = vrot.slane %v3349, 1
        %v3351 = vadd.f32 %v3349, %v3350
        %v3352 = vsel %vm1039, %v3222, 0.0
        %v3353 = vsel %vm1039, %v3223, 0.0
        %v3354 = vadd.f32 %v3352, %v3353
        %v3355 = vrot.slane %v3354, 4
        %v3356 = vadd.f32 %v3354, %v3355
        %v3357 = vrot.slane %v3356, 2
        %v3358 = vadd.f32 %v3356, %v3357
        %v3359 = vrot.slane %v3358, 1
        %v3360 = vadd.f32 %v3358, %v3359
        %v3361 = vsel %vm1039, %v3224, 0.0
        %v3362 = vsel %vm1039, %v3225, 0.0
        %v3363 = vadd.f32 %v3361, %v3362
        %v3364 = vrot.slane %v3363, 4
        %v3365 = vadd.f32 %v3363, %v3364
        %v3366 = vrot.slane %v3365, 2
        %v3367 = vadd.f32 %v3365, %v3366
        %v3368 = vrot.slane %v3367, 1
        %v3369 = vadd.f32 %v3367, %v3368
        %v3386 = vsel %vm1852, %v3243, %v3234
        %v3387 = vsel %vm1854, %v3252, %v3386
        %v3388 = vsel %vm1856, %v3261, %v3387
        %v3389 = vsel %vm1858, %v3270, %v3388
        %v3390 = vsel %vm1860, %v3279, %v3389
        %v3391 = vsel %vm1862, %v3288, %v3390
        %v3392 = vsel %vm1864, %v3297, %v3391
        %v3393 = vsel %vm1852, %v3315, %v3306
        %v3394 = vsel %vm1854, %v3324, %v3393
        %v3395 = vsel %vm1856, %v3333, %v3394
        %v3396 = vsel %vm1858, %v3342, %v3395
        %v3397 = vsel %vm1860, %v3351, %v3396
        %v3398 = vsel %vm1862, %v3360, %v3397
        %v3399 = vsel %vm1864, %v3369, %v3398
        %3400 = vrot.lane.b32.xlu0 %v3392, 8
        %v3401 = vpop.permute.xlu0 %3400
        %3402 = vrot.lane.b32.xlu0 %v3399, 8
        %v3403 = vpop.permute.xlu0 %3402
        %3406 = vst.msk [vmem:[#allocation2] sm:$0xff] %vm1715, %v3401
        %3407 = vst.msk [vmem:[#allocation2 + $0x10] sm:$0xff] %vm1715, %v3403
        %3410 = vrot.lane.b32.xlu0 %v636, 112
        %v3411 = vpop.permute.xlu0 %3410
        %3412 = vrot.lane.b32.xlu0 %v642, 112
        %v3413 = vpop.permute.xlu0 %3412
        %3416 = vrot.lane.b32.xlu0 %v987, 108
        %v3417 = vpop.permute.xlu0 %3416
        %3418 = vrot.lane.b32.xlu0 %v988, 108
        %v3419 = vpop.permute.xlu0 %3418
        %3422 = vrot.lane.b32.xlu0 %v995, 112
        %v3423 = vpop.permute.xlu0 %3422
        %3424 = vrot.lane.b32.xlu0 %v996, 112
        %v3425 = vpop.permute.xlu0 %3424
        %3428 = vrot.lane.b32.xlu0 %v1003, 116
        %v3429 = vpop.permute.xlu0 %3428
        %3430 = vrot.lane.b32.xlu0 %v1004, 116
        %v3431 = vpop.permute.xlu0 %3430
        %v3434 = vsel %vm1479, %v3411, %v3417
        %v3435 = vsel %vm1479, %v3413, %v3419
        %v3436 = vsel %vm1482, %v3434, %v3423
        %v3437 = vsel %vm1482, %v3435, %v3425
        %v3438 = vsel %vm1485, %v3436, %v3429
        %v3439 = vsel %vm1485, %v3437, %v3431
        %v3441 = vsel %vm1479, %v3016, 0
        %v3444 = vsel %vm1479, %v3017, 0
        %3446 = vmatprep.subr.mxu0 0.0
        %3447 = vmatpush1.msra.mxu0 0.0
        %3448 = vmatprep.subr.mxu0 0.0
        %3449 = vmatpush1.msra.mxu0 0.0
        %3450 = vmatprep.subr.mxu0 0.0
        %3451 = vmatpush1.msra.mxu0 0.0
        %3452 = vmatprep.subr.mxu0 0.0
        %3453 = vmatpush1.msra.mxu0 0.0
        %3454 = vmatprep.subr.mxu0 0.0
        %3455 = vmatpush1.msra.mxu0 0.0
        %3456 = vmatprep.subr.mxu0 0.0
        %3457 = vmatpush1.msra.mxu0 0.0
        %3458 = vmatprep.subr.mxu0 0.0
        %3459 = vmatpush1.msra.mxu0 0.0
        %3460 = vmatprep.subr.mxu0 0.0
        %3461 = vmatpush1.msra.mxu0 0.0
        %3462 = vmatprep.subr.mxu0 0.0
        %3463 = vmatpush1.msra.mxu0 0.0
        %3464 = vmatprep.subr.mxu0 0.0
        %3465 = vmatpush1.msra.mxu0 0.0
        %3466 = vmatprep.subr.mxu0 0.0
        %3467 = vmatpush1.msra.mxu0 0.0
        %3468 = vmatprep.subr.mxu0 0.0
        %3469 = vmatpush1.msra.mxu0 0.0
        %3470 = vmatprep.subr.mxu0 0.0
        %3471 = vmatpush1.msra.mxu0 0.0
        %3472 = vmatprep.subr.mxu0 0.0
        %3473 = vmatpush1.msra.mxu0 0.0
        %3474 = vmatprep.subr.mxu0 0.0
        %3475 = vmatpush1.msra.mxu0 %v3439
        %3476 = vmatprep.subr.mxu0 0.0
        %3477 = vmatpush1.msra.mxu0 %v3438
        %3478 = vmatprep.subr.mxu0 0.0
        %3479 = vmatpush2.msra.mxu0 0.0
        %3480 = vmatprep.subr.mxu0 0.0
        %3481 = vmatpush2.msra.mxu0 0.0
        %3482 = vmatprep.subr.mxu0 0.0
        %3483 = vmatpush2.msra.mxu0 0.0
        %3484 = vmatprep.subr.mxu0 0.0
        %3485 = vmatpush2.msra.mxu0 0.0
        %3486 = vmatprep.subr.mxu0 0.0
        %3487 = vmatpush2.msra.mxu0 0.0
        %3488 = vmatprep.subr.mxu0 0.0
        %3489 = vmatpush2.msra.mxu0 0.0
        %3490 = vmatprep.subr.mxu0 0.0
        %3491 = vmatpush2.msra.mxu0 0.0
        %3492 = vmatprep.subr.mxu0 0.0
        %3493 = vmatpush2.msra.mxu0 0.0
        %3494 = vmatprep.subr.mxu0 0.0
        %3495 = vmatpush2.msra.mxu0 0.0
        %3496 = vmatprep.subr.mxu0 0.0
        %3497 = vmatpush2.msra.mxu0 0.0
        %3498 = vmatprep.subr.mxu0 0.0
        %3499 = vmatpush2.msra.mxu0 0.0
        %3500 = vmatprep.subr.mxu0 0.0
        %3501 = vmatpush2.msra.mxu0 0.0
        %3502 = vmatprep.subr.mxu0 0.0
        %3503 = vmatpush2.msra.mxu0 0.0
        %3504 = vmatprep.subr.mxu0 0.0
        %3505 = vmatpush2.msra.mxu0 0.0
        %3506 = vmatprep.subr.mxu0 0.0
        %3507 = vmatpush2.msra.mxu0 0.0
        %3508 = vmatprep.subr.mxu0 0.0
        %3509 = vmatpush2.msra.mxu0 0.0
        %3510 = vmatprep.mubr.f32.mxu0 0.0
        %3511 = vmatmul.mubr.f32.gmra.mxu0 %v3441
        %v3512 = vpop.f32.mrf.mxu0
        %v3513 = vadd.f32 0.0, %v3512
        %v3514 = vpop.f32.mrf.mxu0
        %3515 = vmatprep.mubr.f32.mxu0 0.0
        %3516 = vmatmul.mubr.f32.gmra.mxu0 %v3444
        %v3517 = vpop.f32.mrf.mxu0
        %v3518 = vadd.f32 0.0, %v3517
        %v3519 = vpop.f32.mrf.mxu0
        %3520 = vdwg.mxu0
        %3523 = vrot.lane.b32.xlu0 %v3513, 48
        %v3524 = vpop.permute.xlu0 %3523
        %3525 = vrot.lane.b32.xlu0 %v3518, 48
        %v3526 = vpop.permute.xlu0 %3525
        %vm3529 = vcmask 523648
        %3530 = vst.msk [vmem:[#allocation2] sm:$0xff] %vm3529, %v3524
        %3531 = vst.msk [vmem:[#allocation2 + $0x10] sm:$0xff] %vm3529, %v3526
        %3532 = vrot.lane.b32.xlu0 %v3513, 84
        %v3533 = vpop.permute.xlu0 %3532
        %3534 = vrot.lane.b32.xlu0 %v3518, 84
        %v3535 = vpop.permute.xlu0 %3534
        %vm3538 = vcmask 851744
        %3539 = vst.msk [vmem:[#allocation2] sm:$0xff] %vm3538, %v3533
        %3540 = vst.msk [vmem:[#allocation2 + $0x10] sm:$0xff] %vm3538, %v3535
        %3541 = vrot.lane.b32.xlu0 %v3513, 96
        %v3542 = vpop.permute.xlu0 %3541
        %3543 = vrot.lane.b32.xlu0 %v3518, 96
        %v3544 = vpop.permute.xlu0 %3543
        %vm3547 = vcmask 982944
        %3548 = vst.msk [vmem:[#allocation2] sm:$0xff] %vm3547, %v3542
        %3549 = vst.msk [vmem:[#allocation2 + $0x10] sm:$0xff] %vm3547, %v3544
        %3550 = vrot.lane.b32.xlu0 %v3513, 108
        %v3551 = vpop.permute.xlu0 %3550
        %3552 = vrot.lane.b32.xlu0 %v3518, 108
        %v3553 = vpop.permute.xlu0 %3552
        %vm3556 = vcmask 64544
        %3557 = vst.msk [vmem:[#allocation2 + $0x8] sm:$0xff] %vm3556, %v3551
        %3558 = vst.msk [vmem:[#allocation2 + $0x18] sm:$0xff] %vm3556, %v3553
        %3559 = vrot.lane.b32.xlu0 %v1013, 56
        %v3560 = vpop.permute.xlu0 %3559
        %3561 = vrot.lane.b32.xlu0 %v1014, 56
        %v3562 = vpop.permute.xlu0 %3561
        %v3565 = vsel %vm1421, %v3560, 0.0
        %3566 = vadd.xlane.f32.xlu0 %v3565
        %v3567 = vpop.xlane.xlu0 %3566
        %v3568 = vsel %vm1421, %v3562, 0.0
        %3569 = vadd.xlane.f32.xlu0 %v3568
        %v3570 = vpop.xlane.xlu0 %3569
        %v3571 = vmul.f32 %v3567, %v1029
        %v3572 = vmul.f32 %v3570, %v1029
        %3573 = vrot.lane.b32.xlu0 %v1023, 8
        %v3574 = vpop.permute.xlu0 %3573
        %3575 = vrot.lane.b32.xlu0 %v1024, 8
        %v3576 = vpop.permute.xlu0 %3575
        %v3579 = vsel %vm1421, %v3574, 0.0
        %3580 = vadd.xlane.f32.xlu0 %v3579
        %v3581 = vpop.xlane.xlu0 %3580
        %v3582 = vsel %vm1421, %v3576, 0.0
        %3583 = vadd.xlane.f32.xlu0 %v3582
        %v3584 = vpop.xlane.xlu0 %3583
        %v3585 = vmul.f32 %v3581, %v1029
        %v3586 = vmul.f32 %v3584, %v1029
        %3587 = vrot.lane.b32.xlu0 %v634, 96
        %v3588 = vpop.permute.xlu0 %3587
        %3589 = vrot.lane.b32.xlu0 %v640, 96
        %v3590 = vpop.permute.xlu0 %3589
        %3593 = vrot.lane.b32.xlu0 %v1033, 72
        %v3594 = vpop.permute.xlu0 %3593
        %3595 = vrot.lane.b32.xlu0 %v1034, 72
        %v3596 = vpop.permute.xlu0 %3595
        %3599 = vrot.lane.b32.xlu0 %v1035, 76
        %v3600 = vpop.permute.xlu0 %3599
        %3601 = vrot.lane.b32.xlu0 %v1036, 76
        %v3602 = vpop.permute.xlu0 %3601
        %3605 = vrot.lane.b32.xlu0 %v1037, 80
        %v3606 = vpop.permute.xlu0 %3605
        %3607 = vrot.lane.b32.xlu0 %v1038, 80
        %v3608 = vpop.permute.xlu0 %3607
        %3613 = vrot.lane.b32.xlu0 %v3571, 10
        %v3614 = vpop.permute.xlu0 %3613
        %3615 = vrot.lane.b32.xlu0 %v3572, 10
        %v3616 = vpop.permute.xlu0 %3615
        %v3619 = vsel %vm1479, %v3588, %v3594
        %v3620 = vsel %vm1479, %v3590, %v3596
        %v3621 = vsel %vm1482, %v3619, %v3600
        %v3622 = vsel %vm1482, %v3620, %v3602
        %v3623 = vsel %vm1485, %v3621, %v3606
        %v3624 = vsel %vm1485, %v3622, %v3608
        %v3625 = vsel %vm1488, %v3623, %v3614
        %v3626 = vsel %vm1488, %v3624, %v3616
        %v3627 = vsel %vm1491, %v3625, 1.0
        %v3628 = vsel %vm1491, %v3626, 1.0
        %3629 = vrot.lane.b32.xlu0 %v634, 32
        %v3630 = vpop.permute.xlu0 %3629
        %3631 = vrot.lane.b32.xlu0 %v640, 32
        %v3632 = vpop.permute.xlu0 %3631
        %3635 = vrot.lane.b32.xlu0 %v927, 24
        %v3636 = vpop.permute.xlu0 %3635
        %3637 = vrot.lane.b32.xlu0 %v928, 24
        %v3638 = vpop.permute.xlu0 %3637
        %3641 = vrot.lane.b32.xlu0 %v953, 28
        %v3642 = vpop.permute.xlu0 %3641
        %3643 = vrot.lane.b32.xlu0 %v954, 28
        %v3644 = vpop.permute.xlu0 %3643
        %3647 = vrot.lane.b32.xlu0 %v979, 32
        %v3648 = vpop.permute.xlu0 %3647
        %3649 = vrot.lane.b32.xlu0 %v980, 32
        %v3650 = vpop.permute.xlu0 %3649
        %3655 = vrot.lane.b32.xlu0 %v3585, 11
        %v3656 = vpop.permute.xlu0 %3655
        %3657 = vrot.lane.b32.xlu0 %v3586, 11
        %v3658 = vpop.permute.xlu0 %3657
        %v3661 = vsel %vm1479, %v3630, %v3636
        %v3662 = vsel %vm1479, %v3632, %v3638
        %v3663 = vsel %vm1482, %v3661, %v3642
        %v3664 = vsel %vm1482, %v3662, %v3644
        %v3665 = vsel %vm1485, %v3663, %v3648
        %v3666 = vsel %vm1485, %v3664, %v3650
        %v3667 = vsel %vm1488, %v3665, 1.0
        %v3668 = vsel %vm1488, %v3666, 1.0
        %v3669 = vsel %vm1491, %v3667, %v3656
        %v3670 = vsel %vm1491, %v3668, %v3658
        %3671 = vset.pattern.permute.xlu0 2
        %3672 = vperm.xlu0 %3671, %v1544
        %v3673 = vpop.permute.xlu0 %3672
        %3674 = vset.pattern.permute.xlu0 2
        %3675 = vperm.xlu0 %3674, %v1545
        %v3676 = vpop.permute.xlu0 %3675
        %3677 = vset.pattern.permute.xlu0 2
        %3678 = vperm.xlu0 %3677, %v1546
        %v3679 = vpop.permute.xlu0 %3678
        %3680 = vset.pattern.permute.xlu0 2
        %3681 = vperm.xlu0 %3680, %v1547
        %v3682 = vpop.permute.xlu0 %3681
        %3683 = vset.pattern.permute.xlu0 2
        %3684 = vperm.xlu0 %3683, %v1548
        %v3685 = vpop.permute.xlu0 %3684
        %3686 = vset.pattern.permute.xlu0 2
        %3687 = vperm.xlu0 %3686, %v1549
        %v3688 = vpop.permute.xlu0 %3687
        %3689 = vset.pattern.permute.xlu0 2
        %3690 = vperm.xlu0 %3689, %v1550
        %v3691 = vpop.permute.xlu0 %3690
        %3692 = vset.pattern.permute.xlu0 2
        %3693 = vperm.xlu0 %3692, %v1551
        %v3694 = vpop.permute.xlu0 %3693
        %3695 = vset.pattern.permute.xlu0 2
        %3696 = vperm.xlu0 %3695, %v1552
        %v3697 = vpop.permute.xlu0 %3696
        %3698 = vset.pattern.permute.xlu0 2
        %3699 = vperm.xlu0 %3698, %v1553
        %v3700 = vpop.permute.xlu0 %3699
        %3701 = vset.pattern.permute.xlu0 2
        %3702 = vperm.xlu0 %3701, %v1554
        %v3703 = vpop.permute.xlu0 %3702
        %3704 = vset.pattern.permute.xlu0 2
        %3705 = vperm.xlu0 %3704, %v1555
        %v3706 = vpop.permute.xlu0 %3705
        %3707 = vset.pattern.permute.xlu0 2
        %3708 = vperm.xlu0 %3707, %v1556
        %v3709 = vpop.permute.xlu0 %3708
        %3710 = vset.pattern.permute.xlu0 2
        %3711 = vperm.xlu0 %3710, %v1557
        %v3712 = vpop.permute.xlu0 %3711
        %3713 = vset.pattern.permute.xlu0 2
        %3714 = vperm.xlu0 %3713, %v1558
        %v3715 = vpop.permute.xlu0 %3714
        %3716 = vset.pattern.permute.xlu0 2
        %3717 = vperm.xlu0 %3716, %v1559
        %v3718 = vpop.permute.xlu0 %3717
        %3719 = vset.pattern.permute.xlu0 2
        %3720 = vperm.xlu0 %3719, %v1560
        %v3721 = vpop.permute.xlu0 %3720
        %3722 = vset.pattern.permute.xlu0 2
        %3723 = vperm.xlu0 %3722, %v1561
        %v3724 = vpop.permute.xlu0 %3723
        %3725 = vset.pattern.permute.xlu0 2
        %3726 = vperm.xlu0 %3725, %v1562
        %v3727 = vpop.permute.xlu0 %3726
        %3728 = vset.pattern.permute.xlu0 2
        %3729 = vperm.xlu0 %3728, %v1563
        %v3730 = vpop.permute.xlu0 %3729
        %3731 = vset.pattern.permute.xlu0 2
        %3732 = vperm.xlu0 %3731, %v1564
        %v3733 = vpop.permute.xlu0 %3732
        %3734 = vset.pattern.permute.xlu0 2
        %3735 = vperm.xlu0 %3734, %v1565
        %v3736 = vpop.permute.xlu0 %3735
        %3737 = vset.pattern.permute.xlu0 2
        %3738 = vperm.xlu0 %3737, %v1566
        %v3739 = vpop.permute.xlu0 %3738
        %3740 = vset.pattern.permute.xlu0 2
        %3741 = vperm.xlu0 %3740, %v1567
        %v3742 = vpop.permute.xlu0 %3741
        %3743 = vset.pattern.permute.xlu0 2
        %3744 = vperm.xlu0 %3743, %v1568
        %v3745 = vpop.permute.xlu0 %3744
        %3746 = vset.pattern.permute.xlu0 2
        %3747 = vperm.xlu0 %3746, %v1569
        %v3748 = vpop.permute.xlu0 %3747
        %3749 = vset.pattern.permute.xlu0 2
        %3750 = vperm.xlu0 %3749, %v1570
        %v3751 = vpop.permute.xlu0 %3750
        %3752 = vset.pattern.permute.xlu0 2
        %3753 = vperm.xlu0 %3752, %v1571
        %v3754 = vpop.permute.xlu0 %3753
        %3755 = vset.pattern.permute.xlu0 2
        %3756 = vperm.xlu0 %3755, %v1572
        %v3757 = vpop.permute.xlu0 %3756
        %3758 = vset.pattern.permute.xlu0 2
        %3759 = vperm.xlu0 %3758, %v1573
        %v3760 = vpop.permute.xlu0 %3759
        %3761 = vset.pattern.permute.xlu0 2
        %3762 = vperm.xlu0 %3761, %v1574
        %v3763 = vpop.permute.xlu0 %3762
        %3764 = vset.pattern.permute.xlu0 2
        %3765 = vperm.xlu0 %3764, %v1575
        %v3766 = vpop.permute.xlu0 %3765
        %v3767 = vlaneseq
        %v3768 = vshrl.u32 %v3767, 7
        %v3769 = vsub.s32 %v1705, %v3768
        %v3770 = vrot.slane %v3673, %v3769
        %v3771 = vlaneseq
        %v3772 = vshrl.u32 %v3771, 7
        %v3773 = vsub.s32 %v1710, %v3772
        %v3774 = vrot.slane %v3676, %v3773
        %v3775 = vsel %vm1715, %v3774, %v3770
        %v3776 = vlaneseq
        %v3777 = vshrl.u32 %v3776, 7
        %v3778 = vsub.s32 %v1705, %v3777
        %v3779 = vrot.slane %v3679, %v3778
        %v3780 = vlaneseq
        %v3781 = vshrl.u32 %v3780, 7
        %v3782 = vsub.s32 %v1710, %v3781
        %v3783 = vrot.slane %v3682, %v3782
        %v3784 = vsel %vm1715, %v3783, %v3779
        %v3785 = vlaneseq
        %v3786 = vshrl.u32 %v3785, 7
        %v3787 = vsub.s32 %v1705, %v3786
        %v3788 = vrot.slane %v3685, %v3787
        %v3789 = vlaneseq
        %v3790 = vshrl.u32 %v3789, 7
        %v3791 = vsub.s32 %v1710, %v3790
        %v3792 = vrot.slane %v3688, %v3791
        %v3793 = vsel %vm1715, %v3792, %v3788
        %v3794 = vlaneseq
        %v3795 = vshrl.u32 %v3794, 7
        %v3796 = vsub.s32 %v1705, %v3795
        %v3797 = vrot.slane %v3691, %v3796
        %v3798 = vlaneseq
        %v3799 = vshrl.u32 %v3798, 7
        %v3800 = vsub.s32 %v1710, %v3799
        %v3801 = vrot.slane %v3694, %v3800
        %v3802 = vsel %vm1715, %v3801, %v3797
        %v3803 = vlaneseq
        %v3804 = vshrl.u32 %v3803, 7
        %v3805 = vsub.s32 %v1705, %v3804
        %v3806 = vrot.slane %v3697, %v3805
        %v3807 = vlaneseq
        %v3808 = vshrl.u32 %v3807, 7
        %v3809 = vsub.s32 %v1710, %v3808
        %v3810 = vrot.slane %v3700, %v3809
        %v3811 = vsel %vm1715, %v3810, %v3806
        %v3812 = vlaneseq
        %v3813 = vshrl.u32 %v3812, 7
        %v3814 = vsub.s32 %v1705, %v3813
        %v3815 = vrot.slane %v3703, %v3814
        %v3816 = vlaneseq
        %v3817 = vshrl.u32 %v3816, 7
        %v3818 = vsub.s32 %v1710, %v3817
        %v3819 = vrot.slane %v3706, %v3818
        %v3820 = vsel %vm1715, %v3819, %v3815
        %v3821 = vlaneseq
        %v3822 = vshrl.u32 %v3821, 7
        %v3823 = vsub.s32 %v1705, %v3822
        %v3824 = vrot.slane %v3709, %v3823
        %v3825 = vlaneseq
        %v3826 = vshrl.u32 %v3825, 7
        %v3827 = vsub.s32 %v1710, %v3826
        %v3828 = vrot.slane %v3712, %v3827
        %v3829 = vsel %vm1715, %v3828, %v3824
        %v3830 = vlaneseq
        %v3831 = vshrl.u32 %v3830, 7
        %v3832 = vsub.s32 %v1705, %v3831
        %v3833 = vrot.slane %v3715, %v3832
        %v3834 = vlaneseq
        %v3835 = vshrl.u32 %v3834, 7
        %v3836 = vsub.s32 %v1710, %v3835
        %v3837 = vrot.slane %v3718, %v3836
        %v3838 = vsel %vm1715, %v3837, %v3833
        %v3839 = vlaneseq
        %v3840 = vshrl.u32 %v3839, 7
        %v3841 = vsub.s32 %v1705, %v3840
        %v3842 = vrot.slane %v3721, %v3841
        %v3843 = vlaneseq
        %v3844 = vshrl.u32 %v3843, 7
        %v3845 = vsub.s32 %v1710, %v3844
        %v3846 = vrot.slane %v3724, %v3845
        %v3847 = vsel %vm1715, %v3846, %v3842
        %v3848 = vlaneseq
        %v3849 = vshrl.u32 %v3848, 7
        %v3850 = vsub.s32 %v1705, %v3849
        %v3851 = vrot.slane %v3727, %v3850
        %v3852 = vlaneseq
        %v3853 = vshrl.u32 %v3852, 7
        %v3854 = vsub.s32 %v1710, %v3853
        %v3855 = vrot.slane %v3730, %v3854
        %v3856 = vsel %vm1715, %v3855, %v3851
        %v3857 = vlaneseq
        %v3858 = vshrl.u32 %v3857, 7
        %v3859 = vsub.s32 %v1705, %v3858
        %v3860 = vrot.slane %v3733, %v3859
        %v3861 = vlaneseq
        %v3862 = vshrl.u32 %v3861, 7
        %v3863 = vsub.s32 %v1710, %v3862
        %v3864 = vrot.slane %v3736, %v3863
        %v3865 = vsel %vm1715, %v3864, %v3860
        %v3866 = vlaneseq
        %v3867 = vshrl.u32 %v3866, 7
        %v3868 = vsub.s32 %v1705, %v3867
        %v3869 = vrot.slane %v3739, %v3868
        %v3870 = vlaneseq
        %v3871 = vshrl.u32 %v3870, 7
        %v3872 = vsub.s32 %v1710, %v3871
        %v3873 = vrot.slane %v3742, %v3872
        %v3874 = vsel %vm1715, %v3873, %v3869
        %v3875 = vlaneseq
        %v3876 = vshrl.u32 %v3875, 7
        %v3877 = vsub.s32 %v1705, %v3876
        %v3878 = vrot.slane %v3745, %v3877
        %v3879 = vlaneseq
        %v3880 = vshrl.u32 %v3879, 7
        %v3881 = vsub.s32 %v1710, %v3880
        %v3882 = vrot.slane %v3748, %v3881
        %v3883 = vsel %vm1715, %v3882, %v3878
        %v3884 = vlaneseq
        %v3885 = vshrl.u32 %v3884, 7
        %v3886 = vsub.s32 %v1705, %v3885
        %v3887 = vrot.slane %v3751, %v3886
        %v3888 = vlaneseq
        %v3889 = vshrl.u32 %v3888, 7
        %v3890 = vsub.s32 %v1710, %v3889
        %v3891 = vrot.slane %v3754, %v3890
        %v3892 = vsel %vm1715, %v3891, %v3887
        %v3893 = vlaneseq
        %v3894 = vshrl.u32 %v3893, 7
        %v3895 = vsub.s32 %v1705, %v3894
        %v3896 = vrot.slane %v3757, %v3895
        %v3897 = vlaneseq
        %v3898 = vshrl.u32 %v3897, 7
        %v3899 = vsub.s32 %v1710, %v3898
        %v3900 = vrot.slane %v3760, %v3899
        %v3901 = vsel %vm1715, %v3900, %v3896
        %v3902 = vlaneseq
        %v3903 = vshrl.u32 %v3902, 7
        %v3904 = vsub.s32 %v1705, %v3903
        %v3905 = vrot.slane %v3763, %v3904
        %v3906 = vlaneseq
        %v3907 = vshrl.u32 %v3906, 7
        %v3908 = vsub.s32 %v1710, %v3907
        %v3909 = vrot.slane %v3766, %v3908
        %v3910 = vsel %vm1715, %v3909, %v3905
        %v3911 = vsel %vm1852, %v3784, %v3775
        %v3912 = vsel %vm1854, %v3793, %v3911
        %v3913 = vsel %vm1856, %v3802, %v3912
        %v3914 = vsel %vm1858, %v3811, %v3913
        %v3915 = vsel %vm1860, %v3820, %v3914
        %v3916 = vsel %vm1862, %v3829, %v3915
        %v3917 = vsel %vm1864, %v3838, %v3916
        %v3918 = vsel %vm1852, %v3856, %v3847
        %v3919 = vsel %vm1854, %v3865, %v3918
        %v3920 = vsel %vm1856, %v3874, %v3919
        %v3921 = vsel %vm1858, %v3883, %v3920
        %v3922 = vsel %vm1860, %v3892, %v3921
        %v3923 = vsel %vm1862, %v3901, %v3922
        %v3924 = vsel %vm1864, %v3910, %v3923
        %v3928 = vsel %vm1875, %v3627, 0
        %v3931 = vsel %vm1875, %v3628, 0
        %v3934 = vsel %vm1875, %v3669, 0
        %v3937 = vsel %vm1875, %v3670, 0
        %3939 = vmatprep.subr.mxu0 0.0
        %3940 = vmatpush1.xpose.msra.mxu0 0.0
        %3941 = vmatprep.subr.mxu0 0.0
        %3942 = vmatpush1.xpose.msra.mxu0 0.0
        %3943 = vmatprep.subr.mxu0 0.0
        %3944 = vmatpush1.xpose.msra.mxu0 0.0
        %3945 = vmatprep.subr.mxu0 0.0
        %3946 = vmatpush1.xpose.msra.mxu0 0.0
        %3947 = vmatprep.subr.mxu0 0.0
        %3948 = vmatpush1.xpose.msra.mxu0 0.0
        %3949 = vmatprep.subr.mxu0 0.0
        %3950 = vmatpush1.xpose.msra.mxu0 0.0
        %3951 = vmatprep.subr.mxu0 0.0
        %3952 = vmatpush1.xpose.msra.mxu0 0.0
        %3953 = vmatprep.subr.mxu0 0.0
        %3954 = vmatpush1.xpose.msra.mxu0 0.0
        %3955 = vmatprep.subr.mxu0 0.0
        %3956 = vmatpush1.xpose.msra.mxu0 0.0
        %3957 = vmatprep.subr.mxu0 0.0
        %3958 = vmatpush1.xpose.msra.mxu0 0.0
        %3959 = vmatprep.subr.mxu0 0.0
        %3960 = vmatpush1.xpose.msra.mxu0 0.0
        %3961 = vmatprep.subr.mxu0 0.0
        %3962 = vmatpush1.xpose.msra.mxu0 0.0
        %3963 = vmatprep.subr.mxu0 0.0
        %3964 = vmatpush1.xpose.msra.mxu0 0.0
        %3965 = vmatprep.subr.mxu0 0.0
        %3966 = vmatpush1.xpose.msra.mxu0 0.0
        %3967 = vmatprep.subr.mxu0 0.0
        %3968 = vmatpush1.xpose.msra.mxu0 %v3937
        %3969 = vmatprep.subr.mxu0 0.0
        %3970 = vmatpush1.xpose.msra.mxu0 %v3934
        %3971 = vmatprep.subr.mxu0 0.0
        %3972 = vmatpush2.xpose.msra.mxu0 0.0
        %3973 = vmatprep.subr.mxu0 0.0
        %3974 = vmatpush2.xpose.msra.mxu0 0.0
        %3975 = vmatprep.subr.mxu0 0.0
        %3976 = vmatpush2.xpose.msra.mxu0 0.0
        %3977 = vmatprep.subr.mxu0 0.0
        %3978 = vmatpush2.xpose.msra.mxu0 0.0
        %3979 = vmatprep.subr.mxu0 0.0
        %3980 = vmatpush2.xpose.msra.mxu0 0.0
        %3981 = vmatprep.subr.mxu0 0.0
        %3982 = vmatpush2.xpose.msra.mxu0 0.0
        %3983 = vmatprep.subr.mxu0 0.0
        %3984 = vmatpush2.xpose.msra.mxu0 0.0
        %3985 = vmatprep.subr.mxu0 0.0
        %3986 = vmatpush2.xpose.msra.mxu0 0.0
        %3987 = vmatprep.subr.mxu0 0.0
        %3988 = vmatpush2.xpose.msra.mxu0 0.0
        %3989 = vmatprep.subr.mxu0 0.0
        %3990 = vmatpush2.xpose.msra.mxu0 0.0
        %3991 = vmatprep.subr.mxu0 0.0
        %3992 = vmatpush2.xpose.msra.mxu0 0.0
        %3993 = vmatprep.subr.mxu0 0.0
        %3994 = vmatpush2.xpose.msra.mxu0 0.0
        %3995 = vmatprep.subr.mxu0 0.0
        %3996 = vmatpush2.xpose.msra.mxu0 0.0
        %3997 = vmatprep.subr.mxu0 0.0
        %3998 = vmatpush2.xpose.msra.mxu0 0.0
        %3999 = vmatprep.subr.mxu0 0.0
        %4000 = vmatpush2.xpose.msra.mxu0 0.0
        %4001 = vmatprep.subr.mxu0 0.0
        %4002 = vmatpush2.xpose.msra.mxu0 0.0
        %4003 = vmatprep.mubr.f32.mxu0 0.0
        %4004 = vmatmul.mubr.f32.gmra.mxu0 %v3928
        %v4005 = vpop.f32.mrf.mxu0
        %v4006 = vadd.f32 %v3917, %v4005
        %v4007 = vpop.f32.mrf.mxu0
        %4008 = vmatprep.mubr.f32.mxu0 0.0
        %4009 = vmatmul.mubr.f32.gmra.mxu0 %v3931
        %v4010 = vpop.f32.mrf.mxu0
        %v4011 = vadd.f32 %v3924, %v4010
        %v4012 = vpop.f32.mrf.mxu0
        %4013 = vdwg.mxu0
        %v4014 = vsub.f32 %v4006, 100000.0
        %v4015 = vsub.f32 %v4011, 100000.0
        %v4016 = vsel %vm1409, %v4006, %v4014
        %v4017 = vsel %vm1410, %v4011, %v4015
        %v4018 = vsel %vm1479, %v4016, -inf
        %4019 = vmax.xlane.f32.xlu0 %v4018
        %v4020 = vpop.xlane.xlu0 %4019
        %v4021 = vsel %vm1479, %v4017, -inf
        %4022 = vmax.xlane.f32.xlu0 %v4021
        %v4023 = vpop.xlane.xlu0 %4022
        %v4024 = vsub.f32 %v4016, %v4020
        %v4025 = vsub.f32 %v4017, %v4023
        %v4026 = vmul.f32 %v4024, 1.442695
        %v4027 = vpow.pop %v4026
        %v4028 = vmul.f32 %v4025, 1.442695
        %v4029 = vpow.pop %v4028
        %v4030 = vsel %vm1479, %v4027, 0.0
        %4031 = vadd.xlane.f32.xlu0 %v4030
        %v4032 = vpop.xlane.xlu0 %4031
        %v4033 = vsel %vm1479, %v4029, 0.0
        %4034 = vadd.xlane.f32.xlu0 %v4033
        %v4035 = vpop.xlane.xlu0 %4034
        %v4036 = vrcp.pop %v4032
        %v4037 = vrcp.pop %v4035
        %v4038 = vmul.f32 %v4027, %v4036
        %v4039 = vmul.f32 %v4029, %v4037
        %v4040 = vsel %vm1997, %v4038, 0.0
        %v4041 = vsel %vm1998, %v4039, 0.0
        %v4042 = vlaneseq
        %v4043 = vshrl.u32 %v4042, 7
        %v4044 = vsub.s32 0, %v4043
        %v4045 = vrot.slane %v4040, %v4044
        %4047 = vbcast.lane.b32.xlu0 %v4045, 256
        %v4048 = vpop.permute.xlu0 %4047
        %s4050 = sor.u32 256, 8
        %4051 = vbcast.lane.b32.xlu0 %v4045, %s4050
        %v4052 = vpop.permute.xlu0 %4051
        %v4053 = vlaneseq
        %v4054 = vshrl.u32 %v4053, 7
        %v4055 = vsub.s32 1, %v4054
        %v4056 = vrot.slane %v4040, %v4055
        %4058 = vbcast.lane.b32.xlu0 %v4056, 256
        %v4059 = vpop.permute.xlu0 %4058
        %s4061 = sor.u32 256, 8
        %4062 = vbcast.lane.b32.xlu0 %v4056, %s4061
        %v4063 = vpop.permute.xlu0 %4062
        %v4064 = vlaneseq
        %v4065 = vshrl.u32 %v4064, 7
        %v4066 = vsub.s32 2, %v4065
        %v4067 = vrot.slane %v4040, %v4066
        %4069 = vbcast.lane.b32.xlu0 %v4067, 256
        %v4070 = vpop.permute.xlu0 %4069
        %s4072 = sor.u32 256, 8
        %4073 = vbcast.lane.b32.xlu0 %v4067, %s4072
        %v4074 = vpop.permute.xlu0 %4073
        %v4075 = vlaneseq
        %v4076 = vshrl.u32 %v4075, 7
        %v4077 = vsub.s32 3, %v4076
        %v4078 = vrot.slane %v4040, %v4077
        %4080 = vbcast.lane.b32.xlu0 %v4078, 256
        %v4081 = vpop.permute.xlu0 %4080
        %s4083 = sor.u32 256, 8
        %4084 = vbcast.lane.b32.xlu0 %v4078, %s4083
        %v4085 = vpop.permute.xlu0 %4084
        %v4086 = vlaneseq
        %v4087 = vshrl.u32 %v4086, 7
        %v4088 = vsub.s32 4, %v4087
        %v4089 = vrot.slane %v4040, %v4088
        %4091 = vbcast.lane.b32.xlu0 %v4089, 256
        %v4092 = vpop.permute.xlu0 %4091
        %s4094 = sor.u32 256, 8
        %4095 = vbcast.lane.b32.xlu0 %v4089, %s4094
        %v4096 = vpop.permute.xlu0 %4095
        %v4097 = vlaneseq
        %v4098 = vshrl.u32 %v4097, 7
        %v4099 = vsub.s32 5, %v4098
        %v4100 = vrot.slane %v4040, %v4099
        %4102 = vbcast.lane.b32.xlu0 %v4100, 256
        %v4103 = vpop.permute.xlu0 %4102
        %s4105 = sor.u32 256, 8
        %4106 = vbcast.lane.b32.xlu0 %v4100, %s4105
        %v4107 = vpop.permute.xlu0 %4106
        %v4108 = vlaneseq
        %v4109 = vshrl.u32 %v4108, 7
        %v4110 = vsub.s32 6, %v4109
        %v4111 = vrot.slane %v4040, %v4110
        %4113 = vbcast.lane.b32.xlu0 %v4111, 256
        %v4114 = vpop.permute.xlu0 %4113
        %s4116 = sor.u32 256, 8
        %4117 = vbcast.lane.b32.xlu0 %v4111, %s4116
        %v4118 = vpop.permute.xlu0 %4117
        %v4119 = vlaneseq
        %v4120 = vshrl.u32 %v4119, 7
        %v4121 = vsub.s32 7, %v4120
        %v4122 = vrot.slane %v4040, %v4121
        %4124 = vbcast.lane.b32.xlu0 %v4122, 256
        %v4125 = vpop.permute.xlu0 %4124
        %s4127 = sor.u32 256, 8
        %4128 = vbcast.lane.b32.xlu0 %v4122, %s4127
        %v4129 = vpop.permute.xlu0 %4128
        %v4130 = vlaneseq
        %v4131 = vshrl.u32 %v4130, 7
        %v4132 = vsub.s32 0, %v4131
        %v4133 = vrot.slane %v4041, %v4132
        %4135 = vbcast.lane.b32.xlu0 %v4133, 256
        %v4136 = vpop.permute.xlu0 %4135
        %s4138 = sor.u32 256, 8
        %4139 = vbcast.lane.b32.xlu0 %v4133, %s4138
        %v4140 = vpop.permute.xlu0 %4139
        %v4141 = vlaneseq
        %v4142 = vshrl.u32 %v4141, 7
        %v4143 = vsub.s32 1, %v4142
        %v4144 = vrot.slane %v4041, %v4143
        %4146 = vbcast.lane.b32.xlu0 %v4144, 256
        %v4147 = vpop.permute.xlu0 %4146
        %s4149 = sor.u32 256, 8
        %4150 = vbcast.lane.b32.xlu0 %v4144, %s4149
        %v4151 = vpop.permute.xlu0 %4150
        %v4152 = vlaneseq
        %v4153 = vshrl.u32 %v4152, 7
        %v4154 = vsub.s32 2, %v4153
        %v4155 = vrot.slane %v4041, %v4154
        %4157 = vbcast.lane.b32.xlu0 %v4155, 256
        %v4158 = vpop.permute.xlu0 %4157
        %s4160 = sor.u32 256, 8
        %4161 = vbcast.lane.b32.xlu0 %v4155, %s4160
        %v4162 = vpop.permute.xlu0 %4161
        %v4163 = vlaneseq
        %v4164 = vshrl.u32 %v4163, 7
        %v4165 = vsub.s32 3, %v4164
        %v4166 = vrot.slane %v4041, %v4165
        %4168 = vbcast.lane.b32.xlu0 %v4166, 256
        %v4169 = vpop.permute.xlu0 %4168
        %s4171 = sor.u32 256, 8
        %4172 = vbcast.lane.b32.xlu0 %v4166, %s4171
        %v4173 = vpop.permute.xlu0 %4172
        %v4174 = vlaneseq
        %v4175 = vshrl.u32 %v4174, 7
        %v4176 = vsub.s32 4, %v4175
        %v4177 = vrot.slane %v4041, %v4176
        %4179 = vbcast.lane.b32.xlu0 %v4177, 256
        %v4180 = vpop.permute.xlu0 %4179
        %s4182 = sor.u32 256, 8
        %4183 = vbcast.lane.b32.xlu0 %v4177, %s4182
        %v4184 = vpop.permute.xlu0 %4183
        %v4185 = vlaneseq
        %v4186 = vshrl.u32 %v4185, 7
        %v4187 = vsub.s32 5, %v4186
        %v4188 = vrot.slane %v4041, %v4187
        %4190 = vbcast.lane.b32.xlu0 %v4188, 256
        %v4191 = vpop.permute.xlu0 %4190
        %s4193 = sor.u32 256, 8
        %4194 = vbcast.lane.b32.xlu0 %v4188, %s4193
        %v4195 = vpop.permute.xlu0 %4194
        %v4196 = vlaneseq
        %v4197 = vshrl.u32 %v4196, 7
        %v4198 = vsub.s32 6, %v4197
        %v4199 = vrot.slane %v4041, %v4198
        %4201 = vbcast.lane.b32.xlu0 %v4199, 256
        %v4202 = vpop.permute.xlu0 %4201
        %s4204 = sor.u32 256, 8
        %4205 = vbcast.lane.b32.xlu0 %v4199, %s4204
        %v4206 = vpop.permute.xlu0 %4205
        %v4207 = vlaneseq
        %v4208 = vshrl.u32 %v4207, 7
        %v4209 = vsub.s32 7, %v4208
        %v4210 = vrot.slane %v4041, %v4209
        %4212 = vbcast.lane.b32.xlu0 %v4210, 256
        %v4213 = vpop.permute.xlu0 %4212
        %s4215 = sor.u32 256, 8
        %4216 = vbcast.lane.b32.xlu0 %v4210, %s4215
        %v4217 = vpop.permute.xlu0 %4216
        %v4218 = vmul.f32 %v4048, %v526
        %v4219 = vmul.f32 %v4052, %v527
        %v4220 = vmul.f32 %v4059, %v528
        %v4221 = vmul.f32 %v4063, %v529
        %v4222 = vmul.f32 %v4070, %v530
        %v4223 = vmul.f32 %v4074, %v531
        %v4224 = vmul.f32 %v4081, %v532
        %v4225 = vmul.f32 %v4085, %v533
        %v4226 = vmul.f32 %v4092, %v534
        %v4227 = vmul.f32 %v4096, %v535
        %v4228 = vmul.f32 %v4103, %v536
        %v4229 = vmul.f32 %v4107, %v537
        %v4230 = vmul.f32 %v4114, %v538
        %v4231 = vmul.f32 %v4118, %v539
        %v4232 = vmul.f32 %v4125, %v540
        %v4233 = vmul.f32 %v4129, %v541
        %v4234 = vmul.f32 %v4136, %v542
        %v4235 = vmul.f32 %v4140, %v543
        %v4236 = vmul.f32 %v4147, %v544
        %v4237 = vmul.f32 %v4151, %v545
        %v4238 = vmul.f32 %v4158, %v546
        %v4239 = vmul.f32 %v4162, %v547
        %v4240 = vmul.f32 %v4169, %v548
        %v4241 = vmul.f32 %v4173, %v549
        %v4242 = vmul.f32 %v4180, %v550
        %v4243 = vmul.f32 %v4184, %v551
        %v4244 = vmul.f32 %v4191, %v552
        %v4245 = vmul.f32 %v4195, %v553
        %v4246 = vmul.f32 %v4202, %v554
        %v4247 = vmul.f32 %v4206, %v555
        %v4248 = vmul.f32 %v4213, %v556
        %v4249 = vmul.f32 %v4217, %v557
        %v4250 = vsel %vm1039, %v4218, 0.0
        %v4251 = vsel %vm1039, %v4219, 0.0
        %v4252 = vadd.f32 %v4250, %v4251
        %v4253 = vrot.slane %v4252, 4
        %v4254 = vadd.f32 %v4252, %v4253
        %v4255 = vrot.slane %v4254, 2
        %v4256 = vadd.f32 %v4254, %v4255
        %v4257 = vrot.slane %v4256, 1
        %v4258 = vadd.f32 %v4256, %v4257
        %v4259 = vsel %vm1039, %v4220, 0.0
        %v4260 = vsel %vm1039, %v4221, 0.0
        %v4261 = vadd.f32 %v4259, %v4260
        %v4262 = vrot.slane %v4261, 4
        %v4263 = vadd.f32 %v4261, %v4262
        %v4264 = vrot.slane %v4263, 2
        %v4265 = vadd.f32 %v4263, %v4264
        %v4266 = vrot.slane %v4265, 1
        %v4267 = vadd.f32 %v4265, %v4266
        %v4268 = vsel %vm1039, %v4222, 0.0
        %v4269 = vsel %vm1039, %v4223, 0.0
        %v4270 = vadd.f32 %v4268, %v4269
        %v4271 = vrot.slane %v4270, 4
        %v4272 = vadd.f32 %v4270, %v4271
        %v4273 = vrot.slane %v4272, 2
        %v4274 = vadd.f32 %v4272, %v4273
        %v4275 = vrot.slane %v4274, 1
        %v4276 = vadd.f32 %v4274, %v4275
        %v4277 = vsel %vm1039, %v4224, 0.0
        %v4278 = vsel %vm1039, %v4225, 0.0
        %v4279 = vadd.f32 %v4277, %v4278
        %v4280 = vrot.slane %v4279, 4
        %v4281 = vadd.f32 %v4279, %v4280
        %v4282 = vrot.slane %v4281, 2
        %v4283 = vadd.f32 %v4281, %v4282
        %v4284 = vrot.slane %v4283, 1
        %v4285 = vadd.f32 %v4283, %v4284
        %v4286 = vsel %vm1039, %v4226, 0.0
        %v4287 = vsel %vm1039, %v4227, 0.0
        %v4288 = vadd.f32 %v4286, %v4287
        %v4289 = vrot.slane %v4288, 4
        %v4290 = vadd.f32 %v4288, %v4289
        %v4291 = vrot.slane %v4290, 2
        %v4292 = vadd.f32 %v4290, %v4291
        %v4293 = vrot.slane %v4292, 1
        %v4294 = vadd.f32 %v4292, %v4293
        %v4295 = vsel %vm1039, %v4228, 0.0
        %v4296 = vsel %vm1039, %v4229, 0.0
        %v4297 = vadd.f32 %v4295, %v4296
        %v4298 = vrot.slane %v4297, 4
        %v4299 = vadd.f32 %v4297, %v4298
        %v4300 = vrot.slane %v4299, 2
        %v4301 = vadd.f32 %v4299, %v4300
        %v4302 = vrot.slane %v4301, 1
        %v4303 = vadd.f32 %v4301, %v4302
        %v4304 = vsel %vm1039, %v4230, 0.0
        %v4305 = vsel %vm1039, %v4231, 0.0
        %v4306 = vadd.f32 %v4304, %v4305
        %v4307 = vrot.slane %v4306, 4
        %v4308 = vadd.f32 %v4306, %v4307
        %v4309 = vrot.slane %v4308, 2
        %v4310 = vadd.f32 %v4308, %v4309
        %v4311 = vrot.slane %v4310, 1
        %v4312 = vadd.f32 %v4310, %v4311
        %v4313 = vsel %vm1039, %v4232, 0.0
        %v4314 = vsel %vm1039, %v4233, 0.0
        %v4315 = vadd.f32 %v4313, %v4314
        %v4316 = vrot.slane %v4315, 4
        %v4317 = vadd.f32 %v4315, %v4316
        %v4318 = vrot.slane %v4317, 2
        %v4319 = vadd.f32 %v4317, %v4318
        %v4320 = vrot.slane %v4319, 1
        %v4321 = vadd.f32 %v4319, %v4320
        %v4322 = vsel %vm1039, %v4234, 0.0
        %v4323 = vsel %vm1039, %v4235, 0.0
        %v4324 = vadd.f32 %v4322, %v4323
        %v4325 = vrot.slane %v4324, 4
        %v4326 = vadd.f32 %v4324, %v4325
        %v4327 = vrot.slane %v4326, 2
        %v4328 = vadd.f32 %v4326, %v4327
        %v4329 = vrot.slane %v4328, 1
        %v4330 = vadd.f32 %v4328, %v4329
        %v4331 = vsel %vm1039, %v4236, 0.0
        %v4332 = vsel %vm1039, %v4237, 0.0
        %v4333 = vadd.f32 %v4331, %v4332
        %v4334 = vrot.slane %v4333, 4
        %v4335 = vadd.f32 %v4333, %v4334
        %v4336 = vrot.slane %v4335, 2
        %v4337 = vadd.f32 %v4335, %v4336
        %v4338 = vrot.slane %v4337, 1
        %v4339 = vadd.f32 %v4337, %v4338
        %v4340 = vsel %vm1039, %v4238, 0.0
        %v4341 = vsel %vm1039, %v4239, 0.0
        %v4342 = vadd.f32 %v4340, %v4341
        %v4343 = vrot.slane %v4342, 4
        %v4344 = vadd.f32 %v4342, %v4343
        %v4345 = vrot.slane %v4344, 2
        %v4346 = vadd.f32 %v4344, %v4345
        %v4347 = vrot.slane %v4346, 1
        %v4348 = vadd.f32 %v4346, %v4347
        %v4349 = vsel %vm1039, %v4240, 0.0
        %v4350 = vsel %vm1039, %v4241, 0.0
        %v4351 = vadd.f32 %v4349, %v4350
        %v4352 = vrot.slane %v4351, 4
        %v4353 = vadd.f32 %v4351, %v4352
        %v4354 = vrot.slane %v4353, 2
        %v4355 = vadd.f32 %v4353, %v4354
        %v4356 = vrot.slane %v4355, 1
        %v4357 = vadd.f32 %v4355, %v4356
        %v4358 = vsel %vm1039, %v4242, 0.0
        %v4359 = vsel %vm1039, %v4243, 0.0
        %v4360 = vadd.f32 %v4358, %v4359
        %v4361 = vrot.slane %v4360, 4
        %v4362 = vadd.f32 %v4360, %v4361
        %v4363 = vrot.slane %v4362, 2
        %v4364 = vadd.f32 %v4362, %v4363
        %v4365 = vrot.slane %v4364, 1
        %v4366 = vadd.f32 %v4364, %v4365
        %v4367 = vsel %vm1039, %v4244, 0.0
        %v4368 = vsel %vm1039, %v4245, 0.0
        %v4369 = vadd.f32 %v4367, %v4368
        %v4370 = vrot.slane %v4369, 4
        %v4371 = vadd.f32 %v4369, %v4370
        %v4372 = vrot.slane %v4371, 2
        %v4373 = vadd.f32 %v4371, %v4372
        %v4374 = vrot.slane %v4373, 1
        %v4375 = vadd.f32 %v4373, %v4374
        %v4376 = vsel %vm1039, %v4246, 0.0
        %v4377 = vsel %vm1039, %v4247, 0.0
        %v4378 = vadd.f32 %v4376, %v4377
        %v4379 = vrot.slane %v4378, 4
        %v4380 = vadd.f32 %v4378, %v4379
        %v4381 = vrot.slane %v4380, 2
        %v4382 = vadd.f32 %v4380, %v4381
        %v4383 = vrot.slane %v4382, 1
        %v4384 = vadd.f32 %v4382, %v4383
        %v4385 = vsel %vm1039, %v4248, 0.0
        %v4386 = vsel %vm1039, %v4249, 0.0
        %v4387 = vadd.f32 %v4385, %v4386
        %v4388 = vrot.slane %v4387, 4
        %v4389 = vadd.f32 %v4387, %v4388
        %v4390 = vrot.slane %v4389, 2
        %v4391 = vadd.f32 %v4389, %v4390
        %v4392 = vrot.slane %v4391, 1
        %v4393 = vadd.f32 %v4391, %v4392
        %v4410 = vsel %vm1852, %v4267, %v4258
        %v4411 = vsel %vm1854, %v4276, %v4410
        %v4412 = vsel %vm1856, %v4285, %v4411
        %v4413 = vsel %vm1858, %v4294, %v4412
        %v4414 = vsel %vm1860, %v4303, %v4413
        %v4415 = vsel %vm1862, %v4312, %v4414
        %v4416 = vsel %vm1864, %v4321, %v4415
        %v4417 = vsel %vm1852, %v4339, %v4330
        %v4418 = vsel %vm1854, %v4348, %v4417
        %v4419 = vsel %vm1856, %v4357, %v4418
        %v4420 = vsel %vm1858, %v4366, %v4419
        %v4421 = vsel %vm1860, %v4375, %v4420
        %v4422 = vsel %vm1862, %v4384, %v4421
        %v4423 = vsel %vm1864, %v4393, %v4422
        %4424 = vrot.lane.b32.xlu0 %v4416, 16
        %v4425 = vpop.permute.xlu0 %4424
        %4426 = vrot.lane.b32.xlu0 %v4423, 16
        %v4427 = vpop.permute.xlu0 %4426
        %vm4430 = vcmask 195712
        %4431 = vst.msk [vmem:[#allocation2] sm:$0xff] %vm4430, %v4425
        %4432 = vst.msk [vmem:[#allocation2 + $0x10] sm:$0xff] %vm4430, %v4427
        %4433 = vrot.lane.b32.xlu0 %v636, 96
        %v4434 = vpop.permute.xlu0 %4433
        %4435 = vrot.lane.b32.xlu0 %v642, 96
        %v4436 = vpop.permute.xlu0 %4435
        %4439 = vrot.lane.b32.xlu0 %v987, 104
        %v4440 = vpop.permute.xlu0 %4439
        %4441 = vrot.lane.b32.xlu0 %v988, 104
        %v4442 = vpop.permute.xlu0 %4441
        %4445 = vrot.lane.b32.xlu0 %v995, 108
        %v4446 = vpop.permute.xlu0 %4445
        %4447 = vrot.lane.b32.xlu0 %v996, 108
        %v4448 = vpop.permute.xlu0 %4447
        %4451 = vrot.lane.b32.xlu0 %v1003, 112
        %v4452 = vpop.permute.xlu0 %4451
        %4453 = vrot.lane.b32.xlu0 %v1004, 112
        %v4454 = vpop.permute.xlu0 %4453
        %v4457 = vsel %vm1479, %v4434, %v4440
        %v4458 = vsel %vm1479, %v4436, %v4442
        %v4459 = vsel %vm1482, %v4457, %v4446
        %v4460 = vsel %vm1482, %v4458, %v4448
        %v4461 = vsel %vm1485, %v4459, %v4452
        %v4462 = vsel %vm1485, %v4460, %v4454
        %v4464 = vsel %vm1479, %v4040, 0
        %v4467 = vsel %vm1479, %v4041, 0
        %4469 = vmatprep.subr.mxu0 0.0
        %4470 = vmatpush1.msra.mxu0 0.0
        %4471 = vmatprep.subr.mxu0 0.0
        %4472 = vmatpush1.msra.mxu0 0.0
        %4473 = vmatprep.subr.mxu0 0.0
        %4474 = vmatpush1.msra.mxu0 0.0
        %4475 = vmatprep.subr.mxu0 0.0
        %4476 = vmatpush1.msra.mxu0 0.0
        %4477 = vmatprep.subr.mxu0 0.0
        %4478 = vmatpush1.msra.mxu0 0.0
        %4479 = vmatprep.subr.mxu0 0.0
        %4480 = vmatpush1.msra.mxu0 0.0
        %4481 = vmatprep.subr.mxu0 0.0
        %4482 = vmatpush1.msra.mxu0 0.0
        %4483 = vmatprep.subr.mxu0 0.0
        %4484 = vmatpush1.msra.mxu0 0.0
        %4485 = vmatprep.subr.mxu0 0.0
        %4486 = vmatpush1.msra.mxu0 0.0
        %4487 = vmatprep.subr.mxu0 0.0
        %4488 = vmatpush1.msra.mxu0 0.0
        %4489 = vmatprep.subr.mxu0 0.0
        %4490 = vmatpush1.msra.mxu0 0.0
        %4491 = vmatprep.subr.mxu0 0.0
        %4492 = vmatpush1.msra.mxu0 0.0
        %4493 = vmatprep.subr.mxu0 0.0
        %4494 = vmatpush1.msra.mxu0 0.0
        %4495 = vmatprep.subr.mxu0 0.0
        %4496 = vmatpush1.msra.mxu0 0.0
        %4497 = vmatprep.subr.mxu0 0.0
        %4498 = vmatpush1.msra.mxu0 %v4462
        %4499 = vmatprep.subr.mxu0 0.0
        %4500 = vmatpush1.msra.mxu0 %v4461
        %4501 = vmatprep.subr.mxu0 0.0
        %4502 = vmatpush2.msra.mxu0 0.0
        %4503 = vmatprep.subr.mxu0 0.0
        %4504 = vmatpush2.msra.mxu0 0.0
        %4505 = vmatprep.subr.mxu0 0.0
        %4506 = vmatpush2.msra.mxu0 0.0
        %4507 = vmatprep.subr.mxu0 0.0
        %4508 = vmatpush2.msra.mxu0 0.0
        %4509 = vmatprep.subr.mxu0 0.0
        %4510 = vmatpush2.msra.mxu0 0.0
        %4511 = vmatprep.subr.mxu0 0.0
        %4512 = vmatpush2.msra.mxu0 0.0
        %4513 = vmatprep.subr.mxu0 0.0
        %4514 = vmatpush2.msra.mxu0 0.0
        %4515 = vmatprep.subr.mxu0 0.0
        %4516 = vmatpush2.msra.mxu0 0.0
        %4517 = vmatprep.subr.mxu0 0.0
        %4518 = vmatpush2.msra.mxu0 0.0
        %4519 = vmatprep.subr.mxu0 0.0
        %4520 = vmatpush2.msra.mxu0 0.0
        %4521 = vmatprep.subr.mxu0 0.0
        %4522 = vmatpush2.msra.mxu0 0.0
        %4523 = vmatprep.subr.mxu0 0.0
        %4524 = vmatpush2.msra.mxu0 0.0
        %4525 = vmatprep.subr.mxu0 0.0
        %4526 = vmatpush2.msra.mxu0 0.0
        %4527 = vmatprep.subr.mxu0 0.0
        %4528 = vmatpush2.msra.mxu0 0.0
        %4529 = vmatprep.subr.mxu0 0.0
        %4530 = vmatpush2.msra.mxu0 0.0
        %4531 = vmatprep.subr.mxu0 0.0
        %4532 = vmatpush2.msra.mxu0 0.0
        %4533 = vmatprep.mubr.f32.mxu0 0.0
        %4534 = vmatmul.mubr.f32.gmra.mxu0 %v4464
        %v4535 = vpop.f32.mrf.mxu0
        %v4536 = vadd.f32 0.0, %v4535
        %v4537 = vpop.f32.mrf.mxu0
        %4538 = vmatprep.mubr.f32.mxu0 0.0
        %4539 = vmatmul.mubr.f32.gmra.mxu0 %v4467
        %v4540 = vpop.f32.mrf.mxu0
        %v4541 = vadd.f32 0.0, %v4540
        %v4542 = vpop.f32.mrf.mxu0
        %4543 = vdwg.mxu0
        %4546 = vrot.lane.b32.xlu0 %v4536, 64
        %v4547 = vpop.permute.xlu0 %4546
        %4548 = vrot.lane.b32.xlu0 %v4541, 64
        %v4549 = vpop.permute.xlu0 %4548
        %vm4552 = vcmask 654848
        %4553 = vst.msk [vmem:[#allocation2] sm:$0xff] %vm4552, %v4547
        %4554 = vst.msk [vmem:[#allocation2 + $0x10] sm:$0xff] %vm4552, %v4549
        %4555 = vrot.lane.b32.xlu0 %v4536, 88
        %v4556 = vpop.permute.xlu0 %4555
        %4557 = vrot.lane.b32.xlu0 %v4541, 88
        %v4558 = vpop.permute.xlu0 %4557
        %vm4561 = vcmask 884544
        %4562 = vst.msk [vmem:[#allocation2] sm:$0xff] %vm4561, %v4556
        %4563 = vst.msk [vmem:[#allocation2 + $0x10] sm:$0xff] %vm4561, %v4558
        %4564 = vrot.lane.b32.xlu0 %v4536, 100
        %v4565 = vpop.permute.xlu0 %4564
        %4566 = vrot.lane.b32.xlu0 %v4541, 100
        %v4567 = vpop.permute.xlu0 %4566
        %vm4570 = vcmask 1015744
        %4571 = vst.msk [vmem:[#allocation2] sm:$0xff] %vm4570, %v4565
        %4572 = vst.msk [vmem:[#allocation2 + $0x10] sm:$0xff] %vm4570, %v4567
        %4573 = vrot.lane.b32.xlu0 %v4536, 112
        %v4574 = vpop.permute.xlu0 %4573
        %4575 = vrot.lane.b32.xlu0 %v4541, 112
        %v4576 = vpop.permute.xlu0 %4575
        %vm4579 = vcmask 97344
        %4580 = vst.msk [vmem:[#allocation2 + $0x8] sm:$0xff] %vm4579, %v4574
        %4581 = vst.msk [vmem:[#allocation2 + $0x18] sm:$0xff] %vm4579, %v4576
        %4582 = vrot.lane.b32.xlu0 %v1013, 52
        %v4583 = vpop.permute.xlu0 %4582
        %4584 = vrot.lane.b32.xlu0 %v1014, 52
        %v4585 = vpop.permute.xlu0 %4584
        %v4588 = vsel %vm1421, %v4583, 0.0
        %4589 = vadd.xlane.f32.xlu0 %v4588
        %v4590 = vpop.xlane.xlu0 %4589
        %v4591 = vsel %vm1421, %v4585, 0.0
        %4592 = vadd.xlane.f32.xlu0 %v4591
        %v4593 = vpop.xlane.xlu0 %4592
        %v4594 = vmul.f32 %v4590, %v1029
        %v4595 = vmul.f32 %v4593, %v1029
        %4596 = vrot.lane.b32.xlu0 %v1023, 4
        %v4597 = vpop.permute.xlu0 %4596
        %4598 = vrot.lane.b32.xlu0 %v1024, 4
        %v4599 = vpop.permute.xlu0 %4598
        %v4602 = vsel %vm1421, %v4597, 0.0
        %4603 = vadd.xlane.f32.xlu0 %v4602
        %v4604 = vpop.xlane.xlu0 %4603
        %v4605 = vsel %vm1421, %v4599, 0.0
        %4606 = vadd.xlane.f32.xlu0 %v4605
        %v4607 = vpop.xlane.xlu0 %4606
        %v4608 = vmul.f32 %v4604, %v1029
        %v4609 = vmul.f32 %v4607, %v1029
        %4610 = vrot.lane.b32.xlu0 %v634, 80
        %v4611 = vpop.permute.xlu0 %4610
        %4612 = vrot.lane.b32.xlu0 %v640, 80
        %v4613 = vpop.permute.xlu0 %4612
        %4616 = vrot.lane.b32.xlu0 %v1033, 68
        %v4617 = vpop.permute.xlu0 %4616
        %4618 = vrot.lane.b32.xlu0 %v1034, 68
        %v4619 = vpop.permute.xlu0 %4618
        %4622 = vrot.lane.b32.xlu0 %v1035, 72
        %v4623 = vpop.permute.xlu0 %4622
        %4624 = vrot.lane.b32.xlu0 %v1036, 72
        %v4625 = vpop.permute.xlu0 %4624
        %4628 = vrot.lane.b32.xlu0 %v1037, 76
        %v4629 = vpop.permute.xlu0 %4628
        %4630 = vrot.lane.b32.xlu0 %v1038, 76
        %v4631 = vpop.permute.xlu0 %4630
        %4636 = vrot.lane.b32.xlu0 %v4594, 9
        %v4637 = vpop.permute.xlu0 %4636
        %4638 = vrot.lane.b32.xlu0 %v4595, 9
        %v4639 = vpop.permute.xlu0 %4638
        %v4642 = vsel %vm1479, %v4611, %v4617
        %v4643 = vsel %vm1479, %v4613, %v4619
        %v4644 = vsel %vm1482, %v4642, %v4623
        %v4645 = vsel %vm1482, %v4643, %v4625
        %v4646 = vsel %vm1485, %v4644, %v4629
        %v4647 = vsel %vm1485, %v4645, %v4631
        %v4648 = vsel %vm1488, %v4646, %v4637
        %v4649 = vsel %vm1488, %v4647, %v4639
        %v4650 = vsel %vm1491, %v4648, 1.0
        %v4651 = vsel %vm1491, %v4649, 1.0
        %4652 = vrot.lane.b32.xlu0 %v634, 16
        %v4653 = vpop.permute.xlu0 %4652
        %4654 = vrot.lane.b32.xlu0 %v640, 16
        %v4655 = vpop.permute.xlu0 %4654
        %4658 = vrot.lane.b32.xlu0 %v927, 20
        %v4659 = vpop.permute.xlu0 %4658
        %4660 = vrot.lane.b32.xlu0 %v928, 20
        %v4661 = vpop.permute.xlu0 %4660
        %4664 = vrot.lane.b32.xlu0 %v953, 24
        %v4665 = vpop.permute.xlu0 %4664
        %4666 = vrot.lane.b32.xlu0 %v954, 24
        %v4667 = vpop.permute.xlu0 %4666
        %4670 = vrot.lane.b32.xlu0 %v979, 28
        %v4671 = vpop.permute.xlu0 %4670
        %4672 = vrot.lane.b32.xlu0 %v980, 28
        %v4673 = vpop.permute.xlu0 %4672
        %4678 = vrot.lane.b32.xlu0 %v4608, 10
        %v4679 = vpop.permute.xlu0 %4678
        %4680 = vrot.lane.b32.xlu0 %v4609, 10
        %v4681 = vpop.permute.xlu0 %4680
        %v4684 = vsel %vm1479, %v4653, %v4659
        %v4685 = vsel %vm1479, %v4655, %v4661
        %v4686 = vsel %vm1482, %v4684, %v4665
        %v4687 = vsel %vm1482, %v4685, %v4667
        %v4688 = vsel %vm1485, %v4686, %v4671
        %v4689 = vsel %vm1485, %v4687, %v4673
        %v4690 = vsel %vm1488, %v4688, 1.0
        %v4691 = vsel %vm1488, %v4689, 1.0
        %v4692 = vsel %vm1491, %v4690, %v4679
        %v4693 = vsel %vm1491, %v4691, %v4681
        %4694 = vset.pattern.permute.xlu0 3
        %4695 = vperm.xlu0 %4694, %v1544
        %v4696 = vpop.permute.xlu0 %4695
        %4697 = vset.pattern.permute.xlu0 3
        %4698 = vperm.xlu0 %4697, %v1545
        %v4699 = vpop.permute.xlu0 %4698
        %4700 = vset.pattern.permute.xlu0 3
        %4701 = vperm.xlu0 %4700, %v1546
        %v4702 = vpop.permute.xlu0 %4701
        %4703 = vset.pattern.permute.xlu0 3
        %4704 = vperm.xlu0 %4703, %v1547
        %v4705 = vpop.permute.xlu0 %4704
        %4706 = vset.pattern.permute.xlu0 3
        %4707 = vperm.xlu0 %4706, %v1548
        %v4708 = vpop.permute.xlu0 %4707
        %4709 = vset.pattern.permute.xlu0 3
        %4710 = vperm.xlu0 %4709, %v1549
        %v4711 = vpop.permute.xlu0 %4710
        %4712 = vset.pattern.permute.xlu0 3
        %4713 = vperm.xlu0 %4712, %v1550
        %v4714 = vpop.permute.xlu0 %4713
        %4715 = vset.pattern.permute.xlu0 3
        %4716 = vperm.xlu0 %4715, %v1551
        %v4717 = vpop.permute.xlu0 %4716
        %4718 = vset.pattern.permute.xlu0 3
        %4719 = vperm.xlu0 %4718, %v1552
        %v4720 = vpop.permute.xlu0 %4719
        %4721 = vset.pattern.permute.xlu0 3
        %4722 = vperm.xlu0 %4721, %v1553
        %v4723 = vpop.permute.xlu0 %4722
        %4724 = vset.pattern.permute.xlu0 3
        %4725 = vperm.xlu0 %4724, %v1554
        %v4726 = vpop.permute.xlu0 %4725
        %4727 = vset.pattern.permute.xlu0 3
        %4728 = vperm.xlu0 %4727, %v1555
        %v4729 = vpop.permute.xlu0 %4728
        %4730 = vset.pattern.permute.xlu0 3
        %4731 = vperm.xlu0 %4730, %v1556
        %v4732 = vpop.permute.xlu0 %4731
        %4733 = vset.pattern.permute.xlu0 3
        %4734 = vperm.xlu0 %4733, %v1557
        %v4735 = vpop.permute.xlu0 %4734
        %4736 = vset.pattern.permute.xlu0 3
        %4737 = vperm.xlu0 %4736, %v1558
        %v4738 = vpop.permute.xlu0 %4737
        %4739 = vset.pattern.permute.xlu0 3
        %4740 = vperm.xlu0 %4739, %v1559
        %v4741 = vpop.permute.xlu0 %4740
        %4742 = vset.pattern.permute.xlu0 3
        %4743 = vperm.xlu0 %4742, %v1560
        %v4744 = vpop.permute.xlu0 %4743
        %4745 = vset.pattern.permute.xlu0 3
        %4746 = vperm.xlu0 %4745, %v1561
        %v4747 = vpop.permute.xlu0 %4746
        %4748 = vset.pattern.permute.xlu0 3
        %4749 = vperm.xlu0 %4748, %v1562
        %v4750 = vpop.permute.xlu0 %4749
        %4751 = vset.pattern.permute.xlu0 3
        %4752 = vperm.xlu0 %4751, %v1563
        %v4753 = vpop.permute.xlu0 %4752
        %4754 = vset.pattern.permute.xlu0 3
        %4755 = vperm.xlu0 %4754, %v1564
        %v4756 = vpop.permute.xlu0 %4755
        %4757 = vset.pattern.permute.xlu0 3
        %4758 = vperm.xlu0 %4757, %v1565
        %v4759 = vpop.permute.xlu0 %4758
        %4760 = vset.pattern.permute.xlu0 3
        %4761 = vperm.xlu0 %4760, %v1566
        %v4762 = vpop.permute.xlu0 %4761
        %4763 = vset.pattern.permute.xlu0 3
        %4764 = vperm.xlu0 %4763, %v1567
        %v4765 = vpop.permute.xlu0 %4764
        %4766 = vset.pattern.permute.xlu0 3
        %4767 = vperm.xlu0 %4766, %v1568
        %v4768 = vpop.permute.xlu0 %4767
        %4769 = vset.pattern.permute.xlu0 3
        %4770 = vperm.xlu0 %4769, %v1569
        %v4771 = vpop.permute.xlu0 %4770
        %4772 = vset.pattern.permute.xlu0 3
        %4773 = vperm.xlu0 %4772, %v1570
        %v4774 = vpop.permute.xlu0 %4773
        %4775 = vset.pattern.permute.xlu0 3
        %4776 = vperm.xlu0 %4775, %v1571
        %v4777 = vpop.permute.xlu0 %4776
        %4778 = vset.pattern.permute.xlu0 3
        %4779 = vperm.xlu0 %4778, %v1572
        %v4780 = vpop.permute.xlu0 %4779
        %4781 = vset.pattern.permute.xlu0 3
        %4782 = vperm.xlu0 %4781, %v1573
        %v4783 = vpop.permute.xlu0 %4782
        %4784 = vset.pattern.permute.xlu0 3
        %4785 = vperm.xlu0 %4784, %v1574
        %v4786 = vpop.permute.xlu0 %4785
        %4787 = vset.pattern.permute.xlu0 3
        %4788 = vperm.xlu0 %4787, %v1575
        %v4789 = vpop.permute.xlu0 %4788
        %v4790 = vlaneseq
        %v4791 = vshrl.u32 %v4790, 7
        %v4792 = vsub.s32 %v1705, %v4791
        %v4793 = vrot.slane %v4696, %v4792
        %v4794 = vlaneseq
        %v4795 = vshrl.u32 %v4794, 7
        %v4796 = vsub.s32 %v1710, %v4795
        %v4797 = vrot.slane %v4699, %v4796
        %v4798 = vsel %vm1715, %v4797, %v4793
        %v4799 = vlaneseq
        %v4800 = vshrl.u32 %v4799, 7
        %v4801 = vsub.s32 %v1705, %v4800
        %v4802 = vrot.slane %v4702, %v4801
        %v4803 = vlaneseq
        %v4804 = vshrl.u32 %v4803, 7
        %v4805 = vsub.s32 %v1710, %v4804
        %v4806 = vrot.slane %v4705, %v4805
        %v4807 = vsel %vm1715, %v4806, %v4802
        %v4808 = vlaneseq
        %v4809 = vshrl.u32 %v4808, 7
        %v4810 = vsub.s32 %v1705, %v4809
        %v4811 = vrot.slane %v4708, %v4810
        %v4812 = vlaneseq
        %v4813 = vshrl.u32 %v4812, 7
        %v4814 = vsub.s32 %v1710, %v4813
        %v4815 = vrot.slane %v4711, %v4814
        %v4816 = vsel %vm1715, %v4815, %v4811
        %v4817 = vlaneseq
        %v4818 = vshrl.u32 %v4817, 7
        %v4819 = vsub.s32 %v1705, %v4818
        %v4820 = vrot.slane %v4714, %v4819
        %v4821 = vlaneseq
        %v4822 = vshrl.u32 %v4821, 7
        %v4823 = vsub.s32 %v1710, %v4822
        %v4824 = vrot.slane %v4717, %v4823
        %v4825 = vsel %vm1715, %v4824, %v4820
        %v4826 = vlaneseq
        %v4827 = vshrl.u32 %v4826, 7
        %v4828 = vsub.s32 %v1705, %v4827
        %v4829 = vrot.slane %v4720, %v4828
        %v4830 = vlaneseq
        %v4831 = vshrl.u32 %v4830, 7
        %v4832 = vsub.s32 %v1710, %v4831
        %v4833 = vrot.slane %v4723, %v4832
        %v4834 = vsel %vm1715, %v4833, %v4829
        %v4835 = vlaneseq
        %v4836 = vshrl.u32 %v4835, 7
        %v4837 = vsub.s32 %v1705, %v4836
        %v4838 = vrot.slane %v4726, %v4837
        %v4839 = vlaneseq
        %v4840 = vshrl.u32 %v4839, 7
        %v4841 = vsub.s32 %v1710, %v4840
        %v4842 = vrot.slane %v4729, %v4841
        %v4843 = vsel %vm1715, %v4842, %v4838
        %v4844 = vlaneseq
        %v4845 = vshrl.u32 %v4844, 7
        %v4846 = vsub.s32 %v1705, %v4845
        %v4847 = vrot.slane %v4732, %v4846
        %v4848 = vlaneseq
        %v4849 = vshrl.u32 %v4848, 7
        %v4850 = vsub.s32 %v1710, %v4849
        %v4851 = vrot.slane %v4735, %v4850
        %v4852 = vsel %vm1715, %v4851, %v4847
        %v4853 = vlaneseq
        %v4854 = vshrl.u32 %v4853, 7
        %v4855 = vsub.s32 %v1705, %v4854
        %v4856 = vrot.slane %v4738, %v4855
        %v4857 = vlaneseq
        %v4858 = vshrl.u32 %v4857, 7
        %v4859 = vsub.s32 %v1710, %v4858
        %v4860 = vrot.slane %v4741, %v4859
        %v4861 = vsel %vm1715, %v4860, %v4856
        %v4862 = vlaneseq
        %v4863 = vshrl.u32 %v4862, 7
        %v4864 = vsub.s32 %v1705, %v4863
        %v4865 = vrot.slane %v4744, %v4864
        %v4866 = vlaneseq
        %v4867 = vshrl.u32 %v4866, 7
        %v4868 = vsub.s32 %v1710, %v4867
        %v4869 = vrot.slane %v4747, %v4868
        %v4870 = vsel %vm1715, %v4869, %v4865
        %v4871 = vlaneseq
        %v4872 = vshrl.u32 %v4871, 7
        %v4873 = vsub.s32 %v1705, %v4872
        %v4874 = vrot.slane %v4750, %v4873
        %v4875 = vlaneseq
        %v4876 = vshrl.u32 %v4875, 7
        %v4877 = vsub.s32 %v1710, %v4876
        %v4878 = vrot.slane %v4753, %v4877
        %v4879 = vsel %vm1715, %v4878, %v4874
        %v4880 = vlaneseq
        %v4881 = vshrl.u32 %v4880, 7
        %v4882 = vsub.s32 %v1705, %v4881
        %v4883 = vrot.slane %v4756, %v4882
        %v4884 = vlaneseq
        %v4885 = vshrl.u32 %v4884, 7
        %v4886 = vsub.s32 %v1710, %v4885
        %v4887 = vrot.slane %v4759, %v4886
        %v4888 = vsel %vm1715, %v4887, %v4883
        %v4889 = vlaneseq
        %v4890 = vshrl.u32 %v4889, 7
        %v4891 = vsub.s32 %v1705, %v4890
        %v4892 = vrot.slane %v4762, %v4891
        %v4893 = vlaneseq
        %v4894 = vshrl.u32 %v4893, 7
        %v4895 = vsub.s32 %v1710, %v4894
        %v4896 = vrot.slane %v4765, %v4895
        %v4897 = vsel %vm1715, %v4896, %v4892
        %v4898 = vlaneseq
        %v4899 = vshrl.u32 %v4898, 7
        %v4900 = vsub.s32 %v1705, %v4899
        %v4901 = vrot.slane %v4768, %v4900
        %v4902 = vlaneseq
        %v4903 = vshrl.u32 %v4902, 7
        %v4904 = vsub.s32 %v1710, %v4903
        %v4905 = vrot.slane %v4771, %v4904
        %v4906 = vsel %vm1715, %v4905, %v4901
        %v4907 = vlaneseq
        %v4908 = vshrl.u32 %v4907, 7
        %v4909 = vsub.s32 %v1705, %v4908
        %v4910 = vrot.slane %v4774, %v4909
        %v4911 = vlaneseq
        %v4912 = vshrl.u32 %v4911, 7
        %v4913 = vsub.s32 %v1710, %v4912
        %v4914 = vrot.slane %v4777, %v4913
        %v4915 = vsel %vm1715, %v4914, %v4910
        %v4916 = vlaneseq
        %v4917 = vshrl.u32 %v4916, 7
        %v4918 = vsub.s32 %v1705, %v4917
        %v4919 = vrot.slane %v4780, %v4918
        %v4920 = vlaneseq
        %v4921 = vshrl.u32 %v4920, 7
        %v4922 = vsub.s32 %v1710, %v4921
        %v4923 = vrot.slane %v4783, %v4922
        %v4924 = vsel %vm1715, %v4923, %v4919
        %v4925 = vlaneseq
        %v4926 = vshrl.u32 %v4925, 7
        %v4927 = vsub.s32 %v1705, %v4926
        %v4928 = vrot.slane %v4786, %v4927
        %v4929 = vlaneseq
        %v4930 = vshrl.u32 %v4929, 7
        %v4931 = vsub.s32 %v1710, %v4930
        %v4932 = vrot.slane %v4789, %v4931
        %v4933 = vsel %vm1715, %v4932, %v4928
        %v4934 = vsel %vm1852, %v4807, %v4798
        %v4935 = vsel %vm1854, %v4816, %v4934
        %v4936 = vsel %vm1856, %v4825, %v4935
        %v4937 = vsel %vm1858, %v4834, %v4936
        %v4938 = vsel %vm1860, %v4843, %v4937
        %v4939 = vsel %vm1862, %v4852, %v4938
        %v4940 = vsel %vm1864, %v4861, %v4939
        %v4941 = vsel %vm1852, %v4879, %v4870
        %v4942 = vsel %vm1854, %v4888, %v4941
        %v4943 = vsel %vm1856, %v4897, %v4942
        %v4944 = vsel %vm1858, %v4906, %v4943
        %v4945 = vsel %vm1860, %v4915, %v4944
        %v4946 = vsel %vm1862, %v4924, %v4945
        %v4947 = vsel %vm1864, %v4933, %v4946
        %v4951 = vsel %vm1875, %v4650, 0
        %v4954 = vsel %vm1875, %v4651, 0
        %v4957 = vsel %vm1875, %v4692, 0
        %v4960 = vsel %vm1875, %v4693, 0
        %4962 = vmatprep.subr.mxu0 0.0
        %4963 = vmatpush1.xpose.msra.mxu0 0.0
        %4964 = vmatprep.subr.mxu0 0.0
        %4965 = vmatpush1.xpose.msra.mxu0 0.0
        %4966 = vmatprep.subr.mxu0 0.0
        %4967 = vmatpush1.xpose.msra.mxu0 0.0
        %4968 = vmatprep.subr.mxu0 0.0
        %4969 = vmatpush1.xpose.msra.mxu0 0.0
        %4970 = vmatprep.subr.mxu0 0.0
        %4971 = vmatpush1.xpose.msra.mxu0 0.0
        %4972 = vmatprep.subr.mxu0 0.0
        %4973 = vmatpush1.xpose.msra.mxu0 0.0
        %4974 = vmatprep.subr.mxu0 0.0
        %4975 = vmatpush1.xpose.msra.mxu0 0.0
        %4976 = vmatprep.subr.mxu0 0.0
        %4977 = vmatpush1.xpose.msra.mxu0 0.0
        %4978 = vmatprep.subr.mxu0 0.0
        %4979 = vmatpush1.xpose.msra.mxu0 0.0
        %4980 = vmatprep.subr.mxu0 0.0
        %4981 = vmatpush1.xpose.msra.mxu0 0.0
        %4982 = vmatprep.subr.mxu0 0.0
        %4983 = vmatpush1.xpose.msra.mxu0 0.0
        %4984 = vmatprep.subr.mxu0 0.0
        %4985 = vmatpush1.xpose.msra.mxu0 0.0
        %4986 = vmatprep.subr.mxu0 0.0
        %4987 = vmatpush1.xpose.msra.mxu0 0.0
        %4988 = vmatprep.subr.mxu0 0.0
        %4989 = vmatpush1.xpose.msra.mxu0 0.0
        %4990 = vmatprep.subr.mxu0 0.0
        %4991 = vmatpush1.xpose.msra.mxu0 %v4960
        %4992 = vmatprep.subr.mxu0 0.0
        %4993 = vmatpush1.xpose.msra.mxu0 %v4957
        %4994 = vmatprep.subr.mxu0 0.0
        %4995 = vmatpush2.xpose.msra.mxu0 0.0
        %4996 = vmatprep.subr.mxu0 0.0
        %4997 = vmatpush2.xpose.msra.mxu0 0.0
        %4998 = vmatprep.subr.mxu0 0.0
        %4999 = vmatpush2.xpose.msra.mxu0 0.0
        %5000 = vmatprep.subr.mxu0 0.0
        %5001 = vmatpush2.xpose.msra.mxu0 0.0
        %5002 = vmatprep.subr.mxu0 0.0
        %5003 = vmatpush2.xpose.msra.mxu0 0.0
        %5004 = vmatprep.subr.mxu0 0.0
        %5005 = vmatpush2.xpose.msra.mxu0 0.0
        %5006 = vmatprep.subr.mxu0 0.0
        %5007 = vmatpush2.xpose.msra.mxu0 0.0
        %5008 = vmatprep.subr.mxu0 0.0
        %5009 = vmatpush2.xpose.msra.mxu0 0.0
        %5010 = vmatprep.subr.mxu0 0.0
        %5011 = vmatpush2.xpose.msra.mxu0 0.0
        %5012 = vmatprep.subr.mxu0 0.0
        %5013 = vmatpush2.xpose.msra.mxu0 0.0
        %5014 = vmatprep.subr.mxu0 0.0
        %5015 = vmatpush2.xpose.msra.mxu0 0.0
        %5016 = vmatprep.subr.mxu0 0.0
        %5017 = vmatpush2.xpose.msra.mxu0 0.0
        %5018 = vmatprep.subr.mxu0 0.0
        %5019 = vmatpush2.xpose.msra.mxu0 0.0
        %5020 = vmatprep.subr.mxu0 0.0
        %5021 = vmatpush2.xpose.msra.mxu0 0.0
        %5022 = vmatprep.subr.mxu0 0.0
        %5023 = vmatpush2.xpose.msra.mxu0 0.0
        %5024 = vmatprep.subr.mxu0 0.0
        %5025 = vmatpush2.xpose.msra.mxu0 0.0
        %5026 = vmatprep.mubr.f32.mxu0 0.0
        %5027 = vmatmul.mubr.f32.gmra.mxu0 %v4951
        %v5028 = vpop.f32.mrf.mxu0
        %v5029 = vadd.f32 %v4940, %v5028
        %v5030 = vpop.f32.mrf.mxu0
        %5031 = vmatprep.mubr.f32.mxu0 0.0
        %5032 = vmatmul.mubr.f32.gmra.mxu0 %v4954
        %v5033 = vpop.f32.mrf.mxu0
        %v5034 = vadd.f32 %v4947, %v5033
        %v5035 = vpop.f32.mrf.mxu0
        %5036 = vdwg.mxu0
        %v5037 = vsub.f32 %v5029, 100000.0
        %v5038 = vsub.f32 %v5034, 100000.0
        %v5039 = vsel %vm1409, %v5029, %v5037
        %v5040 = vsel %vm1410, %v5034, %v5038
        %v5041 = vsel %vm1479, %v5039, -inf
        %5042 = vmax.xlane.f32.xlu0 %v5041
        %v5043 = vpop.xlane.xlu0 %5042
        %v5044 = vsel %vm1479, %v5040, -inf
        %5045 = vmax.xlane.f32.xlu0 %v5044
        %v5046 = vpop.xlane.xlu0 %5045
        %v5047 = vsub.f32 %v5039, %v5043
        %v5048 = vsub.f32 %v5040, %v5046
        %v5049 = vmul.f32 %v5047, 1.442695
        %v5050 = vpow.pop %v5049
        %v5051 = vmul.f32 %v5048, 1.442695
        %v5052 = vpow.pop %v5051
        %v5053 = vsel %vm1479, %v5050, 0.0
        %5054 = vadd.xlane.f32.xlu0 %v5053
        %v5055 = vpop.xlane.xlu0 %5054
        %v5056 = vsel %vm1479, %v5052, 0.0
        %5057 = vadd.xlane.f32.xlu0 %v5056
        %v5058 = vpop.xlane.xlu0 %5057
        %v5059 = vrcp.pop %v5055
        %v5060 = vrcp.pop %v5058
        %v5061 = vmul.f32 %v5050, %v5059
        %v5062 = vmul.f32 %v5052, %v5060
        %v5063 = vsel %vm1997, %v5061, 0.0
        %v5064 = vsel %vm1998, %v5062, 0.0
        %v5065 = vlaneseq
        %v5066 = vshrl.u32 %v5065, 7
        %v5067 = vsub.s32 0, %v5066
        %v5068 = vrot.slane %v5063, %v5067
        %5070 = vbcast.lane.b32.xlu0 %v5068, 256
        %v5071 = vpop.permute.xlu0 %5070
        %s5073 = sor.u32 256, 8
        %5074 = vbcast.lane.b32.xlu0 %v5068, %s5073
        %v5075 = vpop.permute.xlu0 %5074
        %v5076 = vlaneseq
        %v5077 = vshrl.u32 %v5076, 7
        %v5078 = vsub.s32 1, %v5077
        %v5079 = vrot.slane %v5063, %v5078
        %5081 = vbcast.lane.b32.xlu0 %v5079, 256
        %v5082 = vpop.permute.xlu0 %5081
        %s5084 = sor.u32 256, 8
        %5085 = vbcast.lane.b32.xlu0 %v5079, %s5084
        %v5086 = vpop.permute.xlu0 %5085
        %v5087 = vlaneseq
        %v5088 = vshrl.u32 %v5087, 7
        %v5089 = vsub.s32 2, %v5088
        %v5090 = vrot.slane %v5063, %v5089
        %5092 = vbcast.lane.b32.xlu0 %v5090, 256
        %v5093 = vpop.permute.xlu0 %5092
        %s5095 = sor.u32 256, 8
        %5096 = vbcast.lane.b32.xlu0 %v5090, %s5095
        %v5097 = vpop.permute.xlu0 %5096
        %v5098 = vlaneseq
        %v5099 = vshrl.u32 %v5098, 7
        %v5100 = vsub.s32 3, %v5099
        %v5101 = vrot.slane %v5063, %v5100
        %5103 = vbcast.lane.b32.xlu0 %v5101, 256
        %v5104 = vpop.permute.xlu0 %5103
        %s5106 = sor.u32 256, 8
        %5107 = vbcast.lane.b32.xlu0 %v5101, %s5106
        %v5108 = vpop.permute.xlu0 %5107
        %v5109 = vlaneseq
        %v5110 = vshrl.u32 %v5109, 7
        %v5111 = vsub.s32 4, %v5110
        %v5112 = vrot.slane %v5063, %v5111
        %5114 = vbcast.lane.b32.xlu0 %v5112, 256
        %v5115 = vpop.permute.xlu0 %5114
        %s5117 = sor.u32 256, 8
        %5118 = vbcast.lane.b32.xlu0 %v5112, %s5117
        %v5119 = vpop.permute.xlu0 %5118
        %v5120 = vlaneseq
        %v5121 = vshrl.u32 %v5120, 7
        %v5122 = vsub.s32 5, %v5121
        %v5123 = vrot.slane %v5063, %v5122
        %5125 = vbcast.lane.b32.xlu0 %v5123, 256
        %v5126 = vpop.permute.xlu0 %5125
        %s5128 = sor.u32 256, 8
        %5129 = vbcast.lane.b32.xlu0 %v5123, %s5128
        %v5130 = vpop.permute.xlu0 %5129
        %v5131 = vlaneseq
        %v5132 = vshrl.u32 %v5131, 7
        %v5133 = vsub.s32 6, %v5132
        %v5134 = vrot.slane %v5063, %v5133
        %5136 = vbcast.lane.b32.xlu0 %v5134, 256
        %v5137 = vpop.permute.xlu0 %5136
        %s5139 = sor.u32 256, 8
        %5140 = vbcast.lane.b32.xlu0 %v5134, %s5139
        %v5141 = vpop.permute.xlu0 %5140
        %v5142 = vlaneseq
        %v5143 = vshrl.u32 %v5142, 7
        %v5144 = vsub.s32 7, %v5143
        %v5145 = vrot.slane %v5063, %v5144
        %5147 = vbcast.lane.b32.xlu0 %v5145, 256
        %v5148 = vpop.permute.xlu0 %5147
        %s5150 = sor.u32 256, 8
        %5151 = vbcast.lane.b32.xlu0 %v5145, %s5150
        %v5152 = vpop.permute.xlu0 %5151
        %v5153 = vlaneseq
        %v5154 = vshrl.u32 %v5153, 7
        %v5155 = vsub.s32 0, %v5154
        %v5156 = vrot.slane %v5064, %v5155
        %5158 = vbcast.lane.b32.xlu0 %v5156, 256
        %v5159 = vpop.permute.xlu0 %5158
        %s5161 = sor.u32 256, 8
        %5162 = vbcast.lane.b32.xlu0 %v5156, %s5161
        %v5163 = vpop.permute.xlu0 %5162
        %v5164 = vlaneseq
        %v5165 = vshrl.u32 %v5164, 7
        %v5166 = vsub.s32 1, %v5165
        %v5167 = vrot.slane %v5064, %v5166
        %5169 = vbcast.lane.b32.xlu0 %v5167, 256
        %v5170 = vpop.permute.xlu0 %5169
        %s5172 = sor.u32 256, 8
        %5173 = vbcast.lane.b32.xlu0 %v5167, %s5172
        %v5174 = vpop.permute.xlu0 %5173
        %v5175 = vlaneseq
        %v5176 = vshrl.u32 %v5175, 7
        %v5177 = vsub.s32 2, %v5176
        %v5178 = vrot.slane %v5064, %v5177
        %5180 = vbcast.lane.b32.xlu0 %v5178, 256
        %v5181 = vpop.permute.xlu0 %5180
        %s5183 = sor.u32 256, 8
        %5184 = vbcast.lane.b32.xlu0 %v5178, %s5183
        %v5185 = vpop.permute.xlu0 %5184
        %v5186 = vlaneseq
        %v5187 = vshrl.u32 %v5186, 7
        %v5188 = vsub.s32 3, %v5187
        %v5189 = vrot.slane %v5064, %v5188
        %5191 = vbcast.lane.b32.xlu0 %v5189, 256
        %v5192 = vpop.permute.xlu0 %5191
        %s5194 = sor.u32 256, 8
        %5195 = vbcast.lane.b32.xlu0 %v5189, %s5194
        %v5196 = vpop.permute.xlu0 %5195
        %v5197 = vlaneseq
        %v5198 = vshrl.u32 %v5197, 7
        %v5199 = vsub.s32 4, %v5198
        %v5200 = vrot.slane %v5064, %v5199
        %5202 = vbcast.lane.b32.xlu0 %v5200, 256
        %v5203 = vpop.permute.xlu0 %5202
        %s5205 = sor.u32 256, 8
        %5206 = vbcast.lane.b32.xlu0 %v5200, %s5205
        %v5207 = vpop.permute.xlu0 %5206
        %v5208 = vlaneseq
        %v5209 = vshrl.u32 %v5208, 7
        %v5210 = vsub.s32 5, %v5209
        %v5211 = vrot.slane %v5064, %v5210
        %5213 = vbcast.lane.b32.xlu0 %v5211, 256
        %v5214 = vpop.permute.xlu0 %5213
        %s5216 = sor.u32 256, 8
        %5217 = vbcast.lane.b32.xlu0 %v5211, %s5216
        %v5218 = vpop.permute.xlu0 %5217
        %v5219 = vlaneseq
        %v5220 = vshrl.u32 %v5219, 7
        %v5221 = vsub.s32 6, %v5220
        %v5222 = vrot.slane %v5064, %v5221
        %5224 = vbcast.lane.b32.xlu0 %v5222, 256
        %v5225 = vpop.permute.xlu0 %5224
        %s5227 = sor.u32 256, 8
        %5228 = vbcast.lane.b32.xlu0 %v5222, %s5227
        %v5229 = vpop.permute.xlu0 %5228
        %v5230 = vlaneseq
        %v5231 = vshrl.u32 %v5230, 7
        %v5232 = vsub.s32 7, %v5231
        %v5233 = vrot.slane %v5064, %v5232
        %5235 = vbcast.lane.b32.xlu0 %v5233, 256
        %v5236 = vpop.permute.xlu0 %5235
        %s5238 = sor.u32 256, 8
        %5239 = vbcast.lane.b32.xlu0 %v5233, %s5238
        %v5240 = vpop.permute.xlu0 %5239
        %v5241 = vmul.f32 %v5071, %v526
        %v5242 = vmul.f32 %v5075, %v527
        %v5243 = vmul.f32 %v5082, %v528
        %v5244 = vmul.f32 %v5086, %v529
        %v5245 = vmul.f32 %v5093, %v530
        %v5246 = vmul.f32 %v5097, %v531
        %v5247 = vmul.f32 %v5104, %v532
        %v5248 = vmul.f32 %v5108, %v533
        %v5249 = vmul.f32 %v5115, %v534
        %v5250 = vmul.f32 %v5119, %v535
        %v5251 = vmul.f32 %v5126, %v536
        %v5252 = vmul.f32 %v5130, %v537
        %v5253 = vmul.f32 %v5137, %v538
        %v5254 = vmul.f32 %v5141, %v539
        %v5255 = vmul.f32 %v5148, %v540
        %v5256 = vmul.f32 %v5152, %v541
        %v5257 = vmul.f32 %v5159, %v542
        %v5258 = vmul.f32 %v5163, %v543
        %v5259 = vmul.f32 %v5170, %v544
        %v5260 = vmul.f32 %v5174, %v545
        %v5261 = vmul.f32 %v5181, %v546
        %v5262 = vmul.f32 %v5185, %v547
        %v5263 = vmul.f32 %v5192, %v548
        %v5264 = vmul.f32 %v5196, %v549
        %v5265 = vmul.f32 %v5203, %v550
        %v5266 = vmul.f32 %v5207, %v551
        %v5267 = vmul.f32 %v5214, %v552
        %v5268 = vmul.f32 %v5218, %v553
        %v5269 = vmul.f32 %v5225, %v554
        %v5270 = vmul.f32 %v5229, %v555
        %v5271 = vmul.f32 %v5236, %v556
        %v5272 = vmul.f32 %v5240, %v557
        %v5273 = vsel %vm1039, %v5241, 0.0
        %v5274 = vsel %vm1039, %v5242, 0.0
        %v5275 = vadd.f32 %v5273, %v5274
        %v5276 = vrot.slane %v5275, 4
        %v5277 = vadd.f32 %v5275, %v5276
        %v5278 = vrot.slane %v5277, 2
        %v5279 = vadd.f32 %v5277, %v5278
        %v5280 = vrot.slane %v5279, 1
        %v5281 = vadd.f32 %v5279, %v5280
        %v5282 = vsel %vm1039, %v5243, 0.0
        %v5283 = vsel %vm1039, %v5244, 0.0
        %v5284 = vadd.f32 %v5282, %v5283
        %v5285 = vrot.slane %v5284, 4
        %v5286 = vadd.f32 %v5284, %v5285
        %v5287 = vrot.slane %v5286, 2
        %v5288 = vadd.f32 %v5286, %v5287
        %v5289 = vrot.slane %v5288, 1
        %v5290 = vadd.f32 %v5288, %v5289
        %v5291 = vsel %vm1039, %v5245, 0.0
        %v5292 = vsel %vm1039, %v5246, 0.0
        %v5293 = vadd.f32 %v5291, %v5292
        %v5294 = vrot.slane %v5293, 4
        %v5295 = vadd.f32 %v5293, %v5294
        %v5296 = vrot.slane %v5295, 2
        %v5297 = vadd.f32 %v5295, %v5296
        %v5298 = vrot.slane %v5297, 1
        %v5299 = vadd.f32 %v5297, %v5298
        %v5300 = vsel %vm1039, %v5247, 0.0
        %v5301 = vsel %vm1039, %v5248, 0.0
        %v5302 = vadd.f32 %v5300, %v5301
        %v5303 = vrot.slane %v5302, 4
        %v5304 = vadd.f32 %v5302, %v5303
        %v5305 = vrot.slane %v5304, 2
        %v5306 = vadd.f32 %v5304, %v5305
        %v5307 = vrot.slane %v5306, 1
        %v5308 = vadd.f32 %v5306, %v5307
        %v5309 = vsel %vm1039, %v5249, 0.0
        %v5310 = vsel %vm1039, %v5250, 0.0
        %v5311 = vadd.f32 %v5309, %v5310
        %v5312 = vrot.slane %v5311, 4
        %v5313 = vadd.f32 %v5311, %v5312
        %v5314 = vrot.slane %v5313, 2
        %v5315 = vadd.f32 %v5313, %v5314
        %v5316 = vrot.slane %v5315, 1
        %v5317 = vadd.f32 %v5315, %v5316
        %v5318 = vsel %vm1039, %v5251, 0.0
        %v5319 = vsel %vm1039, %v5252, 0.0
        %v5320 = vadd.f32 %v5318, %v5319
        %v5321 = vrot.slane %v5320, 4
        %v5322 = vadd.f32 %v5320, %v5321
        %v5323 = vrot.slane %v5322, 2
        %v5324 = vadd.f32 %v5322, %v5323
        %v5325 = vrot.slane %v5324, 1
        %v5326 = vadd.f32 %v5324, %v5325
        %v5327 = vsel %vm1039, %v5253, 0.0
        %v5328 = vsel %vm1039, %v5254, 0.0
        %v5329 = vadd.f32 %v5327, %v5328
        %v5330 = vrot.slane %v5329, 4
        %v5331 = vadd.f32 %v5329, %v5330
        %v5332 = vrot.slane %v5331, 2
        %v5333 = vadd.f32 %v5331, %v5332
        %v5334 = vrot.slane %v5333, 1
        %v5335 = vadd.f32 %v5333, %v5334
        %v5336 = vsel %vm1039, %v5255, 0.0
        %v5337 = vsel %vm1039, %v5256, 0.0
        %v5338 = vadd.f32 %v5336, %v5337
        %v5339 = vrot.slane %v5338, 4
        %v5340 = vadd.f32 %v5338, %v5339
        %v5341 = vrot.slane %v5340, 2
        %v5342 = vadd.f32 %v5340, %v5341
        %v5343 = vrot.slane %v5342, 1
        %v5344 = vadd.f32 %v5342, %v5343
        %v5345 = vsel %vm1039, %v5257, 0.0
        %v5346 = vsel %vm1039, %v5258, 0.0
        %v5347 = vadd.f32 %v5345, %v5346
        %v5348 = vrot.slane %v5347, 4
        %v5349 = vadd.f32 %v5347, %v5348
        %v5350 = vrot.slane %v5349, 2
        %v5351 = vadd.f32 %v5349, %v5350
        %v5352 = vrot.slane %v5351, 1
        %v5353 = vadd.f32 %v5351, %v5352
        %v5354 = vsel %vm1039, %v5259, 0.0
        %v5355 = vsel %vm1039, %v5260, 0.0
        %v5356 = vadd.f32 %v5354, %v5355
        %v5357 = vrot.slane %v5356, 4
        %v5358 = vadd.f32 %v5356, %v5357
        %v5359 = vrot.slane %v5358, 2
        %v5360 = vadd.f32 %v5358, %v5359
        %v5361 = vrot.slane %v5360, 1
        %v5362 = vadd.f32 %v5360, %v5361
        %v5363 = vsel %vm1039, %v5261, 0.0
        %v5364 = vsel %vm1039, %v5262, 0.0
        %v5365 = vadd.f32 %v5363, %v5364
        %v5366 = vrot.slane %v5365, 4
        %v5367 = vadd.f32 %v5365, %v5366
        %v5368 = vrot.slane %v5367, 2
        %v5369 = vadd.f32 %v5367, %v5368
        %v5370 = vrot.slane %v5369, 1
        %v5371 = vadd.f32 %v5369, %v5370
        %v5372 = vsel %vm1039, %v5263, 0.0
        %v5373 = vsel %vm1039, %v5264, 0.0
        %v5374 = vadd.f32 %v5372, %v5373
        %v5375 = vrot.slane %v5374, 4
        %v5376 = vadd.f32 %v5374, %v5375
        %v5377 = vrot.slane %v5376, 2
        %v5378 = vadd.f32 %v5376, %v5377
        %v5379 = vrot.slane %v5378, 1
        %v5380 = vadd.f32 %v5378, %v5379
        %v5381 = vsel %vm1039, %v5265, 0.0
        %v5382 = vsel %vm1039, %v5266, 0.0
        %v5383 = vadd.f32 %v5381, %v5382
        %v5384 = vrot.slane %v5383, 4
        %v5385 = vadd.f32 %v5383, %v5384
        %v5386 = vrot.slane %v5385, 2
        %v5387 = vadd.f32 %v5385, %v5386
        %v5388 = vrot.slane %v5387, 1
        %v5389 = vadd.f32 %v5387, %v5388
        %v5390 = vsel %vm1039, %v5267, 0.0
        %v5391 = vsel %vm1039, %v5268, 0.0
        %v5392 = vadd.f32 %v5390, %v5391
        %v5393 = vrot.slane %v5392, 4
        %v5394 = vadd.f32 %v5392, %v5393
        %v5395 = vrot.slane %v5394, 2
        %v5396 = vadd.f32 %v5394, %v5395
        %v5397 = vrot.slane %v5396, 1
        %v5398 = vadd.f32 %v5396, %v5397
        %v5399 = vsel %vm1039, %v5269, 0.0
        %v5400 = vsel %vm1039, %v5270, 0.0
        %v5401 = vadd.f32 %v5399, %v5400
        %v5402 = vrot.slane %v5401, 4
        %v5403 = vadd.f32 %v5401, %v5402
        %v5404 = vrot.slane %v5403, 2
        %v5405 = vadd.f32 %v5403, %v5404
        %v5406 = vrot.slane %v5405, 1
        %v5407 = vadd.f32 %v5405, %v5406
        %v5408 = vsel %vm1039, %v5271, 0.0
        %v5409 = vsel %vm1039, %v5272, 0.0
        %v5410 = vadd.f32 %v5408, %v5409
        %v5411 = vrot.slane %v5410, 4
        %v5412 = vadd.f32 %v5410, %v5411
        %v5413 = vrot.slane %v5412, 2
        %v5414 = vadd.f32 %v5412, %v5413
        %v5415 = vrot.slane %v5414, 1
        %v5416 = vadd.f32 %v5414, %v5415
        %v5433 = vsel %vm1852, %v5290, %v5281
        %v5434 = vsel %vm1854, %v5299, %v5433
        %v5435 = vsel %vm1856, %v5308, %v5434
        %v5436 = vsel %vm1858, %v5317, %v5435
        %v5437 = vsel %vm1860, %v5326, %v5436
        %v5438 = vsel %vm1862, %v5335, %v5437
        %v5439 = vsel %vm1864, %v5344, %v5438
        %v5440 = vsel %vm1852, %v5362, %v5353
        %v5441 = vsel %vm1854, %v5371, %v5440
        %v5442 = vsel %vm1856, %v5380, %v5441
        %v5443 = vsel %vm1858, %v5389, %v5442
        %v5444 = vsel %vm1860, %v5398, %v5443
        %v5445 = vsel %vm1862, %v5407, %v5444
        %v5446 = vsel %vm1864, %v5416, %v5445
        %5447 = vrot.lane.b32.xlu0 %v5439, 24
        %v5448 = vpop.permute.xlu0 %5447
        %5449 = vrot.lane.b32.xlu0 %v5446, 24
        %v5450 = vpop.permute.xlu0 %5449
        %vm5453 = vcmask 261312
        %5454 = vst.msk [vmem:[#allocation2] sm:$0xff] %vm5453, %v5448
        %5455 = vst.msk [vmem:[#allocation2 + $0x10] sm:$0xff] %vm5453, %v5450
        %5456 = vrot.lane.b32.xlu0 %v636, 80
        %v5457 = vpop.permute.xlu0 %5456
        %5458 = vrot.lane.b32.xlu0 %v642, 80
        %v5459 = vpop.permute.xlu0 %5458
        %5462 = vrot.lane.b32.xlu0 %v987, 100
        %v5463 = vpop.permute.xlu0 %5462
        %5464 = vrot.lane.b32.xlu0 %v988, 100
        %v5465 = vpop.permute.xlu0 %5464
        %5468 = vrot.lane.b32.xlu0 %v995, 104
        %v5469 = vpop.permute.xlu0 %5468
        %5470 = vrot.lane.b32.xlu0 %v996, 104
        %v5471 = vpop.permute.xlu0 %5470
        %5474 = vrot.lane.b32.xlu0 %v1003, 108
        %v5475 = vpop.permute.xlu0 %5474
        %5476 = vrot.lane.b32.xlu0 %v1004, 108
        %v5477 = vpop.permute.xlu0 %5476
        %v5480 = vsel %vm1479, %v5457, %v5463
        %v5481 = vsel %vm1479, %v5459, %v5465
        %v5482 = vsel %vm1482, %v5480, %v5469
        %v5483 = vsel %vm1482, %v5481, %v5471
        %v5484 = vsel %vm1485, %v5482, %v5475
        %v5485 = vsel %vm1485, %v5483, %v5477
        %v5487 = vsel %vm1479, %v5063, 0
        %v5490 = vsel %vm1479, %v5064, 0
        %5492 = vmatprep.subr.mxu0 0.0
        %5493 = vmatpush1.msra.mxu0 0.0
        %5494 = vmatprep.subr.mxu0 0.0
        %5495 = vmatpush1.msra.mxu0 0.0
        %5496 = vmatprep.subr.mxu0 0.0
        %5497 = vmatpush1.msra.mxu0 0.0
        %5498 = vmatprep.subr.mxu0 0.0
        %5499 = vmatpush1.msra.mxu0 0.0
        %5500 = vmatprep.subr.mxu0 0.0
        %5501 = vmatpush1.msra.mxu0 0.0
        %5502 = vmatprep.subr.mxu0 0.0
        %5503 = vmatpush1.msra.mxu0 0.0
        %5504 = vmatprep.subr.mxu0 0.0
        %5505 = vmatpush1.msra.mxu0 0.0
        %5506 = vmatprep.subr.mxu0 0.0
        %5507 = vmatpush1.msra.mxu0 0.0
        %5508 = vmatprep.subr.mxu0 0.0
        %5509 = vmatpush1.msra.mxu0 0.0
        %5510 = vmatprep.subr.mxu0 0.0
        %5511 = vmatpush1.msra.mxu0 0.0
        %5512 = vmatprep.subr.mxu0 0.0
        %5513 = vmatpush1.msra.mxu0 0.0
        %5514 = vmatprep.subr.mxu0 0.0
        %5515 = vmatpush1.msra.mxu0 0.0
        %5516 = vmatprep.subr.mxu0 0.0
        %5517 = vmatpush1.msra.mxu0 0.0
        %5518 = vmatprep.subr.mxu0 0.0
        %5519 = vmatpush1.msra.mxu0 0.0
        %5520 = vmatprep.subr.mxu0 0.0
        %5521 = vmatpush1.msra.mxu0 %v5485
        %5522 = vmatprep.subr.mxu0 0.0
        %5523 = vmatpush1.msra.mxu0 %v5484
        %5524 = vmatprep.subr.mxu0 0.0
        %5525 = vmatpush2.msra.mxu0 0.0
        %5526 = vmatprep.subr.mxu0 0.0
        %5527 = vmatpush2.msra.mxu0 0.0
        %5528 = vmatprep.subr.mxu0 0.0
        %5529 = vmatpush2.msra.mxu0 0.0
        %5530 = vmatprep.subr.mxu0 0.0
        %5531 = vmatpush2.msra.mxu0 0.0
        %5532 = vmatprep.subr.mxu0 0.0
        %5533 = vmatpush2.msra.mxu0 0.0
        %5534 = vmatprep.subr.mxu0 0.0
        %5535 = vmatpush2.msra.mxu0 0.0
        %5536 = vmatprep.subr.mxu0 0.0
        %5537 = vmatpush2.msra.mxu0 0.0
        %5538 = vmatprep.subr.mxu0 0.0
        %5539 = vmatpush2.msra.mxu0 0.0
        %5540 = vmatprep.subr.mxu0 0.0
        %5541 = vmatpush2.msra.mxu0 0.0
        %5542 = vmatprep.subr.mxu0 0.0
        %5543 = vmatpush2.msra.mxu0 0.0
        %5544 = vmatprep.subr.mxu0 0.0
        %5545 = vmatpush2.msra.mxu0 0.0
        %5546 = vmatprep.subr.mxu0 0.0
        %5547 = vmatpush2.msra.mxu0 0.0
        %5548 = vmatprep.subr.mxu0 0.0
        %5549 = vmatpush2.msra.mxu0 0.0
        %5550 = vmatprep.subr.mxu0 0.0
        %5551 = vmatpush2.msra.mxu0 0.0
        %5552 = vmatprep.subr.mxu0 0.0
        %5553 = vmatpush2.msra.mxu0 0.0
        %5554 = vmatprep.subr.mxu0 0.0
        %5555 = vmatpush2.msra.mxu0 0.0
        %5556 = vmatprep.mubr.f32.mxu0 0.0
        %5557 = vmatmul.mubr.f32.gmra.mxu0 %v5487
        %v5558 = vpop.f32.mrf.mxu0
        %v5559 = vadd.f32 0.0, %v5558
        %v5560 = vpop.f32.mrf.mxu0
        %5561 = vmatprep.mubr.f32.mxu0 0.0
        %5562 = vmatmul.mubr.f32.gmra.mxu0 %v5490
        %v5563 = vpop.f32.mrf.mxu0
        %v5564 = vadd.f32 0.0, %v5563
        %v5565 = vpop.f32.mrf.mxu0
        %5566 = vdwg.mxu0
        %5569 = vrot.lane.b32.xlu0 %v5559, 80
        %v5570 = vpop.permute.xlu0 %5569
        %5571 = vrot.lane.b32.xlu0 %v5564, 80
        %v5572 = vpop.permute.xlu0 %5571
        %vm5575 = vcmask 786048
        %5576 = vst.msk [vmem:[#allocation2] sm:$0xff] %vm5575, %v5570
        %5577 = vst.msk [vmem:[#allocation2 + $0x10] sm:$0xff] %vm5575, %v5572
        %5578 = vrot.lane.b32.xlu0 %v5559, 92
        %v5579 = vpop.permute.xlu0 %5578
        %5580 = vrot.lane.b32.xlu0 %v5564, 92
        %v5581 = vpop.permute.xlu0 %5580
        %vm5584 = vcmask 917344
        %5585 = vst.msk [vmem:[#allocation2] sm:$0xff] %vm5584, %v5579
        %5586 = vst.msk [vmem:[#allocation2 + $0x10] sm:$0xff] %vm5584, %v5581
        %5587 = vrot.lane.b32.xlu0 %v5559, 104
        %v5588 = vpop.permute.xlu0 %5587
        %5589 = vrot.lane.b32.xlu0 %v5564, 104
        %v5590 = vpop.permute.xlu0 %5589
        %vm5593 = vcmask 1048544
        %5594 = vst.msk [vmem:[#allocation2] sm:$0xff] %vm5593, %v5588
        %5595 = vst.msk [vmem:[#allocation2 + $0x10] sm:$0xff] %vm5593, %v5590
        %5596 = vrot.lane.b32.xlu0 %v5559, 116
        %v5597 = vpop.permute.xlu0 %5596
        %5598 = vrot.lane.b32.xlu0 %v5564, 116
        %v5599 = vpop.permute.xlu0 %5598
        %vm5602 = vcmask 130144
        %5603 = vst.msk [vmem:[#allocation2 + $0x8] sm:$0xff] %vm5602, %v5597
        %5604 = vst.msk [vmem:[#allocation2 + $0x18] sm:$0xff] %vm5602, %v5599
        %v5605 = vld [vmem:[#allocation2] sm:$0xff]
        %v5606 = vld [vmem:[#allocation2 + $0x10] sm:$0xff]
        %v5607 = vld [vmem:[#allocation2 + $0x8] sm:$0xff]
        %v5608 = vld [vmem:[#allocation2 + $0x18] sm:$0xff]
        %v5609 = vsub.f32 %v5605, %v774
        %v5610 = vsub.f32 %v5606, %v779
        %v5611 = vsub.f32 %v5605, %v835
        %v5612 = vsub.f32 %v5606, %v839
        %v5613 = vsub.f32 %v5607, %v895
        %v5614 = vsub.f32 %v5608, %v899
        %v5615 = vmul.f32 %v722, %v5609
        %v5616 = vmul.f32 %v727, %v5610
        %v5617 = vmul.f32 %v785, %v5611
        %v5618 = vmul.f32 %v789, %v5612
        %5621 = vrot.lane.b32.xlu0 %v5617, 112
        %v5622 = vpop.permute.xlu0 %5621
        %5623 = vrot.lane.b32.xlu0 %v5618, 112
        %v5624 = vpop.permute.xlu0 %5623
        %v5627 = vadd.f32 %v5615, %v5622
        %v5628 = vadd.f32 %v5616, %v5624
        %v5629 = vmul.f32 %v845, %v5613
        %v5630 = vmul.f32 %v849, %v5614
        %5633 = vrot.lane.b32.xlu0 %v5629, 96
        %v5634 = vpop.permute.xlu0 %5633
        %5635 = vrot.lane.b32.xlu0 %v5630, 96
        %v5636 = vpop.permute.xlu0 %5635
        %v5639 = vadd.f32 %v5627, %v5634
        %v5640 = vadd.f32 %v5628, %v5636
        %v5641 = vmul.f32 %v733, %v5609
        %v5642 = vmul.f32 %v737, %v5610
        %v5643 = vmul.f32 %v795, %v5611
        %v5644 = vmul.f32 %v799, %v5612
        %5647 = vrot.lane.b32.xlu0 %v5643, 112
        %v5648 = vpop.permute.xlu0 %5647
        %5649 = vrot.lane.b32.xlu0 %v5644, 112
        %v5650 = vpop.permute.xlu0 %5649
        %v5653 = vadd.f32 %v5641, %v5648
        %v5654 = vadd.f32 %v5642, %v5650
        %v5655 = vmul.f32 %v855, %v5613
        %v5656 = vmul.f32 %v859, %v5614
        %5659 = vrot.lane.b32.xlu0 %v5655, 96
        %v5660 = vpop.permute.xlu0 %5659
        %5661 = vrot.lane.b32.xlu0 %v5656, 96
        %v5662 = vpop.permute.xlu0 %5661
        %v5665 = vadd.f32 %v5653, %v5660
        %v5666 = vadd.f32 %v5654, %v5662
        %v5667 = vmul.f32 %v753, %v5609
        %v5668 = vmul.f32 %v757, %v5610
        %v5669 = vmul.f32 %v815, %v5611
        %v5670 = vmul.f32 %v819, %v5612
        %5673 = vrot.lane.b32.xlu0 %v5669, 112
        %v5674 = vpop.permute.xlu0 %5673
        %5675 = vrot.lane.b32.xlu0 %v5670, 112
        %v5676 = vpop.permute.xlu0 %5675
        %v5679 = vadd.f32 %v5667, %v5674
        %v5680 = vadd.f32 %v5668, %v5676
        %v5681 = vmul.f32 %v875, %v5613
        %v5682 = vmul.f32 %v879, %v5614
        %5685 = vrot.lane.b32.xlu0 %v5681, 96
        %v5686 = vpop.permute.xlu0 %5685
        %5687 = vrot.lane.b32.xlu0 %v5682, 96
        %v5688 = vpop.permute.xlu0 %5687
        %v5691 = vadd.f32 %v5679, %v5686
        %v5692 = vadd.f32 %v5680, %v5688
        %v5693 = vmul.f32 %v5639, %v5639
        %v5694 = vmul.f32 %v5640, %v5640
        %v5695 = vmul.f32 %v5665, %v5665
        %v5696 = vmul.f32 %v5666, %v5666
        %v5697 = vadd.f32 %v5693, %v5695
        %v5698 = vadd.f32 %v5694, %v5696
        %v5699 = vmul.f32 %v5691, %v5691
        %v5700 = vmul.f32 %v5692, %v5692
        %v5701 = vadd.f32 %v5697, %v5699
        %v5702 = vadd.f32 %v5698, %v5700
        %v5703 = vrsqrt.pop %v5701
        %v5704 = vmul.f32 %v5701, %v5703
        %vm5705 = vcmp.eq.f32.partialorder %v5701, inf
        %v5706 = vsel %vm5705, %v5701, %v5704
        %vm5707 = vcmp.eq.f32.partialorder %v5701, 0.0
        %v5708 = vand.u32 %v5701, 2147483648
        %v5709 = vsel %vm5707, %v5708, %v5706
        %v5710 = vrsqrt.pop %v5702
        %v5711 = vmul.f32 %v5702, %v5710
        %vm5712 = vcmp.eq.f32.partialorder %v5702, inf
        %v5713 = vsel %vm5712, %v5702, %v5711
        %vm5714 = vcmp.eq.f32.partialorder %v5702, 0.0
        %v5715 = vand.u32 %v5702, 2147483648
        %v5716 = vsel %vm5714, %v5715, %v5713
        %v5717 = vadd.f32 %v5709, 0.0001
        %v5718 = vadd.f32 %v5716, 0.0001
        %v5719 = vrcp.pop %v5717
        %v5720 = vrcp.pop %v5718
        %vm5721 = vcmask 917248
        %5722 = vst.msk [vmem:[#allocation2] sm:$0xff] %vm5721, %v5639
        %5723 = vst.msk [vmem:[#allocation2 + $0x10] sm:$0xff] %vm5721, %v5640
        %5726 = vrot.lane.b32.xlu0 %v5665, 16
        %v5727 = vpop.permute.xlu0 %5726
        %5728 = vrot.lane.b32.xlu0 %v5666, 16
        %v5729 = vpop.permute.xlu0 %5728
        %vm5732 = vcmask 1048448
        %5733 = vst.msk [vmem:[#allocation2] sm:$0xff] %vm5732, %v5727
        %5734 = vst.msk [vmem:[#allocation2 + $0x10] sm:$0xff] %vm5732, %v5729
        %5737 = vrot.lane.b32.xlu0 %v5691, 32
        %v5738 = vpop.permute.xlu0 %5737
        %5739 = vrot.lane.b32.xlu0 %v5692, 32
        %v5740 = vpop.permute.xlu0 %5739
        %5743 = vst.msk [vmem:[#allocation2 + $0x8] sm:$0xff] %vm1479, %v5738
        %5744 = vst.msk [vmem:[#allocation2 + $0x18] sm:$0xff] %vm1479, %v5740
        %5747 = vrot.lane.b32.xlu0 %v5709, 48
        %v5748 = vpop.permute.xlu0 %5747
        %5749 = vrot.lane.b32.xlu0 %v5716, 48
        %v5750 = vpop.permute.xlu0 %5749
        %vm5753 = vcmask 261248
        %5754 = vst.msk [vmem:[#allocation2 + $0x8] sm:$0xff] %vm5753, %v5748
        %5755 = vst.msk [vmem:[#allocation2 + $0x18] sm:$0xff] %vm5753, %v5750
        %v5756 = vmul.f32 %v5639, %v5719
        %v5757 = vmul.f32 %v5640, %v5720
        %5760 = vrot.lane.b32.xlu0 %v5756, 64
        %v5761 = vpop.permute.xlu0 %5760
        %5762 = vrot.lane.b32.xlu0 %v5757, 64
        %v5763 = vpop.permute.xlu0 %5762
        %5766 = vst.msk [vmem:[#allocation2 + $0x8] sm:$0xff] %vm2506, %v5761
        %5767 = vst.msk [vmem:[#allocation2 + $0x18] sm:$0xff] %vm2506, %v5763
        %v5768 = vmul.f32 %v5665, %v5719
        %v5769 = vmul.f32 %v5666, %v5720
        %5772 = vrot.lane.b32.xlu0 %v5768, 80
        %v5773 = vpop.permute.xlu0 %5772
        %5774 = vrot.lane.b32.xlu0 %v5769, 80
        %v5775 = vpop.permute.xlu0 %5774
        %5778 = vst.msk [vmem:[#allocation2 + $0x8] sm:$0xff] %vm3529, %v5773
        %5779 = vst.msk [vmem:[#allocation2 + $0x18] sm:$0xff] %vm3529, %v5775
        %v5780 = vmul.f32 %v5691, %v5719
        %v5781 = vmul.f32 %v5692, %v5720
        %5784 = vrot.lane.b32.xlu0 %v5780, 96
        %v5785 = vpop.permute.xlu0 %5784
        %5786 = vrot.lane.b32.xlu0 %v5781, 96
        %v5787 = vpop.permute.xlu0 %5786
        %5790 = vst.msk [vmem:[#allocation2 + $0x8] sm:$0xff] %vm4552, %v5785
        %5791 = vst.msk [vmem:[#allocation2 + $0x18] sm:$0xff] %vm4552, %v5787
        %v5792 = vld [vmem:[#allocation2] sm:$0xff]
        %v5793 = vld [vmem:[#allocation2 + $0x8] sm:$0xff]
        %v5794 = vld [vmem:[#allocation2 + $0x10] sm:$0xff]
        %v5795 = vld [vmem:[#allocation2 + $0x18] sm:$0xff]
        %v5796 = vlaneseq
        %v5797 = vshrl.u32 %v5796, 7
        %v5798 = vsub.s32 0, %v5797
        %v5799 = vrot.slane %v505, %v5798
        %vm5800 = vcmask 654336
        %v5802 = vsel %vm5800, %v5793, 0
        %v5805 = vsel %vm5800, %v5795, 0
        %5807 = vmatprep.subr.mxu0 0.0
        %5808 = vmatpush1.msra.mxu0 %v494
        %5809 = vmatprep.subr.mxu0 0.0
        %5810 = vmatpush1.msra.mxu0 %v493
        %5811 = vmatprep.subr.mxu0 0.0
        %5812 = vmatpush1.msra.mxu0 %v492
        %5813 = vmatprep.subr.mxu0 0.0
        %5814 = vmatpush1.msra.mxu0 %v491
        %5815 = vmatprep.subr.mxu0 0.0
        %5816 = vmatpush1.msra.mxu0 %v490
        %5817 = vmatprep.subr.mxu0 0.0
        %5818 = vmatpush1.msra.mxu0 %v489
        %5819 = vmatprep.subr.mxu0 0.0
        %5820 = vmatpush1.msra.mxu0 %v488
        %5821 = vmatprep.subr.mxu0 0.0
        %5822 = vmatpush1.msra.mxu0 %v487
        %5823 = vmatprep.subr.mxu0 0.0
        %5824 = vmatpush1.msra.mxu0 %v486
        %5825 = vmatprep.subr.mxu0 0.0
        %5826 = vmatpush1.msra.mxu0 %v485
        %5827 = vmatprep.subr.mxu0 0.0
        %5828 = vmatpush1.msra.mxu0 %v484
        %5829 = vmatprep.subr.mxu0 0.0
        %5830 = vmatpush1.msra.mxu0 %v483
        %5831 = vmatprep.subr.mxu0 0.0
        %5832 = vmatpush1.msra.mxu0 %v482
        %5833 = vmatprep.subr.mxu0 0.0
        %5834 = vmatpush1.msra.mxu0 %v481
        %5835 = vmatprep.subr.mxu0 0.0
        %5836 = vmatpush1.msra.mxu0 %v480
        %5837 = vmatprep.subr.mxu0 0.0
        %5838 = vmatpush1.msra.mxu0 %v479
        %5839 = vmatprep.subr.mxu0 0.0
        %5840 = vmatpush2.msra.mxu0 0.0
        %5841 = vmatprep.subr.mxu0 0.0
        %5842 = vmatpush2.msra.mxu0 0.0
        %5843 = vmatprep.subr.mxu0 0.0
        %5844 = vmatpush2.msra.mxu0 0.0
        %5845 = vmatprep.subr.mxu0 0.0
        %5846 = vmatpush2.msra.mxu0 0.0
        %5847 = vmatprep.subr.mxu0 0.0
        %5848 = vmatpush2.msra.mxu0 0.0
        %5849 = vmatprep.subr.mxu0 0.0
        %5850 = vmatpush2.msra.mxu0 0.0
        %5851 = vmatprep.subr.mxu0 0.0
        %5852 = vmatpush2.msra.mxu0 %v504
        %5853 = vmatprep.subr.mxu0 0.0
        %5854 = vmatpush2.msra.mxu0 %v503
        %5855 = vmatprep.subr.mxu0 0.0
        %5856 = vmatpush2.msra.mxu0 %v502
        %5857 = vmatprep.subr.mxu0 0.0
        %5858 = vmatpush2.msra.mxu0 %v501
        %5859 = vmatprep.subr.mxu0 0.0
        %5860 = vmatpush2.msra.mxu0 %v500
        %5861 = vmatprep.subr.mxu0 0.0
        %5862 = vmatpush2.msra.mxu0 %v499
        %5863 = vmatprep.subr.mxu0 0.0
        %5864 = vmatpush2.msra.mxu0 %v498
        %5865 = vmatprep.subr.mxu0 0.0
        %5866 = vmatpush2.msra.mxu0 %v497
        %5867 = vmatprep.subr.mxu0 0.0
        %5868 = vmatpush2.msra.mxu0 %v496
        %5869 = vmatprep.subr.mxu0 0.0
        %5870 = vmatpush2.msra.mxu0 %v495
        %5871 = vmatprep.mubr.f32.mxu0 %v5802
        %5872 = vmatmul.mubr.f32.gmra.mxu0 %v5792
        %v5873 = vpop.f32.mrf.mxu0
        %v5874 = vadd.f32 %v5799, %v5873
        %v5875 = vpop.f32.mrf.mxu0
        %5876 = vmatprep.mubr.f32.mxu0 %v5805
        %5877 = vmatmul.mubr.f32.gmra.mxu0 %v5794
        %v5878 = vpop.f32.mrf.mxu0
        %v5879 = vadd.f32 %v5799, %v5878
        %v5880 = vpop.f32.mrf.mxu0
        %5881 = vdwg.mxu0
        %v5882 = vsel %vm1997, %v5874, 0.0
        %v5883 = vsel %vm1998, %v5879, 0.0
        %v5884 = vadd.f32 %v524, %v5882
        %v5885 = vadd.f32 %v525, %v5883
        %v5886 = vsel %vm560, %v5884, 0.0
        %5887 = vadd.xlane.f32.xlu0 %v5886
        %v5888 = vpop.xlane.xlu0 %5887
        %v5889 = vsel %vm560, %v5885, 0.0
        %5890 = vadd.xlane.f32.xlu0 %v5889
        %v5891 = vpop.xlane.xlu0 %5890
        %v5892 = vrcp.pop 32.0
        %v5893 = vmul.f32 %v5888, %v5892
        %v5894 = vmul.f32 %v5891, %v5892
        %v5895 = vsub.f32 %v5884, %v5893
        %v5896 = vsub.f32 %v5885, %v5894
        %v5897 = vmul.f32 %v5895, %v5895
        %v5898 = vmul.f32 %v5896, %v5896
        %v5899 = vsel %vm560, %v5897, 0.0
        %5900 = vadd.xlane.f32.xlu0 %v5899
        %v5901 = vpop.xlane.xlu0 %5900
        %v5902 = vsel %vm560, %v5898, 0.0
        %5903 = vadd.xlane.f32.xlu0 %v5902
        %v5904 = vpop.xlane.xlu0 %5903
        %v5905 = vmul.f32 %v5901, %v5892
        %v5906 = vmul.f32 %v5904, %v5892
        %v5907 = vadd.f32 %v5905, 1e-05
        %v5908 = vadd.f32 %v5906, 1e-05
        %v5909 = vrsqrt.pop %v5907
        %v5910 = vrsqrt.pop %v5908
        %v5911 = vmul.f32 %v5895, %v5909
        %v5912 = vmul.f32 %v5896, %v5910
        %v5913 = vlaneseq
        %v5914 = vshrl.u32 %v5913, 7
        %v5915 = vsub.s32 1, %v5914
        %v5916 = vrot.slane %v505, %v5915
        %v5917 = vmul.f32 %v5911, %v5916
        %v5918 = vmul.f32 %v5912, %v5916
        %v5919 = vlaneseq
        %v5920 = vshrl.u32 %v5919, 7
        %v5921 = vsub.s32 2, %v5920
        %v5922 = vrot.slane %v505, %v5921
        %v5923 = vadd.f32 %v5917, %v5922
        %v5924 = vadd.f32 %v5918, %v5922
        %v5925 = vlaneseq
        %v5926 = vshrl.u32 %v5925, 7
        %v5927 = vsub.s32 3, %v5926
        %v5928 = vrot.slane %v505, %v5927
        %v5930 = vsel %vm560, %v5923, 0
        %v5933 = vsel %vm560, %v5924, 0
        %5935 = vmatprep.subr.mxu0 0.0
        %5936 = vmatpush1.msra.mxu0 0.0
        %5937 = vmatprep.subr.mxu0 0.0
        %5938 = vmatpush1.msra.mxu0 0.0
        %5939 = vmatprep.subr.mxu0 0.0
        %5940 = vmatpush1.msra.mxu0 0.0
        %5941 = vmatprep.subr.mxu0 0.0
        %5942 = vmatpush1.msra.mxu0 0.0
        %5943 = vmatprep.subr.mxu0 0.0
        %5944 = vmatpush1.msra.mxu0 0.0
        %5945 = vmatprep.subr.mxu0 0.0
        %5946 = vmatpush1.msra.mxu0 0.0
        %5947 = vmatprep.subr.mxu0 0.0
        %5948 = vmatpush1.msra.mxu0 0.0
        %5949 = vmatprep.subr.mxu0 0.0
        %5950 = vmatpush1.msra.mxu0 0.0
        %5951 = vmatprep.subr.mxu0 0.0
        %5952 = vmatpush1.msra.mxu0 0.0
        %5953 = vmatprep.subr.mxu0 0.0
        %5954 = vmatpush1.msra.mxu0 0.0
        %5955 = vmatprep.subr.mxu0 0.0
        %5956 = vmatpush1.msra.mxu0 0.0
        %5957 = vmatprep.subr.mxu0 0.0
        %5958 = vmatpush1.msra.mxu0 0.0
        %5959 = vmatprep.subr.mxu0 0.0
        %5960 = vmatpush1.msra.mxu0 %v509
        %5961 = vmatprep.subr.mxu0 0.0
        %5962 = vmatpush1.msra.mxu0 %v508
        %5963 = vmatprep.subr.mxu0 0.0
        %5964 = vmatpush1.msra.mxu0 %v507
        %5965 = vmatprep.subr.mxu0 0.0
        %5966 = vmatpush1.msra.mxu0 %v506
        %5967 = vmatprep.subr.mxu0 0.0
        %5968 = vmatpush2.msra.mxu0 0.0
        %5969 = vmatprep.subr.mxu0 0.0
        %5970 = vmatpush2.msra.mxu0 0.0
        %5971 = vmatprep.subr.mxu0 0.0
        %5972 = vmatpush2.msra.mxu0 0.0
        %5973 = vmatprep.subr.mxu0 0.0
        %5974 = vmatpush2.msra.mxu0 0.0
        %5975 = vmatprep.subr.mxu0 0.0
        %5976 = vmatpush2.msra.mxu0 0.0
        %5977 = vmatprep.subr.mxu0 0.0
        %5978 = vmatpush2.msra.mxu0 0.0
        %5979 = vmatprep.subr.mxu0 0.0
        %5980 = vmatpush2.msra.mxu0 0.0
        %5981 = vmatprep.subr.mxu0 0.0
        %5982 = vmatpush2.msra.mxu0 0.0
        %5983 = vmatprep.subr.mxu0 0.0
        %5984 = vmatpush2.msra.mxu0 0.0
        %5985 = vmatprep.subr.mxu0 0.0
        %5986 = vmatpush2.msra.mxu0 0.0
        %5987 = vmatprep.subr.mxu0 0.0
        %5988 = vmatpush2.msra.mxu0 0.0
        %5989 = vmatprep.subr.mxu0 0.0
        %5990 = vmatpush2.msra.mxu0 0.0
        %5991 = vmatprep.subr.mxu0 0.0
        %5992 = vmatpush2.msra.mxu0 0.0
        %5993 = vmatprep.subr.mxu0 0.0
        %5994 = vmatpush2.msra.mxu0 0.0
        %5995 = vmatprep.subr.mxu0 0.0
        %5996 = vmatpush2.msra.mxu0 0.0
        %5997 = vmatprep.subr.mxu0 0.0
        %5998 = vmatpush2.msra.mxu0 0.0
        %5999 = vmatprep.mubr.f32.mxu0 0.0
        %6000 = vmatmul.mubr.f32.gmra.mxu0 %v5930
        %v6001 = vpop.f32.mrf.mxu0
        %v6002 = vadd.f32 %v5928, %v6001
        %v6003 = vpop.f32.mrf.mxu0
        %6004 = vmatprep.mubr.f32.mxu0 0.0
        %6005 = vmatmul.mubr.f32.gmra.mxu0 %v5933
        %v6006 = vpop.f32.mrf.mxu0
        %v6007 = vadd.f32 %v5928, %v6006
        %v6008 = vpop.f32.mrf.mxu0
        %6009 = vdwg.mxu0
        %v6010 = vmax.f32 %v6002, 0.0
        %v6011 = vmax.f32 %v6007, 0.0
        %v6012 = vlaneseq
        %v6013 = vshrl.u32 %v6012, 7
        %v6014 = vsub.s32 4, %v6013
        %v6015 = vrot.slane %v505, %v6014
        %v6017 = vsel %vm560, %v6010, 0
        %v6020 = vsel %vm560, %v6011, 0
        %6022 = vmatprep.subr.mxu0 0.0
        %6023 = vmatpush1.msra.mxu0 0.0
        %6024 = vmatprep.subr.mxu0 0.0
        %6025 = vmatpush1.msra.mxu0 0.0
        %6026 = vmatprep.subr.mxu0 0.0
        %6027 = vmatpush1.msra.mxu0 0.0
        %6028 = vmatprep.subr.mxu0 0.0
        %6029 = vmatpush1.msra.mxu0 0.0
        %6030 = vmatprep.subr.mxu0 0.0
        %6031 = vmatpush1.msra.mxu0 0.0
        %6032 = vmatprep.subr.mxu0 0.0
        %6033 = vmatpush1.msra.mxu0 0.0
        %6034 = vmatprep.subr.mxu0 0.0
        %6035 = vmatpush1.msra.mxu0 0.0
        %6036 = vmatprep.subr.mxu0 0.0
        %6037 = vmatpush1.msra.mxu0 0.0
        %6038 = vmatprep.subr.mxu0 0.0
        %6039 = vmatpush1.msra.mxu0 0.0
        %6040 = vmatprep.subr.mxu0 0.0
        %6041 = vmatpush1.msra.mxu0 0.0
        %6042 = vmatprep.subr.mxu0 0.0
        %6043 = vmatpush1.msra.mxu0 0.0
        %6044 = vmatprep.subr.mxu0 0.0
        %6045 = vmatpush1.msra.mxu0 0.0
        %6046 = vmatprep.subr.mxu0 0.0
        %6047 = vmatpush1.msra.mxu0 %v514
        %6048 = vmatprep.subr.mxu0 0.0
        %6049 = vmatpush1.msra.mxu0 %v513
        %6050 = vmatprep.subr.mxu0 0.0
        %6051 = vmatpush1.msra.mxu0 %v512
        %6052 = vmatprep.subr.mxu0 0.0
        %6053 = vmatpush1.msra.mxu0 %v511
        %6054 = vmatprep.subr.mxu0 0.0
        %6055 = vmatpush2.msra.mxu0 0.0
        %6056 = vmatprep.subr.mxu0 0.0
        %6057 = vmatpush2.msra.mxu0 0.0
        %6058 = vmatprep.subr.mxu0 0.0
        %6059 = vmatpush2.msra.mxu0 0.0
        %6060 = vmatprep.subr.mxu0 0.0
        %6061 = vmatpush2.msra.mxu0 0.0
        %6062 = vmatprep.subr.mxu0 0.0
        %6063 = vmatpush2.msra.mxu0 0.0
        %6064 = vmatprep.subr.mxu0 0.0
        %6065 = vmatpush2.msra.mxu0 0.0
        %6066 = vmatprep.subr.mxu0 0.0
        %6067 = vmatpush2.msra.mxu0 0.0
        %6068 = vmatprep.subr.mxu0 0.0
        %6069 = vmatpush2.msra.mxu0 0.0
        %6070 = vmatprep.subr.mxu0 0.0
        %6071 = vmatpush2.msra.mxu0 0.0
        %6072 = vmatprep.subr.mxu0 0.0
        %6073 = vmatpush2.msra.mxu0 0.0
        %6074 = vmatprep.subr.mxu0 0.0
        %6075 = vmatpush2.msra.mxu0 0.0
        %6076 = vmatprep.subr.mxu0 0.0
        %6077 = vmatpush2.msra.mxu0 0.0
        %6078 = vmatprep.subr.mxu0 0.0
        %6079 = vmatpush2.msra.mxu0 0.0
        %6080 = vmatprep.subr.mxu0 0.0
        %6081 = vmatpush2.msra.mxu0 0.0
        %6082 = vmatprep.subr.mxu0 0.0
        %6083 = vmatpush2.msra.mxu0 0.0
        %6084 = vmatprep.subr.mxu0 0.0
        %6085 = vmatpush2.msra.mxu0 0.0
        %6086 = vmatprep.mubr.f32.mxu0 0.0
        %6087 = vmatmul.mubr.f32.gmra.mxu0 %v6017
        %v6088 = vpop.f32.mrf.mxu0
        %v6089 = vadd.f32 %v6015, %v6088
        %v6090 = vpop.f32.mrf.mxu0
        %6091 = vmatprep.mubr.f32.mxu0 0.0
        %6092 = vmatmul.mubr.f32.gmra.mxu0 %v6020
        %v6093 = vpop.f32.mrf.mxu0
        %v6094 = vadd.f32 %v6015, %v6093
        %v6095 = vpop.f32.mrf.mxu0
        %6096 = vdwg.mxu0
        %v6097 = vmax.f32 %v6089, 0.0
        %v6098 = vmax.f32 %v6094, 0.0
        %v6099 = vlaneseq
        %v6100 = vshrl.u32 %v6099, 7
        %v6101 = vsub.s32 5, %v6100
        %v6102 = vrot.slane %v505, %v6101
        %v6104 = vsel %vm560, %v6097, 0
        %v6107 = vsel %vm560, %v6098, 0
        %6109 = vmatprep.subr.mxu0 0.0
        %6110 = vmatpush1.msra.mxu0 0.0
        %6111 = vmatprep.subr.mxu0 0.0
        %6112 = vmatpush1.msra.mxu0 0.0
        %6113 = vmatprep.subr.mxu0 0.0
        %6114 = vmatpush1.msra.mxu0 0.0
        %6115 = vmatprep.subr.mxu0 0.0
        %6116 = vmatpush1.msra.mxu0 0.0
        %6117 = vmatprep.subr.mxu0 0.0
        %6118 = vmatpush1.msra.mxu0 0.0
        %6119 = vmatprep.subr.mxu0 0.0
        %6120 = vmatpush1.msra.mxu0 0.0
        %6121 = vmatprep.subr.mxu0 0.0
        %6122 = vmatpush1.msra.mxu0 0.0
        %6123 = vmatprep.subr.mxu0 0.0
        %6124 = vmatpush1.msra.mxu0 0.0
        %6125 = vmatprep.subr.mxu0 0.0
        %6126 = vmatpush1.msra.mxu0 0.0
        %6127 = vmatprep.subr.mxu0 0.0
        %6128 = vmatpush1.msra.mxu0 0.0
        %6129 = vmatprep.subr.mxu0 0.0
        %6130 = vmatpush1.msra.mxu0 0.0
        %6131 = vmatprep.subr.mxu0 0.0
        %6132 = vmatpush1.msra.mxu0 0.0
        %6133 = vmatprep.subr.mxu0 0.0
        %6134 = vmatpush1.msra.mxu0 %v519
        %6135 = vmatprep.subr.mxu0 0.0
        %6136 = vmatpush1.msra.mxu0 %v518
        %6137 = vmatprep.subr.mxu0 0.0
        %6138 = vmatpush1.msra.mxu0 %v517
        %6139 = vmatprep.subr.mxu0 0.0
        %6140 = vmatpush1.msra.mxu0 %v516
        %6141 = vmatprep.subr.mxu0 0.0
        %6142 = vmatpush2.msra.mxu0 0.0
        %6143 = vmatprep.subr.mxu0 0.0
        %6144 = vmatpush2.msra.mxu0 0.0
        %6145 = vmatprep.subr.mxu0 0.0
        %6146 = vmatpush2.msra.mxu0 0.0
        %6147 = vmatprep.subr.mxu0 0.0
        %6148 = vmatpush2.msra.mxu0 0.0
        %6149 = vmatprep.subr.mxu0 0.0
        %6150 = vmatpush2.msra.mxu0 0.0
        %6151 = vmatprep.subr.mxu0 0.0
        %6152 = vmatpush2.msra.mxu0 0.0
        %6153 = vmatprep.subr.mxu0 0.0
        %6154 = vmatpush2.msra.mxu0 0.0
        %6155 = vmatprep.subr.mxu0 0.0
        %6156 = vmatpush2.msra.mxu0 0.0
        %6157 = vmatprep.subr.mxu0 0.0
        %6158 = vmatpush2.msra.mxu0 0.0
        %6159 = vmatprep.subr.mxu0 0.0
        %6160 = vmatpush2.msra.mxu0 0.0
        %6161 = vmatprep.subr.mxu0 0.0
        %6162 = vmatpush2.msra.mxu0 0.0
        %6163 = vmatprep.subr.mxu0 0.0
        %6164 = vmatpush2.msra.mxu0 0.0
        %6165 = vmatprep.subr.mxu0 0.0
        %6166 = vmatpush2.msra.mxu0 0.0
        %6167 = vmatprep.subr.mxu0 0.0
        %6168 = vmatpush2.msra.mxu0 0.0
        %6169 = vmatprep.subr.mxu0 0.0
        %6170 = vmatpush2.msra.mxu0 0.0
        %6171 = vmatprep.subr.mxu0 0.0
        %6172 = vmatpush2.msra.mxu0 0.0
        %6173 = vmatprep.mubr.f32.mxu0 0.0
        %6174 = vmatmul.mubr.f32.gmra.mxu0 %v6104
        %v6175 = vpop.f32.mrf.mxu0
        %v6176 = vadd.f32 %v6102, %v6175
        %v6177 = vpop.f32.mrf.mxu0
        %6178 = vmatprep.mubr.f32.mxu0 0.0
        %6179 = vmatmul.mubr.f32.gmra.mxu0 %v6107
        %v6180 = vpop.f32.mrf.mxu0
        %v6181 = vadd.f32 %v6102, %v6180
        %v6182 = vpop.f32.mrf.mxu0
        %6183 = vdwg.mxu0
        %v6184 = vadd.f32 %v5923, %v6176
        %v6185 = vadd.f32 %v5924, %v6181
        %v6186 = vsel %vm560, %v6184, 0.0
        %6187 = vadd.xlane.f32.xlu0 %v6186
        %v6188 = vpop.xlane.xlu0 %6187
        %v6189 = vsel %vm560, %v6185, 0.0
        %6190 = vadd.xlane.f32.xlu0 %v6189
        %v6191 = vpop.xlane.xlu0 %6190
        %v6192 = vmul.f32 %v6188, %v5892
        %v6193 = vmul.f32 %v6191, %v5892
        %v6194 = vsub.f32 %v6184, %v6192
        %v6195 = vsub.f32 %v6185, %v6193
        %v6196 = vmul.f32 %v6194, %v6194
        %v6197 = vmul.f32 %v6195, %v6195
        %v6198 = vsel %vm560, %v6196, 0.0
        %6199 = vadd.xlane.f32.xlu0 %v6198
        %v6200 = vpop.xlane.xlu0 %6199
        %v6201 = vsel %vm560, %v6197, 0.0
        %6202 = vadd.xlane.f32.xlu0 %v6201
        %v6203 = vpop.xlane.xlu0 %6202
        %v6204 = vmul.f32 %v6200, %v5892
        %v6205 = vmul.f32 %v6203, %v5892
        %v6206 = vadd.f32 %v6204, 1e-05
        %v6207 = vadd.f32 %v6205, 1e-05
        %v6208 = vrsqrt.pop %v6206
        %v6209 = vrsqrt.pop %v6207
        %v6210 = vmul.f32 %v6194, %v6208
        %v6211 = vmul.f32 %v6195, %v6209
        %v6212 = vlaneseq
        %v6213 = vshrl.u32 %v6212, 7
        %v6214 = vsub.s32 6, %v6213
        %v6215 = vrot.slane %v505, %v6214
        %v6216 = vmul.f32 %v6210, %v6215
        %v6217 = vmul.f32 %v6211, %v6215
        %v6218 = vlaneseq
        %v6219 = vshrl.u32 %v6218, 7
        %v6220 = vsub.s32 7, %v6219
        %v6221 = vrot.slane %v505, %v6220
        %v6222 = vadd.f32 %v6216, %v6221
        %v6223 = vadd.f32 %v6217, %v6221
        %6224 = vst.msk [vmem:[%s439] sm:$0xff] %vm560, %v6222
        %6225 = vst.msk [vmem:[%s439 + $0x8] sm:$0xff] %vm560, %v6223
        %s6226 = sand.u32 %s289, 1
        %s6227 = scalar_lea.sflag [#allocation4], %s6226
        %s6228 = sand.u32 %s289, 1
        %s6229 = smul.addr %s6228, 16
        %s6230 = scalar_lea.vmem [#allocation3], %s6229
        // Predicated region
        $region65: #{tpu_custom_call.1} parent=63 // pred_check
          %p6231 = pneg %p299
        $region66: #{tpu_custom_call.1} parent=63 // pred_check_branch
          %6233 = sbr.rel (%p6231) target = $region68
        $region67: #{tpu_custom_call.1} parent=63 // pred_region
          %s6235 = ssub.s32 256, 256
          %6236 = vsyncadd %s6227, %s6235
          %s6237 = smul.addr %s25, 2
          %s6238 = smul.addr %s6237, 128
          %s6239 = scalar_lea.hbm %s11, %s6238
          %s6240 = sshll.u32 %s6230, 4
          %s6241 = int_to_ptr.vmem [resolvable:$true] %s6240
          %6246 = dma.vmem_to_hbm [thread:$0]  %s6241, 256, %s6239, %s6227, 128, 128, 8
        $region68: #{tpu_custom_call.1} parent=63 // pred_fallthru
          _
      $region64: #{tpu_custom_call.1} parent=5 // pred_fallthru
        _
      %p6247 = scmp.le.s32.totalorder 2, %s20
      // Predicated region
      $region69: #{tpu_custom_call.1} parent=5 // pred_check
        %p6248 = pneg %p6247
      $region70: #{tpu_custom_call.1} parent=5 // pred_check_branch
        %6250 = sbr.rel (%p6248) target = $region72
      $region71: #{tpu_custom_call.1} parent=5 // pred_region
        %s6251 = ssub.s32 %s20, 2
        // Predicated region
        $region73: #{tpu_custom_call.1} parent=71 // pred_check
          %p6252 = pneg %p305
        $region74: #{tpu_custom_call.1} parent=71 // pred_check_branch
          %6254 = sbr.rel (%p6252) target = $region76
        $region75: #{tpu_custom_call.1} parent=71 // pred_region
          %s6255 = sand.u32 %s290, 1
          %s6256 = scalar_lea.sflag [#allocation4], %s6255
          %s6257 = sand.u32 %s290, 1
          %s6258 = smul.addr %s6257, 16
          %s6259 = scalar_lea.vmem [#allocation3], %s6258
          %6260 = dma.done %s6256, 256
        $region76: #{tpu_custom_call.1} parent=71 // pred_fallthru
          _
      $region72: #{tpu_custom_call.1} parent=5 // pred_fallthru
        _
    $region6: #{tpu_custom_call.1} parent=1 // loop_footer
      %s24 = sadd.s32 1, %s20
    $region7: #{tpu_custom_call.1} parent=1 // loop_footer_branch
      %19 = sbr.rel target = $region3
    $region8: #{tpu_custom_call.1} parent=1 // loop_exit
      _
    %6261 = vsyncpa [#allocation4], 1
    %s6262 = scalar_lea.sflag [#allocation4], 1
    %6263 = vsyncpa %s6262, 1

</llo_original>
